<compile_context>
chip_gen: v7x
topology: tpu7x:2x2x1
jax: 0.10.0
libtpu: 0.0.40
codegen_flags: <defaults>
</compile_context>

<pallas_src>
import functools

import jax
import jax.numpy as jnp
from jax.experimental import pallas as pl
from jax.experimental.pallas import tpu as pltpu

_EPS = 1e-6  # LayerNorm32(..., eps=1e-06) in the reference module.


# --------------------------- chip-aware parameters ---------------------------

def _vmem_limit_bytes():
    try:
        cap = int(getattr(pltpu.get_tpu_info(), "vmem_capacity_bytes", 0))
        if cap > 0:
            # Leave headroom for double-buffered inputs / compiler scratch.
            return int(min(cap * 3 // 4, 100 * 1024 * 1024))
    except Exception:
        pass
    return None  # fall back to the compiler default


_VMEM_LIMIT = _vmem_limit_bytes()
# Bigger flash K tiles on 128 MiB-VMEM chips (v5e/v6e); half on v7x (64 MiB).
_TK_MAX = 2048 if (_VMEM_LIMIT or 0) >= 80 * 1024 * 1024 else 1024


def _compiler_params(semantics):
    kw = dict(dimension_semantics=semantics)
    if _VMEM_LIMIT is not None:
        kw["vmem_limit_bytes"] = _VMEM_LIMIT
    return pltpu.CompilerParams(**kw)


def _pick_tile(n, max_tile, min_steps=1, modulus=16):
    """Largest tile t <= max_tile with t % modulus == 0, t | n, n//t >= min_steps.

    Falls back to the full dimension n (always a legal block_shape)."""
    t = min(n, max_tile)
    t -= t % modulus
    while t >= modulus:
        if n % t == 0 and n // t >= min_steps:
            return t
        t -= modulus
    return n


# ------------------------------ Pallas kernels ------------------------------

def _ln_linear_kernel(x_ref, w_ref, b_ref, o_ref, *, eps):
    # LayerNorm32 (f32 stats, no affine -- any affine is pre-folded into w/b)
    # followed by a bf16 MXU projection, stored as one lane-dense slab.
    x = x_ref[...].astype(jnp.float32)                               # (tm, C)
    mean = jnp.mean(x, axis=-1, keepdims=True)
    var = jnp.mean(jnp.square(x - mean), axis=-1, keepdims=True)     # biased, like torch LN
    h = (x - mean) * jax.lax.rsqrt(var + eps)
    y = jnp.dot(h.astype(jnp.bfloat16), w_ref[...].astype(jnp.bfloat16),
                preferred_element_type=jnp.float32)
    y = y + b_ref[...].astype(jnp.float32)
    o_ref[...] = y.astype(o_ref.dtype)


def ln_linear(x2d, w, b, *, eps=_EPS, out_dtype=jnp.bfloat16):
    M, C = x2d.shape
    Dout = w.shape[1]
    tm = _pick_tile(M, max_tile=512, min_steps=2)
    grid = (M // tm,)
    return pl.pallas_call(
        functools.partial(_ln_linear_kernel, eps=eps),
        out_shape=jax.ShapeDtypeStruct((M, Dout), out_dtype),
        grid=grid,
        in_specs=[pl.BlockSpec((tm, C), lambda i: (i, 0)),
                  pl.BlockSpec((C, Dout), lambda i: (0, 0)),
                  pl.BlockSpec((1, Dout), lambda i: (0, 0))],
        out_specs=pl.BlockSpec((tm, Dout), lambda i: (i, 0)),
        compiler_params=_compiler_params(("parallel",)),
    )(x2d, w, b)


def _ln_ffn_kernel(x_ref, w1_ref, b1_ref, w2_ref, b2_ref, o_ref, *, eps):
    # Fused LN(no affine) -> Linear -> GELU(tanh) -> Linear -> +residual.
    x = x_ref[...].astype(jnp.float32)                               # (tm, C) residual
    mean = jnp.mean(x, axis=-1, keepdims=True)
    var = jnp.mean(jnp.square(x - mean), axis=-1, keepdims=True)
    h = (x - mean) * jax.lax.rsqrt(var + eps)
    h = jnp.dot(h.astype(jnp.bfloat16), w1_ref[...].astype(jnp.bfloat16),
                preferred_element_type=jnp.float32) + b1_ref[...].astype(jnp.float32)
    h = jax.nn.gelu(h, approximate=True)                             # nn.GELU("tanh")
    y = jnp.dot(h.astype(jnp.bfloat16), w2_ref[...].astype(jnp.bfloat16),
                preferred_element_type=jnp.float32) + b2_ref[...].astype(jnp.float32)
    o_ref[...] = (x + y).astype(o_ref.dtype)                         # fused residual add


def ln_ffn_residual(x2d, w1, b1, w2, b2, *, eps=_EPS):
    M, C = x2d.shape
    Ch = w1.shape[1]
    tm = _pick_tile(M, max_tile=512, min_steps=2)
    grid = (M // tm,)
    return pl.pallas_call(
        functools.partial(_ln_ffn_kernel, eps=eps),
        out_shape=jax.ShapeDtypeStruct((M, C), x2d.dtype),
        grid=grid,
        in_specs=[pl.BlockSpec((tm, C), lambda i: (i, 0)),
                  pl.BlockSpec((C, Ch), lambda i: (0, 0)),
                  pl.BlockSpec((1, Ch), lambda i: (0, 0)),
                  pl.BlockSpec((Ch, C), lambda i: (0, 0)),
                  pl.BlockSpec((1, C), lambda i: (0, 0))],
        out_specs=pl.BlockSpec((tm, C), lambda i: (i, 0)),
        compiler_params=_compiler_params(("parallel",)),
    )(x2d, w1, b1, w2, b2)


def _kv_proj_kernel(x1_ref, x2_ref, w1_ref, w2_ref, b_ref, kv_ref):
    # Cross-attention K/V projection without materializing the concatenated
    # 3072-wide context: kv = x1 @ W1 + x2 @ W2 + b, one lane-dense (tm, 2C) slab.
    y = jnp.dot(x1_ref[...].astype(jnp.bfloat16), w1_ref[...].astype(jnp.bfloat16),
                preferred_element_type=jnp.float32)
    y = y + jnp.dot(x2_ref[...].astype(jnp.bfloat16), w2_ref[...].astype(jnp.bfloat16),
                    preferred_element_type=jnp.float32)
    y = y + b_ref[...].astype(jnp.float32)
    kv_ref[...] = y.astype(kv_ref.dtype)


def kv_proj(x1, x2, w1, w2, b, *, out_dtype=jnp.bfloat16):
    M, D1 = x1.shape
    D2 = x2.shape[1]
    Dout = w1.shape[1]
    tm = _pick_tile(M, max_tile=512, min_steps=2)
    grid = (M // tm,)
    return pl.pallas_call(
        _kv_proj_kernel,
        out_shape=jax.ShapeDtypeStruct((M, Dout), out_dtype),
        grid=grid,
        in_specs=[pl.BlockSpec((tm, D1), lambda i: (i, 0)),
                  pl.BlockSpec((tm, D2), lambda i: (i, 0)),
                  pl.BlockSpec((D1, Dout), lambda i: (0, 0)),
                  pl.BlockSpec((D2, Dout), lambda i: (0, 0)),
                  pl.BlockSpec((1, Dout), lambda i: (0, 0))],
        out_specs=pl.BlockSpec((tm, Dout), lambda i: (i, 0)),
        compiler_params=_compiler_params(("parallel",)),
    )(x1, x2, w1, w2, b)


def _attn_single_kernel(*refs, num_heads, head_dim, scale, q_off, k_off, v_off,
                        fuse_q, eps):
    # One-shot softmax attention (all keys in one tile), fused with the output
    # projection + residual add, and optionally with the next block's
    # LN(norm2 folded) + Q projection for cross-attention.
    if fuse_q:
        (q_ref, kv_ref, res_ref, wo_ref, bo_ref, wq_ref, bq_ref,
         o_ref, qo_ref) = refs
    else:
        (q_ref, kv_ref, res_ref, wo_ref, bo_ref, o_ref) = refs

    q = q_ref[0]                                  # (tq, Wq)  bf16 slab
    kv = kv_ref[0]                                # (Nk, Wkv) bf16 slab
    parts = []
    for h in range(num_heads):
        qh = q[:, q_off + h * head_dim:q_off + (h + 1) * head_dim].astype(jnp.bfloat16)
        kh = kv[:, k_off + h * head_dim:k_off + (h + 1) * head_dim].astype(jnp.bfloat16)
        vh = kv[:, v_off + h * head_dim:v_off + (h + 1) * head_dim].astype(jnp.bfloat16)
        s = jax.lax.dot_general(qh, kh, (((1,), (1,)), ((), ())),
                                preferred_element_type=jnp.float32) * scale
        s = s - jnp.max(s, axis=-1, keepdims=True)
        p = jnp.exp(s)
        denom = jnp.sum(p, axis=-1, keepdims=True)
        acc = jnp.dot(p.astype(jnp.bfloat16), vh, preferred_element_type=jnp.float32)
        parts.append(acc / denom)                 # exact normalization
    attn = jnp.concatenate(parts, axis=-1)        # (tq, C)
    y = jnp.dot(attn.astype(jnp.bfloat16), wo_ref[...].astype(jnp.bfloat16),
                preferred_element_type=jnp.float32)
    x_new = y + bo_ref[...].astype(jnp.float32) + res_ref[0].astype(jnp.float32)
    o_ref[0] = x_new.astype(o_ref.dtype)

    if fuse_q:
        # norm2 (affine folded into wq/bq) + cross-attention Q projection,
        # reusing the live x_new tile (saves one HBM pass over x).
        mean = jnp.mean(x_new, axis=-1, keepdims=True)
        var = jnp.mean(jnp.square(x_new - mean), axis=-1, keepdims=True)
        hln = (x_new - mean) * jax.lax.rsqrt(var + eps)
        qn = jnp.dot(hln.astype(jnp.bfloat16), wq_ref[...].astype(jnp.bfloat16),
                     preferred_element_type=jnp.float32)
        qn = qn + bq_ref[...].astype(jnp.float32)
        qo_ref[0] = qn.astype(qo_ref.dtype)


def _attn_flash_kernel(q_ref, kv_ref, res_ref, wo_ref, bo_ref, o_ref,
                       m_ref, l_ref, acc_ref, *, num_heads, head_dim, scale,
                       q_off, k_off, v_off):
    # Flash-style attention over Lk tiles (online softmax), all heads per grid
    # step, fused with the output projection and the residual add.
    ki = pl.program_id(2)

    @pl.when(ki == 0)
    def _init():
        m_ref[...] = jnp.full_like(m_ref, -jnp.inf)
        l_ref[...] = jnp.zeros_like(l_ref)
        acc_ref[...] = jnp.zeros_like(acc_ref)

    q = q_ref[0]                                  # (tq, Wq) bf16 slab
    kv = kv_ref[0]                                # (tk, Wkv) bf16 slab
    for h in range(num_heads):
        qh = q[:, q_off + h * head_dim:q_off + (h + 1) * head_dim].astype(jnp.bfloat16)
        kh = kv[:, k_off + h * head_dim:k_off + (h + 1) * head_dim].astype(jnp.bfloat16)
        vh = kv[:, v_off + h * head_dim:v_off + (h + 1) * head_dim].astype(jnp.bfloat16)
        s = jax.lax.dot_general(qh, kh, (((1,), (1,)), ((), ())),
                                preferred_element_type=jnp.float32) * scale
        m_prev = m_ref[h]                                             # (tq, 1)
        m_new = jnp.maximum(m_prev, jnp.max(s, axis=-1, keepdims=True))
        alpha = jnp.exp(m_prev - m_new)
        p = jnp.exp(s - m_new)
        l_ref[h] = alpha * l_ref[h] + jnp.sum(p, axis=-1, keepdims=True)
        acc_ref[h] = alpha * acc_ref[h] + jnp.dot(
            p.astype(jnp.bfloat16), vh, preferred_element_type=jnp.float32)
        m_ref[h] = m_new

    @pl.when(ki == pl.num_programs(2) - 1)
    def _finalize():
        parts = [acc_ref[h] / l_ref[h] for h in range(num_heads)]
        attn = jnp.concatenate(parts, axis=-1)        # (tq, C)
        y = jnp.dot(attn.astype(jnp.bfloat16), wo_ref[...].astype(jnp.bfloat16),
                    preferred_element_type=jnp.float32)
        y = y + bo_ref[...].astype(jnp.float32) + res_ref[0].astype(jnp.float32)
        o_ref[0] = y.astype(o_ref.dtype)


def _attn_q_tile(nq, nk):
    # Bound tq so one (tq, Nk) f32 score slab stays <= 4 MiB.
    budget = 4 * 1024 * 1024
    cap = max(16, min(1024, budget // max(4 * nk, 1)))
    return _pick_tile(nq, max_tile=cap)


def attention_block(q_slab, kv_slab, res, wo, bo, *, num_heads, q_off, k_off,
                    v_off, q_proj=None, single_pass_max_nk=1024, flash_tk=None,
                    eps=_EPS):
    """MHA + out-projection + residual (optionally fused next-Q projection).

    q_slab:  (B, Nq, Wq)  slab containing Q at column offset q_off.
    kv_slab: (B, Nk, Wkv) slab containing K/V at offsets k_off / v_off.
    Returns (x_new, q_cross_or_None)."""
    B, Nq, Wq = q_slab.shape
    _, Nk, Wkv = kv_slab.shape
    C = wo.shape[0]
    hd = C // num_heads
    scale = float(hd) ** -0.5
    fuse_q = q_proj is not None

    if Nk <= single_pass_max_nk:
        # ---- one-shot softmax path (no Lk grid axis, no scratch) ----
        tq = _attn_q_tile(Nq, Nk)
        grid = (B, Nq // tq)
        in_specs = [pl.BlockSpec((1, tq, Wq), lambda b, qi: (b, qi, 0)),
                    pl.BlockSpec((1, Nk, Wkv), lambda b, qi: (b, 0, 0)),
                    pl.BlockSpec((1, tq, C), lambda b, qi: (b, qi, 0)),
                    pl.BlockSpec((C, C), lambda b, qi: (0, 0)),
                    pl.BlockSpec((1, C), lambda b, qi: (0, 0))]
        args = [q_slab, kv_slab, res, wo, bo]
        out_shape = [jax.ShapeDtypeStruct((B, Nq, C), res.dtype)]
        out_specs = [pl.BlockSpec((1, tq, C), lambda b, qi: (b, qi, 0))]
        if fuse_q:
            wq, bq = q_proj
            in_specs += [pl.BlockSpec((C, C), lambda b, qi: (0, 0)),
                         pl.BlockSpec((1, C), lambda b, qi: (0, 0))]
            args += [wq, bq]
            out_shape.append(jax.ShapeDtypeStruct((B, Nq, C), jnp.bfloat16))
            out_specs.append(pl.BlockSpec((1, tq, C), lambda b, qi: (b, qi, 0)))
        outs = pl.pallas_call(
            functools.partial(_attn_single_kernel, num_heads=num_heads,
                              head_dim=hd, scale=scale, q_off=q_off,
                              k_off=k_off, v_off=v_off, fuse_q=fuse_q, eps=eps),
            out_shape=tuple(out_shape) if fuse_q else out_shape[0],
            grid=grid,
            in_specs=in_specs,
            out_specs=tuple(out_specs) if fuse_q else out_specs[0],
            compiler_params=_compiler_params(("parallel", "parallel")),
        )(*args)
        return (outs[0], outs[1]) if fuse_q else (outs, None)

    # ---- flash path for large Nk (online softmax over "arbitrary" Lk axis) ----
    tq = _pick_tile(Nq, max_tile=512)
    tk = flash_tk if flash_tk is not None else _pick_tile(Nk, max_tile=_TK_MAX)
    grid = (B, Nq // tq, Nk // tk)
    x_new = pl.pallas_call(
        functools.partial(_attn_flash_kernel, num_heads=num_heads, head_dim=hd,
                          scale=scale, q_off=q_off, k_off=k_off, v_off=v_off),
        out_shape=jax.ShapeDtypeStruct((B, Nq, C), res.dtype),
        grid=grid,
        in_specs=[pl.BlockSpec((1, tq, Wq), lambda b, qi, ki: (b, qi, 0)),
                  pl.BlockSpec((1, tk, Wkv), lambda b, qi, ki: (b, ki, 0)),
                  pl.BlockSpec((1, tq, C), lambda b, qi, ki: (b, qi, 0)),
                  pl.BlockSpec((C, C), lambda b, qi, ki: (0, 0)),
                  pl.BlockSpec((1, C), lambda b, qi, ki: (0, 0))],
        out_specs=pl.BlockSpec((1, tq, C), lambda b, qi, ki: (b, qi, 0)),
        scratch_shapes=[pltpu.VMEM((num_heads, tq, 1), jnp.float32),   # m
                        pltpu.VMEM((num_heads, tq, 1), jnp.float32),   # l
                        pltpu.VMEM((num_heads, tq, hd), jnp.float32)], # acc
        compiler_params=_compiler_params(("parallel", "parallel", "arbitrary")),
    )(q_slab, kv_slab, res, wo, bo)
    if fuse_q:
        wq, bq = q_proj
        M = B * Nq
        q_cross = ln_linear(x_new.reshape(M, C), wq, bq, eps=eps,
                            out_dtype=jnp.bfloat16).reshape(B, Nq, C)
        return x_new, q_cross
    return x_new, None


# ----------------------------- parameter prep -------------------------------

def prepare_params(raw_params):
    """One-time prep: fold norm2 affine into the cross-Q projection, cast
    weight matrices to bf16 (native MXU dtype), pre-reshape biases to (1, D)."""
    prepared = []
    for p in raw_params:
        wq = (p["norm2_g"][:, None] * p["ca_q_w"]).astype(jnp.bfloat16)
        bq = (p["ca_q_b"] + p["norm2_b"] @ p["ca_q_w"]).astype(jnp.float32)
        prepared.append(dict(
            sa_qkv_w=p["sa_qkv_w"].astype(jnp.bfloat16),
            sa_qkv_b=p["sa_qkv_b"].reshape(1, -1).astype(jnp.float32),
            sa_out_w=p["sa_out_w"].astype(jnp.bfloat16),
            sa_out_b=p["sa_out_b"].reshape(1, -1).astype(jnp.float32),
            ca_q_w=wq, ca_q_b=bq.reshape(1, -1),
            ca_kv_w1=p["ca_kv_w1"].astype(jnp.bfloat16),
            ca_kv_w2=p["ca_kv_w2"].astype(jnp.bfloat16),
            ca_kv_b=p["ca_kv_b"].reshape(1, -1).astype(jnp.float32),
            ca_out_w=p["ca_out_w"].astype(jnp.bfloat16),
            ca_out_b=p["ca_out_b"].reshape(1, -1).astype(jnp.float32),
            mlp_w1=p["mlp_w1"].astype(jnp.bfloat16),
            mlp_b1=p["mlp_b1"].reshape(1, -1).astype(jnp.float32),
            mlp_w2=p["mlp_w2"].astype(jnp.bfloat16),
            mlp_b2=p["mlp_b2"].reshape(1, -1).astype(jnp.float32),
        ))
    return prepared


# -------------------- ModulatedTransformerCrossBlock_woT --------------------

def cross_block(p, x, ctx1, ctx2, *, num_heads, single_pass_max_nk=1024,
                flash_tk=None):
    """x: (B, N, C) cond tokens (f32); ctx1: (B, L, 2048); ctx2: (B, L, 1024)."""
    B, N, C = x.shape
    M = B * N

    # ---- norm1 + fused QKV projection -> single lane-dense (M, 3C) bf16 slab
    qkv = ln_linear(x.reshape(M, C), p["sa_qkv_w"], p["sa_qkv_b"],
                    out_dtype=jnp.bfloat16).reshape(B, N, 3 * C)

    # ---- self attention + out-proj + residual (+ fused norm2/Q-proj) ----
    x, q_cross = attention_block(
        qkv, qkv, x, p["sa_out_w"], p["sa_out_b"], num_heads=num_heads,
        q_off=0, k_off=C, v_off=2 * C, q_proj=(p["ca_q_w"], p["ca_q_b"]),
        single_pass_max_nk=single_pass_max_nk, flash_tk=flash_tk)

    # ---- cross K/V from the two UN-concatenated context streams ----
    Lc = ctx1.shape[1]
    M2 = B * Lc
    kv = kv_proj(ctx1.reshape(M2, -1), ctx2.reshape(M2, -1),
                 p["ca_kv_w1"], p["ca_kv_w2"], p["ca_kv_b"]).reshape(B, Lc, 2 * C)

    # ---- cross attention + out-proj + residual ----
    x, _ = attention_block(
        q_cross, kv, x, p["ca_out_w"], p["ca_out_b"], num_heads=num_heads,
        q_off=0, k_off=0, v_off=C, q_proj=None,
        single_pass_max_nk=single_pass_max_nk, flash_tk=flash_tk)

    # ---- norm3 + FFN (GELU tanh) + residual, fully fused ----
    x = ln_ffn_residual(x.reshape(M, C), p["mlp_w1"], p["mlp_b1"],
                        p["mlp_w2"], p["mlp_b2"]).reshape(B, N, C)
    return x


# --------------------------- ModulatedMultiViewCond -------------------------

def modulated_multiview_cond(params, cond_tokens, aggregated_tokens_list,
                             image_cond, *, num_heads, single_pass_max_nk=1024,
                             flash_tk=None):
    b = aggregated_tokens_list[0].shape[0]
    patch_start_idx = 5
    cond = jnp.tile(cond_tokens, (b, 1, 1))                 # .repeat(b, 1, 1)
    ctx2 = image_cond.reshape(b, -1, 1024)
    for idx, layer_idx in enumerate([4, 11, 17, 23]):
        x = aggregated_tokens_list[layer_idx][:, :, patch_start_idx:]
        ctx1 = x.reshape(b, -1, 2048)
        # ctx concat is eliminated: ca_kv weight is split into 2048/1024 rows.
        cond = cross_block(params[idx], cond, ctx1, ctx2, num_heads=num_heads,
                           single_pass_max_nk=single_pass_max_nk,
                           flash_tk=flash_tk)
    return cond


# --------------------------- pure-JAX f32 reference --------------------------

def reference_forward(raw_params, cond_tokens, aggregated_tokens_list,
                      image_cond, num_heads):
    def ln(x, g=None, b=None, eps=_EPS):
        m = jnp.mean(x, -1, keepdims=True)
        v = jnp.mean(jnp.square(x - m), -1, keepdims=True)
        h = (x - m) / jnp.sqrt(v + eps)
        return h * g + b if g is not None else h

    def mha(q, k, v):
        B, Nq, C = q.shape
        hd = C // num_heads
        q = q.reshape(B, Nq, num_heads, hd).transpose(0, 2, 1, 3)
        k = k.reshape(B, -1, num_heads, hd).transpose(0, 2, 1, 3)
        v = v.reshape(B, -1, num_heads, hd).transpose(0, 2, 1, 3)
        s = jnp.einsum("bhqd,bhkd->bhqk", q, k) * (hd ** -0.5)
        o = jnp.einsum("bhqk,bhkd->bhqd", jax.nn.softmax(s, axis=-1), v)
        return o.transpose(0, 2, 1, 3).reshape(B, Nq, C)

    b = aggregated_tokens_list[0].shape[0]
    cond = jnp.tile(cond_tokens, (b, 1, 1))
    ctx2 = image_cond.reshape(b, -1, 1024)
    for idx, li in enumerate([4, 11, 17, 23]):
        p = raw_params[idx]
        x = aggregated_tokens_list[li][:, :, 5:]
        ctx = jnp.concatenate([x.reshape(b, -1, 2048), ctx2], axis=-1)
        h = ln(cond)
        qkv = h @ p["sa_qkv_w"] + p["sa_qkv_b"]
        q, k, v = jnp.split(qkv, 3, axis=-1)
        cond = cond + (mha(q, k, v) @ p["sa_out_w"] + p["sa_out_b"])
        h = ln(cond, p["norm2_g"], p["norm2_b"])
        q = h @ p["ca_q_w"] + p["ca_q_b"]
        kv = ctx @ jnp.concatenate([p["ca_kv_w1"], p["ca_kv_w2"]], 0) + p["ca_kv_b"]
        k, v = jnp.split(kv, 2, axis=-1)
        cond = cond + (mha(q, k, v) @ p["ca_out_w"] + p["ca_out_b"])
        h = ln(cond)
        h = jax.nn.gelu(h @ p["mlp_w1"] + p["mlp_b1"], approximate=True)
        cond = cond + (h @ p["mlp_w2"] + p["mlp_b2"])
    return cond


# ----------------------------------- main -----------------------------------

if __name__ == "__main__":
    B = 2            # batch
    C = 64           # channels
    H = 4            # num_heads (head_dim = 16)
    MLP = 4          # mlp_ratio
    N_TOK = 64       # num_init_tokens (small; default in the module is 4096)
    V = 1            # views in aggregated tokens
    S = 9            # tokens per view; first 5 are skipped -> 4 kept
    L = V * (S - 5)  # context sequence length = 4
    N_LAYERS = 24    # list must reach index 23

    key = jax.random.PRNGKey(0)
    keys = iter(jax.random.split(key, 256))

    def nrm(shape, std=0.02):
        return jax.random.normal(next(keys), shape, jnp.float32) * std

    # Deterministic synthetic parameters for the 4 cross blocks (f32 "master"
    # copy used by the reference; prepare_params folds/casts them once).
    raw_params = []
    for _ in range(4):
        raw_params.append(dict(
            norm2_g=jnp.ones((C,), jnp.float32),
            norm2_b=jnp.zeros((C,), jnp.float32),
            sa_qkv_w=nrm((C, 3 * C)),     sa_qkv_b=jnp.zeros((3 * C,), jnp.float32),
            sa_out_w=nrm((C, C)),         sa_out_b=jnp.zeros((C,), jnp.float32),
            ca_q_w=nrm((C, C)),           ca_q_b=jnp.zeros((C,), jnp.float32),
            ca_kv_w1=nrm((2048, 2 * C)),  ca_kv_w2=nrm((1024, 2 * C)),
            ca_kv_b=jnp.zeros((2 * C,), jnp.float32),
            ca_out_w=nrm((C, C)),         ca_out_b=jnp.zeros((C,), jnp.float32),
            mlp_w1=nrm((C, MLP * C)),     mlp_b1=jnp.zeros((MLP * C,), jnp.float32),
            mlp_w2=nrm((MLP * C, C)),     mlp_b2=jnp.zeros((C,), jnp.float32),
        ))

    # nn.Parameter(torch.randn(1, num_init_tokens, channels)), init std=1e-6
    multiview_cond_tokens = nrm((1, N_TOK, C), std=1e-6)

    # Synthetic inputs: 24 aggregated token tensors (B, V, S, 2048) + image_cond.
    aggregated_tokens_list = [nrm((B, V, S, 2048), std=0.5) for _ in range(N_LAYERS)]
    image_cond = nrm((B, L, 1024), std=0.5)

    params = prepare_params(raw_params)

    # Default path: one-shot-softmax attention with the fused cross-Q projection.
    fwd = jax.jit(functools.partial(modulated_multiview_cond, num_heads=H))
    out = jax.block_until_ready(
        fwd(params, multiview_cond_tokens, aggregated_tokens_list, image_cond))

    # Second run forcing the flash (online-softmax) path for the self-attention
    # (threshold 32 < Nk=64, tk=32 -> 2 online-softmax steps) so the large-N
    # kernel is also exercised and checked.
    fwd_flash = jax.jit(functools.partial(modulated_multiview_cond, num_heads=H,
                                          single_pass_max_nk=32, flash_tk=32))
    out_flash = jax.block_until_ready(
        fwd_flash(params, multiview_cond_tokens, aggregated_tokens_list, image_cond))

    ref = reference_forward(raw_params, multiview_cond_tokens,
                            aggregated_tokens_list, image_cond, H)

    def max_rel_err(a, b):
        a = jnp.asarray(a, jnp.float32)
        b = jnp.asarray(b, jnp.float32)
        return float(jnp.max(jnp.abs(a - b)) / (jnp.max(jnp.abs(b)) + 1e-6))

    assert out.shape == (B, N_TOK, C), out.shape
    assert out_flash.shape == (B, N_TOK, C), out_flash.shape
    assert bool(jnp.all(jnp.isfinite(out)))
    assert bool(jnp.all(jnp.isfinite(out_flash)))
    # bf16-MXU kernels vs. the f32 reference (loose), and path-vs-path (tight).
    assert max_rel_err(out, ref) < 5e-2, max_rel_err(out, ref)
    assert max_rel_err(out_flash, ref) < 5e-2, max_rel_err(out_flash, ref)
    assert max_rel_err(out, out_flash) < 2e-2, max_rel_err(out, out_flash)
    print("KERNEL_OK")
</pallas_src>

<mosaic_0001>
module attributes {stable_mosaic.version = 11 : i64} {
  func.func @_attn_single_kernel(%arg0: i32, %arg1: i32, %arg2: memref<1x64x192xbf16, #tpu.memory_space<vmem>>, %arg3: memref<1x64x192xbf16, #tpu.memory_space<vmem>>, %arg4: memref<1x64x64xf32, #tpu.memory_space<vmem>>, %arg5: memref<64x64xbf16, #tpu.memory_space<vmem>>, %arg6: memref<1x64xf32, #tpu.memory_space<vmem>>, %arg7: memref<64x64xbf16, #tpu.memory_space<vmem>>, %arg8: memref<1x64xf32, #tpu.memory_space<vmem>>, %arg9: memref<1x64x64xf32, #tpu.memory_space<vmem>>, %arg10: memref<1x64x64xbf16, #tpu.memory_space<vmem>>) attributes {dimension_semantics = [#tpu.dimension_semantics<parallel>, #tpu.dimension_semantics<parallel>], iteration_bounds = array<i64: 2, 1>, scalar_prefetch = 0 : i64, scratch_operands = 0 : i64, tpu.core_type = #tpu.core_type<tc>, window_params = [{transform_indices = @transform_0, window_bounds = array<i64: 1, 64, 192>}, {transform_indices = @transform_1, window_bounds = array<i64: 1, 64, 192>}, {transform_indices = @transform_2, window_bounds = array<i64: 1, 64, 64>}, {pipeline_mode = #tpu.pipeline_mode<synchronous>, transform_indices = @transform_3, window_bounds = array<i64: 64, 64>}, {pipeline_mode = #tpu.pipeline_mode<synchronous>, transform_indices = @transform_4, window_bounds = array<i64: 1, 64>}, {pipeline_mode = #tpu.pipeline_mode<synchronous>, transform_indices = @transform_5, window_bounds = array<i64: 64, 64>}, {pipeline_mode = #tpu.pipeline_mode<synchronous>, transform_indices = @transform_6, window_bounds = array<i64: 1, 64>}, {transform_indices = @transform_7, window_bounds = array<i64: 1, 64, 64>}, {transform_indices = @transform_8, window_bounds = array<i64: 1, 64, 64>}]} {
    %c0 = arith.constant 0 : index
    %c0_0 = arith.constant 0 : index
    %c0_1 = arith.constant 0 : index
    %0 = vector.load %arg2[%c0, %c0_0, %c0_1] : memref<1x64x192xbf16, #tpu.memory_space<vmem>>, vector<1x64x192xbf16>
    %1 = vector.shape_cast %0 : vector<1x64x192xbf16> to vector<64x192xbf16>
    %c0_2 = arith.constant 0 : index
    %c0_3 = arith.constant 0 : index
    %c0_4 = arith.constant 0 : index
    %2 = vector.load %arg3[%c0_2, %c0_3, %c0_4] : memref<1x64x192xbf16, #tpu.memory_space<vmem>>, vector<1x64x192xbf16>
    %3 = vector.shape_cast %2 : vector<1x64x192xbf16> to vector<64x192xbf16>
    %4 = vector.extract_strided_slice %1 {offsets = [0, 0], sizes = [64, 16], strides = [1, 1]} : vector<64x192xbf16> to vector<64x16xbf16>
    %5 = vector.extract_strided_slice %3 {offsets = [0, 64], sizes = [64, 16], strides = [1, 1]} : vector<64x192xbf16> to vector<64x16xbf16>
    %6 = vector.extract_strided_slice %3 {offsets = [0, 128], sizes = [64, 16], strides = [1, 1]} : vector<64x192xbf16> to vector<64x16xbf16>
    %cst = arith.constant dense<0.000000e+00> : vector<64x64xf32>
    %7 = tpu.matmul %4, %5, %cst {dimension_numbers = #tpu.dot_dimension_numbers<[1], [1], [0], [0], [0, 0, 1, 0], [], []>} : vector<64x16xbf16>, vector<64x16xbf16>, vector<64x64xf32> -> vector<64x64xf32>
    %cst_5 = arith.constant 2.500000e-01 : f32
    %8 = vector.broadcast %cst_5 : f32 to vector<64x64xf32>
    %9 = arith.mulf %7, %8 : vector<64x64xf32>
    %cst_6 = arith.constant dense<0xFF800000> : vector<64xf32>
    %10 = vector.multi_reduction <maximumf>, %9, %cst_6 [1] : vector<64x64xf32> to vector<64xf32>
    %11 = vector.shape_cast %10 : vector<64xf32> to vector<64x1xf32>
    %12 = vector.broadcast %11 : vector<64x1xf32> to vector<64x64xf32>
    %13 = arith.subf %9, %12 : vector<64x64xf32>
    %14 = math.exp %13 : vector<64x64xf32>
    %cst_7 = arith.constant dense<0.000000e+00> : vector<64xf32>
    %15 = vector.multi_reduction <add>, %14, %cst_7 [1] : vector<64x64xf32> to vector<64xf32>
    %16 = vector.shape_cast %15 : vector<64xf32> to vector<64x1xf32>
    %17 = arith.truncf %14 : vector<64x64xf32> to vector<64x64xbf16>
    %cst_8 = arith.constant dense<0.000000e+00> : vector<64x16xf32>
    %18 = tpu.matmul %17, %6, %cst_8 {dimension_numbers = #tpu.dot_dimension_numbers<[1], [0], [0], [1], [0, 0, 1, 1], [], []>} : vector<64x64xbf16>, vector<64x16xbf16>, vector<64x16xf32> -> vector<64x16xf32>
    %19 = vector.broadcast %16 : vector<64x1xf32> to vector<64x16xf32>
    %20 = arith.divf %18, %19 : vector<64x16xf32>
    %21 = vector.extract_strided_slice %1 {offsets = [0, 16], sizes = [64, 16], strides = [1, 1]} : vector<64x192xbf16> to vector<64x16xbf16>
    %22 = vector.extract_strided_slice %3 {offsets = [0, 80], sizes = [64, 16], strides = [1, 1]} : vector<64x192xbf16> to vector<64x16xbf16>
    %23 = vector.extract_strided_slice %3 {offsets = [0, 144], sizes = [64, 16], strides = [1, 1]} : vector<64x192xbf16> to vector<64x16xbf16>
    %cst_9 = arith.constant dense<0.000000e+00> : vector<64x64xf32>
    %24 = tpu.matmul %21, %22, %cst_9 {dimension_numbers = #tpu.dot_dimension_numbers<[1], [1], [0], [0], [0, 0, 1, 0], [], []>} : vector<64x16xbf16>, vector<64x16xbf16>, vector<64x64xf32> -> vector<64x64xf32>
    %cst_10 = arith.constant 2.500000e-01 : f32
    %25 = vector.broadcast %cst_10 : f32 to vector<64x64xf32>
    %26 = arith.mulf %24, %25 : vector<64x64xf32>
    %cst_11 = arith.constant dense<0xFF800000> : vector<64xf32>
    %27 = vector.multi_reduction <maximumf>, %26, %cst_11 [1] : vector<64x64xf32> to vector<64xf32>
    %28 = vector.shape_cast %27 : vector<64xf32> to vector<64x1xf32>
    %29 = vector.broadcast %28 : vector<64x1xf32> to vector<64x64xf32>
    %30 = arith.subf %26, %29 : vector<64x64xf32>
    %31 = math.exp %30 : vector<64x64xf32>
    %cst_12 = arith.constant dense<0.000000e+00> : vector<64xf32>
    %32 = vector.multi_reduction <add>, %31, %cst_12 [1] : vector<64x64xf32> to vector<64xf32>
    %33 = vector.shape_cast %32 : vector<64xf32> to vector<64x1xf32>
    %34 = arith.truncf %31 : vector<64x64xf32> to vector<64x64xbf16>
    %cst_13 = arith.constant dense<0.000000e+00> : vector<64x16xf32>
    %35 = tpu.matmul %34, %23, %cst_13 {dimension_numbers = #tpu.dot_dimension_numbers<[1], [0], [0], [1], [0, 0, 1, 1], [], []>} : vector<64x64xbf16>, vector<64x16xbf16>, vector<64x16xf32> -> vector<64x16xf32>
    %36 = vector.broadcast %33 : vector<64x1xf32> to vector<64x16xf32>
    %37 = arith.divf %35, %36 : vector<64x16xf32>
    %38 = vector.extract_strided_slice %1 {offsets = [0, 32], sizes = [64, 16], strides = [1, 1]} : vector<64x192xbf16> to vector<64x16xbf16>
    %39 = vector.extract_strided_slice %3 {offsets = [0, 96], sizes = [64, 16], strides = [1, 1]} : vector<64x192xbf16> to vector<64x16xbf16>
    %40 = vector.extract_strided_slice %3 {offsets = [0, 160], sizes = [64, 16], strides = [1, 1]} : vector<64x192xbf16> to vector<64x16xbf16>
    %cst_14 = arith.constant dense<0.000000e+00> : vector<64x64xf32>
    %41 = tpu.matmul %38, %39, %cst_14 {dimension_numbers = #tpu.dot_dimension_numbers<[1], [1], [0], [0], [0, 0, 1, 0], [], []>} : vector<64x16xbf16>, vector<64x16xbf16>, vector<64x64xf32> -> vector<64x64xf32>
    %cst_15 = arith.constant 2.500000e-01 : f32
    %42 = vector.broadcast %cst_15 : f32 to vector<64x64xf32>
    %43 = arith.mulf %41, %42 : vector<64x64xf32>
    %cst_16 = arith.constant dense<0xFF800000> : vector<64xf32>
    %44 = vector.multi_reduction <maximumf>, %43, %cst_16 [1] : vector<64x64xf32> to vector<64xf32>
    %45 = vector.shape_cast %44 : vector<64xf32> to vector<64x1xf32>
    %46 = vector.broadcast %45 : vector<64x1xf32> to vector<64x64xf32>
    %47 = arith.subf %43, %46 : vector<64x64xf32>
    %48 = math.exp %47 : vector<64x64xf32>
    %cst_17 = arith.constant dense<0.000000e+00> : vector<64xf32>
    %49 = vector.multi_reduction <add>, %48, %cst_17 [1] : vector<64x64xf32> to vector<64xf32>
    %50 = vector.shape_cast %49 : vector<64xf32> to vector<64x1xf32>
    %51 = arith.truncf %48 : vector<64x64xf32> to vector<64x64xbf16>
    %cst_18 = arith.constant dense<0.000000e+00> : vector<64x16xf32>
    %52 = tpu.matmul %51, %40, %cst_18 {dimension_numbers = #tpu.dot_dimension_numbers<[1], [0], [0], [1], [0, 0, 1, 1], [], []>} : vector<64x64xbf16>, vector<64x16xbf16>, vector<64x16xf32> -> vector<64x16xf32>
    %53 = vector.broadcast %50 : vector<64x1xf32> to vector<64x16xf32>
    %54 = arith.divf %52, %53 : vector<64x16xf32>
    %55 = vector.extract_strided_slice %1 {offsets = [0, 48], sizes = [64, 16], strides = [1, 1]} : vector<64x192xbf16> to vector<64x16xbf16>
    %56 = vector.extract_strided_slice %3 {offsets = [0, 112], sizes = [64, 16], strides = [1, 1]} : vector<64x192xbf16> to vector<64x16xbf16>
    %57 = vector.extract_strided_slice %3 {offsets = [0, 176], sizes = [64, 16], strides = [1, 1]} : vector<64x192xbf16> to vector<64x16xbf16>
    %cst_19 = arith.constant dense<0.000000e+00> : vector<64x64xf32>
    %58 = tpu.matmul %55, %56, %cst_19 {dimension_numbers = #tpu.dot_dimension_numbers<[1], [1], [0], [0], [0, 0, 1, 0], [], []>} : vector<64x16xbf16>, vector<64x16xbf16>, vector<64x64xf32> -> vector<64x64xf32>
    %cst_20 = arith.constant 2.500000e-01 : f32
    %59 = vector.broadcast %cst_20 : f32 to vector<64x64xf32>
    %60 = arith.mulf %58, %59 : vector<64x64xf32>
    %cst_21 = arith.constant dense<0xFF800000> : vector<64xf32>
    %61 = vector.multi_reduction <maximumf>, %60, %cst_21 [1] : vector<64x64xf32> to vector<64xf32>
    %62 = vector.shape_cast %61 : vector<64xf32> to vector<64x1xf32>
    %63 = vector.broadcast %62 : vector<64x1xf32> to vector<64x64xf32>
    %64 = arith.subf %60, %63 : vector<64x64xf32>
    %65 = math.exp %64 : vector<64x64xf32>
    %cst_22 = arith.constant dense<0.000000e+00> : vector<64xf32>
    %66 = vector.multi_reduction <add>, %65, %cst_22 [1] : vector<64x64xf32> to vector<64xf32>
    %67 = vector.shape_cast %66 : vector<64xf32> to vector<64x1xf32>
    %68 = arith.truncf %65 : vector<64x64xf32> to vector<64x64xbf16>
    %cst_23 = arith.constant dense<0.000000e+00> : vector<64x16xf32>
    %69 = tpu.matmul %68, %57, %cst_23 {dimension_numbers = #tpu.dot_dimension_numbers<[1], [0], [0], [1], [0, 0, 1, 1], [], []>} : vector<64x64xbf16>, vector<64x16xbf16>, vector<64x16xf32> -> vector<64x16xf32>
    %70 = vector.broadcast %67 : vector<64x1xf32> to vector<64x16xf32>
    %71 = arith.divf %69, %70 : vector<64x16xf32>
    %72 = tpu.concatenate %20, %37, %54, %71 in 1 : vector<64x16xf32>, vector<64x16xf32>, vector<64x16xf32>, vector<64x16xf32> -> vector<64x64xf32>
    %73 = arith.truncf %72 : vector<64x64xf32> to vector<64x64xbf16>
    %c0_24 = arith.constant 0 : index
    %c0_25 = arith.constant 0 : index
    %74 = vector.load %arg5[%c0_24, %c0_25] : memref<64x64xbf16, #tpu.memory_space<vmem>>, vector<64x64xbf16>
    %cst_26 = arith.constant dense<0.000000e+00> : vector<64x64xf32>
    %75 = tpu.matmul %73, %74, %cst_26 {dimension_numbers = #tpu.dot_dimension_numbers<[1], [0], [0], [1], [0, 0, 1, 1], [], []>} : vector<64x64xbf16>, vector<64x64xbf16>, vector<64x64xf32> -> vector<64x64xf32>
    %c0_27 = arith.constant 0 : index
    %c0_28 = arith.constant 0 : index
    %76 = vector.load %arg6[%c0_27, %c0_28] : memref<1x64xf32, #tpu.memory_space<vmem>>, vector<1x64xf32>
    %77 = vector.broadcast %76 : vector<1x64xf32> to vector<64x64xf32>
    %78 = arith.addf %75, %77 : vector<64x64xf32>
    %c0_29 = arith.constant 0 : index
    %c0_30 = arith.constant 0 : index
    %c0_31 = arith.constant 0 : index
    %79 = vector.load %arg4[%c0_29, %c0_30, %c0_31] : memref<1x64x64xf32, #tpu.memory_space<vmem>>, vector<1x64x64xf32>
    %80 = vector.shape_cast %79 : vector<1x64x64xf32> to vector<64x64xf32>
    %81 = arith.addf %78, %80 : vector<64x64xf32>
    %c0_32 = arith.constant 0 : index
    %c0_33 = arith.constant 0 : index
    %c0_34 = arith.constant 0 : index
    %82 = vector.load %arg9[%c0_32, %c0_33, %c0_34] : memref<1x64x64xf32, #tpu.memory_space<vmem>>, vector<1x64x64xf32>
    %83 = vector.shape_cast %82 : vector<1x64x64xf32> to vector<64x64xf32>
    %84 = vector.shape_cast %81 : vector<64x64xf32> to vector<1x64x64xf32>
    tpu.vector_store %arg9[%c0_32, %c0_33, %c0_34], %84 {strides = array<i32>} : memref<1x64x64xf32, #tpu.memory_space<vmem>>, vector<1x64x64xf32>,
    %cst_35 = arith.constant dense<0.000000e+00> : vector<64xf32>
    %85 = vector.multi_reduction <add>, %81, %cst_35 [1] : vector<64x64xf32> to vector<64xf32>
    %86 = vector.shape_cast %85 : vector<64xf32> to vector<64x1xf32>
    %cst_36 = arith.constant 6.400000e+01 : f32
    %87 = vector.broadcast %cst_36 : f32 to vector<64x1xf32>
    %88 = arith.divf %86, %87 : vector<64x1xf32>
    %89 = vector.broadcast %88 : vector<64x1xf32> to vector<64x64xf32>
    %90 = arith.subf %81, %89 : vector<64x64xf32>
    %91 = arith.mulf %90, %90 : vector<64x64xf32>
    %cst_37 = arith.constant dense<0.000000e+00> : vector<64xf32>
    %92 = vector.multi_reduction <add>, %91, %cst_37 [1] : vector<64x64xf32> to vector<64xf32>
    %93 = vector.shape_cast %92 : vector<64xf32> to vector<64x1xf32>
    %cst_38 = arith.constant 6.400000e+01 : f32
    %94 = vector.broadcast %cst_38 : f32 to vector<64x1xf32>
    %95 = arith.divf %93, %94 : vector<64x1xf32>
    %96 = vector.broadcast %88 : vector<64x1xf32> to vector<64x64xf32>
    %97 = arith.subf %81, %96 : vector<64x64xf32>
    %cst_39 = arith.constant 9.99999997E-7 : f32
    %98 = vector.broadcast %cst_39 : f32 to vector<64x1xf32>
    %99 = arith.addf %95, %98 : vector<64x1xf32>
    %100 = math.rsqrt %99 : vector<64x1xf32>
    %101 = vector.broadcast %100 : vector<64x1xf32> to vector<64x64xf32>
    %102 = arith.mulf %97, %101 : vector<64x64xf32>
    %103 = arith.truncf %102 : vector<64x64xf32> to vector<64x64xbf16>
    %c0_40 = arith.constant 0 : index
    %c0_41 = arith.constant 0 : index
    %104 = vector.load %arg7[%c0_40, %c0_41] : memref<64x64xbf16, #tpu.memory_space<vmem>>, vector<64x64xbf16>
    %cst_42 = arith.constant dense<0.000000e+00> : vector<64x64xf32>
    %105 = tpu.matmul %103, %104, %cst_42 {dimension_numbers = #tpu.dot_dimension_numbers<[1], [0], [0], [1], [0, 0, 1, 1], [], []>} : vector<64x64xbf16>, vector<64x64xbf16>, vector<64x64xf32> -> vector<64x64xf32>
    %c0_43 = arith.constant 0 : index
    %c0_44 = arith.constant 0 : index
    %106 = vector.load %arg8[%c0_43, %c0_44] : memref<1x64xf32, #tpu.memory_space<vmem>>, vector<1x64xf32>
    %107 = vector.broadcast %106 : vector<1x64xf32> to vector<64x64xf32>
    %108 = arith.addf %105, %107 : vector<64x64xf32>
    %109 = arith.truncf %108 : vector<64x64xf32> to vector<64x64xbf16>
    %c0_45 = arith.constant 0 : index
    %c0_46 = arith.constant 0 : index
    %c0_47 = arith.constant 0 : index
    %110 = vector.load %arg10[%c0_45, %c0_46, %c0_47] : memref<1x64x64xbf16, #tpu.memory_space<vmem>>, vector<1x64x64xbf16>
    %111 = vector.shape_cast %110 : vector<1x64x64xbf16> to vector<64x64xbf16>
    %112 = vector.shape_cast %109 : vector<64x64xbf16> to vector<1x64x64xbf16>
    tpu.vector_store %arg10[%c0_45, %c0_46, %c0_47], %112 {strides = array<i32>} : memref<1x64x64xbf16, #tpu.memory_space<vmem>>, vector<1x64x64xbf16>,
    return
  }
  func.func @transform_0(%arg0: i32, %arg1: i32) -> (i32, i32, i32) {
    %c0_i32 = arith.constant 0 : i32
    %c0_i32_0 = arith.constant 0 : i32
    return %arg0, %arg1, %c0_i32 : i32, i32, i32
  }
  func.func @transform_1(%arg0: i32, %arg1: i32) -> (i32, i32, i32) {
    %c0_i32 = arith.constant 0 : i32
    %c0_i32_0 = arith.constant 0 : i32
    %c0_i32_1 = arith.constant 0 : i32
    return %arg0, %c0_i32, %c0_i32_0 : i32, i32, i32
  }
  func.func @transform_2(%arg0: i32, %arg1: i32) -> (i32, i32, i32) {
    %c0_i32 = arith.constant 0 : i32
    %c0_i32_0 = arith.constant 0 : i32
    return %arg0, %arg1, %c0_i32 : i32, i32, i32
  }
  func.func @transform_3(%arg0: i32, %arg1: i32) -> (i32, i32) {
    %c0_i32 = arith.constant 0 : i32
    %c0_i32_0 = arith.constant 0 : i32
    %c0_i32_1 = arith.constant 0 : i32
    return %c0_i32, %c0_i32_0 : i32, i32
  }
  func.func @transform_4(%arg0: i32, %arg1: i32) -> (i32, i32) {
    %c0_i32 = arith.constant 0 : i32
    %c0_i32_0 = arith.constant 0 : i32
    %c0_i32_1 = arith.constant 0 : i32
    return %c0_i32, %c0_i32_0 : i32, i32
  }
  func.func @transform_5(%arg0: i32, %arg1: i32) -> (i32, i32) {
    %c0_i32 = arith.constant 0 : i32
    %c0_i32_0 = arith.constant 0 : i32
    %c0_i32_1 = arith.constant 0 : i32
    return %c0_i32, %c0_i32_0 : i32, i32
  }
  func.func @transform_6(%arg0: i32, %arg1: i32) -> (i32, i32) {
    %c0_i32 = arith.constant 0 : i32
    %c0_i32_0 = arith.constant 0 : i32
    %c0_i32_1 = arith.constant 0 : i32
    return %c0_i32, %c0_i32_0 : i32, i32
  }
  func.func @transform_7(%arg0: i32, %arg1: i32) -> (i32, i32, i32) {
    %c0_i32 = arith.constant 0 : i32
    %c0_i32_0 = arith.constant 0 : i32
    return %arg0, %arg1, %c0_i32 : i32, i32, i32
  }
  func.func @transform_8(%arg0: i32, %arg1: i32) -> (i32, i32, i32) {
    %c0_i32 = arith.constant 0 : i32
    %c0_i32_0 = arith.constant 0 : i32
    return %arg0, %arg1, %c0_i32 : i32, i32, i32
  }
}

module attributes {stable_mosaic.version = 11 : i64} {
  func.func @_ln_linear_kernel(%arg0: i32, %arg1: memref<64x64xf32, #tpu.memory_space<vmem>>, %arg2: memref<64x192xbf16, #tpu.memory_space<vmem>>, %arg3: memref<1x192xf32, #tpu.memory_space<vmem>>, %arg4: memref<64x192xbf16, #tpu.memory_space<vmem>>) attributes {dimension_semantics = [#tpu.dimension_semantics<parallel>], iteration_bounds = array<i64: 2>, scalar_prefetch = 0 : i64, scratch_operands = 0 : i64, tpu.core_type = #tpu.core_type<tc>, window_params = [{transform_indices = @transform_0, window_bounds = array<i64: 64, 64>}, {pipeline_mode = #tpu.pipeline_mode<synchronous>, transform_indices = @transform_1, window_bounds = array<i64: 64, 192>}, {pipeline_mode = #tpu.pipeline_mode<synchronous>, transform_indices = @transform_2, window_bounds = array<i64: 1, 192>}, {transform_indices = @transform_3, window_bounds = array<i64: 64, 192>}]} {
    %c0 = arith.constant 0 : index
    %c0_0 = arith.constant 0 : index
    %0 = vector.load %arg1[%c0, %c0_0] : memref<64x64xf32, #tpu.memory_space<vmem>>, vector<64x64xf32>
    %cst = arith.constant dense<0.000000e+00> : vector<64xf32>
    %1 = vector.multi_reduction <add>, %0, %cst [1] : vector<64x64xf32> to vector<64xf32>
    %2 = vector.shape_cast %1 : vector<64xf32> to vector<64x1xf32>
    %cst_1 = arith.constant 6.400000e+01 : f32
    %3 = vector.broadcast %cst_1 : f32 to vector<64x1xf32>
    %4 = arith.divf %2, %3 : vector<64x1xf32>
    %5 = vector.broadcast %4 : vector<64x1xf32> to vector<64x64xf32>
    %6 = arith.subf %0, %5 : vector<64x64xf32>
    %7 = arith.mulf %6, %6 : vector<64x64xf32>
    %cst_2 = arith.constant dense<0.000000e+00> : vector<64xf32>
    %8 = vector.multi_reduction <add>, %7, %cst_2 [1] : vector<64x64xf32> to vector<64xf32>
    %9 = vector.shape_cast %8 : vector<64xf32> to vector<64x1xf32>
    %cst_3 = arith.constant 6.400000e+01 : f32
    %10 = vector.broadcast %cst_3 : f32 to vector<64x1xf32>
    %11 = arith.divf %9, %10 : vector<64x1xf32>
    %12 = vector.broadcast %4 : vector<64x1xf32> to vector<64x64xf32>
    %13 = arith.subf %0, %12 : vector<64x64xf32>
    %cst_4 = arith.constant 9.99999997E-7 : f32
    %14 = vector.broadcast %cst_4 : f32 to vector<64x1xf32>
    %15 = arith.addf %11, %14 : vector<64x1xf32>
    %16 = math.rsqrt %15 : vector<64x1xf32>
    %17 = vector.broadcast %16 : vector<64x1xf32> to vector<64x64xf32>
    %18 = arith.mulf %13, %17 : vector<64x64xf32>
    %19 = arith.truncf %18 : vector<64x64xf32> to vector<64x64xbf16>
    %c0_5 = arith.constant 0 : index
    %c0_6 = arith.constant 0 : index
    %20 = vector.load %arg2[%c0_5, %c0_6] : memref<64x192xbf16, #tpu.memory_space<vmem>>, vector<64x192xbf16>
    %cst_7 = arith.constant dense<0.000000e+00> : vector<64x192xf32>
    %21 = tpu.matmul %19, %20, %cst_7 {dimension_numbers = #tpu.dot_dimension_numbers<[1], [0], [0], [1], [0, 0, 1, 1], [], []>} : vector<64x64xbf16>, vector<64x192xbf16>, vector<64x192xf32> -> vector<64x192xf32>
    %c0_8 = arith.constant 0 : index
    %c0_9 = arith.constant 0 : index
    %22 = vector.load %arg3[%c0_8, %c0_9] : memref<1x192xf32, #tpu.memory_space<vmem>>, vector<1x192xf32>
    %23 = vector.broadcast %22 : vector<1x192xf32> to vector<64x192xf32>
    %24 = arith.addf %21, %23 : vector<64x192xf32>
    %25 = arith.truncf %24 : vector<64x192xf32> to vector<64x192xbf16>
    %c0_10 = arith.constant 0 : index
    %c0_11 = arith.constant 0 : index
    %26 = vector.load %arg4[%c0_10, %c0_11] : memref<64x192xbf16, #tpu.memory_space<vmem>>, vector<64x192xbf16>
    tpu.vector_store %arg4[%c0_10, %c0_11], %25 {strides = array<i32>} : memref<64x192xbf16, #tpu.memory_space<vmem>>, vector<64x192xbf16>,
    return
  }
  func.func @transform_0(%arg0: i32) -> (i32, i32) {
    %c0_i32 = arith.constant 0 : i32
    %c0_i32_0 = arith.constant 0 : i32
    return %arg0, %c0_i32 : i32, i32
  }
  func.func @transform_1(%arg0: i32) -> (i32, i32) {
    %c0_i32 = arith.constant 0 : i32
    %c0_i32_0 = arith.constant 0 : i32
    %c0_i32_1 = arith.constant 0 : i32
    return %c0_i32, %c0_i32_0 : i32, i32
  }
  func.func @transform_2(%arg0: i32) -> (i32, i32) {
    %c0_i32 = arith.constant 0 : i32
    %c0_i32_0 = arith.constant 0 : i32
    %c0_i32_1 = arith.constant 0 : i32
    return %c0_i32, %c0_i32_0 : i32, i32
  }
  func.func @transform_3(%arg0: i32) -> (i32, i32) {
    %c0_i32 = arith.constant 0 : i32
    %c0_i32_0 = arith.constant 0 : i32
    return %arg0, %c0_i32 : i32, i32
  }
}

module attributes {stable_mosaic.version = 11 : i64} {
  func.func @_kv_proj_kernel(%arg0: i32, %arg1: memref<8x2048xf32, #tpu.memory_space<vmem>>, %arg2: memref<8x1024xf32, #tpu.memory_space<vmem>>, %arg3: memref<2048x128xbf16, #tpu.memory_space<vmem>>, %arg4: memref<1024x128xbf16, #tpu.memory_space<vmem>>, %arg5: memref<1x128xf32, #tpu.memory_space<vmem>>, %arg6: memref<8x128xbf16, #tpu.memory_space<vmem>>) attributes {dimension_semantics = [#tpu.dimension_semantics<parallel>], iteration_bounds = array<i64: 1>, scalar_prefetch = 0 : i64, scratch_operands = 0 : i64, tpu.core_type = #tpu.core_type<tc>, window_params = [{transform_indices = @transform_0, window_bounds = array<i64: 8, 2048>}, {transform_indices = @transform_1, window_bounds = array<i64: 8, 1024>}, {pipeline_mode = #tpu.pipeline_mode<synchronous>, transform_indices = @transform_2, window_bounds = array<i64: 2048, 128>}, {pipeline_mode = #tpu.pipeline_mode<synchronous>, transform_indices = @transform_3, window_bounds = array<i64: 1024, 128>}, {pipeline_mode = #tpu.pipeline_mode<synchronous>, transform_indices = @transform_4, window_bounds = array<i64: 1, 128>}, {transform_indices = @transform_5, window_bounds = array<i64: 8, 128>}]} {
    %c0 = arith.constant 0 : index
    %c0_0 = arith.constant 0 : index
    %0 = vector.load %arg1[%c0, %c0_0] : memref<8x2048xf32, #tpu.memory_space<vmem>>, vector<8x2048xf32>
    %1 = arith.truncf %0 : vector<8x2048xf32> to vector<8x2048xbf16>
    %c0_1 = arith.constant 0 : index
    %c0_2 = arith.constant 0 : index
    %2 = vector.load %arg3[%c0_1, %c0_2] : memref<2048x128xbf16, #tpu.memory_space<vmem>>, vector<2048x128xbf16>
    %cst = arith.constant dense<0.000000e+00> : vector<8x128xf32>
    %3 = tpu.matmul %1, %2, %cst {dimension_numbers = #tpu.dot_dimension_numbers<[1], [0], [0], [1], [0, 0, 1, 1], [], []>} : vector<8x2048xbf16>, vector<2048x128xbf16>, vector<8x128xf32> -> vector<8x128xf32>
    %c0_3 = arith.constant 0 : index
    %c0_4 = arith.constant 0 : index
    %4 = vector.load %arg2[%c0_3, %c0_4] : memref<8x1024xf32, #tpu.memory_space<vmem>>, vector<8x1024xf32>
    %5 = arith.truncf %4 : vector<8x1024xf32> to vector<8x1024xbf16>
    %c0_5 = arith.constant 0 : index
    %c0_6 = arith.constant 0 : index
    %6 = vector.load %arg4[%c0_5, %c0_6] : memref<1024x128xbf16, #tpu.memory_space<vmem>>, vector<1024x128xbf16>
    %cst_7 = arith.constant dense<0.000000e+00> : vector<8x128xf32>
    %7 = tpu.matmul %5, %6, %cst_7 {dimension_numbers = #tpu.dot_dimension_numbers<[1], [0], [0], [1], [0, 0, 1, 1], [], []>} : vector<8x1024xbf16>, vector<1024x128xbf16>, vector<8x128xf32> -> vector<8x128xf32>
    %8 = arith.addf %3, %7 : vector<8x128xf32>
    %c0_8 = arith.constant 0 : index
    %c0_9 = arith.constant 0 : index
    %9 = vector.load %arg5[%c0_8, %c0_9] : memref<1x128xf32, #tpu.memory_space<vmem>>, vector<1x128xf32>
    %10 = vector.broadcast %9 : vector<1x128xf32> to vector<8x128xf32>
    %11 = arith.addf %8, %10 : vector<8x128xf32>
    %12 = arith.truncf %11 : vector<8x128xf32> to vector<8x128xbf16>
    %c0_10 = arith.constant 0 : index
    %c0_11 = arith.constant 0 : index
    %13 = vector.load %arg6[%c0_10, %c0_11] : memref<8x128xbf16, #tpu.memory_space<vmem>>, vector<8x128xbf16>
    tpu.vector_store %arg6[%c0_10, %c0_11], %12 {strides = array<i32>} : memref<8x128xbf16, #tpu.memory_space<vmem>>, vector<8x128xbf16>,
    return
  }
  func.func @transform_0(%arg0: i32) -> (i32, i32) {
    %c0_i32 = arith.constant 0 : i32
    %c0_i32_0 = arith.constant 0 : i32
    return %arg0, %c0_i32 : i32, i32
  }
  func.func @transform_1(%arg0: i32) -> (i32, i32) {
    %c0_i32 = arith.constant 0 : i32
    %c0_i32_0 = arith.constant 0 : i32
    return %arg0, %c0_i32 : i32, i32
  }
  func.func @transform_2(%arg0: i32) -> (i32, i32) {
    %c0_i32 = arith.constant 0 : i32
    %c0_i32_0 = arith.constant 0 : i32
    %c0_i32_1 = arith.constant 0 : i32
    return %c0_i32, %c0_i32_0 : i32, i32
  }
  func.func @transform_3(%arg0: i32) -> (i32, i32) {
    %c0_i32 = arith.constant 0 : i32
    %c0_i32_0 = arith.constant 0 : i32
    %c0_i32_1 = arith.constant 0 : i32
    return %c0_i32, %c0_i32_0 : i32, i32
  }
  func.func @transform_4(%arg0: i32) -> (i32, i32) {
    %c0_i32 = arith.constant 0 : i32
    %c0_i32_0 = arith.constant 0 : i32
    %c0_i32_1 = arith.constant 0 : i32
    return %c0_i32, %c0_i32_0 : i32, i32
  }
  func.func @transform_5(%arg0: i32) -> (i32, i32) {
    %c0_i32 = arith.constant 0 : i32
    %c0_i32_0 = arith.constant 0 : i32
    return %arg0, %c0_i32 : i32, i32
  }
}

module attributes {stable_mosaic.version = 11 : i64} {
  func.func @_attn_single_kernel(%arg0: i32, %arg1: i32, %arg2: memref<1x64x64xbf16, #tpu.memory_space<vmem>>, %arg3: memref<1x4x128xbf16, #tpu.memory_space<vmem>>, %arg4: memref<1x64x64xf32, #tpu.memory_space<vmem>>, %arg5: memref<64x64xbf16, #tpu.memory_space<vmem>>, %arg6: memref<1x64xf32, #tpu.memory_space<vmem>>, %arg7: memref<1x64x64xf32, #tpu.memory_space<vmem>>) attributes {dimension_semantics = [#tpu.dimension_semantics<parallel>, #tpu.dimension_semantics<parallel>], iteration_bounds = array<i64: 2, 1>, scalar_prefetch = 0 : i64, scratch_operands = 0 : i64, tpu.core_type = #tpu.core_type<tc>, window_params = [{transform_indices = @transform_0, window_bounds = array<i64: 1, 64, 64>}, {transform_indices = @transform_1, window_bounds = array<i64: 1, 4, 128>}, {transform_indices = @transform_2, window_bounds = array<i64: 1, 64, 64>}, {pipeline_mode = #tpu.pipeline_mode<synchronous>, transform_indices = @transform_3, window_bounds = array<i64: 64, 64>}, {pipeline_mode = #tpu.pipeline_mode<synchronous>, transform_indices = @transform_4, window_bounds = array<i64: 1, 64>}, {transform_indices = @transform_5, window_bounds = array<i64: 1, 64, 64>}]} {
    %c0 = arith.constant 0 : index
    %c0_0 = arith.constant 0 : index
    %c0_1 = arith.constant 0 : index
    %0 = vector.load %arg2[%c0, %c0_0, %c0_1] : memref<1x64x64xbf16, #tpu.memory_space<vmem>>, vector<1x64x64xbf16>
    %1 = vector.shape_cast %0 : vector<1x64x64xbf16> to vector<64x64xbf16>
    %c0_2 = arith.constant 0 : index
    %c0_3 = arith.constant 0 : index
    %c0_4 = arith.constant 0 : index
    %2 = vector.load %arg3[%c0_2, %c0_3, %c0_4] : memref<1x4x128xbf16, #tpu.memory_space<vmem>>, vector<1x4x128xbf16>
    %3 = vector.shape_cast %2 : vector<1x4x128xbf16> to vector<4x128xbf16>
    %4 = vector.extract_strided_slice %1 {offsets = [0, 0], sizes = [64, 16], strides = [1, 1]} : vector<64x64xbf16> to vector<64x16xbf16>
    %5 = vector.extract_strided_slice %3 {offsets = [0, 0], sizes = [4, 16], strides = [1, 1]} : vector<4x128xbf16> to vector<4x16xbf16>
    %6 = vector.extract_strided_slice %3 {offsets = [0, 64], sizes = [4, 16], strides = [1, 1]} : vector<4x128xbf16> to vector<4x16xbf16>
    %cst = arith.constant dense<0.000000e+00> : vector<64x4xf32>
    %7 = tpu.matmul %4, %5, %cst {dimension_numbers = #tpu.dot_dimension_numbers<[1], [1], [0], [0], [0, 0, 1, 0], [], []>} : vector<64x16xbf16>, vector<4x16xbf16>, vector<64x4xf32> -> vector<64x4xf32>
    %cst_5 = arith.constant 2.500000e-01 : f32
    %8 = vector.broadcast %cst_5 : f32 to vector<64x4xf32>
    %9 = arith.mulf %7, %8 : vector<64x4xf32>
    %cst_6 = arith.constant dense<0xFF800000> : vector<64xf32>
    %10 = vector.multi_reduction <maximumf>, %9, %cst_6 [1] : vector<64x4xf32> to vector<64xf32>
    %11 = vector.shape_cast %10 : vector<64xf32> to vector<64x1xf32>
    %12 = vector.broadcast %11 : vector<64x1xf32> to vector<64x4xf32>
    %13 = arith.subf %9, %12 : vector<64x4xf32>
    %14 = math.exp %13 : vector<64x4xf32>
    %cst_7 = arith.constant dense<0.000000e+00> : vector<64xf32>
    %15 = vector.multi_reduction <add>, %14, %cst_7 [1] : vector<64x4xf32> to vector<64xf32>
    %16 = vector.shape_cast %15 : vector<64xf32> to vector<64x1xf32>
    %17 = arith.truncf %14 : vector<64x4xf32> to vector<64x4xbf16>
    %cst_8 = arith.constant dense<0.000000e+00> : vector<64x16xf32>
    %18 = tpu.matmul %17, %6, %cst_8 {dimension_numbers = #tpu.dot_dimension_numbers<[1], [0], [0], [1], [0, 0, 1, 1], [], []>} : vector<64x4xbf16>, vector<4x16xbf16>, vector<64x16xf32> -> vector<64x16xf32>
    %19 = vector.broadcast %16 : vector<64x1xf32> to vector<64x16xf32>
    %20 = arith.divf %18, %19 : vector<64x16xf32>
    %21 = vector.extract_strided_slice %1 {offsets = [0, 16], sizes = [64, 16], strides = [1, 1]} : vector<64x64xbf16> to vector<64x16xbf16>
    %22 = vector.extract_strided_slice %3 {offsets = [0, 16], sizes = [4, 16], strides = [1, 1]} : vector<4x128xbf16> to vector<4x16xbf16>
    %23 = vector.extract_strided_slice %3 {offsets = [0, 80], sizes = [4, 16], strides = [1, 1]} : vector<4x128xbf16> to vector<4x16xbf16>
    %cst_9 = arith.constant dense<0.000000e+00> : vector<64x4xf32>
    %24 = tpu.matmul %21, %22, %cst_9 {dimension_numbers = #tpu.dot_dimension_numbers<[1], [1], [0], [0], [0, 0, 1, 0], [], []>} : vector<64x16xbf16>, vector<4x16xbf16>, vector<64x4xf32> -> vector<64x4xf32>
    %cst_10 = arith.constant 2.500000e-01 : f32
    %25 = vector.broadcast %cst_10 : f32 to vector<64x4xf32>
    %26 = arith.mulf %24, %25 : vector<64x4xf32>
    %cst_11 = arith.constant dense<0xFF800000> : vector<64xf32>
    %27 = vector.multi_reduction <maximumf>, %26, %cst_11 [1] : vector<64x4xf32> to vector<64xf32>
    %28 = vector.shape_cast %27 : vector<64xf32> to vector<64x1xf32>
    %29 = vector.broadcast %28 : vector<64x1xf32> to vector<64x4xf32>
    %30 = arith.subf %26, %29 : vector<64x4xf32>
    %31 = math.exp %30 : vector<64x4xf32>
    %cst_12 = arith.constant dense<0.000000e+00> : vector<64xf32>
    %32 = vector.multi_reduction <add>, %31, %cst_12 [1] : vector<64x4xf32> to vector<64xf32>
    %33 = vector.shape_cast %32 : vector<64xf32> to vector<64x1xf32>
    %34 = arith.truncf %31 : vector<64x4xf32> to vector<64x4xbf16>
    %cst_13 = arith.constant dense<0.000000e+00> : vector<64x16xf32>
    %35 = tpu.matmul %34, %23, %cst_13 {dimension_numbers = #tpu.dot_dimension_numbers<[1], [0], [0], [1], [0, 0, 1, 1], [], []>} : vector<64x4xbf16>, vector<4x16xbf16>, vector<64x16xf32> -> vector<64x16xf32>
    %36 = vector.broadcast %33 : vector<64x1xf32> to vector<64x16xf32>
    %37 = arith.divf %35, %36 : vector<64x16xf32>
    %38 = vector.extract_strided_slice %1 {offsets = [0, 32], sizes = [64, 16], strides = [1, 1]} : vector<64x64xbf16> to vector<64x16xbf16>
    %39 = vector.extract_strided_slice %3 {offsets = [0, 32], sizes = [4, 16], strides = [1, 1]} : vector<4x128xbf16> to vector<4x16xbf16>
    %40 = vector.extract_strided_slice %3 {offsets = [0, 96], sizes = [4, 16], strides = [1, 1]} : vector<4x128xbf16> to vector<4x16xbf16>
    %cst_14 = arith.constant dense<0.000000e+00> : vector<64x4xf32>
    %41 = tpu.matmul %38, %39, %cst_14 {dimension_numbers = #tpu.dot_dimension_numbers<[1], [1], [0], [0], [0, 0, 1, 0], [], []>} : vector<64x16xbf16>, vector<4x16xbf16>, vector<64x4xf32> -> vector<64x4xf32>
    %cst_15 = arith.constant 2.500000e-01 : f32
    %42 = vector.broadcast %cst_15 : f32 to vector<64x4xf32>
    %43 = arith.mulf %41, %42 : vector<64x4xf32>
    %cst_16 = arith.constant dense<0xFF800000> : vector<64xf32>
    %44 = vector.multi_reduction <maximumf>, %43, %cst_16 [1] : vector<64x4xf32> to vector<64xf32>
    %45 = vector.shape_cast %44 : vector<64xf32> to vector<64x1xf32>
    %46 = vector.broadcast %45 : vector<64x1xf32> to vector<64x4xf32>
    %47 = arith.subf %43, %46 : vector<64x4xf32>
    %48 = math.exp %47 : vector<64x4xf32>
    %cst_17 = arith.constant dense<0.000000e+00> : vector<64xf32>
    %49 = vector.multi_reduction <add>, %48, %cst_17 [1] : vector<64x4xf32> to vector<64xf32>
    %50 = vector.shape_cast %49 : vector<64xf32> to vector<64x1xf32>
    %51 = arith.truncf %48 : vector<64x4xf32> to vector<64x4xbf16>
    %cst_18 = arith.constant dense<0.000000e+00> : vector<64x16xf32>
    %52 = tpu.matmul %51, %40, %cst_18 {dimension_numbers = #tpu.dot_dimension_numbers<[1], [0], [0], [1], [0, 0, 1, 1], [], []>} : vector<64x4xbf16>, vector<4x16xbf16>, vector<64x16xf32> -> vector<64x16xf32>
    %53 = vector.broadcast %50 : vector<64x1xf32> to vector<64x16xf32>
    %54 = arith.divf %52, %53 : vector<64x16xf32>
    %55 = vector.extract_strided_slice %1 {offsets = [0, 48], sizes = [64, 16], strides = [1, 1]} : vector<64x64xbf16> to vector<64x16xbf16>
    %56 = vector.extract_strided_slice %3 {offsets = [0, 48], sizes = [4, 16], strides = [1, 1]} : vector<4x128xbf16> to vector<4x16xbf16>
    %57 = vector.extract_strided_slice %3 {offsets = [0, 112], sizes = [4, 16], strides = [1, 1]} : vector<4x128xbf16> to vector<4x16xbf16>
    %cst_19 = arith.constant dense<0.000000e+00> : vector<64x4xf32>
    %58 = tpu.matmul %55, %56, %cst_19 {dimension_numbers = #tpu.dot_dimension_numbers<[1], [1], [0], [0], [0, 0, 1, 0], [], []>} : vector<64x16xbf16>, vector<4x16xbf16>, vector<64x4xf32> -> vector<64x4xf32>
    %cst_20 = arith.constant 2.500000e-01 : f32
    %59 = vector.broadcast %cst_20 : f32 to vector<64x4xf32>
    %60 = arith.mulf %58, %59 : vector<64x4xf32>
    %cst_21 = arith.constant dense<0xFF800000> : vector<64xf32>
    %61 = vector.multi_reduction <maximumf>, %60, %cst_21 [1] : vector<64x4xf32> to vector<64xf32>
    %62 = vector.shape_cast %61 : vector<64xf32> to vector<64x1xf32>
    %63 = vector.broadcast %62 : vector<64x1xf32> to vector<64x4xf32>
    %64 = arith.subf %60, %63 : vector<64x4xf32>
    %65 = math.exp %64 : vector<64x4xf32>
    %cst_22 = arith.constant dense<0.000000e+00> : vector<64xf32>
    %66 = vector.multi_reduction <add>, %65, %cst_22 [1] : vector<64x4xf32> to vector<64xf32>
    %67 = vector.shape_cast %66 : vector<64xf32> to vector<64x1xf32>
    %68 = arith.truncf %65 : vector<64x4xf32> to vector<64x4xbf16>
    %cst_23 = arith.constant dense<0.000000e+00> : vector<64x16xf32>
    %69 = tpu.matmul %68, %57, %cst_23 {dimension_numbers = #tpu.dot_dimension_numbers<[1], [0], [0], [1], [0, 0, 1, 1], [], []>} : vector<64x4xbf16>, vector<4x16xbf16>, vector<64x16xf32> -> vector<64x16xf32>
    %70 = vector.broadcast %67 : vector<64x1xf32> to vector<64x16xf32>
    %71 = arith.divf %69, %70 : vector<64x16xf32>
    %72 = tpu.concatenate %20, %37, %54, %71 in 1 : vector<64x16xf32>, vector<64x16xf32>, vector<64x16xf32>, vector<64x16xf32> -> vector<64x64xf32>
    %73 = arith.truncf %72 : vector<64x64xf32> to vector<64x64xbf16>
    %c0_24 = arith.constant 0 : index
    %c0_25 = arith.constant 0 : index
    %74 = vector.load %arg5[%c0_24, %c0_25] : memref<64x64xbf16, #tpu.memory_space<vmem>>, vector<64x64xbf16>
    %cst_26 = arith.constant dense<0.000000e+00> : vector<64x64xf32>
    %75 = tpu.matmul %73, %74, %cst_26 {dimension_numbers = #tpu.dot_dimension_numbers<[1], [0], [0], [1], [0, 0, 1, 1], [], []>} : vector<64x64xbf16>, vector<64x64xbf16>, vector<64x64xf32> -> vector<64x64xf32>
    %c0_27 = arith.constant 0 : index
    %c0_28 = arith.constant 0 : index
    %76 = vector.load %arg6[%c0_27, %c0_28] : memref<1x64xf32, #tpu.memory_space<vmem>>, vector<1x64xf32>
    %77 = vector.broadcast %76 : vector<1x64xf32> to vector<64x64xf32>
    %78 = arith.addf %75, %77 : vector<64x64xf32>
    %c0_29 = arith.constant 0 : index
    %c0_30 = arith.constant 0 : index
    %c0_31 = arith.constant 0 : index
    %79 = vector.load %arg4[%c0_29, %c0_30, %c0_31] : memref<1x64x64xf32, #tpu.memory_space<vmem>>, vector<1x64x64xf32>
    %80 = vector.shape_cast %79 : vector<1x64x64xf32> to vector<64x64xf32>
    %81 = arith.addf %78, %80 : vector<64x64xf32>
    %c0_32 = arith.constant 0 : index
    %c0_33 = arith.constant 0 : index
    %c0_34 = arith.constant 0 : index
    %82 = vector.load %arg7[%c0_32, %c0_33, %c0_34] : memref<1x64x64xf32, #tpu.memory_space<vmem>>, vector<1x64x64xf32>
    %83 = vector.shape_cast %82 : vector<1x64x64xf32> to vector<64x64xf32>
    %84 = vector.shape_cast %81 : vector<64x64xf32> to vector<1x64x64xf32>
    tpu.vector_store %arg7[%c0_32, %c0_33, %c0_34], %84 {strides = array<i32>} : memref<1x64x64xf32, #tpu.memory_space<vmem>>, vector<1x64x64xf32>,
    return
  }
  func.func @transform_0(%arg0: i32, %arg1: i32) -> (i32, i32, i32) {
    %c0_i32 = arith.constant 0 : i32
    %c0_i32_0 = arith.constant 0 : i32
    return %arg0, %arg1, %c0_i32 : i32, i32, i32
  }
  func.func @transform_1(%arg0: i32, %arg1: i32) -> (i32, i32, i32) {
    %c0_i32 = arith.constant 0 : i32
    %c0_i32_0 = arith.constant 0 : i32
    %c0_i32_1 = arith.constant 0 : i32
    return %arg0, %c0_i32, %c0_i32_0 : i32, i32, i32
  }
  func.func @transform_2(%arg0: i32, %arg1: i32) -> (i32, i32, i32) {
    %c0_i32 = arith.constant 0 : i32
    %c0_i32_0 = arith.constant 0 : i32
    return %arg0, %arg1, %c0_i32 : i32, i32, i32
  }
  func.func @transform_3(%arg0: i32, %arg1: i32) -> (i32, i32) {
    %c0_i32 = arith.constant 0 : i32
    %c0_i32_0 = arith.constant 0 : i32
    %c0_i32_1 = arith.constant 0 : i32
    return %c0_i32, %c0_i32_0 : i32, i32
  }
  func.func @transform_4(%arg0: i32, %arg1: i32) -> (i32, i32) {
    %c0_i32 = arith.constant 0 : i32
    %c0_i32_0 = arith.constant 0 : i32
    %c0_i32_1 = arith.constant 0 : i32
    return %c0_i32, %c0_i32_0 : i32, i32
  }
  func.func @transform_5(%arg0: i32, %arg1: i32) -> (i32, i32, i32) {
    %c0_i32 = arith.constant 0 : i32
    %c0_i32_0 = arith.constant 0 : i32
    return %arg0, %arg1, %c0_i32 : i32, i32, i32
  }
}

module attributes {stable_mosaic.version = 11 : i64} {
  func.func @_ln_ffn_kernel(%arg0: i32, %arg1: memref<64x64xf32, #tpu.memory_space<vmem>>, %arg2: memref<64x256xbf16, #tpu.memory_space<vmem>>, %arg3: memref<1x256xf32, #tpu.memory_space<vmem>>, %arg4: memref<256x64xbf16, #tpu.memory_space<vmem>>, %arg5: memref<1x64xf32, #tpu.memory_space<vmem>>, %arg6: memref<64x64xf32, #tpu.memory_space<vmem>>) attributes {dimension_semantics = [#tpu.dimension_semantics<parallel>], iteration_bounds = array<i64: 2>, scalar_prefetch = 0 : i64, scratch_operands = 0 : i64, tpu.core_type = #tpu.core_type<tc>, window_params = [{transform_indices = @transform_0, window_bounds = array<i64: 64, 64>}, {pipeline_mode = #tpu.pipeline_mode<synchronous>, transform_indices = @transform_1, window_bounds = array<i64: 64, 256>}, {pipeline_mode = #tpu.pipeline_mode<synchronous>, transform_indices = @transform_2, window_bounds = array<i64: 1, 256>}, {pipeline_mode = #tpu.pipeline_mode<synchronous>, transform_indices = @transform_3, window_bounds = array<i64: 256, 64>}, {pipeline_mode = #tpu.pipeline_mode<synchronous>, transform_indices = @transform_4, window_bounds = array<i64: 1, 64>}, {transform_indices = @transform_5, window_bounds = array<i64: 64, 64>}]} {
    %c0 = arith.constant 0 : index
    %c0_0 = arith.constant 0 : index
    %0 = vector.load %arg1[%c0, %c0_0] : memref<64x64xf32, #tpu.memory_space<vmem>>, vector<64x64xf32>
    %cst = arith.constant dense<0.000000e+00> : vector<64xf32>
    %1 = vector.multi_reduction <add>, %0, %cst [1] : vector<64x64xf32> to vector<64xf32>
    %2 = vector.shape_cast %1 : vector<64xf32> to vector<64x1xf32>
    %cst_1 = arith.constant 6.400000e+01 : f32
    %3 = vector.broadcast %cst_1 : f32 to vector<64x1xf32>
    %4 = arith.divf %2, %3 : vector<64x1xf32>
    %5 = vector.broadcast %4 : vector<64x1xf32> to vector<64x64xf32>
    %6 = arith.subf %0, %5 : vector<64x64xf32>
    %7 = arith.mulf %6, %6 : vector<64x64xf32>
    %cst_2 = arith.constant dense<0.000000e+00> : vector<64xf32>
    %8 = vector.multi_reduction <add>, %7, %cst_2 [1] : vector<64x64xf32> to vector<64xf32>
    %9 = vector.shape_cast %8 : vector<64xf32> to vector<64x1xf32>
    %cst_3 = arith.constant 6.400000e+01 : f32
    %10 = vector.broadcast %cst_3 : f32 to vector<64x1xf32>
    %11 = arith.divf %9, %10 : vector<64x1xf32>
    %12 = vector.broadcast %4 : vector<64x1xf32> to vector<64x64xf32>
    %13 = arith.subf %0, %12 : vector<64x64xf32>
    %cst_4 = arith.constant 9.99999997E-7 : f32
    %14 = vector.broadcast %cst_4 : f32 to vector<64x1xf32>
    %15 = arith.addf %11, %14 : vector<64x1xf32>
    %16 = math.rsqrt %15 : vector<64x1xf32>
    %17 = vector.broadcast %16 : vector<64x1xf32> to vector<64x64xf32>
    %18 = arith.mulf %13, %17 : vector<64x64xf32>
    %19 = arith.truncf %18 : vector<64x64xf32> to vector<64x64xbf16>
    %c0_5 = arith.constant 0 : index
    %c0_6 = arith.constant 0 : index
    %20 = vector.load %arg2[%c0_5, %c0_6] : memref<64x256xbf16, #tpu.memory_space<vmem>>, vector<64x256xbf16>
    %cst_7 = arith.constant dense<0.000000e+00> : vector<64x256xf32>
    %21 = tpu.matmul %19, %20, %cst_7 {dimension_numbers = #tpu.dot_dimension_numbers<[1], [0], [0], [1], [0, 0, 1, 1], [], []>} : vector<64x64xbf16>, vector<64x256xbf16>, vector<64x256xf32> -> vector<64x256xf32>
    %c0_8 = arith.constant 0 : index
    %c0_9 = arith.constant 0 : index
    %22 = vector.load %arg3[%c0_8, %c0_9] : memref<1x256xf32, #tpu.memory_space<vmem>>, vector<1x256xf32>
    %23 = vector.broadcast %22 : vector<1x256xf32> to vector<64x256xf32>
    %24 = arith.addf %21, %23 : vector<64x256xf32>
    %25 = arith.mulf %24, %24 : vector<64x256xf32>
    %26 = arith.mulf %24, %25 : vector<64x256xf32>
    %cst_10 = arith.constant 4.471500e-02 : f32
    %27 = vector.broadcast %cst_10 : f32 to vector<64x256xf32>
    %28 = arith.mulf %27, %26 : vector<64x256xf32>
    %29 = arith.addf %24, %28 : vector<64x256xf32>
    %cst_11 = arith.constant 0.797884583 : f32
    %30 = vector.broadcast %cst_11 : f32 to vector<64x256xf32>
    %31 = arith.mulf %30, %29 : vector<64x256xf32>
    %32 = math.tanh %31 : vector<64x256xf32>
    %cst_12 = arith.constant 1.000000e+00 : f32
    %33 = vector.broadcast %cst_12 : f32 to vector<64x256xf32>
    %34 = arith.addf %33, %32 : vector<64x256xf32>
    %cst_13 = arith.constant 5.000000e-01 : f32
    %35 = vector.broadcast %cst_13 : f32 to vector<64x256xf32>
    %36 = arith.mulf %35, %34 : vector<64x256xf32>
    %37 = arith.mulf %24, %36 : vector<64x256xf32>
    %38 = arith.truncf %37 : vector<64x256xf32> to vector<64x256xbf16>
    %c0_14 = arith.constant 0 : index
    %c0_15 = arith.constant 0 : index
    %39 = vector.load %arg4[%c0_14, %c0_15] : memref<256x64xbf16, #tpu.memory_space<vmem>>, vector<256x64xbf16>
    %cst_16 = arith.constant dense<0.000000e+00> : vector<64x64xf32>
    %40 = tpu.matmul %38, %39, %cst_16 {dimension_numbers = #tpu.dot_dimension_numbers<[1], [0], [0], [1], [0, 0, 1, 1], [], []>} : vector<64x256xbf16>, vector<256x64xbf16>, vector<64x64xf32> -> vector<64x64xf32>
    %c0_17 = arith.constant 0 : index
    %c0_18 = arith.constant 0 : index
    %41 = vector.load %arg5[%c0_17, %c0_18] : memref<1x64xf32, #tpu.memory_space<vmem>>, vector<1x64xf32>
    %42 = vector.broadcast %41 : vector<1x64xf32> to vector<64x64xf32>
    %43 = arith.addf %40, %42 : vector<64x64xf32>
    %44 = arith.addf %0, %43 : vector<64x64xf32>
    %c0_19 = arith.constant 0 : index
    %c0_20 = arith.constant 0 : index
    %45 = vector.load %arg6[%c0_19, %c0_20] : memref<64x64xf32, #tpu.memory_space<vmem>>, vector<64x64xf32>
    tpu.vector_store %arg6[%c0_19, %c0_20], %44 {strides = array<i32>} : memref<64x64xf32, #tpu.memory_space<vmem>>, vector<64x64xf32>,
    return
  }
  func.func @transform_0(%arg0: i32) -> (i32, i32) {
    %c0_i32 = arith.constant 0 : i32
    %c0_i32_0 = arith.constant 0 : i32
    return %arg0, %c0_i32 : i32, i32
  }
  func.func @transform_1(%arg0: i32) -> (i32, i32) {
    %c0_i32 = arith.constant 0 : i32
    %c0_i32_0 = arith.constant 0 : i32
    %c0_i32_1 = arith.constant 0 : i32
    return %c0_i32, %c0_i32_0 : i32, i32
  }
  func.func @transform_2(%arg0: i32) -> (i32, i32) {
    %c0_i32 = arith.constant 0 : i32
    %c0_i32_0 = arith.constant 0 : i32
    %c0_i32_1 = arith.constant 0 : i32
    return %c0_i32, %c0_i32_0 : i32, i32
  }
  func.func @transform_3(%arg0: i32) -> (i32, i32) {
    %c0_i32 = arith.constant 0 : i32
    %c0_i32_0 = arith.constant 0 : i32
    %c0_i32_1 = arith.constant 0 : i32
    return %c0_i32, %c0_i32_0 : i32, i32
  }
  func.func @transform_4(%arg0: i32) -> (i32, i32) {
    %c0_i32 = arith.constant 0 : i32
    %c0_i32_0 = arith.constant 0 : i32
    %c0_i32_1 = arith.constant 0 : i32
    return %c0_i32, %c0_i32_0 : i32, i32
  }
  func.func @transform_5(%arg0: i32) -> (i32, i32) {
    %c0_i32 = arith.constant 0 : i32
    %c0_i32_0 = arith.constant 0 : i32
    return %arg0, %c0_i32 : i32, i32
  }
}

module attributes {stable_mosaic.version = 11 : i64} {
  func.func @_ln_ffn_kernel(%arg0: i32, %arg1: memref<64x64xf32, #tpu.memory_space<vmem>>, %arg2: memref<64x256xbf16, #tpu.memory_space<vmem>>, %arg3: memref<1x256xf32, #tpu.memory_space<vmem>>, %arg4: memref<256x64xbf16, #tpu.memory_space<vmem>>, %arg5: memref<1x64xf32, #tpu.memory_space<vmem>>, %arg6: memref<64x64xf32, #tpu.memory_space<vmem>>) attributes {dimension_semantics = [#tpu.dimension_semantics<parallel>], iteration_bounds = array<i64: 2>, scalar_prefetch = 0 : i64, scratch_operands = 0 : i64, tpu.core_type = #tpu.core_type<tc>, window_params = [{transform_indices = @transform_0, window_bounds = array<i64: 64, 64>}, {pipeline_mode = #tpu.pipeline_mode<synchronous>, transform_indices = @transform_1, window_bounds = array<i64: 64, 256>}, {pipeline_mode = #tpu.pipeline_mode<synchronous>, transform_indices = @transform_2, window_bounds = array<i64: 1, 256>}, {pipeline_mode = #tpu.pipeline_mode<synchronous>, transform_indices = @transform_3, window_bounds = array<i64: 256, 64>}, {pipeline_mode = #tpu.pipeline_mode<synchronous>, transform_indices = @transform_4, window_bounds = array<i64: 1, 64>}, {transform_indices = @transform_5, window_bounds = array<i64: 64, 64>}]} {
    %c0 = arith.constant 0 : index
    %c0_0 = arith.constant 0 : index
    %0 = vector.load %arg1[%c0, %c0_0] : memref<64x64xf32, #tpu.memory_space<vmem>>, vector<64x64xf32>
    %cst = arith.constant dense<0.000000e+00> : vector<64xf32>
    %1 = vector.multi_reduction <add>, %0, %cst [1] : vector<64x64xf32> to vector<64xf32>
    %2 = vector.shape_cast %1 : vector<64xf32> to vector<64x1xf32>
    %cst_1 = arith.constant 6.400000e+01 : f32
    %3 = vector.broadcast %cst_1 : f32 to vector<64x1xf32>
    %4 = arith.divf %2, %3 : vector<64x1xf32>
    %5 = vector.broadcast %4 : vector<64x1xf32> to vector<64x64xf32>
    %6 = arith.subf %0, %5 : vector<64x64xf32>
    %7 = arith.mulf %6, %6 : vector<64x64xf32>
    %cst_2 = arith.constant dense<0.000000e+00> : vector<64xf32>
    %8 = vector.multi_reduction <add>, %7, %cst_2 [1] : vector<64x64xf32> to vector<64xf32>
    %9 = vector.shape_cast %8 : vector<64xf32> to vector<64x1xf32>
    %cst_3 = arith.constant 6.400000e+01 : f32
    %10 = vector.broadcast %cst_3 : f32 to vector<64x1xf32>
    %11 = arith.divf %9, %10 : vector<64x1xf32>
    %12 = vector.broadcast %4 : vector<64x1xf32> to vector<64x64xf32>
    %13 = arith.subf %0, %12 : vector<64x64xf32>
    %cst_4 = arith.constant 9.99999997E-7 : f32
    %14 = vector.broadcast %cst_4 : f32 to vector<64x1xf32>
    %15 = arith.addf %11, %14 : vector<64x1xf32>
    %16 = math.rsqrt %15 : vector<64x1xf32>
    %17 = vector.broadcast %16 : vector<64x1xf32> to vector<64x64xf32>
    %18 = arith.mulf %13, %17 : vector<64x64xf32>
    %19 = arith.truncf %18 : vector<64x64xf32> to vector<64x64xbf16>
    %c0_5 = arith.constant 0 : index
    %c0_6 = arith.constant 0 : index
    %20 = vector.load %arg2[%c0_5, %c0_6] : memref<64x256xbf16, #tpu.memory_space<vmem>>, vector<64x256xbf16>
    %cst_7 = arith.constant dense<0.000000e+00> : vector<64x256xf32>
    %21 = tpu.matmul %19, %20, %cst_7 {dimension_numbers = #tpu.dot_dimension_numbers<[1], [0], [0], [1], [0, 0, 1, 1], [], []>} : vector<64x64xbf16>, vector<64x256xbf16>, vector<64x256xf32> -> vector<64x256xf32>
    %c0_8 = arith.constant 0 : index
    %c0_9 = arith.constant 0 : index
    %22 = vector.load %arg3[%c0_8, %c0_9] : memref<1x256xf32, #tpu.memory_space<vmem>>, vector<1x256xf32>
    %23 = vector.broadcast %22 : vector<1x256xf32> to vector<64x256xf32>
    %24 = arith.addf %21, %23 : vector<64x256xf32>
    %25 = arith.mulf %24, %24 : vector<64x256xf32>
    %26 = arith.mulf %24, %25 : vector<64x256xf32>
    %cst_10 = arith.constant 4.471500e-02 : f32
    %27 = vector.broadcast %cst_10 : f32 to vector<64x256xf32>
    %28 = arith.mulf %27, %26 : vector<64x256xf32>
    %29 = arith.addf %24, %28 : vector<64x256xf32>
    %cst_11 = arith.constant 0.797884583 : f32
    %30 = vector.broadcast %cst_11 : f32 to vector<64x256xf32>
    %31 = arith.mulf %30, %29 : vector<64x256xf32>
    %32 = math.tanh %31 : vector<64x256xf32>
    %cst_12 = arith.constant 1.000000e+00 : f32
    %33 = vector.broadcast %cst_12 : f32 to vector<64x256xf32>
    %34 = arith.addf %33, %32 : vector<64x256xf32>
    %cst_13 = arith.constant 5.000000e-01 : f32
    %35 = vector.broadcast %cst_13 : f32 to vector<64x256xf32>
    %36 = arith.mulf %35, %34 : vector<64x256xf32>
    %37 = arith.mulf %24, %36 : vector<64x256xf32>
    %38 = arith.truncf %37 : vector<64x256xf32> to vector<64x256xbf16>
    %c0_14 = arith.constant 0 : index
    %c0_15 = arith.constant 0 : index
    %39 = vector.load %arg4[%c0_14, %c0_15] : memref<256x64xbf16, #tpu.memory_space<vmem>>, vector<256x64xbf16>
    %cst_16 = arith.constant dense<0.000000e+00> : vector<64x64xf32>
    %40 = tpu.matmul %38, %39, %cst_16 {dimension_numbers = #tpu.dot_dimension_numbers<[1], [0], [0], [1], [0, 0, 1, 1], [], []>} : vector<64x256xbf16>, vector<256x64xbf16>, vector<64x64xf32> -> vector<64x64xf32>
    %c0_17 = arith.constant 0 : index
    %c0_18 = arith.constant 0 : index
    %41 = vector.load %arg5[%c0_17, %c0_18] : memref<1x64xf32, #tpu.memory_space<vmem>>, vector<1x64xf32>
    %42 = vector.broadcast %41 : vector<1x64xf32> to vector<64x64xf32>
    %43 = arith.addf %40, %42 : vector<64x64xf32>
    %44 = arith.addf %0, %43 : vector<64x64xf32>
    %c0_19 = arith.constant 0 : index
    %c0_20 = arith.constant 0 : index
    %45 = vector.load %arg6[%c0_19, %c0_20] : memref<64x64xf32, #tpu.memory_space<vmem>>, vector<64x64xf32>
    tpu.vector_store %arg6[%c0_19, %c0_20], %44 {strides = array<i32>} : memref<64x64xf32, #tpu.memory_space<vmem>>, vector<64x64xf32>,
    return
  }
  func.func @transform_0(%arg0: i32) -> (i32, i32) {
    %c0_i32 = arith.constant 0 : i32
    %c0_i32_0 = arith.constant 0 : i32
    return %arg0, %c0_i32 : i32, i32
  }
  func.func @transform_1(%arg0: i32) -> (i32, i32) {
    %c0_i32 = arith.constant 0 : i32
    %c0_i32_0 = arith.constant 0 : i32
    %c0_i32_1 = arith.constant 0 : i32
    return %c0_i32, %c0_i32_0 : i32, i32
  }
  func.func @transform_2(%arg0: i32) -> (i32, i32) {
    %c0_i32 = arith.constant 0 : i32
    %c0_i32_0 = arith.constant 0 : i32
    %c0_i32_1 = arith.constant 0 : i32
    return %c0_i32, %c0_i32_0 : i32, i32
  }
  func.func @transform_3(%arg0: i32) -> (i32, i32) {
    %c0_i32 = arith.constant 0 : i32
    %c0_i32_0 = arith.constant 0 : i32
    %c0_i32_1 = arith.constant 0 : i32
    return %c0_i32, %c0_i32_0 : i32, i32
  }
  func.func @transform_4(%arg0: i32) -> (i32, i32) {
    %c0_i32 = arith.constant 0 : i32
    %c0_i32_0 = arith.constant 0 : i32
    %c0_i32_1 = arith.constant 0 : i32
    return %c0_i32, %c0_i32_0 : i32, i32
  }
  func.func @transform_5(%arg0: i32) -> (i32, i32) {
    %c0_i32 = arith.constant 0 : i32
    %c0_i32_0 = arith.constant 0 : i32
    return %arg0, %c0_i32 : i32, i32
  }
}

</mosaic_0001>

<llo_original>
// kernel: modulated_multiview_cond.20
$region0: #{modulated_multiview_cond.20}
  #allocation0 [shape = 'u32[]', space=smem, size = 0x4, offset = 0x4, fixed_abs, tag = 'smem constant byte address 0x4 - core index']
  #allocation1 [shape = 'u32[144,128]{1,0:T(1,128)}', space=vmem, size = 0x12000, scoped, tag = 'internal scratch']
  %s0 = inlined_call_operand.vmem [shape: f32[128,64], index: 0, kind: input, shape index: {}]
  %s1 = inlined_call_operand.vmem [shape: bf16[64,192], index: 1, kind: input, shape index: {}]
  %s2 = inlined_call_operand.vmem [shape: f32[1,192], index: 2, kind: input, shape index: {}]
  %s3 = inlined_call_operand.vmem [shape: bf16[128,192], index: 3, kind: output, shape index: {}]
  %s4 = sld [smem:[#allocation0]]
  $region45: #{modulated_multiview_cond.20} parent=0
    _
  %s6 = ssub.s32 1, %s4
  %s7 = scalar_select 0, %s6, %s4
  loop: start=0, step=1, limit=4
  $region2: #{modulated_multiview_cond.20} parent=0 // loop_pre_header
    _
  $region3: #{modulated_multiview_cond.20} parent=0 // loop_header
    %s9 = sphi 0, %s13
    %p10 = scmp.ge.s32.totalorder %s9, 4
    %s19 = sphi 0, %s21
    %s22 = sphi 0, %s19
    %s23 = sphi 0, %s22
    %s39 = sphi 0, %s23
    %s43 = sphi 0, %s43
    %s45 = sphi 0, %s43
    %s46 = sphi 0, %s45
    %s60 = sphi 0, %s46
    %s64 = sphi 0, %s64
    %s66 = sphi 0, %s64
    %s67 = sphi 0, %s66
    %s81 = sphi 0, %s67
    %s87 = sphi 0, %s89
    %s90 = sphi 0, %s87
    %s91 = sphi 0, %s90
    %s107 = sphi 0, %s91
  $region4: #{modulated_multiview_cond.20} parent=0 // loop_header_branch
    %12 = sbr.rel (%p10) target = $region8
  $region5: #{modulated_multiview_cond.20} parent=0 // loop_body
    %s14 = ssub.s32 %s9, 1
    %s15 = ssub.s32 %s9, 2
    %s16 = sadd.s32 %s9, 1
    %s17 = ssub.s32 %s9, %s16
    %p18 = scmp.eq.s32.totalorder %s17, 0
    %s20 = sadd.s32 %s19, 1
    %s21 = scalar_select %p18, %s19, %s20
    %p24 = pneg %p18
    %p25 = scmp.eq.s32.totalorder %s9, 1
    %p26 = por %p24, %p25
    %p27 = scmp.ne.s32.totalorder %s19, %s22
    %p28 = scmp.eq.s32.totalorder %s9, 0
    %p29 = por %p27, %p28
    %p30 = scmp.ne.s32.totalorder %s19, %s22
    %p31 = scmp.eq.s32.totalorder %s14, 1
    %p32 = por %p30, %p31
    %p33 = scmp.ne.s32.totalorder %s22, %s23
    %p34 = scmp.eq.s32.totalorder %s14, 0
    %p35 = por %p33, %p34
    %p36 = scmp.ne.s32.totalorder %s22, %s23
    %p37 = scmp.eq.s32.totalorder %s15, 1
    %p38 = por %p36, %p37
    %p40 = scmp.ne.s32.totalorder %s23, %s39
    %p41 = scmp.eq.s32.totalorder %s15, 0
    %p42 = por %p40, %p41
    %s44 = sadd.s32 %s43, 1
    %p47 = scmp.eq.s32.totalorder %s9, 1
    %p48 = scmp.ne.s32.totalorder %s43, %s45
    %p49 = scmp.eq.s32.totalorder %s9, 0
    %p50 = por %p48, %p49
    %p51 = scmp.ne.s32.totalorder %s43, %s45
    %p52 = scmp.eq.s32.totalorder %s14, 1
    %p53 = por %p51, %p52
    %p54 = scmp.ne.s32.totalorder %s45, %s46
    %p55 = scmp.eq.s32.totalorder %s14, 0
    %p56 = por %p54, %p55
    %p57 = scmp.ne.s32.totalorder %s45, %s46
    %p58 = scmp.eq.s32.totalorder %s15, 1
    %p59 = por %p57, %p58
    %p61 = scmp.ne.s32.totalorder %s46, %s60
    %p62 = scmp.eq.s32.totalorder %s15, 0
    %p63 = por %p61, %p62
    %s65 = sadd.s32 %s64, 1
    %p68 = scmp.eq.s32.totalorder %s9, 1
    %p69 = scmp.ne.s32.totalorder %s64, %s66
    %p70 = scmp.eq.s32.totalorder %s9, 0
    %p71 = por %p69, %p70
    %p72 = scmp.ne.s32.totalorder %s64, %s66
    %p73 = scmp.eq.s32.totalorder %s14, 1
    %p74 = por %p72, %p73
    %p75 = scmp.ne.s32.totalorder %s66, %s67
    %p76 = scmp.eq.s32.totalorder %s14, 0
    %p77 = por %p75, %p76
    %p78 = scmp.ne.s32.totalorder %s66, %s67
    %p79 = scmp.eq.s32.totalorder %s15, 1
    %p80 = por %p78, %p79
    %p82 = scmp.ne.s32.totalorder %s67, %s81
    %p83 = scmp.eq.s32.totalorder %s15, 0
    %p84 = por %p82, %p83
    %s85 = ssub.s32 %s9, %s16
    %p86 = scmp.eq.s32.totalorder %s85, 0
    %s88 = sadd.s32 %s87, 1
    %s89 = scalar_select %p86, %s87, %s88
    %p92 = pneg %p86
    %p93 = scmp.eq.s32.totalorder %s9, 1
    %p94 = por %p92, %p93
    %p95 = scmp.ne.s32.totalorder %s87, %s90
    %p96 = scmp.eq.s32.totalorder %s9, 0
    %p97 = por %p95, %p96
    %p98 = scmp.ne.s32.totalorder %s87, %s90
    %p99 = scmp.eq.s32.totalorder %s14, 1
    %p100 = por %p98, %p99
    %p101 = scmp.ne.s32.totalorder %s90, %s91
    %p102 = scmp.eq.s32.totalorder %s14, 0
    %p103 = por %p101, %p102
    %p104 = scmp.ne.s32.totalorder %s90, %s91
    %p105 = scmp.eq.s32.totalorder %s15, 1
    %p106 = por %p104, %p105
    %p108 = scmp.ne.s32.totalorder %s91, %s107
    %p109 = scmp.eq.s32.totalorder %s15, 0
    %p110 = por %p108, %p109
    %p111 = scmp.le.s32.totalorder 1, %s9
    %p112 = scmp.lt.s32.totalorder %s9, 3
    %p113 = pnand %p111, %p112
    %p114 = pneg %p113
    // Predicated region
    $region9: #{modulated_multiview_cond.20} parent=5 // pred_check
      _
    $region10: #{modulated_multiview_cond.20} parent=5 // pred_check_branch
      %116 = sbr.rel (%p113) target = $region12
    $region11: #{modulated_multiview_cond.20} parent=5 // pred_region
      %s117 = ssub.s32 %s9, 1
      // Predicated region
      $region13: #{modulated_multiview_cond.20} parent=11 // pred_check
        %p118 = pneg %p56
      $region14: #{modulated_multiview_cond.20} parent=11 // pred_check_branch
        %120 = sbr.rel (%p118) target = $region16
      $region15: #{modulated_multiview_cond.20} parent=11 // pred_region
        _
      $region16: #{modulated_multiview_cond.20} parent=11 // pred_fallthru
        _
      // Predicated region
      $region17: #{modulated_multiview_cond.20} parent=11 // pred_check
        %p121 = pneg %p77
      $region18: #{modulated_multiview_cond.20} parent=11 // pred_check_branch
        %123 = sbr.rel (%p121) target = $region20
      $region19: #{modulated_multiview_cond.20} parent=11 // pred_region
        _
      $region20: #{modulated_multiview_cond.20} parent=11 // pred_fallthru
        _
    $region12: #{modulated_multiview_cond.20} parent=5 // pred_fallthru
      _
    %p124 = scmp.lt.s32.totalorder %s9, 2
    // Predicated region
    $region21: #{modulated_multiview_cond.20} parent=5 // pred_check
      %p125 = pneg %p124
    $region22: #{modulated_multiview_cond.20} parent=5 // pred_check_branch
      %127 = sbr.rel (%p125) target = $region24
    $region23: #{modulated_multiview_cond.20} parent=5 // pred_region
      // Predicated region
      $region25: #{modulated_multiview_cond.20} parent=23 // pred_check
        %p128 = pneg %p29
      $region26: #{modulated_multiview_cond.20} parent=23 // pred_check_branch
        %130 = sbr.rel (%p128) target = $region28
      $region27: #{modulated_multiview_cond.20} parent=23 // pred_region
        %s131 = smul.u32 8, %s9
        %p132 = scmp.lt.s32.totalorder %s131, 15
        %s133 = scalar_select %p132, %s131, 15
        %s134 = smul.addr %s133, 8
        %s135 = scalar_lea.vmem %s0, %s134
        %s136 = smul.u32 8, %s9
      $region28: #{modulated_multiview_cond.20} parent=23 // pred_fallthru
        _
    $region24: #{modulated_multiview_cond.20} parent=5 // pred_fallthru
      _
    %p137 = scmp.le.s32.totalorder 1, %s9
    %p138 = scmp.lt.s32.totalorder %s9, 3
    %p139 = pnand %p137, %p138
    %p140 = pneg %p139
    // Predicated region
    $region29: #{modulated_multiview_cond.20} parent=5 // pred_check
      _
    $region30: #{modulated_multiview_cond.20} parent=5 // pred_check_branch
      %142 = sbr.rel (%p139) target = $region32
    $region31: #{modulated_multiview_cond.20} parent=5 // pred_region
      %s143 = ssub.s32 %s9, 1
      %s144 = smul.u32 8, %s14
      %p145 = scmp.lt.s32.totalorder %s144, 15
      %s146 = scalar_select %p145, %s144, 15
      %s147 = smul.addr %s146, 8
      %s148 = scalar_lea.vmem %s0, %s147
      %p149 = pneg %p35
      %p150 = pneg %p32
      %p151 = pneg %p56
      %p152 = pneg %p53
      %p153 = pneg %p77
      %p154 = pneg %p74
      %p155 = pneg %p103
      %p156 = pneg %p100
      %s157 = smul.u32 8, %s14
      %p158 = scmp.lt.s32.totalorder %s157, 15
      %s159 = scalar_select %p158, %s157, 15
      %s160 = smul.addr %s159, 2
      %s161 = smul.addr %s160, 4
      %s162 = scalar_lea.vmem %s3, %s161
      %s163 = smul.u32 8, %s14
      %p164 = scmp.lt.s32.totalorder %s163, 15
      %s165 = scalar_select %p164, %s163, 15
      %s166 = smul.addr %s165, 8
      %s167 = scalar_lea.vmem %s0, %s166
      %s168 = smul.u32 8, %s14
      %s169 = smul.u32 8, %s14
      %p170 = scmp.lt.s32.totalorder %s169, 15
      %s171 = scalar_select %p170, %s169, 15
      %s172 = smul.addr %s171, 2
      %s173 = smul.addr %s172, 4
      %s174 = scalar_lea.vmem %s3, %s173
      %s175 = smul.u32 8, %s14
      %v177 = vld [vmem:[%s167] sm:$0xff]
      %v178 = vld [vmem:[%s167 + $0x8] sm:$0xff]
      %v179 = vld [vmem:[%s167 + $0x10] sm:$0xff]
      %v180 = vld [vmem:[%s167 + $0x18] sm:$0xff]
      %v181 = vld [vmem:[%s167 + $0x20] sm:$0xff]
      %v182 = vld [vmem:[%s167 + $0x28] sm:$0xff]
      %v183 = vld [vmem:[%s167 + $0x30] sm:$0xff]
      %v184 = vld [vmem:[%s167 + $0x38] sm:$0xff]
      %vm185 = vcmask 523264
      %v186 = vsel %vm185, %v177, 0.0
      %187 = vadd.xlane.f32.xlu0 %v186
      %v188 = vpop.xlane.xlu0 %187
      %v189 = vsel %vm185, %v178, 0.0
      %190 = vadd.xlane.f32.xlu0 %v189
      %v191 = vpop.xlane.xlu0 %190
      %v192 = vsel %vm185, %v179, 0.0
      %193 = vadd.xlane.f32.xlu0 %v192
      %v194 = vpop.xlane.xlu0 %193
      %v195 = vsel %vm185, %v180, 0.0
      %196 = vadd.xlane.f32.xlu0 %v195
      %v197 = vpop.xlane.xlu0 %196
      %v198 = vsel %vm185, %v181, 0.0
      %199 = vadd.xlane.f32.xlu0 %v198
      %v200 = vpop.xlane.xlu0 %199
      %v201 = vsel %vm185, %v182, 0.0
      %202 = vadd.xlane.f32.xlu0 %v201
      %v203 = vpop.xlane.xlu0 %202
      %v204 = vsel %vm185, %v183, 0.0
      %205 = vadd.xlane.f32.xlu0 %v204
      %v206 = vpop.xlane.xlu0 %205
      %v207 = vsel %vm185, %v184, 0.0
      %208 = vadd.xlane.f32.xlu0 %v207
      %v209 = vpop.xlane.xlu0 %208
      %v210 = vrcp.pop 64.0
      %v211 = vmul.f32 %v188, %v210
      %v212 = vmul.f32 %v191, %v210
      %v213 = vmul.f32 %v194, %v210
      %v214 = vmul.f32 %v197, %v210
      %v215 = vmul.f32 %v200, %v210
      %v216 = vmul.f32 %v203, %v210
      %v217 = vmul.f32 %v206, %v210
      %v218 = vmul.f32 %v209, %v210
      %v219 = vsub.f32 %v177, %v211
      %v220 = vsub.f32 %v178, %v212
      %v221 = vsub.f32 %v179, %v213
      %v222 = vsub.f32 %v180, %v214
      %v223 = vsub.f32 %v181, %v215
      %v224 = vsub.f32 %v182, %v216
      %v225 = vsub.f32 %v183, %v217
      %v226 = vsub.f32 %v184, %v218
      %v227 = vmul.f32 %v219, %v219
      %v228 = vmul.f32 %v220, %v220
      %v229 = vmul.f32 %v221, %v221
      %v230 = vmul.f32 %v222, %v222
      %v231 = vmul.f32 %v223, %v223
      %v232 = vmul.f32 %v224, %v224
      %v233 = vmul.f32 %v225, %v225
      %v234 = vmul.f32 %v226, %v226
      %v235 = vsel %vm185, %v227, 0.0
      %236 = vadd.xlane.f32.xlu0 %v235
      %v237 = vpop.xlane.xlu0 %236
      %v238 = vsel %vm185, %v228, 0.0
      %239 = vadd.xlane.f32.xlu0 %v238
      %v240 = vpop.xlane.xlu0 %239
      %v241 = vsel %vm185, %v229, 0.0
      %242 = vadd.xlane.f32.xlu0 %v241
      %v243 = vpop.xlane.xlu0 %242
      %v244 = vsel %vm185, %v230, 0.0
      %245 = vadd.xlane.f32.xlu0 %v244
      %v246 = vpop.xlane.xlu0 %245
      %v247 = vsel %vm185, %v231, 0.0
      %248 = vadd.xlane.f32.xlu0 %v247
      %v249 = vpop.xlane.xlu0 %248
      %v250 = vsel %vm185, %v232, 0.0
      %251 = vadd.xlane.f32.xlu0 %v250
      %v252 = vpop.xlane.xlu0 %251
      %v253 = vsel %vm185, %v233, 0.0
      %254 = vadd.xlane.f32.xlu0 %v253
      %v255 = vpop.xlane.xlu0 %254
      %v256 = vsel %vm185, %v234, 0.0
      %257 = vadd.xlane.f32.xlu0 %v256
      %v258 = vpop.xlane.xlu0 %257
      %v259 = vmul.f32 %v237, %v210
      %v260 = vmul.f32 %v240, %v210
      %v261 = vmul.f32 %v243, %v210
      %v262 = vmul.f32 %v246, %v210
      %v263 = vmul.f32 %v249, %v210
      %v264 = vmul.f32 %v252, %v210
      %v265 = vmul.f32 %v255, %v210
      %v266 = vmul.f32 %v258, %v210
      %v267 = vadd.f32 %v259, 1e-06
      %v268 = vadd.f32 %v260, 1e-06
      %v269 = vadd.f32 %v261, 1e-06
      %v270 = vadd.f32 %v262, 1e-06
      %v271 = vadd.f32 %v263, 1e-06
      %v272 = vadd.f32 %v264, 1e-06
      %v273 = vadd.f32 %v265, 1e-06
      %v274 = vadd.f32 %v266, 1e-06
      %v275 = vrsqrt.pop %v267
      %v276 = vrsqrt.pop %v268
      %v277 = vrsqrt.pop %v269
      %v278 = vrsqrt.pop %v270
      %v279 = vrsqrt.pop %v271
      %v280 = vrsqrt.pop %v272
      %v281 = vrsqrt.pop %v273
      %v282 = vrsqrt.pop %v274
      %v283 = vmul.f32 %v219, %v275
      %v284 = vmul.f32 %v220, %v276
      %v285 = vmul.f32 %v221, %v277
      %v286 = vmul.f32 %v222, %v278
      %v287 = vmul.f32 %v223, %v279
      %v288 = vmul.f32 %v224, %v280
      %v289 = vmul.f32 %v225, %v281
      %v290 = vmul.f32 %v226, %v282
      %v291 = vpack.c.bf16 %v284, %v283
      %v292 = vpack.c.bf16 %v286, %v285
      %v293 = vpack.c.bf16 %v288, %v287
      %v294 = vpack.c.bf16 %v290, %v289
      %v295 = vld [vmem:[%s1] sm:$0xff]
      %v296 = vld [vmem:[%s1 + $0x8] sm:$0xff]
      %v297 = vld [vmem:[%s1 + $0x10] sm:$0xff]
      %v298 = vld [vmem:[%s1 + $0x18] sm:$0xff]
      %v299 = vld [vmem:[%s1 + $0x20] sm:$0xff]
      %v300 = vld [vmem:[%s1 + $0x28] sm:$0xff]
      %v301 = vld [vmem:[%s1 + $0x30] sm:$0xff]
      %v302 = vld [vmem:[%s1 + $0x38] sm:$0xff]
      %v303 = vld [vmem:[%s2] sm:$0x3]
      %v305 = vlaneseq
      %v306 = vshrl.u32 %v305, 7
      %v307 = vsub.s32 0, %v306
      %v308 = vrot.slane %v303, %v307
      %v309 = vlaneseq
      %v310 = vshrl.u32 %v309, 7
      %v311 = vsub.s32 1, %v310
      %v312 = vrot.slane %v303, %v311
      %v323 = vunpack.c.l.b16 %v295
      %v324 = vunpack.c.h.b16 %v295
      %v325 = vunpack.c.l.b16 %v296
      %v326 = vunpack.c.h.b16 %v296
      %v327 = vunpack.c.l.b16 %v297
      %v328 = vunpack.c.h.b16 %v297
      %v329 = vunpack.c.l.b16 %v298
      %v330 = vunpack.c.h.b16 %v298
      %v331 = vunpack.c.l.b16 %v299
      %v332 = vunpack.c.h.b16 %v299
      %v333 = vunpack.c.l.b16 %v300
      %v334 = vunpack.c.h.b16 %v300
      %v335 = vunpack.c.l.b16 %v301
      %v336 = vunpack.c.h.b16 %v301
      %v337 = vunpack.c.l.b16 %v302
      %v338 = vunpack.c.h.b16 %v302
      %v339 = vpack.c.b16 %v325, %v323
      %v340 = vpack.c.b16 %v326, %v324
      %v341 = vpack.c.b16 %v329, %v327
      %v342 = vpack.c.b16 %v330, %v328
      %v343 = vpack.c.b16 %v333, %v331
      %v344 = vpack.c.b16 %v334, %v332
      %v345 = vpack.c.b16 %v337, %v335
      %v346 = vpack.c.b16 %v338, %v336
      %v356 = vsel %vm185, %v291, 0
      %v359 = vsel %vm185, %v292, 0
      %v362 = vsel %vm185, %v293, 0
      %v365 = vsel %vm185, %v294, 0
      %367 = vmatprep.subr.bf16.mxu0 %v340
      %368 = vmatpush1.bf16.msra.mxu0 %v339
      %369 = vmatprep.subr.bf16.mxu0 %v342
      %370 = vmatpush1.bf16.msra.mxu0 %v341
      %371 = vmatprep.subr.bf16.mxu0 %v344
      %372 = vmatpush1.bf16.msra.mxu0 %v343
      %373 = vmatprep.subr.bf16.mxu0 %v346
      %374 = vmatpush1.bf16.msra.mxu0 %v345
      %375 = vmatprep.subr.bf16.mxu0 0
      %376 = vmatpush1.bf16.msra.mxu0 0
      %377 = vmatprep.subr.bf16.mxu0 0
      %378 = vmatpush1.bf16.msra.mxu0 0
      %379 = vmatprep.subr.bf16.mxu0 0
      %380 = vmatpush1.bf16.msra.mxu0 0
      %381 = vmatprep.subr.bf16.mxu0 0
      %382 = vmatpush1.bf16.msra.mxu0 0
      %383 = vmatprep.subr.bf16.mxu0 0
      %384 = vmatpush1.bf16.msra.mxu0 0
      %385 = vmatprep.subr.bf16.mxu0 0
      %386 = vmatpush1.bf16.msra.mxu0 0
      %387 = vmatprep.subr.bf16.mxu0 0
      %388 = vmatpush1.bf16.msra.mxu0 0
      %389 = vmatprep.subr.bf16.mxu0 0
      %390 = vmatpush1.bf16.msra.mxu0 0
      %391 = vmatprep.subr.bf16.mxu0 0
      %392 = vmatpush1.bf16.msra.mxu0 0
      %393 = vmatprep.subr.bf16.mxu0 0
      %394 = vmatpush1.bf16.msra.mxu0 0
      %395 = vmatprep.subr.bf16.mxu0 0
      %396 = vmatpush1.bf16.msra.mxu0 0
      %397 = vmatprep.subr.bf16.mxu0 0
      %398 = vmatpush1.bf16.msra.mxu0 0
      %399 = vmatprep.mubr.bf16.mxu0 0
      %400 = vmatmul.mubr.bf16.gmra.mrb[0].mxu0 %v356
      %v401 = vpop.f32.mrb[0].mxu0
      %v402 = vadd.f32 %v308, %v401
      %v403 = vpop.f32.mrb[0].mxu0
      %v404 = vadd.f32 %v312, %v403
      %v405 = vpop.f32.mrb[0].mxu0
      %v406 = vadd.f32 %v308, %v405
      %v407 = vpop.f32.mrb[0].mxu0
      %v408 = vadd.f32 %v312, %v407
      %409 = vmatprep.mubr.bf16.mxu0 0
      %410 = vmatmul.mubr.bf16.gmra.mrb[0].mxu0 %v359
      %v411 = vpop.f32.mrb[0].mxu0
      %v412 = vadd.f32 %v308, %v411
      %v413 = vpop.f32.mrb[0].mxu0
      %v414 = vadd.f32 %v312, %v413
      %v415 = vpop.f32.mrb[0].mxu0
      %v416 = vadd.f32 %v308, %v415
      %v417 = vpop.f32.mrb[0].mxu0
      %v418 = vadd.f32 %v312, %v417
      %419 = vmatprep.mubr.bf16.mxu0 0
      %420 = vmatmul.mubr.bf16.gmra.mrb[0].mxu0 %v362
      %v421 = vpop.f32.mrb[0].mxu0
      %v422 = vadd.f32 %v308, %v421
      %v423 = vpop.f32.mrb[0].mxu0
      %v424 = vadd.f32 %v312, %v423
      %v425 = vpop.f32.mrb[0].mxu0
      %v426 = vadd.f32 %v308, %v425
      %v427 = vpop.f32.mrb[0].mxu0
      %v428 = vadd.f32 %v312, %v427
      %429 = vmatprep.mubr.bf16.mxu0 0
      %430 = vmatmul.mubr.bf16.gmra.mrb[0].mxu0 %v365
      %v431 = vpop.f32.mrb[0].mxu0
      %v432 = vadd.f32 %v308, %v431
      %v433 = vpop.f32.mrb[0].mxu0
      %v434 = vadd.f32 %v312, %v433
      %v435 = vpop.f32.mrb[0].mxu0
      %v436 = vadd.f32 %v308, %v435
      %v437 = vpop.f32.mrb[0].mxu0
      %v438 = vadd.f32 %v312, %v437
      %439 = vdwg.mxu0
      %v440 = vpack.c.bf16 %v406, %v402
      %v441 = vpack.c.bf16 %v408, %v404
      %v442 = vpack.c.bf16 %v416, %v412
      %v443 = vpack.c.bf16 %v418, %v414
      %v444 = vpack.c.bf16 %v426, %v422
      %v445 = vpack.c.bf16 %v428, %v424
      %v446 = vpack.c.bf16 %v436, %v432
      %v447 = vpack.c.bf16 %v438, %v434
      %v456 = vunpack.c.l.b16 %v440
      %v457 = vunpack.c.l.b16 %v441
      %v458 = vunpack.c.h.b16 %v440
      %v459 = vunpack.c.h.b16 %v441
      %v460 = vunpack.c.l.b16 %v442
      %v461 = vunpack.c.l.b16 %v443
      %v462 = vunpack.c.h.b16 %v442
      %v463 = vunpack.c.h.b16 %v443
      %v464 = vunpack.c.l.b16 %v444
      %v465 = vunpack.c.l.b16 %v445
      %v466 = vunpack.c.h.b16 %v444
      %v467 = vunpack.c.h.b16 %v445
      %v468 = vunpack.c.l.b16 %v446
      %v469 = vunpack.c.l.b16 %v447
      %v470 = vunpack.c.h.b16 %v446
      %v471 = vunpack.c.h.b16 %v447
      %v472 = vpack.c.b16 %v457, %v456
      %v473 = vpack.c.b16 %v459, %v458
      %v474 = vpack.c.b16 %v461, %v460
      %v475 = vpack.c.b16 %v463, %v462
      %v476 = vpack.c.b16 %v465, %v464
      %v477 = vpack.c.b16 %v467, %v466
      %v478 = vpack.c.b16 %v469, %v468
      %v479 = vpack.c.b16 %v471, %v470
      %vm488 = vcmask 1043456
      %vm489 = vcmask 523268
      %vm490 = vmor %vm489, %vm488
      %491 = vst.msk [vmem:[%s174] sm:$0xff] %vm490, %v472
      %492 = vst.msk [vmem:[%s174 + $0x8] sm:$0xff] %vm490, %v473
      %493 = vst.msk [vmem:[%s174 + $0x10] sm:$0xff] %vm490, %v474
      %494 = vst.msk [vmem:[%s174 + $0x18] sm:$0xff] %vm490, %v475
      %495 = vst.msk [vmem:[%s174 + $0x20] sm:$0xff] %vm490, %v476
      %496 = vst.msk [vmem:[%s174 + $0x28] sm:$0xff] %vm490, %v477
      %497 = vst.msk [vmem:[%s174 + $0x30] sm:$0xff] %vm490, %v478
      %498 = vst.msk [vmem:[%s174 + $0x38] sm:$0xff] %vm490, %v479
      %s499 = smul.u32 8, %s14
      %p500 = scmp.lt.s32.totalorder %s499, 15
      %s501 = scalar_select %p500, %s499, 15
      %s502 = smul.addr %s501, 2
      %s503 = smul.addr %s502, 4
      %s504 = scalar_lea.vmem %s3, %s503
      // Predicated region
      $region33: #{modulated_multiview_cond.20} parent=31 // pred_check
        %p505 = pneg %p100
      $region34: #{modulated_multiview_cond.20} parent=31 // pred_check_branch
        %507 = sbr.rel (%p505) target = $region36
      $region35: #{modulated_multiview_cond.20} parent=31 // pred_region
        %s508 = smul.u32 8, %s14
      $region36: #{modulated_multiview_cond.20} parent=31 // pred_fallthru
        _
    $region32: #{modulated_multiview_cond.20} parent=5 // pred_fallthru
      _
    %p509 = scmp.le.s32.totalorder 2, %s9
    // Predicated region
    $region37: #{modulated_multiview_cond.20} parent=5 // pred_check
      %p510 = pneg %p509
    $region38: #{modulated_multiview_cond.20} parent=5 // pred_check_branch
      %512 = sbr.rel (%p510) target = $region40
    $region39: #{modulated_multiview_cond.20} parent=5 // pred_region
      %s513 = ssub.s32 %s9, 2
      // Predicated region
      $region41: #{modulated_multiview_cond.20} parent=39 // pred_check
        %p514 = pneg %p106
      $region42: #{modulated_multiview_cond.20} parent=39 // pred_check_branch
        %516 = sbr.rel (%p514) target = $region44
      $region43: #{modulated_multiview_cond.20} parent=39 // pred_region
        %s517 = smul.u32 8, %s15
        %p518 = scmp.lt.s32.totalorder %s517, 15
        %s519 = scalar_select %p518, %s517, 15
        %s520 = smul.addr %s519, 2
        %s521 = smul.addr %s520, 4
        %s522 = scalar_lea.vmem %s3, %s521
      $region44: #{modulated_multiview_cond.20} parent=39 // pred_fallthru
        _
    $region40: #{modulated_multiview_cond.20} parent=5 // pred_fallthru
      _
  $region6: #{modulated_multiview_cond.20} parent=0 // loop_footer
    %s13 = sadd.s32 1, %s9
  $region7: #{modulated_multiview_cond.20} parent=0 // loop_footer_branch
    %8 = sbr.rel target = $region3
  $region8: #{modulated_multiview_cond.20} parent=0 // loop_exit
    _

// kernel: modulated_multiview_cond.21
$region0: #{modulated_multiview_cond.21}
  #allocation0 [shape = 'u32[]', space=smem, size = 0x4, offset = 0x4, fixed_abs, tag = 'smem constant byte address 0x4 - core index']
  #allocation1 [shape = 'u32[144,128]{1,0:T(1,128)}', space=vmem, size = 0x12000, scoped, tag = 'internal scratch']
  %s0 = inlined_call_operand.vmem [shape: bf16[2,64,192], index: 0, kind: input, shape index: {}, may-alias: {0,1}]
  %s1 = inlined_call_operand.vmem [shape: bf16[2,64,192], index: 1, kind: input, shape index: {}, may-alias: {0,1}]
  %s2 = inlined_call_operand.vmem [shape: f32[2,64,64], index: 2, kind: input, shape index: {}]
  %s3 = inlined_call_operand.vmem [shape: bf16[64,64], index: 3, kind: input, shape index: {}]
  %s4 = inlined_call_operand.vmem [shape: f32[1,64], index: 4, kind: input, shape index: {}]
  %s5 = inlined_call_operand.vmem [shape: bf16[64,64], index: 5, kind: input, shape index: {}]
  %s6 = inlined_call_operand.vmem [shape: f32[1,64], index: 6, kind: input, shape index: {}]
  %s7 = inlined_call_operand.vmem [shape: f32[2,64,64], index: 7, kind: output, shape index: {0}]
  %s8 = inlined_call_operand.vmem [shape: bf16[2,64,64], index: 8, kind: output, shape index: {1}]
  %9 = xla_tuple %s7, %s8
  %s10 = sld [smem:[#allocation0]]
  $region69: #{modulated_multiview_cond.21} parent=0
    _
  %s12 = ssub.s32 1, %s10
  %s13 = scalar_select 0, %s12, %s10
  loop: start=0, step=1, limit=4
  $region2: #{modulated_multiview_cond.21} parent=0 // loop_pre_header
    _
  $region3: #{modulated_multiview_cond.21} parent=0 // loop_header
    %s15 = sphi 0, %s19
    %p16 = scmp.ge.s32.totalorder %s15, 4
    %s22 = sphi 0, %s34
    %s23 = sphi 0, %s30
    %s24 = sphi 0, %s22
    %s25 = sphi 0, %s23
    %s26 = sphi 0, %s24
    %s27 = sphi 0, %s25
    %s39 = sphi 0, %s41
    %s42 = sphi 0, %s39
    %s43 = sphi 0, %s42
    %s59 = sphi 0, %s43
    %s65 = sphi 0, %s67
    %s68 = sphi 0, %s65
    %s69 = sphi 0, %s68
    %s85 = sphi 0, %s69
    %s93 = sphi 0, %s95
    %s96 = sphi 0, %s93
    %s97 = sphi 0, %s96
    %s113 = sphi 0, %s97
    %s117 = sphi 0, %s117
    %s119 = sphi 0, %s117
    %s120 = sphi 0, %s119
    %s134 = sphi 0, %s120
    %s138 = sphi 0, %s138
    %s140 = sphi 0, %s138
    %s141 = sphi 0, %s140
    %s155 = sphi 0, %s141
    %s159 = sphi 0, %s159
    %s161 = sphi 0, %s159
    %s162 = sphi 0, %s161
    %s176 = sphi 0, %s162
    %s180 = sphi 0, %s180
    %s182 = sphi 0, %s180
    %s183 = sphi 0, %s182
    %s197 = sphi 0, %s183
    %s205 = sphi 0, %s207
    %s208 = sphi 0, %s205
    %s209 = sphi 0, %s208
    %s225 = sphi 0, %s209
    %s233 = sphi 0, %s235
    %s236 = sphi 0, %s233
    %s237 = sphi 0, %s236
    %s253 = sphi 0, %s237
  $region4: #{modulated_multiview_cond.21} parent=0 // loop_header_branch
    %18 = sbr.rel (%p16) target = $region8
  $region5: #{modulated_multiview_cond.21} parent=0 // loop_body
    %s20 = ssub.s32 %s15, 1
    %s21 = ssub.s32 %s15, 2
    %s28 = sadd.s32 1, %s23
    %p29 = scmp.ge.s32.totalorder %s28, 1
    %s30 = scalar_select %p29, 0, %s28
    %s31 = sadd.s32 1, %s22
    %s32 = scalar_select %p29, %s31, %s22
    %p33 = scmp.ge.s32.totalorder %s32, 2
    %s34 = scalar_select %p33, 0, %s32
    %s35 = ssub.s32 %s22, %s34
    %s36 = ssub.s32 %s23, %s30
    %s37 = sor.u32 %s35, %s36
    %p38 = scmp.eq.s32.totalorder %s37, 0
    %s40 = sadd.s32 %s39, 1
    %s41 = scalar_select %p38, %s39, %s40
    %p44 = pneg %p38
    %p45 = scmp.eq.s32.totalorder %s15, 1
    %p46 = por %p44, %p45
    %p47 = scmp.ne.s32.totalorder %s39, %s42
    %p48 = scmp.eq.s32.totalorder %s15, 0
    %p49 = por %p47, %p48
    %p50 = scmp.ne.s32.totalorder %s39, %s42
    %p51 = scmp.eq.s32.totalorder %s20, 1
    %p52 = por %p50, %p51
    %p53 = scmp.ne.s32.totalorder %s42, %s43
    %p54 = scmp.eq.s32.totalorder %s20, 0
    %p55 = por %p53, %p54
    %p56 = scmp.ne.s32.totalorder %s42, %s43
    %p57 = scmp.eq.s32.totalorder %s21, 1
    %p58 = por %p56, %p57
    %p60 = scmp.ne.s32.totalorder %s43, %s59
    %p61 = scmp.eq.s32.totalorder %s21, 0
    %p62 = por %p60, %p61
    %s63 = ssub.s32 %s22, %s34
    %p64 = scmp.eq.s32.totalorder %s63, 0
    %s66 = sadd.s32 %s65, 1
    %s67 = scalar_select %p64, %s65, %s66
    %p70 = pneg %p64
    %p71 = scmp.eq.s32.totalorder %s15, 1
    %p72 = por %p70, %p71
    %p73 = scmp.ne.s32.totalorder %s65, %s68
    %p74 = scmp.eq.s32.totalorder %s15, 0
    %p75 = por %p73, %p74
    %p76 = scmp.ne.s32.totalorder %s65, %s68
    %p77 = scmp.eq.s32.totalorder %s20, 1
    %p78 = por %p76, %p77
    %p79 = scmp.ne.s32.totalorder %s68, %s69
    %p80 = scmp.eq.s32.totalorder %s20, 0
    %p81 = por %p79, %p80
    %p82 = scmp.ne.s32.totalorder %s68, %s69
    %p83 = scmp.eq.s32.totalorder %s21, 1
    %p84 = por %p82, %p83
    %p86 = scmp.ne.s32.totalorder %s69, %s85
    %p87 = scmp.eq.s32.totalorder %s21, 0
    %p88 = por %p86, %p87
    %s89 = ssub.s32 %s22, %s34
    %s90 = ssub.s32 %s23, %s30
    %s91 = sor.u32 %s89, %s90
    %p92 = scmp.eq.s32.totalorder %s91, 0
    %s94 = sadd.s32 %s93, 1
    %s95 = scalar_select %p92, %s93, %s94
    %p98 = pneg %p92
    %p99 = scmp.eq.s32.totalorder %s15, 1
    %p100 = por %p98, %p99
    %p101 = scmp.ne.s32.totalorder %s93, %s96
    %p102 = scmp.eq.s32.totalorder %s15, 0
    %p103 = por %p101, %p102
    %p104 = scmp.ne.s32.totalorder %s93, %s96
    %p105 = scmp.eq.s32.totalorder %s20, 1
    %p106 = por %p104, %p105
    %p107 = scmp.ne.s32.totalorder %s96, %s97
    %p108 = scmp.eq.s32.totalorder %s20, 0
    %p109 = por %p107, %p108
    %p110 = scmp.ne.s32.totalorder %s96, %s97
    %p111 = scmp.eq.s32.totalorder %s21, 1
    %p112 = por %p110, %p111
    %p114 = scmp.ne.s32.totalorder %s97, %s113
    %p115 = scmp.eq.s32.totalorder %s21, 0
    %p116 = por %p114, %p115
    %s118 = sadd.s32 %s117, 1
    %p121 = scmp.eq.s32.totalorder %s15, 1
    %p122 = scmp.ne.s32.totalorder %s117, %s119
    %p123 = scmp.eq.s32.totalorder %s15, 0
    %p124 = por %p122, %p123
    %p125 = scmp.ne.s32.totalorder %s117, %s119
    %p126 = scmp.eq.s32.totalorder %s20, 1
    %p127 = por %p125, %p126
    %p128 = scmp.ne.s32.totalorder %s119, %s120
    %p129 = scmp.eq.s32.totalorder %s20, 0
    %p130 = por %p128, %p129
    %p131 = scmp.ne.s32.totalorder %s119, %s120
    %p132 = scmp.eq.s32.totalorder %s21, 1
    %p133 = por %p131, %p132
    %p135 = scmp.ne.s32.totalorder %s120, %s134
    %p136 = scmp.eq.s32.totalorder %s21, 0
    %p137 = por %p135, %p136
    %s139 = sadd.s32 %s138, 1
    %p142 = scmp.eq.s32.totalorder %s15, 1
    %p143 = scmp.ne.s32.totalorder %s138, %s140
    %p144 = scmp.eq.s32.totalorder %s15, 0
    %p145 = por %p143, %p144
    %p146 = scmp.ne.s32.totalorder %s138, %s140
    %p147 = scmp.eq.s32.totalorder %s20, 1
    %p148 = por %p146, %p147
    %p149 = scmp.ne.s32.totalorder %s140, %s141
    %p150 = scmp.eq.s32.totalorder %s20, 0
    %p151 = por %p149, %p150
    %p152 = scmp.ne.s32.totalorder %s140, %s141
    %p153 = scmp.eq.s32.totalorder %s21, 1
    %p154 = por %p152, %p153
    %p156 = scmp.ne.s32.totalorder %s141, %s155
    %p157 = scmp.eq.s32.totalorder %s21, 0
    %p158 = por %p156, %p157
    %s160 = sadd.s32 %s159, 1
    %p163 = scmp.eq.s32.totalorder %s15, 1
    %p164 = scmp.ne.s32.totalorder %s159, %s161
    %p165 = scmp.eq.s32.totalorder %s15, 0
    %p166 = por %p164, %p165
    %p167 = scmp.ne.s32.totalorder %s159, %s161
    %p168 = scmp.eq.s32.totalorder %s20, 1
    %p169 = por %p167, %p168
    %p170 = scmp.ne.s32.totalorder %s161, %s162
    %p171 = scmp.eq.s32.totalorder %s20, 0
    %p172 = por %p170, %p171
    %p173 = scmp.ne.s32.totalorder %s161, %s162
    %p174 = scmp.eq.s32.totalorder %s21, 1
    %p175 = por %p173, %p174
    %p177 = scmp.ne.s32.totalorder %s162, %s176
    %p178 = scmp.eq.s32.totalorder %s21, 0
    %p179 = por %p177, %p178
    %s181 = sadd.s32 %s180, 1
    %p184 = scmp.eq.s32.totalorder %s15, 1
    %p185 = scmp.ne.s32.totalorder %s180, %s182
    %p186 = scmp.eq.s32.totalorder %s15, 0
    %p187 = por %p185, %p186
    %p188 = scmp.ne.s32.totalorder %s180, %s182
    %p189 = scmp.eq.s32.totalorder %s20, 1
    %p190 = por %p188, %p189
    %p191 = scmp.ne.s32.totalorder %s182, %s183
    %p192 = scmp.eq.s32.totalorder %s20, 0
    %p193 = por %p191, %p192
    %p194 = scmp.ne.s32.totalorder %s182, %s183
    %p195 = scmp.eq.s32.totalorder %s21, 1
    %p196 = por %p194, %p195
    %p198 = scmp.ne.s32.totalorder %s183, %s197
    %p199 = scmp.eq.s32.totalorder %s21, 0
    %p200 = por %p198, %p199
    %s201 = ssub.s32 %s22, %s34
    %s202 = ssub.s32 %s23, %s30
    %s203 = sor.u32 %s201, %s202
    %p204 = scmp.eq.s32.totalorder %s203, 0
    %s206 = sadd.s32 %s205, 1
    %s207 = scalar_select %p204, %s205, %s206
    %p210 = pneg %p204
    %p211 = scmp.eq.s32.totalorder %s15, 1
    %p212 = por %p210, %p211
    %p213 = scmp.ne.s32.totalorder %s205, %s208
    %p214 = scmp.eq.s32.totalorder %s15, 0
    %p215 = por %p213, %p214
    %p216 = scmp.ne.s32.totalorder %s205, %s208
    %p217 = scmp.eq.s32.totalorder %s20, 1
    %p218 = por %p216, %p217
    %p219 = scmp.ne.s32.totalorder %s208, %s209
    %p220 = scmp.eq.s32.totalorder %s20, 0
    %p221 = por %p219, %p220
    %p222 = scmp.ne.s32.totalorder %s208, %s209
    %p223 = scmp.eq.s32.totalorder %s21, 1
    %p224 = por %p222, %p223
    %p226 = scmp.ne.s32.totalorder %s209, %s225
    %p227 = scmp.eq.s32.totalorder %s21, 0
    %p228 = por %p226, %p227
    %s229 = ssub.s32 %s22, %s34
    %s230 = ssub.s32 %s23, %s30
    %s231 = sor.u32 %s229, %s230
    %p232 = scmp.eq.s32.totalorder %s231, 0
    %s234 = sadd.s32 %s233, 1
    %s235 = scalar_select %p232, %s233, %s234
    %p238 = pneg %p232
    %p239 = scmp.eq.s32.totalorder %s15, 1
    %p240 = por %p238, %p239
    %p241 = scmp.ne.s32.totalorder %s233, %s236
    %p242 = scmp.eq.s32.totalorder %s15, 0
    %p243 = por %p241, %p242
    %p244 = scmp.ne.s32.totalorder %s233, %s236
    %p245 = scmp.eq.s32.totalorder %s20, 1
    %p246 = por %p244, %p245
    %p247 = scmp.ne.s32.totalorder %s236, %s237
    %p248 = scmp.eq.s32.totalorder %s20, 0
    %p249 = por %p247, %p248
    %p250 = scmp.ne.s32.totalorder %s236, %s237
    %p251 = scmp.eq.s32.totalorder %s21, 1
    %p252 = por %p250, %p251
    %p254 = scmp.ne.s32.totalorder %s237, %s253
    %p255 = scmp.eq.s32.totalorder %s21, 0
    %p256 = por %p254, %p255
    %p257 = scmp.le.s32.totalorder 1, %s15
    %p258 = scmp.lt.s32.totalorder %s15, 3
    %p259 = pnand %p257, %p258
    %p260 = pneg %p259
    // Predicated region
    $region9: #{modulated_multiview_cond.21} parent=5 // pred_check
      _
    $region10: #{modulated_multiview_cond.21} parent=5 // pred_check_branch
      %262 = sbr.rel (%p259) target = $region12
    $region11: #{modulated_multiview_cond.21} parent=5 // pred_region
      %s263 = ssub.s32 %s15, 1
      // Predicated region
      $region13: #{modulated_multiview_cond.21} parent=11 // pred_check
        %p264 = pneg %p130
      $region14: #{modulated_multiview_cond.21} parent=11 // pred_check_branch
        %266 = sbr.rel (%p264) target = $region16
      $region15: #{modulated_multiview_cond.21} parent=11 // pred_region
        _
      $region16: #{modulated_multiview_cond.21} parent=11 // pred_fallthru
        _
      // Predicated region
      $region17: #{modulated_multiview_cond.21} parent=11 // pred_check
        %p267 = pneg %p151
      $region18: #{modulated_multiview_cond.21} parent=11 // pred_check_branch
        %269 = sbr.rel (%p267) target = $region20
      $region19: #{modulated_multiview_cond.21} parent=11 // pred_region
        _
      $region20: #{modulated_multiview_cond.21} parent=11 // pred_fallthru
        _
      // Predicated region
      $region21: #{modulated_multiview_cond.21} parent=11 // pred_check
        %p270 = pneg %p172
      $region22: #{modulated_multiview_cond.21} parent=11 // pred_check_branch
        %272 = sbr.rel (%p270) target = $region24
      $region23: #{modulated_multiview_cond.21} parent=11 // pred_region
        _
      $region24: #{modulated_multiview_cond.21} parent=11 // pred_fallthru
        _
      // Predicated region
      $region25: #{modulated_multiview_cond.21} parent=11 // pred_check
        %p273 = pneg %p193
      $region26: #{modulated_multiview_cond.21} parent=11 // pred_check_branch
        %275 = sbr.rel (%p273) target = $region28
      $region27: #{modulated_multiview_cond.21} parent=11 // pred_region
        _
      $region28: #{modulated_multiview_cond.21} parent=11 // pred_fallthru
        _
    $region12: #{modulated_multiview_cond.21} parent=5 // pred_fallthru
      _
    %p276 = scmp.lt.s32.totalorder %s15, 2
    // Predicated region
    $region29: #{modulated_multiview_cond.21} parent=5 // pred_check
      %p277 = pneg %p276
    $region30: #{modulated_multiview_cond.21} parent=5 // pred_check_branch
      %279 = sbr.rel (%p277) target = $region32
    $region31: #{modulated_multiview_cond.21} parent=5 // pred_region
      // Predicated region
      $region33: #{modulated_multiview_cond.21} parent=31 // pred_check
        %p280 = pneg %p49
      $region34: #{modulated_multiview_cond.21} parent=31 // pred_check_branch
        %282 = sbr.rel (%p280) target = $region36
      $region35: #{modulated_multiview_cond.21} parent=31 // pred_region
        %s283 = smul.u32 8, %s23
        %p284 = scmp.lt.s32.totalorder %s22, 1
        %s285 = scalar_select %p284, %s22, 1
        %p286 = scmp.lt.s32.totalorder %s283, 7
        %s287 = scalar_select %p286, %s283, 7
        %s288 = smul.addr %s287, 2
        %s289 = smul.addr %s285, 16
        %s290 = sadd.s32 %s288, %s289
        %s291 = smul.addr %s290, 4
        %s292 = scalar_lea.vmem %s0, %s291
        %s293 = smul.u32 8, %s23
      $region36: #{modulated_multiview_cond.21} parent=31 // pred_fallthru
        _
      // Predicated region
      $region37: #{modulated_multiview_cond.21} parent=31 // pred_check
        %p294 = pneg %p75
      $region38: #{modulated_multiview_cond.21} parent=31 // pred_check_branch
        %296 = sbr.rel (%p294) target = $region40
      $region39: #{modulated_multiview_cond.21} parent=31 // pred_region
        %p297 = scmp.lt.s32.totalorder %s22, 1
        %s298 = scalar_select %p297, %s22, 1
        %s299 = smul.addr %s298, 16
        %s300 = smul.addr %s299, 4
        %s301 = scalar_lea.vmem %s1, %s300
      $region40: #{modulated_multiview_cond.21} parent=31 // pred_fallthru
        _
      // Predicated region
      $region41: #{modulated_multiview_cond.21} parent=31 // pred_check
        %p302 = pneg %p103
      $region42: #{modulated_multiview_cond.21} parent=31 // pred_check_branch
        %304 = sbr.rel (%p302) target = $region44
      $region43: #{modulated_multiview_cond.21} parent=31 // pred_region
        %s305 = smul.u32 8, %s23
        %p306 = scmp.lt.s32.totalorder %s22, 1
        %s307 = scalar_select %p306, %s22, 1
        %p308 = scmp.lt.s32.totalorder %s305, 7
        %s309 = scalar_select %p308, %s305, 7
        %s310 = smul.addr %s307, 8
        %s311 = sadd.s32 %s309, %s310
        %s312 = smul.addr %s311, 8
        %s313 = scalar_lea.vmem %s2, %s312
        %s314 = smul.u32 8, %s23
      $region44: #{modulated_multiview_cond.21} parent=31 // pred_fallthru
        _
    $region32: #{modulated_multiview_cond.21} parent=5 // pred_fallthru
      _
    %p315 = scmp.le.s32.totalorder 1, %s15
    %p316 = scmp.lt.s32.totalorder %s15, 3
    %p317 = pnand %p315, %p316
    %p318 = pneg %p317
    // Predicated region
    $region45: #{modulated_multiview_cond.21} parent=5 // pred_check
      _
    $region46: #{modulated_multiview_cond.21} parent=5 // pred_check_branch
      %320 = sbr.rel (%p317) target = $region48
    $region47: #{modulated_multiview_cond.21} parent=5 // pred_region
      %s321 = ssub.s32 %s15, 1
      %s322 = smul.u32 8, %s25
      %p323 = scmp.lt.s32.totalorder %s24, 1
      %s324 = scalar_select %p323, %s24, 1
      %p325 = scmp.lt.s32.totalorder %s322, 7
      %s326 = scalar_select %p325, %s322, 7
      %s327 = smul.addr %s326, 2
      %s328 = smul.addr %s324, 16
      %s329 = sadd.s32 %s327, %s328
      %s330 = smul.addr %s329, 4
      %s331 = scalar_lea.vmem %s0, %s330
      %p332 = pneg %p55
      %p333 = pneg %p52
      %p334 = scmp.lt.s32.totalorder %s24, 1
      %s335 = scalar_select %p334, %s24, 1
      %s336 = smul.addr %s335, 16
      %s337 = smul.addr %s336, 4
      %s338 = scalar_lea.vmem %s1, %s337
      %p339 = pneg %p81
      %p340 = pneg %p78
      %s341 = smul.u32 8, %s25
      %p342 = scmp.lt.s32.totalorder %s24, 1
      %s343 = scalar_select %p342, %s24, 1
      %p344 = scmp.lt.s32.totalorder %s341, 7
      %s345 = scalar_select %p344, %s341, 7
      %s346 = smul.addr %s343, 8
      %s347 = sadd.s32 %s345, %s346
      %s348 = smul.addr %s347, 8
      %s349 = scalar_lea.vmem %s2, %s348
      %p350 = pneg %p109
      %p351 = pneg %p106
      %p352 = pneg %p130
      %p353 = pneg %p127
      %p354 = pneg %p151
      %p355 = pneg %p148
      %p356 = pneg %p172
      %p357 = pneg %p169
      %p358 = pneg %p193
      %p359 = pneg %p190
      %p360 = pneg %p221
      %p361 = pneg %p218
      %s362 = smul.u32 8, %s25
      %p363 = scmp.lt.s32.totalorder %s24, 1
      %s364 = scalar_select %p363, %s24, 1
      %p365 = scmp.lt.s32.totalorder %s362, 7
      %s366 = scalar_select %p365, %s362, 7
      %s367 = smul.addr %s364, 8
      %s368 = sadd.s32 %s366, %s367
      %s369 = smul.addr %s368, 8
      %s370 = scalar_lea.vmem %s7, %s369
      %p371 = pneg %p249
      %p372 = pneg %p246
      %s373 = smul.u32 8, %s25
      %p374 = scmp.lt.s32.totalorder %s24, 1
      %s375 = scalar_select %p374, %s24, 1
      %p376 = scmp.lt.s32.totalorder %s373, 7
      %s377 = scalar_select %p376, %s373, 7
      %s378 = smul.addr %s375, 8
      %s379 = sadd.s32 %s377, %s378
      %s380 = smul.addr %s379, 4
      %s381 = scalar_lea.vmem %s8, %s380
      %s382 = smul.u32 8, %s25
      %p383 = scmp.lt.s32.totalorder %s24, 1
      %s384 = scalar_select %p383, %s24, 1
      %p385 = scmp.lt.s32.totalorder %s382, 7
      %s386 = scalar_select %p385, %s382, 7
      %s387 = smul.addr %s386, 2
      %s388 = smul.addr %s384, 16
      %s389 = sadd.s32 %s387, %s388
      %s390 = smul.addr %s389, 4
      %s391 = scalar_lea.vmem %s0, %s390
      %s392 = smul.u32 8, %s25
      %p393 = scmp.lt.s32.totalorder %s24, 1
      %s394 = scalar_select %p393, %s24, 1
      %s395 = smul.addr %s394, 16
      %s396 = smul.addr %s395, 4
      %s397 = scalar_lea.vmem %s1, %s396
      %s398 = smul.u32 8, %s25
      %p399 = scmp.lt.s32.totalorder %s24, 1
      %s400 = scalar_select %p399, %s24, 1
      %p401 = scmp.lt.s32.totalorder %s398, 7
      %s402 = scalar_select %p401, %s398, 7
      %s403 = smul.addr %s400, 8
      %s404 = sadd.s32 %s402, %s403
      %s405 = smul.addr %s404, 8
      %s406 = scalar_lea.vmem %s2, %s405
      %s407 = smul.u32 8, %s25
      %s408 = smul.u32 8, %s25
      %p409 = scmp.lt.s32.totalorder %s24, 1
      %s410 = scalar_select %p409, %s24, 1
      %p411 = scmp.lt.s32.totalorder %s408, 7
      %s412 = scalar_select %p411, %s408, 7
      %s413 = smul.addr %s410, 8
      %s414 = sadd.s32 %s412, %s413
      %s415 = smul.addr %s414, 8
      %s416 = scalar_lea.vmem %s7, %s415
      %s417 = smul.u32 8, %s25
      %s418 = smul.u32 8, %s25
      %p419 = scmp.lt.s32.totalorder %s24, 1
      %s420 = scalar_select %p419, %s24, 1
      %p421 = scmp.lt.s32.totalorder %s418, 7
      %s422 = scalar_select %p421, %s418, 7
      %s423 = smul.addr %s420, 8
      %s424 = sadd.s32 %s422, %s423
      %s425 = smul.addr %s424, 4
      %s426 = scalar_lea.vmem %s8, %s425
      %s427 = smul.u32 8, %s25
      %v429 = vld [vmem:[%s391] sm:$0xff]
      %v430 = vld [vmem:[%s391 + $0x8] sm:$0xff]
      %v431 = vld [vmem:[%s391 + $0x10] sm:$0xff]
      %v432 = vld [vmem:[%s391 + $0x18] sm:$0xff]
      %v433 = vld [vmem:[%s391 + $0x20] sm:$0xff]
      %v434 = vld [vmem:[%s391 + $0x28] sm:$0xff]
      %v435 = vld [vmem:[%s391 + $0x30] sm:$0xff]
      %v436 = vld [vmem:[%s391 + $0x38] sm:$0xff]
      %v437 = vld [vmem:[%s397] sm:$0xff]
      %v438 = vld [vmem:[%s397 + $0x8] sm:$0xff]
      %v439 = vld [vmem:[%s397 + $0x10] sm:$0xff]
      %v440 = vld [vmem:[%s397 + $0x18] sm:$0xff]
      %v441 = vld [vmem:[%s397 + $0x20] sm:$0xff]
      %v442 = vld [vmem:[%s397 + $0x28] sm:$0xff]
      %v443 = vld [vmem:[%s397 + $0x30] sm:$0xff]
      %v444 = vld [vmem:[%s397 + $0x38] sm:$0xff]
      %v453 = vunpack.c.l.b16 %v429
      %v454 = vunpack.c.l.b16 %v430
      %v455 = vunpack.c.l.b16 %v431
      %v456 = vunpack.c.l.b16 %v432
      %v457 = vunpack.c.l.b16 %v433
      %v458 = vunpack.c.l.b16 %v434
      %v459 = vunpack.c.l.b16 %v435
      %v460 = vunpack.c.l.b16 %v436
      %v461 = vpack.c.b16 %v454, %v453
      %v462 = vpack.c.b16 %v456, %v455
      %v463 = vpack.c.b16 %v458, %v457
      %v464 = vpack.c.b16 %v460, %v459
      %v473 = vunpack.c.l.b16 %v437
      %v474 = vunpack.c.l.b16 %v438
      %v475 = vunpack.c.l.b16 %v439
      %v476 = vunpack.c.l.b16 %v440
      %v477 = vunpack.c.l.b16 %v441
      %v478 = vunpack.c.l.b16 %v442
      %v479 = vunpack.c.l.b16 %v443
      %v480 = vunpack.c.l.b16 %v444
      %v481 = vpack.c.b16 %v474, %v473
      %v482 = vpack.c.b16 %v476, %v475
      %v483 = vpack.c.b16 %v478, %v477
      %v484 = vpack.c.b16 %v480, %v479
      %485 = vrot.lane.b32.xlu0 %v481, 64
      %v486 = vpop.permute.xlu0 %485
      %487 = vrot.lane.b32.xlu0 %v482, 64
      %v488 = vpop.permute.xlu0 %487
      %489 = vrot.lane.b32.xlu0 %v483, 64
      %v490 = vpop.permute.xlu0 %489
      %491 = vrot.lane.b32.xlu0 %v484, 64
      %v492 = vpop.permute.xlu0 %491
      %vm493 = vcmask 130048
      %v495 = vsel %vm493, %v461, 0
      %v498 = vsel %vm493, %v462, 0
      %v501 = vsel %vm493, %v463, 0
      %v504 = vsel %vm493, %v464, 0
      %v507 = vsel %vm493, %v486, 0
      %v510 = vsel %vm493, %v488, 0
      %v513 = vsel %vm493, %v490, 0
      %v516 = vsel %vm493, %v492, 0
      %518 = vmatprep.subr.bf16.mxu0 0
      %519 = vmatpush1.bf16.xpose.msra.mxu0 %v507
      %520 = vmatprep.subr.bf16.mxu0 0
      %521 = vmatpush1.bf16.xpose.msra.mxu0 %v510
      %522 = vmatprep.subr.bf16.mxu0 0
      %523 = vmatpush1.bf16.xpose.msra.mxu0 %v513
      %524 = vmatprep.subr.bf16.mxu0 0
      %525 = vmatpush1.bf16.xpose.msra.mxu0 %v516
      %526 = vmatprep.subr.bf16.mxu0 0
      %527 = vmatpush1.bf16.xpose.msra.mxu0 0
      %528 = vmatprep.subr.bf16.mxu0 0
      %529 = vmatpush1.bf16.xpose.msra.mxu0 0
      %530 = vmatprep.subr.bf16.mxu0 0
      %531 = vmatpush1.bf16.xpose.msra.mxu0 0
      %532 = vmatprep.subr.bf16.mxu0 0
      %533 = vmatpush1.bf16.xpose.msra.mxu0 0
      %534 = vmatprep.subr.bf16.mxu0 0
      %535 = vmatpush1.bf16.xpose.msra.mxu0 0
      %536 = vmatprep.subr.bf16.mxu0 0
      %537 = vmatpush1.bf16.xpose.msra.mxu0 0
      %538 = vmatprep.subr.bf16.mxu0 0
      %539 = vmatpush1.bf16.xpose.msra.mxu0 0
      %540 = vmatprep.subr.bf16.mxu0 0
      %541 = vmatpush1.bf16.xpose.msra.mxu0 0
      %542 = vmatprep.subr.bf16.mxu0 0
      %543 = vmatpush1.bf16.xpose.msra.mxu0 0
      %544 = vmatprep.subr.bf16.mxu0 0
      %545 = vmatpush1.bf16.xpose.msra.mxu0 0
      %546 = vmatprep.subr.bf16.mxu0 0
      %547 = vmatpush1.bf16.xpose.msra.mxu0 0
      %548 = vmatprep.subr.bf16.mxu0 0
      %549 = vmatpush1.bf16.xpose.msra.mxu0 0
      %550 = vmatprep.mubr.bf16.mxu0 0
      %551 = vmatmul.mubr.bf16.gmra.mrb[0].mxu0 %v495
      %v552 = vpop.f32.mrb[0].mxu0
      %v553 = vadd.f32 0.0, %v552
      %v554 = vpop.f32.mrb[0].mxu0
      %v555 = vpop.f32.mrb[0].mxu0
      %v556 = vadd.f32 0.0, %v555
      %v557 = vpop.f32.mrb[0].mxu0
      %558 = vmatprep.mubr.bf16.mxu0 0
      %559 = vmatmul.mubr.bf16.gmra.mrb[0].mxu0 %v498
      %v560 = vpop.f32.mrb[0].mxu0
      %v561 = vadd.f32 0.0, %v560
      %v562 = vpop.f32.mrb[0].mxu0
      %v563 = vpop.f32.mrb[0].mxu0
      %v564 = vadd.f32 0.0, %v563
      %v565 = vpop.f32.mrb[0].mxu0
      %566 = vmatprep.mubr.bf16.mxu0 0
      %567 = vmatmul.mubr.bf16.gmra.mrb[0].mxu0 %v501
      %v568 = vpop.f32.mrb[0].mxu0
      %v569 = vadd.f32 0.0, %v568
      %v570 = vpop.f32.mrb[0].mxu0
      %v571 = vpop.f32.mrb[0].mxu0
      %v572 = vadd.f32 0.0, %v571
      %v573 = vpop.f32.mrb[0].mxu0
      %574 = vmatprep.mubr.bf16.mxu0 0
      %575 = vmatmul.mubr.bf16.gmra.mrb[0].mxu0 %v504
      %v576 = vpop.f32.mrb[0].mxu0
      %v577 = vadd.f32 0.0, %v576
      %v578 = vpop.f32.mrb[0].mxu0
      %v579 = vpop.f32.mrb[0].mxu0
      %v580 = vadd.f32 0.0, %v579
      %v581 = vpop.f32.mrb[0].mxu0
      %582 = vdwg.mxu0
      %v583 = vmul.f32 %v553, 0.25
      %v584 = vmul.f32 %v556, 0.25
      %v585 = vmul.f32 %v561, 0.25
      %v586 = vmul.f32 %v564, 0.25
      %v587 = vmul.f32 %v569, 0.25
      %v588 = vmul.f32 %v572, 0.25
      %v589 = vmul.f32 %v577, 0.25
      %v590 = vmul.f32 %v580, 0.25
      %vm591 = vcmask 523264
      %v592 = vsel %vm591, %v583, -inf
      %593 = vmax.xlane.f32.xlu0 %v592
      %v594 = vpop.xlane.xlu0 %593
      %v595 = vsel %vm591, %v584, -inf
      %596 = vmax.xlane.f32.xlu0 %v595
      %v597 = vpop.xlane.xlu0 %596
      %v598 = vsel %vm591, %v585, -inf
      %599 = vmax.xlane.f32.xlu0 %v598
      %v600 = vpop.xlane.xlu0 %599
      %v601 = vsel %vm591, %v586, -inf
      %602 = vmax.xlane.f32.xlu0 %v601
      %v603 = vpop.xlane.xlu0 %602
      %v604 = vsel %vm591, %v587, -inf
      %605 = vmax.xlane.f32.xlu0 %v604
      %v606 = vpop.xlane.xlu0 %605
      %v607 = vsel %vm591, %v588, -inf
      %608 = vmax.xlane.f32.xlu0 %v607
      %v609 = vpop.xlane.xlu0 %608
      %v610 = vsel %vm591, %v589, -inf
      %611 = vmax.xlane.f32.xlu0 %v610
      %v612 = vpop.xlane.xlu0 %611
      %v613 = vsel %vm591, %v590, -inf
      %614 = vmax.xlane.f32.xlu0 %v613
      %v615 = vpop.xlane.xlu0 %614
      %v616 = vsub.f32 %v583, %v594
      %v617 = vsub.f32 %v584, %v597
      %v618 = vsub.f32 %v585, %v600
      %v619 = vsub.f32 %v586, %v603
      %v620 = vsub.f32 %v587, %v606
      %v621 = vsub.f32 %v588, %v609
      %v622 = vsub.f32 %v589, %v612
      %v623 = vsub.f32 %v590, %v615
      %v624 = vmul.f32 %v616, 1.442695
      %v625 = vpow.pop %v624
      %v626 = vmul.f32 %v617, 1.442695
      %v627 = vpow.pop %v626
      %v628 = vmul.f32 %v618, 1.442695
      %v629 = vpow.pop %v628
      %v630 = vmul.f32 %v619, 1.442695
      %v631 = vpow.pop %v630
      %v632 = vmul.f32 %v620, 1.442695
      %v633 = vpow.pop %v632
      %v634 = vmul.f32 %v621, 1.442695
      %v635 = vpow.pop %v634
      %v636 = vmul.f32 %v622, 1.442695
      %v637 = vpow.pop %v636
      %v638 = vmul.f32 %v623, 1.442695
      %v639 = vpow.pop %v638
      %v640 = vsel %vm591, %v625, 0.0
      %641 = vadd.xlane.f32.xlu0 %v640
      %v642 = vpop.xlane.xlu0 %641
      %v643 = vsel %vm591, %v627, 0.0
      %644 = vadd.xlane.f32.xlu0 %v643
      %v645 = vpop.xlane.xlu0 %644
      %v646 = vsel %vm591, %v629, 0.0
      %647 = vadd.xlane.f32.xlu0 %v646
      %v648 = vpop.xlane.xlu0 %647
      %v649 = vsel %vm591, %v631, 0.0
      %650 = vadd.xlane.f32.xlu0 %v649
      %v651 = vpop.xlane.xlu0 %650
      %v652 = vsel %vm591, %v633, 0.0
      %653 = vadd.xlane.f32.xlu0 %v652
      %v654 = vpop.xlane.xlu0 %653
      %v655 = vsel %vm591, %v635, 0.0
      %656 = vadd.xlane.f32.xlu0 %v655
      %v657 = vpop.xlane.xlu0 %656
      %v658 = vsel %vm591, %v637, 0.0
      %659 = vadd.xlane.f32.xlu0 %v658
      %v660 = vpop.xlane.xlu0 %659
      %v661 = vsel %vm591, %v639, 0.0
      %662 = vadd.xlane.f32.xlu0 %v661
      %v663 = vpop.xlane.xlu0 %662
      %v664 = vpack.c.bf16 %v627, %v625
      %v665 = vpack.c.bf16 %v631, %v629
      %v666 = vpack.c.bf16 %v635, %v633
      %v667 = vpack.c.bf16 %v639, %v637
      %v668 = vunpack.c.h.b16 %v437
      %v669 = vunpack.c.h.b16 %v438
      %v670 = vunpack.c.h.b16 %v439
      %v671 = vunpack.c.h.b16 %v440
      %v672 = vunpack.c.h.b16 %v441
      %v673 = vunpack.c.h.b16 %v442
      %v674 = vunpack.c.h.b16 %v443
      %v675 = vunpack.c.h.b16 %v444
      %v676 = vpack.c.b16 %v669, %v668
      %v677 = vpack.c.b16 %v671, %v670
      %v678 = vpack.c.b16 %v673, %v672
      %v679 = vpack.c.b16 %v675, %v674
      %v685 = vsel %vm591, %v664, 0
      %v688 = vsel %vm591, %v665, 0
      %v691 = vsel %vm591, %v666, 0
      %v694 = vsel %vm591, %v667, 0
      %696 = vmatprep.subr.bf16.mxu0 0
      %697 = vmatpush1.bf16.msra.mxu0 %v676
      %698 = vmatprep.subr.bf16.mxu0 0
      %699 = vmatpush1.bf16.msra.mxu0 %v677
      %700 = vmatprep.subr.bf16.mxu0 0
      %701 = vmatpush1.bf16.msra.mxu0 %v678
      %702 = vmatprep.subr.bf16.mxu0 0
      %703 = vmatpush1.bf16.msra.mxu0 %v679
      %704 = vmatprep.subr.bf16.mxu0 0
      %705 = vmatpush1.bf16.msra.mxu0 0
      %706 = vmatprep.subr.bf16.mxu0 0
      %707 = vmatpush1.bf16.msra.mxu0 0
      %708 = vmatprep.subr.bf16.mxu0 0
      %709 = vmatpush1.bf16.msra.mxu0 0
      %710 = vmatprep.subr.bf16.mxu0 0
      %711 = vmatpush1.bf16.msra.mxu0 0
      %712 = vmatprep.subr.bf16.mxu0 0
      %713 = vmatpush1.bf16.msra.mxu0 0
      %714 = vmatprep.subr.bf16.mxu0 0
      %715 = vmatpush1.bf16.msra.mxu0 0
      %716 = vmatprep.subr.bf16.mxu0 0
      %717 = vmatpush1.bf16.msra.mxu0 0
      %718 = vmatprep.subr.bf16.mxu0 0
      %719 = vmatpush1.bf16.msra.mxu0 0
      %720 = vmatprep.subr.bf16.mxu0 0
      %721 = vmatpush1.bf16.msra.mxu0 0
      %722 = vmatprep.subr.bf16.mxu0 0
      %723 = vmatpush1.bf16.msra.mxu0 0
      %724 = vmatprep.subr.bf16.mxu0 0
      %725 = vmatpush1.bf16.msra.mxu0 0
      %726 = vmatprep.subr.bf16.mxu0 0
      %727 = vmatpush1.bf16.msra.mxu0 0
      %728 = vmatprep.mubr.bf16.mxu0 0
      %729 = vmatmul.mubr.bf16.gmra.mrb[0].mxu0 %v685
      %v730 = vpop.f32.mrb[0].mxu0
      %v731 = vadd.f32 0.0, %v730
      %v732 = vpop.f32.mrb[0].mxu0
      %v733 = vpop.f32.mrb[0].mxu0
      %v734 = vadd.f32 0.0, %v733
      %v735 = vpop.f32.mrb[0].mxu0
      %736 = vmatprep.mubr.bf16.mxu0 0
      %737 = vmatmul.mubr.bf16.gmra.mrb[0].mxu0 %v688
      %v738 = vpop.f32.mrb[0].mxu0
      %v739 = vadd.f32 0.0, %v738
      %v740 = vpop.f32.mrb[0].mxu0
      %v741 = vpop.f32.mrb[0].mxu0
      %v742 = vadd.f32 0.0, %v741
      %v743 = vpop.f32.mrb[0].mxu0
      %744 = vmatprep.mubr.bf16.mxu0 0
      %745 = vmatmul.mubr.bf16.gmra.mrb[0].mxu0 %v691
      %v746 = vpop.f32.mrb[0].mxu0
      %v747 = vadd.f32 0.0, %v746
      %v748 = vpop.f32.mrb[0].mxu0
      %v749 = vpop.f32.mrb[0].mxu0
      %v750 = vadd.f32 0.0, %v749
      %v751 = vpop.f32.mrb[0].mxu0
      %752 = vmatprep.mubr.bf16.mxu0 0
      %753 = vmatmul.mubr.bf16.gmra.mrb[0].mxu0 %v694
      %v754 = vpop.f32.mrb[0].mxu0
      %v755 = vadd.f32 0.0, %v754
      %v756 = vpop.f32.mrb[0].mxu0
      %v757 = vpop.f32.mrb[0].mxu0
      %v758 = vadd.f32 0.0, %v757
      %v759 = vpop.f32.mrb[0].mxu0
      %760 = vdwg.mxu0
      %v761 = vrcp.pop %v642
      %v762 = vmul.f32 %v731, %v761
      %v763 = vrcp.pop %v645
      %v764 = vmul.f32 %v734, %v763
      %v765 = vrcp.pop %v648
      %v766 = vmul.f32 %v739, %v765
      %v767 = vrcp.pop %v651
      %v768 = vmul.f32 %v742, %v767
      %v769 = vrcp.pop %v654
      %v770 = vmul.f32 %v747, %v769
      %v771 = vrcp.pop %v657
      %v772 = vmul.f32 %v750, %v771
      %v773 = vrcp.pop %v660
      %v774 = vmul.f32 %v755, %v773
      %v775 = vrcp.pop %v663
      %v776 = vmul.f32 %v758, %v775
      %777 = vrot.lane.b32.xlu0 %v461, 112
      %v778 = vpop.permute.xlu0 %777
      %779 = vrot.lane.b32.xlu0 %v462, 112
      %v780 = vpop.permute.xlu0 %779
      %781 = vrot.lane.b32.xlu0 %v463, 112
      %v782 = vpop.permute.xlu0 %781
      %783 = vrot.lane.b32.xlu0 %v464, 112
      %v784 = vpop.permute.xlu0 %783
      %785 = vrot.lane.b32.xlu0 %v481, 48
      %v786 = vpop.permute.xlu0 %785
      %787 = vrot.lane.b32.xlu0 %v482, 48
      %v788 = vpop.permute.xlu0 %787
      %789 = vrot.lane.b32.xlu0 %v483, 48
      %v790 = vpop.permute.xlu0 %789
      %791 = vrot.lane.b32.xlu0 %v484, 48
      %v792 = vpop.permute.xlu0 %791
      %v794 = vsel %vm493, %v778, 0
      %v797 = vsel %vm493, %v780, 0
      %v800 = vsel %vm493, %v782, 0
      %v803 = vsel %vm493, %v784, 0
      %v806 = vsel %vm493, %v786, 0
      %v809 = vsel %vm493, %v788, 0
      %v812 = vsel %vm493, %v790, 0
      %v815 = vsel %vm493, %v792, 0
      %817 = vmatprep.subr.bf16.mxu0 0
      %818 = vmatpush1.bf16.xpose.msra.mxu0 %v806
      %819 = vmatprep.subr.bf16.mxu0 0
      %820 = vmatpush1.bf16.xpose.msra.mxu0 %v809
      %821 = vmatprep.subr.bf16.mxu0 0
      %822 = vmatpush1.bf16.xpose.msra.mxu0 %v812
      %823 = vmatprep.subr.bf16.mxu0 0
      %824 = vmatpush1.bf16.xpose.msra.mxu0 %v815
      %825 = vmatprep.subr.bf16.mxu0 0
      %826 = vmatpush1.bf16.xpose.msra.mxu0 0
      %827 = vmatprep.subr.bf16.mxu0 0
      %828 = vmatpush1.bf16.xpose.msra.mxu0 0
      %829 = vmatprep.subr.bf16.mxu0 0
      %830 = vmatpush1.bf16.xpose.msra.mxu0 0
      %831 = vmatprep.subr.bf16.mxu0 0
      %832 = vmatpush1.bf16.xpose.msra.mxu0 0
      %833 = vmatprep.subr.bf16.mxu0 0
      %834 = vmatpush1.bf16.xpose.msra.mxu0 0
      %835 = vmatprep.subr.bf16.mxu0 0
      %836 = vmatpush1.bf16.xpose.msra.mxu0 0
      %837 = vmatprep.subr.bf16.mxu0 0
      %838 = vmatpush1.bf16.xpose.msra.mxu0 0
      %839 = vmatprep.subr.bf16.mxu0 0
      %840 = vmatpush1.bf16.xpose.msra.mxu0 0
      %841 = vmatprep.subr.bf16.mxu0 0
      %842 = vmatpush1.bf16.xpose.msra.mxu0 0
      %843 = vmatprep.subr.bf16.mxu0 0
      %844 = vmatpush1.bf16.xpose.msra.mxu0 0
      %845 = vmatprep.subr.bf16.mxu0 0
      %846 = vmatpush1.bf16.xpose.msra.mxu0 0
      %847 = vmatprep.subr.bf16.mxu0 0
      %848 = vmatpush1.bf16.xpose.msra.mxu0 0
      %849 = vmatprep.mubr.bf16.mxu0 0
      %850 = vmatmul.mubr.bf16.gmra.mrb[0].mxu0 %v794
      %v851 = vpop.f32.mrb[0].mxu0
      %v852 = vadd.f32 0.0, %v851
      %v853 = vpop.f32.mrb[0].mxu0
      %v854 = vpop.f32.mrb[0].mxu0
      %v855 = vadd.f32 0.0, %v854
      %v856 = vpop.f32.mrb[0].mxu0
      %857 = vmatprep.mubr.bf16.mxu0 0
      %858 = vmatmul.mubr.bf16.gmra.mrb[0].mxu0 %v797
      %v859 = vpop.f32.mrb[0].mxu0
      %v860 = vadd.f32 0.0, %v859
      %v861 = vpop.f32.mrb[0].mxu0
      %v862 = vpop.f32.mrb[0].mxu0
      %v863 = vadd.f32 0.0, %v862
      %v864 = vpop.f32.mrb[0].mxu0
      %865 = vmatprep.mubr.bf16.mxu0 0
      %866 = vmatmul.mubr.bf16.gmra.mrb[0].mxu0 %v800
      %v867 = vpop.f32.mrb[0].mxu0
      %v868 = vadd.f32 0.0, %v867
      %v869 = vpop.f32.mrb[0].mxu0
      %v870 = vpop.f32.mrb[0].mxu0
      %v871 = vadd.f32 0.0, %v870
      %v872 = vpop.f32.mrb[0].mxu0
      %873 = vmatprep.mubr.bf16.mxu0 0
      %874 = vmatmul.mubr.bf16.gmra.mrb[0].mxu0 %v803
      %v875 = vpop.f32.mrb[0].mxu0
      %v876 = vadd.f32 0.0, %v875
      %v877 = vpop.f32.mrb[0].mxu0
      %v878 = vpop.f32.mrb[0].mxu0
      %v879 = vadd.f32 0.0, %v878
      %v880 = vpop.f32.mrb[0].mxu0
      %881 = vdwg.mxu0
      %v882 = vmul.f32 %v852, 0.25
      %v883 = vmul.f32 %v855, 0.25
      %v884 = vmul.f32 %v860, 0.25
      %v885 = vmul.f32 %v863, 0.25
      %v886 = vmul.f32 %v868, 0.25
      %v887 = vmul.f32 %v871, 0.25
      %v888 = vmul.f32 %v876, 0.25
      %v889 = vmul.f32 %v879, 0.25
      %v890 = vsel %vm591, %v882, -inf
      %891 = vmax.xlane.f32.xlu0 %v890
      %v892 = vpop.xlane.xlu0 %891
      %v893 = vsel %vm591, %v883, -inf
      %894 = vmax.xlane.f32.xlu0 %v893
      %v895 = vpop.xlane.xlu0 %894
      %v896 = vsel %vm591, %v884, -inf
      %897 = vmax.xlane.f32.xlu0 %v896
      %v898 = vpop.xlane.xlu0 %897
      %v899 = vsel %vm591, %v885, -inf
      %900 = vmax.xlane.f32.xlu0 %v899
      %v901 = vpop.xlane.xlu0 %900
      %v902 = vsel %vm591, %v886, -inf
      %903 = vmax.xlane.f32.xlu0 %v902
      %v904 = vpop.xlane.xlu0 %903
      %v905 = vsel %vm591, %v887, -inf
      %906 = vmax.xlane.f32.xlu0 %v905
      %v907 = vpop.xlane.xlu0 %906
      %v908 = vsel %vm591, %v888, -inf
      %909 = vmax.xlane.f32.xlu0 %v908
      %v910 = vpop.xlane.xlu0 %909
      %v911 = vsel %vm591, %v889, -inf
      %912 = vmax.xlane.f32.xlu0 %v911
      %v913 = vpop.xlane.xlu0 %912
      %v914 = vsub.f32 %v882, %v892
      %v915 = vsub.f32 %v883, %v895
      %v916 = vsub.f32 %v884, %v898
      %v917 = vsub.f32 %v885, %v901
      %v918 = vsub.f32 %v886, %v904
      %v919 = vsub.f32 %v887, %v907
      %v920 = vsub.f32 %v888, %v910
      %v921 = vsub.f32 %v889, %v913
      %v922 = vmul.f32 %v914, 1.442695
      %v923 = vpow.pop %v922
      %v924 = vmul.f32 %v915, 1.442695
      %v925 = vpow.pop %v924
      %v926 = vmul.f32 %v916, 1.442695
      %v927 = vpow.pop %v926
      %v928 = vmul.f32 %v917, 1.442695
      %v929 = vpow.pop %v928
      %v930 = vmul.f32 %v918, 1.442695
      %v931 = vpow.pop %v930
      %v932 = vmul.f32 %v919, 1.442695
      %v933 = vpow.pop %v932
      %v934 = vmul.f32 %v920, 1.442695
      %v935 = vpow.pop %v934
      %v936 = vmul.f32 %v921, 1.442695
      %v937 = vpow.pop %v936
      %v938 = vsel %vm591, %v923, 0.0
      %939 = vadd.xlane.f32.xlu0 %v938
      %v940 = vpop.xlane.xlu0 %939
      %v941 = vsel %vm591, %v925, 0.0
      %942 = vadd.xlane.f32.xlu0 %v941
      %v943 = vpop.xlane.xlu0 %942
      %v944 = vsel %vm591, %v927, 0.0
      %945 = vadd.xlane.f32.xlu0 %v944
      %v946 = vpop.xlane.xlu0 %945
      %v947 = vsel %vm591, %v929, 0.0
      %948 = vadd.xlane.f32.xlu0 %v947
      %v949 = vpop.xlane.xlu0 %948
      %v950 = vsel %vm591, %v931, 0.0
      %951 = vadd.xlane.f32.xlu0 %v950
      %v952 = vpop.xlane.xlu0 %951
      %v953 = vsel %vm591, %v933, 0.0
      %954 = vadd.xlane.f32.xlu0 %v953
      %v955 = vpop.xlane.xlu0 %954
      %v956 = vsel %vm591, %v935, 0.0
      %957 = vadd.xlane.f32.xlu0 %v956
      %v958 = vpop.xlane.xlu0 %957
      %v959 = vsel %vm591, %v937, 0.0
      %960 = vadd.xlane.f32.xlu0 %v959
      %v961 = vpop.xlane.xlu0 %960
      %v962 = vpack.c.bf16 %v925, %v923
      %v963 = vpack.c.bf16 %v929, %v927
      %v964 = vpack.c.bf16 %v933, %v931
      %v965 = vpack.c.bf16 %v937, %v935
      %966 = vrot.lane.b32.xlu0 %v676, 112
      %v967 = vpop.permute.xlu0 %966
      %968 = vrot.lane.b32.xlu0 %v677, 112
      %v969 = vpop.permute.xlu0 %968
      %970 = vrot.lane.b32.xlu0 %v678, 112
      %v971 = vpop.permute.xlu0 %970
      %972 = vrot.lane.b32.xlu0 %v679, 112
      %v973 = vpop.permute.xlu0 %972
      %v979 = vsel %vm591, %v962, 0
      %v982 = vsel %vm591, %v963, 0
      %v985 = vsel %vm591, %v964, 0
      %v988 = vsel %vm591, %v965, 0
      %990 = vmatprep.subr.bf16.mxu0 0
      %991 = vmatpush1.bf16.msra.mxu0 %v967
      %992 = vmatprep.subr.bf16.mxu0 0
      %993 = vmatpush1.bf16.msra.mxu0 %v969
      %994 = vmatprep.subr.bf16.mxu0 0
      %995 = vmatpush1.bf16.msra.mxu0 %v971
      %996 = vmatprep.subr.bf16.mxu0 0
      %997 = vmatpush1.bf16.msra.mxu0 %v973
      %998 = vmatprep.subr.bf16.mxu0 0
      %999 = vmatpush1.bf16.msra.mxu0 0
      %1000 = vmatprep.subr.bf16.mxu0 0
      %1001 = vmatpush1.bf16.msra.mxu0 0
      %1002 = vmatprep.subr.bf16.mxu0 0
      %1003 = vmatpush1.bf16.msra.mxu0 0
      %1004 = vmatprep.subr.bf16.mxu0 0
      %1005 = vmatpush1.bf16.msra.mxu0 0
      %1006 = vmatprep.subr.bf16.mxu0 0
      %1007 = vmatpush1.bf16.msra.mxu0 0
      %1008 = vmatprep.subr.bf16.mxu0 0
      %1009 = vmatpush1.bf16.msra.mxu0 0
      %1010 = vmatprep.subr.bf16.mxu0 0
      %1011 = vmatpush1.bf16.msra.mxu0 0
      %1012 = vmatprep.subr.bf16.mxu0 0
      %1013 = vmatpush1.bf16.msra.mxu0 0
      %1014 = vmatprep.subr.bf16.mxu0 0
      %1015 = vmatpush1.bf16.msra.mxu0 0
      %1016 = vmatprep.subr.bf16.mxu0 0
      %1017 = vmatpush1.bf16.msra.mxu0 0
      %1018 = vmatprep.subr.bf16.mxu0 0
      %1019 = vmatpush1.bf16.msra.mxu0 0
      %1020 = vmatprep.subr.bf16.mxu0 0
      %1021 = vmatpush1.bf16.msra.mxu0 0
      %1022 = vmatprep.mubr.bf16.mxu0 0
      %1023 = vmatmul.mubr.bf16.gmra.mrb[0].mxu0 %v979
      %v1024 = vpop.f32.mrb[0].mxu0
      %v1025 = vadd.f32 0.0, %v1024
      %v1026 = vpop.f32.mrb[0].mxu0
      %v1027 = vpop.f32.mrb[0].mxu0
      %v1028 = vadd.f32 0.0, %v1027
      %v1029 = vpop.f32.mrb[0].mxu0
      %1030 = vmatprep.mubr.bf16.mxu0 0
      %1031 = vmatmul.mubr.bf16.gmra.mrb[0].mxu0 %v982
      %v1032 = vpop.f32.mrb[0].mxu0
      %v1033 = vadd.f32 0.0, %v1032
      %v1034 = vpop.f32.mrb[0].mxu0
      %v1035 = vpop.f32.mrb[0].mxu0
      %v1036 = vadd.f32 0.0, %v1035
      %v1037 = vpop.f32.mrb[0].mxu0
      %1038 = vmatprep.mubr.bf16.mxu0 0
      %1039 = vmatmul.mubr.bf16.gmra.mrb[0].mxu0 %v985
      %v1040 = vpop.f32.mrb[0].mxu0
      %v1041 = vadd.f32 0.0, %v1040
      %v1042 = vpop.f32.mrb[0].mxu0
      %v1043 = vpop.f32.mrb[0].mxu0
      %v1044 = vadd.f32 0.0, %v1043
      %v1045 = vpop.f32.mrb[0].mxu0
      %1046 = vmatprep.mubr.bf16.mxu0 0
      %1047 = vmatmul.mubr.bf16.gmra.mrb[0].mxu0 %v988
      %v1048 = vpop.f32.mrb[0].mxu0
      %v1049 = vadd.f32 0.0, %v1048
      %v1050 = vpop.f32.mrb[0].mxu0
      %v1051 = vpop.f32.mrb[0].mxu0
      %v1052 = vadd.f32 0.0, %v1051
      %v1053 = vpop.f32.mrb[0].mxu0
      %1054 = vdwg.mxu0
      %v1055 = vrcp.pop %v940
      %v1056 = vmul.f32 %v1025, %v1055
      %v1057 = vrcp.pop %v943
      %v1058 = vmul.f32 %v1028, %v1057
      %v1059 = vrcp.pop %v946
      %v1060 = vmul.f32 %v1033, %v1059
      %v1061 = vrcp.pop %v949
      %v1062 = vmul.f32 %v1036, %v1061
      %v1063 = vrcp.pop %v952
      %v1064 = vmul.f32 %v1041, %v1063
      %v1065 = vrcp.pop %v955
      %v1066 = vmul.f32 %v1044, %v1065
      %v1067 = vrcp.pop %v958
      %v1068 = vmul.f32 %v1049, %v1067
      %v1069 = vrcp.pop %v961
      %v1070 = vmul.f32 %v1052, %v1069
      %1071 = vrot.lane.b32.xlu0 %v461, 96
      %v1072 = vpop.permute.xlu0 %1071
      %1073 = vrot.lane.b32.xlu0 %v462, 96
      %v1074 = vpop.permute.xlu0 %1073
      %1075 = vrot.lane.b32.xlu0 %v463, 96
      %v1076 = vpop.permute.xlu0 %1075
      %1077 = vrot.lane.b32.xlu0 %v464, 96
      %v1078 = vpop.permute.xlu0 %1077
      %1079 = vrot.lane.b32.xlu0 %v481, 32
      %v1080 = vpop.permute.xlu0 %1079
      %1081 = vrot.lane.b32.xlu0 %v482, 32
      %v1082 = vpop.permute.xlu0 %1081
      %1083 = vrot.lane.b32.xlu0 %v483, 32
      %v1084 = vpop.permute.xlu0 %1083
      %1085 = vrot.lane.b32.xlu0 %v484, 32
      %v1086 = vpop.permute.xlu0 %1085
      %v1088 = vsel %vm493, %v1072, 0
      %v1091 = vsel %vm493, %v1074, 0
      %v1094 = vsel %vm493, %v1076, 0
      %v1097 = vsel %vm493, %v1078, 0
      %v1100 = vsel %vm493, %v1080, 0
      %v1103 = vsel %vm493, %v1082, 0
      %v1106 = vsel %vm493, %v1084, 0
      %v1109 = vsel %vm493, %v1086, 0
      %1111 = vmatprep.subr.bf16.mxu0 0
      %1112 = vmatpush1.bf16.xpose.msra.mxu0 %v1100
      %1113 = vmatprep.subr.bf16.mxu0 0
      %1114 = vmatpush1.bf16.xpose.msra.mxu0 %v1103
      %1115 = vmatprep.subr.bf16.mxu0 0
      %1116 = vmatpush1.bf16.xpose.msra.mxu0 %v1106
      %1117 = vmatprep.subr.bf16.mxu0 0
      %1118 = vmatpush1.bf16.xpose.msra.mxu0 %v1109
      %1119 = vmatprep.subr.bf16.mxu0 0
      %1120 = vmatpush1.bf16.xpose.msra.mxu0 0
      %1121 = vmatprep.subr.bf16.mxu0 0
      %1122 = vmatpush1.bf16.xpose.msra.mxu0 0
      %1123 = vmatprep.subr.bf16.mxu0 0
      %1124 = vmatpush1.bf16.xpose.msra.mxu0 0
      %1125 = vmatprep.subr.bf16.mxu0 0
      %1126 = vmatpush1.bf16.xpose.msra.mxu0 0
      %1127 = vmatprep.subr.bf16.mxu0 0
      %1128 = vmatpush1.bf16.xpose.msra.mxu0 0
      %1129 = vmatprep.subr.bf16.mxu0 0
      %1130 = vmatpush1.bf16.xpose.msra.mxu0 0
      %1131 = vmatprep.subr.bf16.mxu0 0
      %1132 = vmatpush1.bf16.xpose.msra.mxu0 0
      %1133 = vmatprep.subr.bf16.mxu0 0
      %1134 = vmatpush1.bf16.xpose.msra.mxu0 0
      %1135 = vmatprep.subr.bf16.mxu0 0
      %1136 = vmatpush1.bf16.xpose.msra.mxu0 0
      %1137 = vmatprep.subr.bf16.mxu0 0
      %1138 = vmatpush1.bf16.xpose.msra.mxu0 0
      %1139 = vmatprep.subr.bf16.mxu0 0
      %1140 = vmatpush1.bf16.xpose.msra.mxu0 0
      %1141 = vmatprep.subr.bf16.mxu0 0
      %1142 = vmatpush1.bf16.xpose.msra.mxu0 0
      %1143 = vmatprep.mubr.bf16.mxu0 0
      %1144 = vmatmul.mubr.bf16.gmra.mrb[0].mxu0 %v1088
      %v1145 = vpop.f32.mrb[0].mxu0
      %v1146 = vadd.f32 0.0, %v1145
      %v1147 = vpop.f32.mrb[0].mxu0
      %v1148 = vpop.f32.mrb[0].mxu0
      %v1149 = vadd.f32 0.0, %v1148
      %v1150 = vpop.f32.mrb[0].mxu0
      %1151 = vmatprep.mubr.bf16.mxu0 0
      %1152 = vmatmul.mubr.bf16.gmra.mrb[0].mxu0 %v1091
      %v1153 = vpop.f32.mrb[0].mxu0
      %v1154 = vadd.f32 0.0, %v1153
      %v1155 = vpop.f32.mrb[0].mxu0
      %v1156 = vpop.f32.mrb[0].mxu0
      %v1157 = vadd.f32 0.0, %v1156
      %v1158 = vpop.f32.mrb[0].mxu0
      %1159 = vmatprep.mubr.bf16.mxu0 0
      %1160 = vmatmul.mubr.bf16.gmra.mrb[0].mxu0 %v1094
      %v1161 = vpop.f32.mrb[0].mxu0
      %v1162 = vadd.f32 0.0, %v1161
      %v1163 = vpop.f32.mrb[0].mxu0
      %v1164 = vpop.f32.mrb[0].mxu0
      %v1165 = vadd.f32 0.0, %v1164
      %v1166 = vpop.f32.mrb[0].mxu0
      %1167 = vmatprep.mubr.bf16.mxu0 0
      %1168 = vmatmul.mubr.bf16.gmra.mrb[0].mxu0 %v1097
      %v1169 = vpop.f32.mrb[0].mxu0
      %v1170 = vadd.f32 0.0, %v1169
      %v1171 = vpop.f32.mrb[0].mxu0
      %v1172 = vpop.f32.mrb[0].mxu0
      %v1173 = vadd.f32 0.0, %v1172
      %v1174 = vpop.f32.mrb[0].mxu0
      %1175 = vdwg.mxu0
      %v1176 = vmul.f32 %v1146, 0.25
      %v1177 = vmul.f32 %v1149, 0.25
      %v1178 = vmul.f32 %v1154, 0.25
      %v1179 = vmul.f32 %v1157, 0.25
      %v1180 = vmul.f32 %v1162, 0.25
      %v1181 = vmul.f32 %v1165, 0.25
      %v1182 = vmul.f32 %v1170, 0.25
      %v1183 = vmul.f32 %v1173, 0.25
      %v1184 = vsel %vm591, %v1176, -inf
      %1185 = vmax.xlane.f32.xlu0 %v1184
      %v1186 = vpop.xlane.xlu0 %1185
      %v1187 = vsel %vm591, %v1177, -inf
      %1188 = vmax.xlane.f32.xlu0 %v1187
      %v1189 = vpop.xlane.xlu0 %1188
      %v1190 = vsel %vm591, %v1178, -inf
      %1191 = vmax.xlane.f32.xlu0 %v1190
      %v1192 = vpop.xlane.xlu0 %1191
      %v1193 = vsel %vm591, %v1179, -inf
      %1194 = vmax.xlane.f32.xlu0 %v1193
      %v1195 = vpop.xlane.xlu0 %1194
      %v1196 = vsel %vm591, %v1180, -inf
      %1197 = vmax.xlane.f32.xlu0 %v1196
      %v1198 = vpop.xlane.xlu0 %1197
      %v1199 = vsel %vm591, %v1181, -inf
      %1200 = vmax.xlane.f32.xlu0 %v1199
      %v1201 = vpop.xlane.xlu0 %1200
      %v1202 = vsel %vm591, %v1182, -inf
      %1203 = vmax.xlane.f32.xlu0 %v1202
      %v1204 = vpop.xlane.xlu0 %1203
      %v1205 = vsel %vm591, %v1183, -inf
      %1206 = vmax.xlane.f32.xlu0 %v1205
      %v1207 = vpop.xlane.xlu0 %1206
      %v1208 = vsub.f32 %v1176, %v1186
      %v1209 = vsub.f32 %v1177, %v1189
      %v1210 = vsub.f32 %v1178, %v1192
      %v1211 = vsub.f32 %v1179, %v1195
      %v1212 = vsub.f32 %v1180, %v1198
      %v1213 = vsub.f32 %v1181, %v1201
      %v1214 = vsub.f32 %v1182, %v1204
      %v1215 = vsub.f32 %v1183, %v1207
      %v1216 = vmul.f32 %v1208, 1.442695
      %v1217 = vpow.pop %v1216
      %v1218 = vmul.f32 %v1209, 1.442695
      %v1219 = vpow.pop %v1218
      %v1220 = vmul.f32 %v1210, 1.442695
      %v1221 = vpow.pop %v1220
      %v1222 = vmul.f32 %v1211, 1.442695
      %v1223 = vpow.pop %v1222
      %v1224 = vmul.f32 %v1212, 1.442695
      %v1225 = vpow.pop %v1224
      %v1226 = vmul.f32 %v1213, 1.442695
      %v1227 = vpow.pop %v1226
      %v1228 = vmul.f32 %v1214, 1.442695
      %v1229 = vpow.pop %v1228
      %v1230 = vmul.f32 %v1215, 1.442695
      %v1231 = vpow.pop %v1230
      %v1232 = vsel %vm591, %v1217, 0.0
      %1233 = vadd.xlane.f32.xlu0 %v1232
      %v1234 = vpop.xlane.xlu0 %1233
      %v1235 = vsel %vm591, %v1219, 0.0
      %1236 = vadd.xlane.f32.xlu0 %v1235
      %v1237 = vpop.xlane.xlu0 %1236
      %v1238 = vsel %vm591, %v1221, 0.0
      %1239 = vadd.xlane.f32.xlu0 %v1238
      %v1240 = vpop.xlane.xlu0 %1239
      %v1241 = vsel %vm591, %v1223, 0.0
      %1242 = vadd.xlane.f32.xlu0 %v1241
      %v1243 = vpop.xlane.xlu0 %1242
      %v1244 = vsel %vm591, %v1225, 0.0
      %1245 = vadd.xlane.f32.xlu0 %v1244
      %v1246 = vpop.xlane.xlu0 %1245
      %v1247 = vsel %vm591, %v1227, 0.0
      %1248 = vadd.xlane.f32.xlu0 %v1247
      %v1249 = vpop.xlane.xlu0 %1248
      %v1250 = vsel %vm591, %v1229, 0.0
      %1251 = vadd.xlane.f32.xlu0 %v1250
      %v1252 = vpop.xlane.xlu0 %1251
      %v1253 = vsel %vm591, %v1231, 0.0
      %1254 = vadd.xlane.f32.xlu0 %v1253
      %v1255 = vpop.xlane.xlu0 %1254
      %v1256 = vpack.c.bf16 %v1219, %v1217
      %v1257 = vpack.c.bf16 %v1223, %v1221
      %v1258 = vpack.c.bf16 %v1227, %v1225
      %v1259 = vpack.c.bf16 %v1231, %v1229
      %1260 = vrot.lane.b32.xlu0 %v676, 96
      %v1261 = vpop.permute.xlu0 %1260
      %1262 = vrot.lane.b32.xlu0 %v677, 96
      %v1263 = vpop.permute.xlu0 %1262
      %1264 = vrot.lane.b32.xlu0 %v678, 96
      %v1265 = vpop.permute.xlu0 %1264
      %1266 = vrot.lane.b32.xlu0 %v679, 96
      %v1267 = vpop.permute.xlu0 %1266
      %v1273 = vsel %vm591, %v1256, 0
      %v1276 = vsel %vm591, %v1257, 0
      %v1279 = vsel %vm591, %v1258, 0
      %v1282 = vsel %vm591, %v1259, 0
      %1284 = vmatprep.subr.bf16.mxu0 0
      %1285 = vmatpush1.bf16.msra.mxu0 %v1261
      %1286 = vmatprep.subr.bf16.mxu0 0
      %1287 = vmatpush1.bf16.msra.mxu0 %v1263
      %1288 = vmatprep.subr.bf16.mxu0 0
      %1289 = vmatpush1.bf16.msra.mxu0 %v1265
      %1290 = vmatprep.subr.bf16.mxu0 0
      %1291 = vmatpush1.bf16.msra.mxu0 %v1267
      %1292 = vmatprep.subr.bf16.mxu0 0
      %1293 = vmatpush1.bf16.msra.mxu0 0
      %1294 = vmatprep.subr.bf16.mxu0 0
      %1295 = vmatpush1.bf16.msra.mxu0 0
      %1296 = vmatprep.subr.bf16.mxu0 0
      %1297 = vmatpush1.bf16.msra.mxu0 0
      %1298 = vmatprep.subr.bf16.mxu0 0
      %1299 = vmatpush1.bf16.msra.mxu0 0
      %1300 = vmatprep.subr.bf16.mxu0 0
      %1301 = vmatpush1.bf16.msra.mxu0 0
      %1302 = vmatprep.subr.bf16.mxu0 0
      %1303 = vmatpush1.bf16.msra.mxu0 0
      %1304 = vmatprep.subr.bf16.mxu0 0
      %1305 = vmatpush1.bf16.msra.mxu0 0
      %1306 = vmatprep.subr.bf16.mxu0 0
      %1307 = vmatpush1.bf16.msra.mxu0 0
      %1308 = vmatprep.subr.bf16.mxu0 0
      %1309 = vmatpush1.bf16.msra.mxu0 0
      %1310 = vmatprep.subr.bf16.mxu0 0
      %1311 = vmatpush1.bf16.msra.mxu0 0
      %1312 = vmatprep.subr.bf16.mxu0 0
      %1313 = vmatpush1.bf16.msra.mxu0 0
      %1314 = vmatprep.subr.bf16.mxu0 0
      %1315 = vmatpush1.bf16.msra.mxu0 0
      %1316 = vmatprep.mubr.bf16.mxu0 0
      %1317 = vmatmul.mubr.bf16.gmra.mrb[0].mxu0 %v1273
      %v1318 = vpop.f32.mrb[0].mxu0
      %v1319 = vadd.f32 0.0, %v1318
      %v1320 = vpop.f32.mrb[0].mxu0
      %v1321 = vpop.f32.mrb[0].mxu0
      %v1322 = vadd.f32 0.0, %v1321
      %v1323 = vpop.f32.mrb[0].mxu0
      %1324 = vmatprep.mubr.bf16.mxu0 0
      %1325 = vmatmul.mubr.bf16.gmra.mrb[0].mxu0 %v1276
      %v1326 = vpop.f32.mrb[0].mxu0
      %v1327 = vadd.f32 0.0, %v1326
      %v1328 = vpop.f32.mrb[0].mxu0
      %v1329 = vpop.f32.mrb[0].mxu0
      %v1330 = vadd.f32 0.0, %v1329
      %v1331 = vpop.f32.mrb[0].mxu0
      %1332 = vmatprep.mubr.bf16.mxu0 0
      %1333 = vmatmul.mubr.bf16.gmra.mrb[0].mxu0 %v1279
      %v1334 = vpop.f32.mrb[0].mxu0
      %v1335 = vadd.f32 0.0, %v1334
      %v1336 = vpop.f32.mrb[0].mxu0
      %v1337 = vpop.f32.mrb[0].mxu0
      %v1338 = vadd.f32 0.0, %v1337
      %v1339 = vpop.f32.mrb[0].mxu0
      %1340 = vmatprep.mubr.bf16.mxu0 0
      %1341 = vmatmul.mubr.bf16.gmra.mrb[0].mxu0 %v1282
      %v1342 = vpop.f32.mrb[0].mxu0
      %v1343 = vadd.f32 0.0, %v1342
      %v1344 = vpop.f32.mrb[0].mxu0
      %v1345 = vpop.f32.mrb[0].mxu0
      %v1346 = vadd.f32 0.0, %v1345
      %v1347 = vpop.f32.mrb[0].mxu0
      %1348 = vdwg.mxu0
      %v1349 = vrcp.pop %v1234
      %v1350 = vmul.f32 %v1319, %v1349
      %v1351 = vrcp.pop %v1237
      %v1352 = vmul.f32 %v1322, %v1351
      %v1353 = vrcp.pop %v1240
      %v1354 = vmul.f32 %v1327, %v1353
      %v1355 = vrcp.pop %v1243
      %v1356 = vmul.f32 %v1330, %v1355
      %v1357 = vrcp.pop %v1246
      %v1358 = vmul.f32 %v1335, %v1357
      %v1359 = vrcp.pop %v1249
      %v1360 = vmul.f32 %v1338, %v1359
      %v1361 = vrcp.pop %v1252
      %v1362 = vmul.f32 %v1343, %v1361
      %v1363 = vrcp.pop %v1255
      %v1364 = vmul.f32 %v1346, %v1363
      %1365 = vrot.lane.b32.xlu0 %v461, 80
      %v1366 = vpop.permute.xlu0 %1365
      %1367 = vrot.lane.b32.xlu0 %v462, 80
      %v1368 = vpop.permute.xlu0 %1367
      %1369 = vrot.lane.b32.xlu0 %v463, 80
      %v1370 = vpop.permute.xlu0 %1369
      %1371 = vrot.lane.b32.xlu0 %v464, 80
      %v1372 = vpop.permute.xlu0 %1371
      %1373 = vrot.lane.b32.xlu0 %v481, 16
      %v1374 = vpop.permute.xlu0 %1373
      %1375 = vrot.lane.b32.xlu0 %v482, 16
      %v1376 = vpop.permute.xlu0 %1375
      %1377 = vrot.lane.b32.xlu0 %v483, 16
      %v1378 = vpop.permute.xlu0 %1377
      %1379 = vrot.lane.b32.xlu0 %v484, 16
      %v1380 = vpop.permute.xlu0 %1379
      %v1382 = vsel %vm493, %v1366, 0
      %v1385 = vsel %vm493, %v1368, 0
      %v1388 = vsel %vm493, %v1370, 0
      %v1391 = vsel %vm493, %v1372, 0
      %v1394 = vsel %vm493, %v1374, 0
      %v1397 = vsel %vm493, %v1376, 0
      %v1400 = vsel %vm493, %v1378, 0
      %v1403 = vsel %vm493, %v1380, 0
      %1405 = vmatprep.subr.bf16.mxu0 0
      %1406 = vmatpush1.bf16.xpose.msra.mxu0 %v1394
      %1407 = vmatprep.subr.bf16.mxu0 0
      %1408 = vmatpush1.bf16.xpose.msra.mxu0 %v1397
      %1409 = vmatprep.subr.bf16.mxu0 0
      %1410 = vmatpush1.bf16.xpose.msra.mxu0 %v1400
      %1411 = vmatprep.subr.bf16.mxu0 0
      %1412 = vmatpush1.bf16.xpose.msra.mxu0 %v1403
      %1413 = vmatprep.subr.bf16.mxu0 0
      %1414 = vmatpush1.bf16.xpose.msra.mxu0 0
      %1415 = vmatprep.subr.bf16.mxu0 0
      %1416 = vmatpush1.bf16.xpose.msra.mxu0 0
      %1417 = vmatprep.subr.bf16.mxu0 0
      %1418 = vmatpush1.bf16.xpose.msra.mxu0 0
      %1419 = vmatprep.subr.bf16.mxu0 0
      %1420 = vmatpush1.bf16.xpose.msra.mxu0 0
      %1421 = vmatprep.subr.bf16.mxu0 0
      %1422 = vmatpush1.bf16.xpose.msra.mxu0 0
      %1423 = vmatprep.subr.bf16.mxu0 0
      %1424 = vmatpush1.bf16.xpose.msra.mxu0 0
      %1425 = vmatprep.subr.bf16.mxu0 0
      %1426 = vmatpush1.bf16.xpose.msra.mxu0 0
      %1427 = vmatprep.subr.bf16.mxu0 0
      %1428 = vmatpush1.bf16.xpose.msra.mxu0 0
      %1429 = vmatprep.subr.bf16.mxu0 0
      %1430 = vmatpush1.bf16.xpose.msra.mxu0 0
      %1431 = vmatprep.subr.bf16.mxu0 0
      %1432 = vmatpush1.bf16.xpose.msra.mxu0 0
      %1433 = vmatprep.subr.bf16.mxu0 0
      %1434 = vmatpush1.bf16.xpose.msra.mxu0 0
      %1435 = vmatprep.subr.bf16.mxu0 0
      %1436 = vmatpush1.bf16.xpose.msra.mxu0 0
      %1437 = vmatprep.mubr.bf16.mxu0 0
      %1438 = vmatmul.mubr.bf16.gmra.mrb[0].mxu0 %v1382
      %v1439 = vpop.f32.mrb[0].mxu0
      %v1440 = vadd.f32 0.0, %v1439
      %v1441 = vpop.f32.mrb[0].mxu0
      %v1442 = vpop.f32.mrb[0].mxu0
      %v1443 = vadd.f32 0.0, %v1442
      %v1444 = vpop.f32.mrb[0].mxu0
      %1445 = vmatprep.mubr.bf16.mxu0 0
      %1446 = vmatmul.mubr.bf16.gmra.mrb[0].mxu0 %v1385
      %v1447 = vpop.f32.mrb[0].mxu0
      %v1448 = vadd.f32 0.0, %v1447
      %v1449 = vpop.f32.mrb[0].mxu0
      %v1450 = vpop.f32.mrb[0].mxu0
      %v1451 = vadd.f32 0.0, %v1450
      %v1452 = vpop.f32.mrb[0].mxu0
      %1453 = vmatprep.mubr.bf16.mxu0 0
      %1454 = vmatmul.mubr.bf16.gmra.mrb[0].mxu0 %v1388
      %v1455 = vpop.f32.mrb[0].mxu0
      %v1456 = vadd.f32 0.0, %v1455
      %v1457 = vpop.f32.mrb[0].mxu0
      %v1458 = vpop.f32.mrb[0].mxu0
      %v1459 = vadd.f32 0.0, %v1458
      %v1460 = vpop.f32.mrb[0].mxu0
      %1461 = vmatprep.mubr.bf16.mxu0 0
      %1462 = vmatmul.mubr.bf16.gmra.mrb[0].mxu0 %v1391
      %v1463 = vpop.f32.mrb[0].mxu0
      %v1464 = vadd.f32 0.0, %v1463
      %v1465 = vpop.f32.mrb[0].mxu0
      %v1466 = vpop.f32.mrb[0].mxu0
      %v1467 = vadd.f32 0.0, %v1466
      %v1468 = vpop.f32.mrb[0].mxu0
      %1469 = vdwg.mxu0
      %v1470 = vmul.f32 %v1440, 0.25
      %v1471 = vmul.f32 %v1443, 0.25
      %v1472 = vmul.f32 %v1448, 0.25
      %v1473 = vmul.f32 %v1451, 0.25
      %v1474 = vmul.f32 %v1456, 0.25
      %v1475 = vmul.f32 %v1459, 0.25
      %v1476 = vmul.f32 %v1464, 0.25
      %v1477 = vmul.f32 %v1467, 0.25
      %v1478 = vsel %vm591, %v1470, -inf
      %1479 = vmax.xlane.f32.xlu0 %v1478
      %v1480 = vpop.xlane.xlu0 %1479
      %v1481 = vsel %vm591, %v1471, -inf
      %1482 = vmax.xlane.f32.xlu0 %v1481
      %v1483 = vpop.xlane.xlu0 %1482
      %v1484 = vsel %vm591, %v1472, -inf
      %1485 = vmax.xlane.f32.xlu0 %v1484
      %v1486 = vpop.xlane.xlu0 %1485
      %v1487 = vsel %vm591, %v1473, -inf
      %1488 = vmax.xlane.f32.xlu0 %v1487
      %v1489 = vpop.xlane.xlu0 %1488
      %v1490 = vsel %vm591, %v1474, -inf
      %1491 = vmax.xlane.f32.xlu0 %v1490
      %v1492 = vpop.xlane.xlu0 %1491
      %v1493 = vsel %vm591, %v1475, -inf
      %1494 = vmax.xlane.f32.xlu0 %v1493
      %v1495 = vpop.xlane.xlu0 %1494
      %v1496 = vsel %vm591, %v1476, -inf
      %1497 = vmax.xlane.f32.xlu0 %v1496
      %v1498 = vpop.xlane.xlu0 %1497
      %v1499 = vsel %vm591, %v1477, -inf
      %1500 = vmax.xlane.f32.xlu0 %v1499
      %v1501 = vpop.xlane.xlu0 %1500
      %v1502 = vsub.f32 %v1470, %v1480
      %v1503 = vsub.f32 %v1471, %v1483
      %v1504 = vsub.f32 %v1472, %v1486
      %v1505 = vsub.f32 %v1473, %v1489
      %v1506 = vsub.f32 %v1474, %v1492
      %v1507 = vsub.f32 %v1475, %v1495
      %v1508 = vsub.f32 %v1476, %v1498
      %v1509 = vsub.f32 %v1477, %v1501
      %v1510 = vmul.f32 %v1502, 1.442695
      %v1511 = vpow.pop %v1510
      %v1512 = vmul.f32 %v1503, 1.442695
      %v1513 = vpow.pop %v1512
      %v1514 = vmul.f32 %v1504, 1.442695
      %v1515 = vpow.pop %v1514
      %v1516 = vmul.f32 %v1505, 1.442695
      %v1517 = vpow.pop %v1516
      %v1518 = vmul.f32 %v1506, 1.442695
      %v1519 = vpow.pop %v1518
      %v1520 = vmul.f32 %v1507, 1.442695
      %v1521 = vpow.pop %v1520
      %v1522 = vmul.f32 %v1508, 1.442695
      %v1523 = vpow.pop %v1522
      %v1524 = vmul.f32 %v1509, 1.442695
      %v1525 = vpow.pop %v1524
      %v1526 = vsel %vm591, %v1511, 0.0
      %1527 = vadd.xlane.f32.xlu0 %v1526
      %v1528 = vpop.xlane.xlu0 %1527
      %v1529 = vsel %vm591, %v1513, 0.0
      %1530 = vadd.xlane.f32.xlu0 %v1529
      %v1531 = vpop.xlane.xlu0 %1530
      %v1532 = vsel %vm591, %v1515, 0.0
      %1533 = vadd.xlane.f32.xlu0 %v1532
      %v1534 = vpop.xlane.xlu0 %1533
      %v1535 = vsel %vm591, %v1517, 0.0
      %1536 = vadd.xlane.f32.xlu0 %v1535
      %v1537 = vpop.xlane.xlu0 %1536
      %v1538 = vsel %vm591, %v1519, 0.0
      %1539 = vadd.xlane.f32.xlu0 %v1538
      %v1540 = vpop.xlane.xlu0 %1539
      %v1541 = vsel %vm591, %v1521, 0.0
      %1542 = vadd.xlane.f32.xlu0 %v1541
      %v1543 = vpop.xlane.xlu0 %1542
      %v1544 = vsel %vm591, %v1523, 0.0
      %1545 = vadd.xlane.f32.xlu0 %v1544
      %v1546 = vpop.xlane.xlu0 %1545
      %v1547 = vsel %vm591, %v1525, 0.0
      %1548 = vadd.xlane.f32.xlu0 %v1547
      %v1549 = vpop.xlane.xlu0 %1548
      %v1550 = vpack.c.bf16 %v1513, %v1511
      %v1551 = vpack.c.bf16 %v1517, %v1515
      %v1552 = vpack.c.bf16 %v1521, %v1519
      %v1553 = vpack.c.bf16 %v1525, %v1523
      %1554 = vrot.lane.b32.xlu0 %v676, 80
      %v1555 = vpop.permute.xlu0 %1554
      %1556 = vrot.lane.b32.xlu0 %v677, 80
      %v1557 = vpop.permute.xlu0 %1556
      %1558 = vrot.lane.b32.xlu0 %v678, 80
      %v1559 = vpop.permute.xlu0 %1558
      %1560 = vrot.lane.b32.xlu0 %v679, 80
      %v1561 = vpop.permute.xlu0 %1560
      %v1567 = vsel %vm591, %v1550, 0
      %v1570 = vsel %vm591, %v1551, 0
      %v1573 = vsel %vm591, %v1552, 0
      %v1576 = vsel %vm591, %v1553, 0
      %1578 = vmatprep.subr.bf16.mxu0 0
      %1579 = vmatpush1.bf16.msra.mxu0 %v1555
      %1580 = vmatprep.subr.bf16.mxu0 0
      %1581 = vmatpush1.bf16.msra.mxu0 %v1557
      %1582 = vmatprep.subr.bf16.mxu0 0
      %1583 = vmatpush1.bf16.msra.mxu0 %v1559
      %1584 = vmatprep.subr.bf16.mxu0 0
      %1585 = vmatpush1.bf16.msra.mxu0 %v1561
      %1586 = vmatprep.subr.bf16.mxu0 0
      %1587 = vmatpush1.bf16.msra.mxu0 0
      %1588 = vmatprep.subr.bf16.mxu0 0
      %1589 = vmatpush1.bf16.msra.mxu0 0
      %1590 = vmatprep.subr.bf16.mxu0 0
      %1591 = vmatpush1.bf16.msra.mxu0 0
      %1592 = vmatprep.subr.bf16.mxu0 0
      %1593 = vmatpush1.bf16.msra.mxu0 0
      %1594 = vmatprep.subr.bf16.mxu0 0
      %1595 = vmatpush1.bf16.msra.mxu0 0
      %1596 = vmatprep.subr.bf16.mxu0 0
      %1597 = vmatpush1.bf16.msra.mxu0 0
      %1598 = vmatprep.subr.bf16.mxu0 0
      %1599 = vmatpush1.bf16.msra.mxu0 0
      %1600 = vmatprep.subr.bf16.mxu0 0
      %1601 = vmatpush1.bf16.msra.mxu0 0
      %1602 = vmatprep.subr.bf16.mxu0 0
      %1603 = vmatpush1.bf16.msra.mxu0 0
      %1604 = vmatprep.subr.bf16.mxu0 0
      %1605 = vmatpush1.bf16.msra.mxu0 0
      %1606 = vmatprep.subr.bf16.mxu0 0
      %1607 = vmatpush1.bf16.msra.mxu0 0
      %1608 = vmatprep.subr.bf16.mxu0 0
      %1609 = vmatpush1.bf16.msra.mxu0 0
      %1610 = vmatprep.mubr.bf16.mxu0 0
      %1611 = vmatmul.mubr.bf16.gmra.mrb[0].mxu0 %v1567
      %v1612 = vpop.f32.mrb[0].mxu0
      %v1613 = vadd.f32 0.0, %v1612
      %v1614 = vpop.f32.mrb[0].mxu0
      %v1615 = vpop.f32.mrb[0].mxu0
      %v1616 = vadd.f32 0.0, %v1615
      %v1617 = vpop.f32.mrb[0].mxu0
      %1618 = vmatprep.mubr.bf16.mxu0 0
      %1619 = vmatmul.mubr.bf16.gmra.mrb[0].mxu0 %v1570
      %v1620 = vpop.f32.mrb[0].mxu0
      %v1621 = vadd.f32 0.0, %v1620
      %v1622 = vpop.f32.mrb[0].mxu0
      %v1623 = vpop.f32.mrb[0].mxu0
      %v1624 = vadd.f32 0.0, %v1623
      %v1625 = vpop.f32.mrb[0].mxu0
      %1626 = vmatprep.mubr.bf16.mxu0 0
      %1627 = vmatmul.mubr.bf16.gmra.mrb[0].mxu0 %v1573
      %v1628 = vpop.f32.mrb[0].mxu0
      %v1629 = vadd.f32 0.0, %v1628
      %v1630 = vpop.f32.mrb[0].mxu0
      %v1631 = vpop.f32.mrb[0].mxu0
      %v1632 = vadd.f32 0.0, %v1631
      %v1633 = vpop.f32.mrb[0].mxu0
      %1634 = vmatprep.mubr.bf16.mxu0 0
      %1635 = vmatmul.mubr.bf16.gmra.mrb[0].mxu0 %v1576
      %v1636 = vpop.f32.mrb[0].mxu0
      %v1637 = vadd.f32 0.0, %v1636
      %v1638 = vpop.f32.mrb[0].mxu0
      %v1639 = vpop.f32.mrb[0].mxu0
      %v1640 = vadd.f32 0.0, %v1639
      %v1641 = vpop.f32.mrb[0].mxu0
      %1642 = vdwg.mxu0
      %v1643 = vrcp.pop %v1528
      %v1644 = vmul.f32 %v1613, %v1643
      %v1645 = vrcp.pop %v1531
      %v1646 = vmul.f32 %v1616, %v1645
      %v1647 = vrcp.pop %v1534
      %v1648 = vmul.f32 %v1621, %v1647
      %v1649 = vrcp.pop %v1537
      %v1650 = vmul.f32 %v1624, %v1649
      %v1651 = vrcp.pop %v1540
      %v1652 = vmul.f32 %v1629, %v1651
      %v1653 = vrcp.pop %v1543
      %v1654 = vmul.f32 %v1632, %v1653
      %v1655 = vrcp.pop %v1546
      %v1656 = vmul.f32 %v1637, %v1655
      %v1657 = vrcp.pop %v1549
      %v1658 = vmul.f32 %v1640, %v1657
      %1667 = vrot.lane.b32.xlu0 %v1056, 16
      %v1668 = vpop.permute.xlu0 %1667
      %1669 = vrot.lane.b32.xlu0 %v1058, 16
      %v1670 = vpop.permute.xlu0 %1669
      %1671 = vrot.lane.b32.xlu0 %v1060, 16
      %v1672 = vpop.permute.xlu0 %1671
      %1673 = vrot.lane.b32.xlu0 %v1062, 16
      %v1674 = vpop.permute.xlu0 %1673
      %1675 = vrot.lane.b32.xlu0 %v1064, 16
      %v1676 = vpop.permute.xlu0 %1675
      %1677 = vrot.lane.b32.xlu0 %v1066, 16
      %v1678 = vpop.permute.xlu0 %1677
      %1679 = vrot.lane.b32.xlu0 %v1068, 16
      %v1680 = vpop.permute.xlu0 %1679
      %1681 = vrot.lane.b32.xlu0 %v1070, 16
      %v1682 = vpop.permute.xlu0 %1681
      %1699 = vrot.lane.b32.xlu0 %v1350, 32
      %v1700 = vpop.permute.xlu0 %1699
      %1701 = vrot.lane.b32.xlu0 %v1352, 32
      %v1702 = vpop.permute.xlu0 %1701
      %1703 = vrot.lane.b32.xlu0 %v1354, 32
      %v1704 = vpop.permute.xlu0 %1703
      %1705 = vrot.lane.b32.xlu0 %v1356, 32
      %v1706 = vpop.permute.xlu0 %1705
      %1707 = vrot.lane.b32.xlu0 %v1358, 32
      %v1708 = vpop.permute.xlu0 %1707
      %1709 = vrot.lane.b32.xlu0 %v1360, 32
      %v1710 = vpop.permute.xlu0 %1709
      %1711 = vrot.lane.b32.xlu0 %v1362, 32
      %v1712 = vpop.permute.xlu0 %1711
      %1713 = vrot.lane.b32.xlu0 %v1364, 32
      %v1714 = vpop.permute.xlu0 %1713
      %1731 = vrot.lane.b32.xlu0 %v1644, 48
      %v1732 = vpop.permute.xlu0 %1731
      %1733 = vrot.lane.b32.xlu0 %v1646, 48
      %v1734 = vpop.permute.xlu0 %1733
      %1735 = vrot.lane.b32.xlu0 %v1648, 48
      %v1736 = vpop.permute.xlu0 %1735
      %1737 = vrot.lane.b32.xlu0 %v1650, 48
      %v1738 = vpop.permute.xlu0 %1737
      %1739 = vrot.lane.b32.xlu0 %v1652, 48
      %v1740 = vpop.permute.xlu0 %1739
      %1741 = vrot.lane.b32.xlu0 %v1654, 48
      %v1742 = vpop.permute.xlu0 %1741
      %1743 = vrot.lane.b32.xlu0 %v1656, 48
      %v1744 = vpop.permute.xlu0 %1743
      %1745 = vrot.lane.b32.xlu0 %v1658, 48
      %v1746 = vpop.permute.xlu0 %1745
      %v1755 = vsel %vm493, %v762, %v1668
      %v1756 = vsel %vm493, %v764, %v1670
      %v1757 = vsel %vm493, %v766, %v1672
      %v1758 = vsel %vm493, %v768, %v1674
      %v1759 = vsel %vm493, %v770, %v1676
      %v1760 = vsel %vm493, %v772, %v1678
      %v1761 = vsel %vm493, %v774, %v1680
      %v1762 = vsel %vm493, %v776, %v1682
      %vm1763 = vcmask 261120
      %v1764 = vsel %vm1763, %v1755, %v1700
      %v1765 = vsel %vm1763, %v1756, %v1702
      %v1766 = vsel %vm1763, %v1757, %v1704
      %v1767 = vsel %vm1763, %v1758, %v1706
      %v1768 = vsel %vm1763, %v1759, %v1708
      %v1769 = vsel %vm1763, %v1760, %v1710
      %v1770 = vsel %vm1763, %v1761, %v1712
      %v1771 = vsel %vm1763, %v1762, %v1714
      %vm1772 = vcmask 392192
      %v1773 = vsel %vm1772, %v1764, %v1732
      %v1774 = vsel %vm1772, %v1765, %v1734
      %v1775 = vsel %vm1772, %v1766, %v1736
      %v1776 = vsel %vm1772, %v1767, %v1738
      %v1777 = vsel %vm1772, %v1768, %v1740
      %v1778 = vsel %vm1772, %v1769, %v1742
      %v1779 = vsel %vm1772, %v1770, %v1744
      %v1780 = vsel %vm1772, %v1771, %v1746
      %v1781 = vpack.c.bf16 %v1774, %v1773
      %v1782 = vpack.c.bf16 %v1776, %v1775
      %v1783 = vpack.c.bf16 %v1778, %v1777
      %v1784 = vpack.c.bf16 %v1780, %v1779
      %v1785 = vld [vmem:[%s3] sm:$0xf]
      %v1786 = vld [vmem:[%s3 + $0x4] sm:$0xf]
      %v1787 = vld [vmem:[%s3 + $0x8] sm:$0xf]
      %v1788 = vld [vmem:[%s3 + $0xc] sm:$0xf]
      %v1789 = vld [vmem:[%s3 + $0x10] sm:$0xf]
      %v1790 = vld [vmem:[%s3 + $0x14] sm:$0xf]
      %v1791 = vld [vmem:[%s3 + $0x18] sm:$0xf]
      %v1792 = vld [vmem:[%s3 + $0x1c] sm:$0xf]
      %v1793 = vld [vmem:[%s4] sm:$0x1]
      %v1795 = vlaneseq
      %v1796 = vshrl.u32 %v1795, 7
      %v1797 = vsub.s32 0, %v1796
      %v1798 = vrot.slane %v1793, %v1797
      %v1808 = vunpack.c.l.b16 %v1785
      %v1809 = vunpack.c.l.b16 %v1786
      %v1810 = vunpack.c.l.b16 %v1787
      %v1811 = vunpack.c.l.b16 %v1788
      %v1812 = vunpack.c.l.b16 %v1789
      %v1813 = vunpack.c.l.b16 %v1790
      %v1814 = vunpack.c.l.b16 %v1791
      %v1815 = vunpack.c.l.b16 %v1792
      %v1816 = vpack.c.b16 %v1809, %v1808
      %v1817 = vpack.c.b16 %v1811, %v1810
      %v1818 = vpack.c.b16 %v1813, %v1812
      %v1819 = vpack.c.b16 %v1815, %v1814
      %v1825 = vsel %vm591, %v1781, 0
      %v1828 = vsel %vm591, %v1782, 0
      %v1831 = vsel %vm591, %v1783, 0
      %v1834 = vsel %vm591, %v1784, 0
      %1836 = vmatprep.subr.bf16.mxu0 0
      %1837 = vmatpush1.bf16.msra.mxu0 %v1816
      %1838 = vmatprep.subr.bf16.mxu0 0
      %1839 = vmatpush1.bf16.msra.mxu0 %v1817
      %1840 = vmatprep.subr.bf16.mxu0 0
      %1841 = vmatpush1.bf16.msra.mxu0 %v1818
      %1842 = vmatprep.subr.bf16.mxu0 0
      %1843 = vmatpush1.bf16.msra.mxu0 %v1819
      %1844 = vmatprep.subr.bf16.mxu0 0
      %1845 = vmatpush1.bf16.msra.mxu0 0
      %1846 = vmatprep.subr.bf16.mxu0 0
      %1847 = vmatpush1.bf16.msra.mxu0 0
      %1848 = vmatprep.subr.bf16.mxu0 0
      %1849 = vmatpush1.bf16.msra.mxu0 0
      %1850 = vmatprep.subr.bf16.mxu0 0
      %1851 = vmatpush1.bf16.msra.mxu0 0
      %1852 = vmatprep.subr.bf16.mxu0 0
      %1853 = vmatpush1.bf16.msra.mxu0 0
      %1854 = vmatprep.subr.bf16.mxu0 0
      %1855 = vmatpush1.bf16.msra.mxu0 0
      %1856 = vmatprep.subr.bf16.mxu0 0
      %1857 = vmatpush1.bf16.msra.mxu0 0
      %1858 = vmatprep.subr.bf16.mxu0 0
      %1859 = vmatpush1.bf16.msra.mxu0 0
      %1860 = vmatprep.subr.bf16.mxu0 0
      %1861 = vmatpush1.bf16.msra.mxu0 0
      %1862 = vmatprep.subr.bf16.mxu0 0
      %1863 = vmatpush1.bf16.msra.mxu0 0
      %1864 = vmatprep.subr.bf16.mxu0 0
      %1865 = vmatpush1.bf16.msra.mxu0 0
      %1866 = vmatprep.subr.bf16.mxu0 0
      %1867 = vmatpush1.bf16.msra.mxu0 0
      %1868 = vmatprep.mubr.bf16.mxu0 0
      %1869 = vmatmul.mubr.bf16.gmra.mrb[0].mxu0 %v1825
      %v1870 = vpop.f32.mrb[0].mxu0
      %v1871 = vadd.f32 %v1798, %v1870
      %v1872 = vpop.f32.mrb[0].mxu0
      %v1873 = vpop.f32.mrb[0].mxu0
      %v1874 = vadd.f32 %v1798, %v1873
      %v1875 = vpop.f32.mrb[0].mxu0
      %1876 = vmatprep.mubr.bf16.mxu0 0
      %1877 = vmatmul.mubr.bf16.gmra.mrb[0].mxu0 %v1828
      %v1878 = vpop.f32.mrb[0].mxu0
      %v1879 = vadd.f32 %v1798, %v1878
      %v1880 = vpop.f32.mrb[0].mxu0
      %v1881 = vpop.f32.mrb[0].mxu0
      %v1882 = vadd.f32 %v1798, %v1881
      %v1883 = vpop.f32.mrb[0].mxu0
      %1884 = vmatprep.mubr.bf16.mxu0 0
      %1885 = vmatmul.mubr.bf16.gmra.mrb[0].mxu0 %v1831
      %v1886 = vpop.f32.mrb[0].mxu0
      %v1887 = vadd.f32 %v1798, %v1886
      %v1888 = vpop.f32.mrb[0].mxu0
      %v1889 = vpop.f32.mrb[0].mxu0
      %v1890 = vadd.f32 %v1798, %v1889
      %v1891 = vpop.f32.mrb[0].mxu0
      %1892 = vmatprep.mubr.bf16.mxu0 0
      %1893 = vmatmul.mubr.bf16.gmra.mrb[0].mxu0 %v1834
      %v1894 = vpop.f32.mrb[0].mxu0
      %v1895 = vadd.f32 %v1798, %v1894
      %v1896 = vpop.f32.mrb[0].mxu0
      %v1897 = vpop.f32.mrb[0].mxu0
      %v1898 = vadd.f32 %v1798, %v1897
      %v1899 = vpop.f32.mrb[0].mxu0
      %1900 = vdwg.mxu0
      %v1901 = vld [vmem:[%s406] sm:$0xff]
      %v1902 = vld [vmem:[%s406 + $0x8] sm:$0xff]
      %v1903 = vld [vmem:[%s406 + $0x10] sm:$0xff]
      %v1904 = vld [vmem:[%s406 + $0x18] sm:$0xff]
      %v1905 = vld [vmem:[%s406 + $0x20] sm:$0xff]
      %v1906 = vld [vmem:[%s406 + $0x28] sm:$0xff]
      %v1907 = vld [vmem:[%s406 + $0x30] sm:$0xff]
      %v1908 = vld [vmem:[%s406 + $0x38] sm:$0xff]
      %v1909 = vadd.f32 %v1871, %v1901
      %v1910 = vadd.f32 %v1874, %v1902
      %v1911 = vadd.f32 %v1879, %v1903
      %v1912 = vadd.f32 %v1882, %v1904
      %v1913 = vadd.f32 %v1887, %v1905
      %v1914 = vadd.f32 %v1890, %v1906
      %v1915 = vadd.f32 %v1895, %v1907
      %v1916 = vadd.f32 %v1898, %v1908
      %1917 = vst.msk [vmem:[%s416] sm:$0xff] %vm591, %v1909
      %1918 = vst.msk [vmem:[%s416 + $0x8] sm:$0xff] %vm591, %v1910
      %1919 = vst.msk [vmem:[%s416 + $0x10] sm:$0xff] %vm591, %v1911
      %1920 = vst.msk [vmem:[%s416 + $0x18] sm:$0xff] %vm591, %v1912
      %1921 = vst.msk [vmem:[%s416 + $0x20] sm:$0xff] %vm591, %v1913
      %1922 = vst.msk [vmem:[%s416 + $0x28] sm:$0xff] %vm591, %v1914
      %1923 = vst.msk [vmem:[%s416 + $0x30] sm:$0xff] %vm591, %v1915
      %1924 = vst.msk [vmem:[%s416 + $0x38] sm:$0xff] %vm591, %v1916
      %v1925 = vsel %vm591, %v1909, 0.0
      %1926 = vadd.xlane.f32.xlu0 %v1925
      %v1927 = vpop.xlane.xlu0 %1926
      %v1928 = vsel %vm591, %v1910, 0.0
      %1929 = vadd.xlane.f32.xlu0 %v1928
      %v1930 = vpop.xlane.xlu0 %1929
      %v1931 = vsel %vm591, %v1911, 0.0
      %1932 = vadd.xlane.f32.xlu0 %v1931
      %v1933 = vpop.xlane.xlu0 %1932
      %v1934 = vsel %vm591, %v1912, 0.0
      %1935 = vadd.xlane.f32.xlu0 %v1934
      %v1936 = vpop.xlane.xlu0 %1935
      %v1937 = vsel %vm591, %v1913, 0.0
      %1938 = vadd.xlane.f32.xlu0 %v1937
      %v1939 = vpop.xlane.xlu0 %1938
      %v1940 = vsel %vm591, %v1914, 0.0
      %1941 = vadd.xlane.f32.xlu0 %v1940
      %v1942 = vpop.xlane.xlu0 %1941
      %v1943 = vsel %vm591, %v1915, 0.0
      %1944 = vadd.xlane.f32.xlu0 %v1943
      %v1945 = vpop.xlane.xlu0 %1944
      %v1946 = vsel %vm591, %v1916, 0.0
      %1947 = vadd.xlane.f32.xlu0 %v1946
      %v1948 = vpop.xlane.xlu0 %1947
      %v1949 = vrcp.pop 64.0
      %v1950 = vmul.f32 %v1927, %v1949
      %v1951 = vmul.f32 %v1930, %v1949
      %v1952 = vmul.f32 %v1933, %v1949
      %v1953 = vmul.f32 %v1936, %v1949
      %v1954 = vmul.f32 %v1939, %v1949
      %v1955 = vmul.f32 %v1942, %v1949
      %v1956 = vmul.f32 %v1945, %v1949
      %v1957 = vmul.f32 %v1948, %v1949
      %v1958 = vsub.f32 %v1909, %v1950
      %v1959 = vsub.f32 %v1910, %v1951
      %v1960 = vsub.f32 %v1911, %v1952
      %v1961 = vsub.f32 %v1912, %v1953
      %v1962 = vsub.f32 %v1913, %v1954
      %v1963 = vsub.f32 %v1914, %v1955
      %v1964 = vsub.f32 %v1915, %v1956
      %v1965 = vsub.f32 %v1916, %v1957
      %v1966 = vmul.f32 %v1958, %v1958
      %v1967 = vmul.f32 %v1959, %v1959
      %v1968 = vmul.f32 %v1960, %v1960
      %v1969 = vmul.f32 %v1961, %v1961
      %v1970 = vmul.f32 %v1962, %v1962
      %v1971 = vmul.f32 %v1963, %v1963
      %v1972 = vmul.f32 %v1964, %v1964
      %v1973 = vmul.f32 %v1965, %v1965
      %v1974 = vsel %vm591, %v1966, 0.0
      %1975 = vadd.xlane.f32.xlu0 %v1974
      %v1976 = vpop.xlane.xlu0 %1975
      %v1977 = vsel %vm591, %v1967, 0.0
      %1978 = vadd.xlane.f32.xlu0 %v1977
      %v1979 = vpop.xlane.xlu0 %1978
      %v1980 = vsel %vm591, %v1968, 0.0
      %1981 = vadd.xlane.f32.xlu0 %v1980
      %v1982 = vpop.xlane.xlu0 %1981
      %v1983 = vsel %vm591, %v1969, 0.0
      %1984 = vadd.xlane.f32.xlu0 %v1983
      %v1985 = vpop.xlane.xlu0 %1984
      %v1986 = vsel %vm591, %v1970, 0.0
      %1987 = vadd.xlane.f32.xlu0 %v1986
      %v1988 = vpop.xlane.xlu0 %1987
      %v1989 = vsel %vm591, %v1971, 0.0
      %1990 = vadd.xlane.f32.xlu0 %v1989
      %v1991 = vpop.xlane.xlu0 %1990
      %v1992 = vsel %vm591, %v1972, 0.0
      %1993 = vadd.xlane.f32.xlu0 %v1992
      %v1994 = vpop.xlane.xlu0 %1993
      %v1995 = vsel %vm591, %v1973, 0.0
      %1996 = vadd.xlane.f32.xlu0 %v1995
      %v1997 = vpop.xlane.xlu0 %1996
      %v1998 = vmul.f32 %v1976, %v1949
      %v1999 = vmul.f32 %v1979, %v1949
      %v2000 = vmul.f32 %v1982, %v1949
      %v2001 = vmul.f32 %v1985, %v1949
      %v2002 = vmul.f32 %v1988, %v1949
      %v2003 = vmul.f32 %v1991, %v1949
      %v2004 = vmul.f32 %v1994, %v1949
      %v2005 = vmul.f32 %v1997, %v1949
      %v2006 = vadd.f32 %v1998, 1e-06
      %v2007 = vadd.f32 %v1999, 1e-06
      %v2008 = vadd.f32 %v2000, 1e-06
      %v2009 = vadd.f32 %v2001, 1e-06
      %v2010 = vadd.f32 %v2002, 1e-06
      %v2011 = vadd.f32 %v2003, 1e-06
      %v2012 = vadd.f32 %v2004, 1e-06
      %v2013 = vadd.f32 %v2005, 1e-06
      %v2014 = vrsqrt.pop %v2006
      %v2015 = vrsqrt.pop %v2007
      %v2016 = vrsqrt.pop %v2008
      %v2017 = vrsqrt.pop %v2009
      %v2018 = vrsqrt.pop %v2010
      %v2019 = vrsqrt.pop %v2011
      %v2020 = vrsqrt.pop %v2012
      %v2021 = vrsqrt.pop %v2013
      %v2022 = vmul.f32 %v1958, %v2014
      %v2023 = vmul.f32 %v1959, %v2015
      %v2024 = vmul.f32 %v1960, %v2016
      %v2025 = vmul.f32 %v1961, %v2017
      %v2026 = vmul.f32 %v1962, %v2018
      %v2027 = vmul.f32 %v1963, %v2019
      %v2028 = vmul.f32 %v1964, %v2020
      %v2029 = vmul.f32 %v1965, %v2021
      %v2030 = vpack.c.bf16 %v2023, %v2022
      %v2031 = vpack.c.bf16 %v2025, %v2024
      %v2032 = vpack.c.bf16 %v2027, %v2026
      %v2033 = vpack.c.bf16 %v2029, %v2028
      %v2034 = vld [vmem:[%s5] sm:$0xf]
      %v2035 = vld [vmem:[%s5 + $0x4] sm:$0xf]
      %v2036 = vld [vmem:[%s5 + $0x8] sm:$0xf]
      %v2037 = vld [vmem:[%s5 + $0xc] sm:$0xf]
      %v2038 = vld [vmem:[%s5 + $0x10] sm:$0xf]
      %v2039 = vld [vmem:[%s5 + $0x14] sm:$0xf]
      %v2040 = vld [vmem:[%s5 + $0x18] sm:$0xf]
      %v2041 = vld [vmem:[%s5 + $0x1c] sm:$0xf]
      %v2042 = vld [vmem:[%s6] sm:$0x1]
      %v2044 = vlaneseq
      %v2045 = vshrl.u32 %v2044, 7
      %v2046 = vsub.s32 0, %v2045
      %v2047 = vrot.slane %v2042, %v2046
      %v2057 = vunpack.c.l.b16 %v2034
      %v2058 = vunpack.c.l.b16 %v2035
      %v2059 = vunpack.c.l.b16 %v2036
      %v2060 = vunpack.c.l.b16 %v2037
      %v2061 = vunpack.c.l.b16 %v2038
      %v2062 = vunpack.c.l.b16 %v2039
      %v2063 = vunpack.c.l.b16 %v2040
      %v2064 = vunpack.c.l.b16 %v2041
      %v2065 = vpack.c.b16 %v2058, %v2057
      %v2066 = vpack.c.b16 %v2060, %v2059
      %v2067 = vpack.c.b16 %v2062, %v2061
      %v2068 = vpack.c.b16 %v2064, %v2063
      %v2074 = vsel %vm591, %v2030, 0
      %v2077 = vsel %vm591, %v2031, 0
      %v2080 = vsel %vm591, %v2032, 0
      %v2083 = vsel %vm591, %v2033, 0
      %2085 = vmatprep.subr.bf16.mxu0 0
      %2086 = vmatpush1.bf16.msra.mxu0 %v2065
      %2087 = vmatprep.subr.bf16.mxu0 0
      %2088 = vmatpush1.bf16.msra.mxu0 %v2066
      %2089 = vmatprep.subr.bf16.mxu0 0
      %2090 = vmatpush1.bf16.msra.mxu0 %v2067
      %2091 = vmatprep.subr.bf16.mxu0 0
      %2092 = vmatpush1.bf16.msra.mxu0 %v2068
      %2093 = vmatprep.subr.bf16.mxu0 0
      %2094 = vmatpush1.bf16.msra.mxu0 0
      %2095 = vmatprep.subr.bf16.mxu0 0
      %2096 = vmatpush1.bf16.msra.mxu0 0
      %2097 = vmatprep.subr.bf16.mxu0 0
      %2098 = vmatpush1.bf16.msra.mxu0 0
      %2099 = vmatprep.subr.bf16.mxu0 0
      %2100 = vmatpush1.bf16.msra.mxu0 0
      %2101 = vmatprep.subr.bf16.mxu0 0
      %2102 = vmatpush1.bf16.msra.mxu0 0
      %2103 = vmatprep.subr.bf16.mxu0 0
      %2104 = vmatpush1.bf16.msra.mxu0 0
      %2105 = vmatprep.subr.bf16.mxu0 0
      %2106 = vmatpush1.bf16.msra.mxu0 0
      %2107 = vmatprep.subr.bf16.mxu0 0
      %2108 = vmatpush1.bf16.msra.mxu0 0
      %2109 = vmatprep.subr.bf16.mxu0 0
      %2110 = vmatpush1.bf16.msra.mxu0 0
      %2111 = vmatprep.subr.bf16.mxu0 0
      %2112 = vmatpush1.bf16.msra.mxu0 0
      %2113 = vmatprep.subr.bf16.mxu0 0
      %2114 = vmatpush1.bf16.msra.mxu0 0
      %2115 = vmatprep.subr.bf16.mxu0 0
      %2116 = vmatpush1.bf16.msra.mxu0 0
      %2117 = vmatprep.mubr.bf16.mxu0 0
      %2118 = vmatmul.mubr.bf16.gmra.mrb[0].mxu0 %v2074
      %v2119 = vpop.f32.mrb[0].mxu0
      %v2120 = vadd.f32 %v2047, %v2119
      %v2121 = vpop.f32.mrb[0].mxu0
      %v2122 = vpop.f32.mrb[0].mxu0
      %v2123 = vadd.f32 %v2047, %v2122
      %v2124 = vpop.f32.mrb[0].mxu0
      %2125 = vmatprep.mubr.bf16.mxu0 0
      %2126 = vmatmul.mubr.bf16.gmra.mrb[0].mxu0 %v2077
      %v2127 = vpop.f32.mrb[0].mxu0
      %v2128 = vadd.f32 %v2047, %v2127
      %v2129 = vpop.f32.mrb[0].mxu0
      %v2130 = vpop.f32.mrb[0].mxu0
      %v2131 = vadd.f32 %v2047, %v2130
      %v2132 = vpop.f32.mrb[0].mxu0
      %2133 = vmatprep.mubr.bf16.mxu0 0
      %2134 = vmatmul.mubr.bf16.gmra.mrb[0].mxu0 %v2080
      %v2135 = vpop.f32.mrb[0].mxu0
      %v2136 = vadd.f32 %v2047, %v2135
      %v2137 = vpop.f32.mrb[0].mxu0
      %v2138 = vpop.f32.mrb[0].mxu0
      %v2139 = vadd.f32 %v2047, %v2138
      %v2140 = vpop.f32.mrb[0].mxu0
      %2141 = vmatprep.mubr.bf16.mxu0 0
      %2142 = vmatmul.mubr.bf16.gmra.mrb[0].mxu0 %v2083
      %v2143 = vpop.f32.mrb[0].mxu0
      %v2144 = vadd.f32 %v2047, %v2143
      %v2145 = vpop.f32.mrb[0].mxu0
      %v2146 = vpop.f32.mrb[0].mxu0
      %v2147 = vadd.f32 %v2047, %v2146
      %v2148 = vpop.f32.mrb[0].mxu0
      %2149 = vdwg.mxu0
      %v2150 = vpack.c.bf16 %v2123, %v2120
      %v2151 = vpack.c.bf16 %v2131, %v2128
      %v2152 = vpack.c.bf16 %v2139, %v2136
      %v2153 = vpack.c.bf16 %v2147, %v2144
      %v2158 = vunpack.c.l.b16 %v2150
      %v2159 = vunpack.c.h.b16 %v2150
      %v2160 = vunpack.c.l.b16 %v2151
      %v2161 = vunpack.c.h.b16 %v2151
      %v2162 = vunpack.c.l.b16 %v2152
      %v2163 = vunpack.c.h.b16 %v2152
      %v2164 = vunpack.c.l.b16 %v2153
      %v2165 = vunpack.c.h.b16 %v2153
      %v2166 = vpack.c.b16 %v2158, %v2158
      %v2167 = vpack.c.b16 %v2159, %v2159
      %v2168 = vpack.c.b16 %v2160, %v2160
      %v2169 = vpack.c.b16 %v2161, %v2161
      %v2170 = vpack.c.b16 %v2162, %v2162
      %v2171 = vpack.c.b16 %v2163, %v2163
      %v2172 = vpack.c.b16 %v2164, %v2164
      %v2173 = vpack.c.b16 %v2165, %v2165
      %vm2182 = vcmask 519168
      %2183 = vst.msk [vmem:[%s426] sm:$0xf] %vm2182, %v2166
      %2184 = vst.msk [vmem:[%s426 + $0x4] sm:$0xf] %vm2182, %v2167
      %2185 = vst.msk [vmem:[%s426 + $0x8] sm:$0xf] %vm2182, %v2168
      %2186 = vst.msk [vmem:[%s426 + $0xc] sm:$0xf] %vm2182, %v2169
      %2187 = vst.msk [vmem:[%s426 + $0x10] sm:$0xf] %vm2182, %v2170
      %2188 = vst.msk [vmem:[%s426 + $0x14] sm:$0xf] %vm2182, %v2171
      %2189 = vst.msk [vmem:[%s426 + $0x18] sm:$0xf] %vm2182, %v2172
      %2190 = vst.msk [vmem:[%s426 + $0x1c] sm:$0xf] %vm2182, %v2173
      %s2191 = smul.u32 8, %s25
      %p2192 = scmp.lt.s32.totalorder %s24, 1
      %s2193 = scalar_select %p2192, %s24, 1
      %p2194 = scmp.lt.s32.totalorder %s2191, 7
      %s2195 = scalar_select %p2194, %s2191, 7
      %s2196 = smul.addr %s2193, 8
      %s2197 = sadd.s32 %s2195, %s2196
      %s2198 = smul.addr %s2197, 8
      %s2199 = scalar_lea.vmem %s7, %s2198
      %s2200 = smul.u32 8, %s25
      %p2201 = scmp.lt.s32.totalorder %s24, 1
      %s2202 = scalar_select %p2201, %s24, 1
      %p2203 = scmp.lt.s32.totalorder %s2200, 7
      %s2204 = scalar_select %p2203, %s2200, 7
      %s2205 = smul.addr %s2202, 8
      %s2206 = sadd.s32 %s2204, %s2205
      %s2207 = smul.addr %s2206, 4
      %s2208 = scalar_lea.vmem %s8, %s2207
      // Predicated region
      $region49: #{modulated_multiview_cond.21} parent=47 // pred_check
        %p2209 = pneg %p218
      $region50: #{modulated_multiview_cond.21} parent=47 // pred_check_branch
        %2211 = sbr.rel (%p2209) target = $region52
      $region51: #{modulated_multiview_cond.21} parent=47 // pred_region
        %s2212 = smul.u32 8, %s25
      $region52: #{modulated_multiview_cond.21} parent=47 // pred_fallthru
        _
      // Predicated region
      $region53: #{modulated_multiview_cond.21} parent=47 // pred_check
        %p2213 = pneg %p246
      $region54: #{modulated_multiview_cond.21} parent=47 // pred_check_branch
        %2215 = sbr.rel (%p2213) target = $region56
      $region55: #{modulated_multiview_cond.21} parent=47 // pred_region
        %s2216 = smul.u32 8, %s25
      $region56: #{modulated_multiview_cond.21} parent=47 // pred_fallthru
        _
    $region48: #{modulated_multiview_cond.21} parent=5 // pred_fallthru
      _
    %p2217 = scmp.le.s32.totalorder 2, %s15
    // Predicated region
    $region57: #{modulated_multiview_cond.21} parent=5 // pred_check
      %p2218 = pneg %p2217
    $region58: #{modulated_multiview_cond.21} parent=5 // pred_check_branch
      %2220 = sbr.rel (%p2218) target = $region60
    $region59: #{modulated_multiview_cond.21} parent=5 // pred_region
      %s2221 = ssub.s32 %s15, 2
      // Predicated region
      $region61: #{modulated_multiview_cond.21} parent=59 // pred_check
        %p2222 = pneg %p224
      $region62: #{modulated_multiview_cond.21} parent=59 // pred_check_branch
        %2224 = sbr.rel (%p2222) target = $region64
      $region63: #{modulated_multiview_cond.21} parent=59 // pred_region
        %s2225 = smul.u32 8, %s27
        %p2226 = scmp.lt.s32.totalorder %s26, 1
        %s2227 = scalar_select %p2226, %s26, 1
        %p2228 = scmp.lt.s32.totalorder %s2225, 7
        %s2229 = scalar_select %p2228, %s2225, 7
        %s2230 = smul.addr %s2227, 8
        %s2231 = sadd.s32 %s2229, %s2230
        %s2232 = smul.addr %s2231, 8
        %s2233 = scalar_lea.vmem %s7, %s2232
      $region64: #{modulated_multiview_cond.21} parent=59 // pred_fallthru
        _
      // Predicated region
      $region65: #{modulated_multiview_cond.21} parent=59 // pred_check
        %p2234 = pneg %p252
      $region66: #{modulated_multiview_cond.21} parent=59 // pred_check_branch
        %2236 = sbr.rel (%p2234) target = $region68
      $region67: #{modulated_multiview_cond.21} parent=59 // pred_region
        %s2237 = smul.u32 8, %s27
        %p2238 = scmp.lt.s32.totalorder %s26, 1
        %s2239 = scalar_select %p2238, %s26, 1
        %p2240 = scmp.lt.s32.totalorder %s2237, 7
        %s2241 = scalar_select %p2240, %s2237, 7
        %s2242 = smul.addr %s2239, 8
        %s2243 = sadd.s32 %s2241, %s2242
        %s2244 = smul.addr %s2243, 4
        %s2245 = scalar_lea.vmem %s8, %s2244
      $region68: #{modulated_multiview_cond.21} parent=59 // pred_fallthru
        _
    $region60: #{modulated_multiview_cond.21} parent=5 // pred_fallthru
      _
  $region6: #{modulated_multiview_cond.21} parent=0 // loop_footer
    %s19 = sadd.s32 1, %s15
  $region7: #{modulated_multiview_cond.21} parent=0 // loop_footer_branch
    %14 = sbr.rel target = $region3
  $region8: #{modulated_multiview_cond.21} parent=0 // loop_exit
    _

// kernel: modulated_multiview_cond.23
$region0: #{modulated_multiview_cond.23}
  #allocation0 [shape = 'u32[]', space=smem, size = 0x4, offset = 0x4, fixed_abs, tag = 'smem constant byte address 0x4 - core index']
  #allocation1 [shape = 'u32[144,128]{1,0:T(1,128)}', space=vmem, size = 0x12000, scoped, tag = 'internal scratch']
  %s0 = inlined_call_operand.vmem [shape: bf16[2,64,64], index: 0, kind: input, shape index: {}]
  %s1 = inlined_call_operand.vmem [shape: bf16[2,4,128], index: 1, kind: input, shape index: {}]
  %s2 = inlined_call_operand.vmem [shape: f32[2,64,64], index: 2, kind: input, shape index: {}]
  %s3 = inlined_call_operand.vmem [shape: bf16[64,64], index: 3, kind: input, shape index: {}]
  %s4 = inlined_call_operand.vmem [shape: f32[1,64], index: 4, kind: input, shape index: {}]
  %s5 = inlined_call_operand.vmem [shape: f32[2,64,64], index: 5, kind: output, shape index: {}]
  %s6 = sld [smem:[#allocation0]]
  $region53: #{modulated_multiview_cond.23} parent=0
    _
  %s8 = ssub.s32 1, %s6
  %s9 = scalar_select 0, %s8, %s6
  loop: start=0, step=1, limit=4
  $region2: #{modulated_multiview_cond.23} parent=0 // loop_pre_header
    _
  $region3: #{modulated_multiview_cond.23} parent=0 // loop_header
    %s11 = sphi 0, %s15
    %p12 = scmp.ge.s32.totalorder %s11, 4
    %s18 = sphi 0, %s30
    %s19 = sphi 0, %s26
    %s20 = sphi 0, %s18
    %s21 = sphi 0, %s19
    %s22 = sphi 0, %s20
    %s23 = sphi 0, %s21
    %s35 = sphi 0, %s37
    %s38 = sphi 0, %s35
    %s39 = sphi 0, %s38
    %s55 = sphi 0, %s39
    %s61 = sphi 0, %s63
    %s64 = sphi 0, %s61
    %s65 = sphi 0, %s64
    %s81 = sphi 0, %s65
    %s89 = sphi 0, %s91
    %s92 = sphi 0, %s89
    %s93 = sphi 0, %s92
    %s109 = sphi 0, %s93
    %s113 = sphi 0, %s113
    %s115 = sphi 0, %s113
    %s116 = sphi 0, %s115
    %s130 = sphi 0, %s116
    %s134 = sphi 0, %s134
    %s136 = sphi 0, %s134
    %s137 = sphi 0, %s136
    %s151 = sphi 0, %s137
    %s159 = sphi 0, %s161
    %s162 = sphi 0, %s159
    %s163 = sphi 0, %s162
    %s179 = sphi 0, %s163
  $region4: #{modulated_multiview_cond.23} parent=0 // loop_header_branch
    %14 = sbr.rel (%p12) target = $region8
  $region5: #{modulated_multiview_cond.23} parent=0 // loop_body
    %s16 = ssub.s32 %s11, 1
    %s17 = ssub.s32 %s11, 2
    %s24 = sadd.s32 1, %s19
    %p25 = scmp.ge.s32.totalorder %s24, 1
    %s26 = scalar_select %p25, 0, %s24
    %s27 = sadd.s32 1, %s18
    %s28 = scalar_select %p25, %s27, %s18
    %p29 = scmp.ge.s32.totalorder %s28, 2
    %s30 = scalar_select %p29, 0, %s28
    %s31 = ssub.s32 %s18, %s30
    %s32 = ssub.s32 %s19, %s26
    %s33 = sor.u32 %s31, %s32
    %p34 = scmp.eq.s32.totalorder %s33, 0
    %s36 = sadd.s32 %s35, 1
    %s37 = scalar_select %p34, %s35, %s36
    %p40 = pneg %p34
    %p41 = scmp.eq.s32.totalorder %s11, 1
    %p42 = por %p40, %p41
    %p43 = scmp.ne.s32.totalorder %s35, %s38
    %p44 = scmp.eq.s32.totalorder %s11, 0
    %p45 = por %p43, %p44
    %p46 = scmp.ne.s32.totalorder %s35, %s38
    %p47 = scmp.eq.s32.totalorder %s16, 1
    %p48 = por %p46, %p47
    %p49 = scmp.ne.s32.totalorder %s38, %s39
    %p50 = scmp.eq.s32.totalorder %s16, 0
    %p51 = por %p49, %p50
    %p52 = scmp.ne.s32.totalorder %s38, %s39
    %p53 = scmp.eq.s32.totalorder %s17, 1
    %p54 = por %p52, %p53
    %p56 = scmp.ne.s32.totalorder %s39, %s55
    %p57 = scmp.eq.s32.totalorder %s17, 0
    %p58 = por %p56, %p57
    %s59 = ssub.s32 %s18, %s30
    %p60 = scmp.eq.s32.totalorder %s59, 0
    %s62 = sadd.s32 %s61, 1
    %s63 = scalar_select %p60, %s61, %s62
    %p66 = pneg %p60
    %p67 = scmp.eq.s32.totalorder %s11, 1
    %p68 = por %p66, %p67
    %p69 = scmp.ne.s32.totalorder %s61, %s64
    %p70 = scmp.eq.s32.totalorder %s11, 0
    %p71 = por %p69, %p70
    %p72 = scmp.ne.s32.totalorder %s61, %s64
    %p73 = scmp.eq.s32.totalorder %s16, 1
    %p74 = por %p72, %p73
    %p75 = scmp.ne.s32.totalorder %s64, %s65
    %p76 = scmp.eq.s32.totalorder %s16, 0
    %p77 = por %p75, %p76
    %p78 = scmp.ne.s32.totalorder %s64, %s65
    %p79 = scmp.eq.s32.totalorder %s17, 1
    %p80 = por %p78, %p79
    %p82 = scmp.ne.s32.totalorder %s65, %s81
    %p83 = scmp.eq.s32.totalorder %s17, 0
    %p84 = por %p82, %p83
    %s85 = ssub.s32 %s18, %s30
    %s86 = ssub.s32 %s19, %s26
    %s87 = sor.u32 %s85, %s86
    %p88 = scmp.eq.s32.totalorder %s87, 0
    %s90 = sadd.s32 %s89, 1
    %s91 = scalar_select %p88, %s89, %s90
    %p94 = pneg %p88
    %p95 = scmp.eq.s32.totalorder %s11, 1
    %p96 = por %p94, %p95
    %p97 = scmp.ne.s32.totalorder %s89, %s92
    %p98 = scmp.eq.s32.totalorder %s11, 0
    %p99 = por %p97, %p98
    %p100 = scmp.ne.s32.totalorder %s89, %s92
    %p101 = scmp.eq.s32.totalorder %s16, 1
    %p102 = por %p100, %p101
    %p103 = scmp.ne.s32.totalorder %s92, %s93
    %p104 = scmp.eq.s32.totalorder %s16, 0
    %p105 = por %p103, %p104
    %p106 = scmp.ne.s32.totalorder %s92, %s93
    %p107 = scmp.eq.s32.totalorder %s17, 1
    %p108 = por %p106, %p107
    %p110 = scmp.ne.s32.totalorder %s93, %s109
    %p111 = scmp.eq.s32.totalorder %s17, 0
    %p112 = por %p110, %p111
    %s114 = sadd.s32 %s113, 1
    %p117 = scmp.eq.s32.totalorder %s11, 1
    %p118 = scmp.ne.s32.totalorder %s113, %s115
    %p119 = scmp.eq.s32.totalorder %s11, 0
    %p120 = por %p118, %p119
    %p121 = scmp.ne.s32.totalorder %s113, %s115
    %p122 = scmp.eq.s32.totalorder %s16, 1
    %p123 = por %p121, %p122
    %p124 = scmp.ne.s32.totalorder %s115, %s116
    %p125 = scmp.eq.s32.totalorder %s16, 0
    %p126 = por %p124, %p125
    %p127 = scmp.ne.s32.totalorder %s115, %s116
    %p128 = scmp.eq.s32.totalorder %s17, 1
    %p129 = por %p127, %p128
    %p131 = scmp.ne.s32.totalorder %s116, %s130
    %p132 = scmp.eq.s32.totalorder %s17, 0
    %p133 = por %p131, %p132
    %s135 = sadd.s32 %s134, 1
    %p138 = scmp.eq.s32.totalorder %s11, 1
    %p139 = scmp.ne.s32.totalorder %s134, %s136
    %p140 = scmp.eq.s32.totalorder %s11, 0
    %p141 = por %p139, %p140
    %p142 = scmp.ne.s32.totalorder %s134, %s136
    %p143 = scmp.eq.s32.totalorder %s16, 1
    %p144 = por %p142, %p143
    %p145 = scmp.ne.s32.totalorder %s136, %s137
    %p146 = scmp.eq.s32.totalorder %s16, 0
    %p147 = por %p145, %p146
    %p148 = scmp.ne.s32.totalorder %s136, %s137
    %p149 = scmp.eq.s32.totalorder %s17, 1
    %p150 = por %p148, %p149
    %p152 = scmp.ne.s32.totalorder %s137, %s151
    %p153 = scmp.eq.s32.totalorder %s17, 0
    %p154 = por %p152, %p153
    %s155 = ssub.s32 %s18, %s30
    %s156 = ssub.s32 %s19, %s26
    %s157 = sor.u32 %s155, %s156
    %p158 = scmp.eq.s32.totalorder %s157, 0
    %s160 = sadd.s32 %s159, 1
    %s161 = scalar_select %p158, %s159, %s160
    %p164 = pneg %p158
    %p165 = scmp.eq.s32.totalorder %s11, 1
    %p166 = por %p164, %p165
    %p167 = scmp.ne.s32.totalorder %s159, %s162
    %p168 = scmp.eq.s32.totalorder %s11, 0
    %p169 = por %p167, %p168
    %p170 = scmp.ne.s32.totalorder %s159, %s162
    %p171 = scmp.eq.s32.totalorder %s16, 1
    %p172 = por %p170, %p171
    %p173 = scmp.ne.s32.totalorder %s162, %s163
    %p174 = scmp.eq.s32.totalorder %s16, 0
    %p175 = por %p173, %p174
    %p176 = scmp.ne.s32.totalorder %s162, %s163
    %p177 = scmp.eq.s32.totalorder %s17, 1
    %p178 = por %p176, %p177
    %p180 = scmp.ne.s32.totalorder %s163, %s179
    %p181 = scmp.eq.s32.totalorder %s17, 0
    %p182 = por %p180, %p181
    %p183 = scmp.le.s32.totalorder 1, %s11
    %p184 = scmp.lt.s32.totalorder %s11, 3
    %p185 = pnand %p183, %p184
    %p186 = pneg %p185
    // Predicated region
    $region9: #{modulated_multiview_cond.23} parent=5 // pred_check
      _
    $region10: #{modulated_multiview_cond.23} parent=5 // pred_check_branch
      %188 = sbr.rel (%p185) target = $region12
    $region11: #{modulated_multiview_cond.23} parent=5 // pred_region
      %s189 = ssub.s32 %s11, 1
      // Predicated region
      $region13: #{modulated_multiview_cond.23} parent=11 // pred_check
        %p190 = pneg %p126
      $region14: #{modulated_multiview_cond.23} parent=11 // pred_check_branch
        %192 = sbr.rel (%p190) target = $region16
      $region15: #{modulated_multiview_cond.23} parent=11 // pred_region
        _
      $region16: #{modulated_multiview_cond.23} parent=11 // pred_fallthru
        _
      // Predicated region
      $region17: #{modulated_multiview_cond.23} parent=11 // pred_check
        %p193 = pneg %p147
      $region18: #{modulated_multiview_cond.23} parent=11 // pred_check_branch
        %195 = sbr.rel (%p193) target = $region20
      $region19: #{modulated_multiview_cond.23} parent=11 // pred_region
        _
      $region20: #{modulated_multiview_cond.23} parent=11 // pred_fallthru
        _
    $region12: #{modulated_multiview_cond.23} parent=5 // pred_fallthru
      _
    %p196 = scmp.lt.s32.totalorder %s11, 2
    // Predicated region
    $region21: #{modulated_multiview_cond.23} parent=5 // pred_check
      %p197 = pneg %p196
    $region22: #{modulated_multiview_cond.23} parent=5 // pred_check_branch
      %199 = sbr.rel (%p197) target = $region24
    $region23: #{modulated_multiview_cond.23} parent=5 // pred_region
      // Predicated region
      $region25: #{modulated_multiview_cond.23} parent=23 // pred_check
        %p200 = pneg %p45
      $region26: #{modulated_multiview_cond.23} parent=23 // pred_check_branch
        %202 = sbr.rel (%p200) target = $region28
      $region27: #{modulated_multiview_cond.23} parent=23 // pred_region
        %s203 = smul.u32 8, %s19
        %p204 = scmp.lt.s32.totalorder %s18, 1
        %s205 = scalar_select %p204, %s18, 1
        %p206 = scmp.lt.s32.totalorder %s203, 7
        %s207 = scalar_select %p206, %s203, 7
        %s208 = smul.addr %s205, 8
        %s209 = sadd.s32 %s207, %s208
        %s210 = smul.addr %s209, 4
        %s211 = scalar_lea.vmem %s0, %s210
        %s212 = smul.u32 8, %s19
      $region28: #{modulated_multiview_cond.23} parent=23 // pred_fallthru
        _
      // Predicated region
      $region29: #{modulated_multiview_cond.23} parent=23 // pred_check
        %p213 = pneg %p71
      $region30: #{modulated_multiview_cond.23} parent=23 // pred_check_branch
        %215 = sbr.rel (%p213) target = $region32
      $region31: #{modulated_multiview_cond.23} parent=23 // pred_region
        %p216 = scmp.lt.s32.totalorder %s18, 1
        %s217 = scalar_select %p216, %s18, 1
        %s218 = smul.addr %s217, 2
        %s219 = scalar_lea.vmem %s1, %s218
      $region32: #{modulated_multiview_cond.23} parent=23 // pred_fallthru
        _
      // Predicated region
      $region33: #{modulated_multiview_cond.23} parent=23 // pred_check
        %p220 = pneg %p99
      $region34: #{modulated_multiview_cond.23} parent=23 // pred_check_branch
        %222 = sbr.rel (%p220) target = $region36
      $region35: #{modulated_multiview_cond.23} parent=23 // pred_region
        %s223 = smul.u32 8, %s19
        %p224 = scmp.lt.s32.totalorder %s18, 1
        %s225 = scalar_select %p224, %s18, 1
        %p226 = scmp.lt.s32.totalorder %s223, 7
        %s227 = scalar_select %p226, %s223, 7
        %s228 = smul.addr %s225, 8
        %s229 = sadd.s32 %s227, %s228
        %s230 = smul.addr %s229, 8
        %s231 = scalar_lea.vmem %s2, %s230
        %s232 = smul.u32 8, %s19
      $region36: #{modulated_multiview_cond.23} parent=23 // pred_fallthru
        _
    $region24: #{modulated_multiview_cond.23} parent=5 // pred_fallthru
      _
    %p233 = scmp.le.s32.totalorder 1, %s11
    %p234 = scmp.lt.s32.totalorder %s11, 3
    %p235 = pnand %p233, %p234
    %p236 = pneg %p235
    // Predicated region
    $region37: #{modulated_multiview_cond.23} parent=5 // pred_check
      _
    $region38: #{modulated_multiview_cond.23} parent=5 // pred_check_branch
      %238 = sbr.rel (%p235) target = $region40
    $region39: #{modulated_multiview_cond.23} parent=5 // pred_region
      %s239 = ssub.s32 %s11, 1
      %s240 = smul.u32 8, %s21
      %p241 = scmp.lt.s32.totalorder %s20, 1
      %s242 = scalar_select %p241, %s20, 1
      %p243 = scmp.lt.s32.totalorder %s240, 7
      %s244 = scalar_select %p243, %s240, 7
      %s245 = smul.addr %s242, 8
      %s246 = sadd.s32 %s244, %s245
      %s247 = smul.addr %s246, 4
      %s248 = scalar_lea.vmem %s0, %s247
      %p249 = pneg %p51
      %p250 = pneg %p48
      %p251 = scmp.lt.s32.totalorder %s20, 1
      %s252 = scalar_select %p251, %s20, 1
      %s253 = smul.addr %s252, 2
      %s254 = scalar_lea.vmem %s1, %s253
      %p255 = pneg %p77
      %p256 = pneg %p74
      %s257 = smul.u32 8, %s21
      %p258 = scmp.lt.s32.totalorder %s20, 1
      %s259 = scalar_select %p258, %s20, 1
      %p260 = scmp.lt.s32.totalorder %s257, 7
      %s261 = scalar_select %p260, %s257, 7
      %s262 = smul.addr %s259, 8
      %s263 = sadd.s32 %s261, %s262
      %s264 = smul.addr %s263, 8
      %s265 = scalar_lea.vmem %s2, %s264
      %p266 = pneg %p105
      %p267 = pneg %p102
      %p268 = pneg %p126
      %p269 = pneg %p123
      %p270 = pneg %p147
      %p271 = pneg %p144
      %p272 = pneg %p175
      %p273 = pneg %p172
      %s274 = smul.u32 8, %s21
      %p275 = scmp.lt.s32.totalorder %s20, 1
      %s276 = scalar_select %p275, %s20, 1
      %p277 = scmp.lt.s32.totalorder %s274, 7
      %s278 = scalar_select %p277, %s274, 7
      %s279 = smul.addr %s276, 8
      %s280 = sadd.s32 %s278, %s279
      %s281 = smul.addr %s280, 8
      %s282 = scalar_lea.vmem %s5, %s281
      %s283 = smul.u32 8, %s21
      %p284 = scmp.lt.s32.totalorder %s20, 1
      %s285 = scalar_select %p284, %s20, 1
      %p286 = scmp.lt.s32.totalorder %s283, 7
      %s287 = scalar_select %p286, %s283, 7
      %s288 = smul.addr %s285, 8
      %s289 = sadd.s32 %s287, %s288
      %s290 = smul.addr %s289, 4
      %s291 = scalar_lea.vmem %s0, %s290
      %s292 = smul.u32 8, %s21
      %p293 = scmp.lt.s32.totalorder %s20, 1
      %s294 = scalar_select %p293, %s20, 1
      %s295 = smul.addr %s294, 2
      %s296 = scalar_lea.vmem %s1, %s295
      %s297 = smul.u32 8, %s21
      %p298 = scmp.lt.s32.totalorder %s20, 1
      %s299 = scalar_select %p298, %s20, 1
      %p300 = scmp.lt.s32.totalorder %s297, 7
      %s301 = scalar_select %p300, %s297, 7
      %s302 = smul.addr %s299, 8
      %s303 = sadd.s32 %s301, %s302
      %s304 = smul.addr %s303, 8
      %s305 = scalar_lea.vmem %s2, %s304
      %s306 = smul.u32 8, %s21
      %s307 = smul.u32 8, %s21
      %p308 = scmp.lt.s32.totalorder %s20, 1
      %s309 = scalar_select %p308, %s20, 1
      %p310 = scmp.lt.s32.totalorder %s307, 7
      %s311 = scalar_select %p310, %s307, 7
      %s312 = smul.addr %s309, 8
      %s313 = sadd.s32 %s311, %s312
      %s314 = smul.addr %s313, 8
      %s315 = scalar_lea.vmem %s5, %s314
      %s316 = smul.u32 8, %s21
      %v318 = vld [vmem:[%s291] sm:$0xf]
      %v319 = vld [vmem:[%s291 + $0x4] sm:$0xf]
      %v320 = vld [vmem:[%s291 + $0x8] sm:$0xf]
      %v321 = vld [vmem:[%s291 + $0xc] sm:$0xf]
      %v322 = vld [vmem:[%s291 + $0x10] sm:$0xf]
      %v323 = vld [vmem:[%s291 + $0x14] sm:$0xf]
      %v324 = vld [vmem:[%s291 + $0x18] sm:$0xf]
      %v325 = vld [vmem:[%s291 + $0x1c] sm:$0xf]
      %v326 = vld [vmem:[%s296] sm:$0x3]
      %v335 = vunpack.c.l.b16 %v318
      %v336 = vunpack.c.l.b16 %v319
      %v337 = vunpack.c.l.b16 %v320
      %v338 = vunpack.c.l.b16 %v321
      %v339 = vunpack.c.l.b16 %v322
      %v340 = vunpack.c.l.b16 %v323
      %v341 = vunpack.c.l.b16 %v324
      %v342 = vunpack.c.l.b16 %v325
      %v343 = vpack.c.b16 %v336, %v335
      %v344 = vpack.c.b16 %v338, %v337
      %v345 = vpack.c.b16 %v340, %v339
      %v346 = vpack.c.b16 %v342, %v341
      %vm347 = vcmask 130048
      %v349 = vsel %vm347, %v343, 0
      %v352 = vsel %vm347, %v344, 0
      %v355 = vsel %vm347, %v345, 0
      %v358 = vsel %vm347, %v346, 0
      %v361 = vsel %vm347, %v326, 0
      %363 = vmatprep.subr.bf16.mxu0 0
      %364 = vmatpush1.bf16.xpose.msra.mxu0 %v361
      %365 = vmatprep.subr.bf16.mxu0 0
      %366 = vmatpush1.bf16.xpose.msra.mxu0 0
      %367 = vmatprep.subr.bf16.mxu0 0
      %368 = vmatpush1.bf16.xpose.msra.mxu0 0
      %369 = vmatprep.subr.bf16.mxu0 0
      %370 = vmatpush1.bf16.xpose.msra.mxu0 0
      %371 = vmatprep.subr.bf16.mxu0 0
      %372 = vmatpush1.bf16.xpose.msra.mxu0 0
      %373 = vmatprep.subr.bf16.mxu0 0
      %374 = vmatpush1.bf16.xpose.msra.mxu0 0
      %375 = vmatprep.subr.bf16.mxu0 0
      %376 = vmatpush1.bf16.xpose.msra.mxu0 0
      %377 = vmatprep.subr.bf16.mxu0 0
      %378 = vmatpush1.bf16.xpose.msra.mxu0 0
      %379 = vmatprep.subr.bf16.mxu0 0
      %380 = vmatpush1.bf16.xpose.msra.mxu0 0
      %381 = vmatprep.subr.bf16.mxu0 0
      %382 = vmatpush1.bf16.xpose.msra.mxu0 0
      %383 = vmatprep.subr.bf16.mxu0 0
      %384 = vmatpush1.bf16.xpose.msra.mxu0 0
      %385 = vmatprep.subr.bf16.mxu0 0
      %386 = vmatpush1.bf16.xpose.msra.mxu0 0
      %387 = vmatprep.subr.bf16.mxu0 0
      %388 = vmatpush1.bf16.xpose.msra.mxu0 0
      %389 = vmatprep.subr.bf16.mxu0 0
      %390 = vmatpush1.bf16.xpose.msra.mxu0 0
      %391 = vmatprep.subr.bf16.mxu0 0
      %392 = vmatpush1.bf16.xpose.msra.mxu0 0
      %393 = vmatprep.subr.bf16.mxu0 0
      %394 = vmatpush1.bf16.xpose.msra.mxu0 0
      %395 = vmatprep.mubr.bf16.mxu0 0
      %396 = vmatmul.mubr.bf16.gmra.mrb[0].mxu0 %v349
      %v397 = vpop.f32.mrb[0].mxu0
      %v398 = vadd.f32 0.0, %v397
      %v399 = vpop.f32.mrb[0].mxu0
      %v400 = vpop.f32.mrb[0].mxu0
      %v401 = vadd.f32 0.0, %v400
      %v402 = vpop.f32.mrb[0].mxu0
      %403 = vmatprep.mubr.bf16.mxu0 0
      %404 = vmatmul.mubr.bf16.gmra.mrb[0].mxu0 %v352
      %v405 = vpop.f32.mrb[0].mxu0
      %v406 = vadd.f32 0.0, %v405
      %v407 = vpop.f32.mrb[0].mxu0
      %v408 = vpop.f32.mrb[0].mxu0
      %v409 = vadd.f32 0.0, %v408
      %v410 = vpop.f32.mrb[0].mxu0
      %411 = vmatprep.mubr.bf16.mxu0 0
      %412 = vmatmul.mubr.bf16.gmra.mrb[0].mxu0 %v355
      %v413 = vpop.f32.mrb[0].mxu0
      %v414 = vadd.f32 0.0, %v413
      %v415 = vpop.f32.mrb[0].mxu0
      %v416 = vpop.f32.mrb[0].mxu0
      %v417 = vadd.f32 0.0, %v416
      %v418 = vpop.f32.mrb[0].mxu0
      %419 = vmatprep.mubr.bf16.mxu0 0
      %420 = vmatmul.mubr.bf16.gmra.mrb[0].mxu0 %v358
      %v421 = vpop.f32.mrb[0].mxu0
      %v422 = vadd.f32 0.0, %v421
      %v423 = vpop.f32.mrb[0].mxu0
      %v424 = vpop.f32.mrb[0].mxu0
      %v425 = vadd.f32 0.0, %v424
      %v426 = vpop.f32.mrb[0].mxu0
      %427 = vdwg.mxu0
      %v428 = vmul.f32 %v398, 0.25
      %v429 = vmul.f32 %v401, 0.25
      %v430 = vmul.f32 %v406, 0.25
      %v431 = vmul.f32 %v409, 0.25
      %v432 = vmul.f32 %v414, 0.25
      %v433 = vmul.f32 %v417, 0.25
      %v434 = vmul.f32 %v422, 0.25
      %v435 = vmul.f32 %v425, 0.25
      %vm436 = vcmask 31744
      %v437 = vsel %vm436, %v428, -inf
      %438 = vmax.xlane.f32.xlu0 %v437
      %v439 = vpop.xlane.xlu0 %438
      %v440 = vsel %vm436, %v429, -inf
      %441 = vmax.xlane.f32.xlu0 %v440
      %v442 = vpop.xlane.xlu0 %441
      %v443 = vsel %vm436, %v430, -inf
      %444 = vmax.xlane.f32.xlu0 %v443
      %v445 = vpop.xlane.xlu0 %444
      %v446 = vsel %vm436, %v431, -inf
      %447 = vmax.xlane.f32.xlu0 %v446
      %v448 = vpop.xlane.xlu0 %447
      %v449 = vsel %vm436, %v432, -inf
      %450 = vmax.xlane.f32.xlu0 %v449
      %v451 = vpop.xlane.xlu0 %450
      %v452 = vsel %vm436, %v433, -inf
      %453 = vmax.xlane.f32.xlu0 %v452
      %v454 = vpop.xlane.xlu0 %453
      %v455 = vsel %vm436, %v434, -inf
      %456 = vmax.xlane.f32.xlu0 %v455
      %v457 = vpop.xlane.xlu0 %456
      %v458 = vsel %vm436, %v435, -inf
      %459 = vmax.xlane.f32.xlu0 %v458
      %v460 = vpop.xlane.xlu0 %459
      %v461 = vsub.f32 %v428, %v439
      %v462 = vsub.f32 %v429, %v442
      %v463 = vsub.f32 %v430, %v445
      %v464 = vsub.f32 %v431, %v448
      %v465 = vsub.f32 %v432, %v451
      %v466 = vsub.f32 %v433, %v454
      %v467 = vsub.f32 %v434, %v457
      %v468 = vsub.f32 %v435, %v460
      %v469 = vmul.f32 %v461, 1.442695
      %v470 = vpow.pop %v469
      %v471 = vmul.f32 %v462, 1.442695
      %v472 = vpow.pop %v471
      %v473 = vmul.f32 %v463, 1.442695
      %v474 = vpow.pop %v473
      %v475 = vmul.f32 %v464, 1.442695
      %v476 = vpow.pop %v475
      %v477 = vmul.f32 %v465, 1.442695
      %v478 = vpow.pop %v477
      %v479 = vmul.f32 %v466, 1.442695
      %v480 = vpow.pop %v479
      %v481 = vmul.f32 %v467, 1.442695
      %v482 = vpow.pop %v481
      %v483 = vmul.f32 %v468, 1.442695
      %v484 = vpow.pop %v483
      %v485 = vsel %vm436, %v470, 0.0
      %486 = vadd.xlane.f32.xlu0 %v485
      %v487 = vpop.xlane.xlu0 %486
      %v488 = vsel %vm436, %v472, 0.0
      %489 = vadd.xlane.f32.xlu0 %v488
      %v490 = vpop.xlane.xlu0 %489
      %v491 = vsel %vm436, %v474, 0.0
      %492 = vadd.xlane.f32.xlu0 %v491
      %v493 = vpop.xlane.xlu0 %492
      %v494 = vsel %vm436, %v476, 0.0
      %495 = vadd.xlane.f32.xlu0 %v494
      %v496 = vpop.xlane.xlu0 %495
      %v497 = vsel %vm436, %v478, 0.0
      %498 = vadd.xlane.f32.xlu0 %v497
      %v499 = vpop.xlane.xlu0 %498
      %v500 = vsel %vm436, %v480, 0.0
      %501 = vadd.xlane.f32.xlu0 %v500
      %v502 = vpop.xlane.xlu0 %501
      %v503 = vsel %vm436, %v482, 0.0
      %504 = vadd.xlane.f32.xlu0 %v503
      %v505 = vpop.xlane.xlu0 %504
      %v506 = vsel %vm436, %v484, 0.0
      %507 = vadd.xlane.f32.xlu0 %v506
      %v508 = vpop.xlane.xlu0 %507
      %v509 = vpack.c.bf16 %v472, %v470
      %v510 = vpack.c.bf16 %v476, %v474
      %v511 = vpack.c.bf16 %v480, %v478
      %v512 = vpack.c.bf16 %v484, %v482
      %v515 = vunpack.c.l.s4 1983009808
      %v516 = vunpack.c.0.s8 %v515
      %v517 = vlaneseq
      %v518 = vshrl.u32 %v517, 7
      %v519 = vsub.s32 %v516, %v518
      %v520 = vrot.slane %v326, %v519
      %521 = vrot.lane.b32.xlu0 %v520, 64
      %v522 = vpop.permute.xlu0 %521
      %v524 = vsel %vm436, %v509, 0
      %v527 = vsel %vm436, %v510, 0
      %v530 = vsel %vm436, %v511, 0
      %v533 = vsel %vm436, %v512, 0
      %vm535 = vcmask 1041408
      %v537 = vsel %vm535, %v522, 0
      %539 = vmatprep.subr.bf16.mxu0 0
      %540 = vmatpush1.bf16.msra.mxu0 %v537
      %541 = vmatprep.subr.bf16.mxu0 0
      %542 = vmatpush1.bf16.msra.mxu0 0
      %543 = vmatprep.subr.bf16.mxu0 0
      %544 = vmatpush1.bf16.msra.mxu0 0
      %545 = vmatprep.subr.bf16.mxu0 0
      %546 = vmatpush1.bf16.msra.mxu0 0
      %547 = vmatprep.subr.bf16.mxu0 0
      %548 = vmatpush1.bf16.msra.mxu0 0
      %549 = vmatprep.subr.bf16.mxu0 0
      %550 = vmatpush1.bf16.msra.mxu0 0
      %551 = vmatprep.subr.bf16.mxu0 0
      %552 = vmatpush1.bf16.msra.mxu0 0
      %553 = vmatprep.subr.bf16.mxu0 0
      %554 = vmatpush1.bf16.msra.mxu0 0
      %555 = vmatprep.subr.bf16.mxu0 0
      %556 = vmatpush1.bf16.msra.mxu0 0
      %557 = vmatprep.subr.bf16.mxu0 0
      %558 = vmatpush1.bf16.msra.mxu0 0
      %559 = vmatprep.subr.bf16.mxu0 0
      %560 = vmatpush1.bf16.msra.mxu0 0
      %561 = vmatprep.subr.bf16.mxu0 0
      %562 = vmatpush1.bf16.msra.mxu0 0
      %563 = vmatprep.subr.bf16.mxu0 0
      %564 = vmatpush1.bf16.msra.mxu0 0
      %565 = vmatprep.subr.bf16.mxu0 0
      %566 = vmatpush1.bf16.msra.mxu0 0
      %567 = vmatprep.subr.bf16.mxu0 0
      %568 = vmatpush1.bf16.msra.mxu0 0
      %569 = vmatprep.subr.bf16.mxu0 0
      %570 = vmatpush1.bf16.msra.mxu0 0
      %571 = vmatprep.mubr.bf16.mxu0 0
      %572 = vmatmul.mubr.bf16.gmra.mrb[0].mxu0 %v524
      %v573 = vpop.f32.mrb[0].mxu0
      %v574 = vadd.f32 0.0, %v573
      %v575 = vpop.f32.mrb[0].mxu0
      %v576 = vpop.f32.mrb[0].mxu0
      %v577 = vadd.f32 0.0, %v576
      %v578 = vpop.f32.mrb[0].mxu0
      %579 = vmatprep.mubr.bf16.mxu0 0
      %580 = vmatmul.mubr.bf16.gmra.mrb[0].mxu0 %v527
      %v581 = vpop.f32.mrb[0].mxu0
      %v582 = vadd.f32 0.0, %v581
      %v583 = vpop.f32.mrb[0].mxu0
      %v584 = vpop.f32.mrb[0].mxu0
      %v585 = vadd.f32 0.0, %v584
      %v586 = vpop.f32.mrb[0].mxu0
      %587 = vmatprep.mubr.bf16.mxu0 0
      %588 = vmatmul.mubr.bf16.gmra.mrb[0].mxu0 %v530
      %v589 = vpop.f32.mrb[0].mxu0
      %v590 = vadd.f32 0.0, %v589
      %v591 = vpop.f32.mrb[0].mxu0
      %v592 = vpop.f32.mrb[0].mxu0
      %v593 = vadd.f32 0.0, %v592
      %v594 = vpop.f32.mrb[0].mxu0
      %595 = vmatprep.mubr.bf16.mxu0 0
      %596 = vmatmul.mubr.bf16.gmra.mrb[0].mxu0 %v533
      %v597 = vpop.f32.mrb[0].mxu0
      %v598 = vadd.f32 0.0, %v597
      %v599 = vpop.f32.mrb[0].mxu0
      %v600 = vpop.f32.mrb[0].mxu0
      %v601 = vadd.f32 0.0, %v600
      %v602 = vpop.f32.mrb[0].mxu0
      %603 = vdwg.mxu0
      %v604 = vrcp.pop %v487
      %v605 = vmul.f32 %v574, %v604
      %v606 = vrcp.pop %v490
      %v607 = vmul.f32 %v577, %v606
      %v608 = vrcp.pop %v493
      %v609 = vmul.f32 %v582, %v608
      %v610 = vrcp.pop %v496
      %v611 = vmul.f32 %v585, %v610
      %v612 = vrcp.pop %v499
      %v613 = vmul.f32 %v590, %v612
      %v614 = vrcp.pop %v502
      %v615 = vmul.f32 %v593, %v614
      %v616 = vrcp.pop %v505
      %v617 = vmul.f32 %v598, %v616
      %v618 = vrcp.pop %v508
      %v619 = vmul.f32 %v601, %v618
      %620 = vrot.lane.b32.xlu0 %v343, 112
      %v621 = vpop.permute.xlu0 %620
      %622 = vrot.lane.b32.xlu0 %v344, 112
      %v623 = vpop.permute.xlu0 %622
      %624 = vrot.lane.b32.xlu0 %v345, 112
      %v625 = vpop.permute.xlu0 %624
      %626 = vrot.lane.b32.xlu0 %v346, 112
      %v627 = vpop.permute.xlu0 %626
      %628 = vrot.lane.b32.xlu0 %v520, 112
      %v629 = vpop.permute.xlu0 %628
      %v631 = vsel %vm347, %v621, 0
      %v634 = vsel %vm347, %v623, 0
      %v637 = vsel %vm347, %v625, 0
      %v640 = vsel %vm347, %v627, 0
      %v643 = vsel %vm347, %v629, 0
      %645 = vmatprep.subr.bf16.mxu0 0
      %646 = vmatpush1.bf16.xpose.msra.mxu0 %v643
      %647 = vmatprep.subr.bf16.mxu0 0
      %648 = vmatpush1.bf16.xpose.msra.mxu0 0
      %649 = vmatprep.subr.bf16.mxu0 0
      %650 = vmatpush1.bf16.xpose.msra.mxu0 0
      %651 = vmatprep.subr.bf16.mxu0 0
      %652 = vmatpush1.bf16.xpose.msra.mxu0 0
      %653 = vmatprep.subr.bf16.mxu0 0
      %654 = vmatpush1.bf16.xpose.msra.mxu0 0
      %655 = vmatprep.subr.bf16.mxu0 0
      %656 = vmatpush1.bf16.xpose.msra.mxu0 0
      %657 = vmatprep.subr.bf16.mxu0 0
      %658 = vmatpush1.bf16.xpose.msra.mxu0 0
      %659 = vmatprep.subr.bf16.mxu0 0
      %660 = vmatpush1.bf16.xpose.msra.mxu0 0
      %661 = vmatprep.subr.bf16.mxu0 0
      %662 = vmatpush1.bf16.xpose.msra.mxu0 0
      %663 = vmatprep.subr.bf16.mxu0 0
      %664 = vmatpush1.bf16.xpose.msra.mxu0 0
      %665 = vmatprep.subr.bf16.mxu0 0
      %666 = vmatpush1.bf16.xpose.msra.mxu0 0
      %667 = vmatprep.subr.bf16.mxu0 0
      %668 = vmatpush1.bf16.xpose.msra.mxu0 0
      %669 = vmatprep.subr.bf16.mxu0 0
      %670 = vmatpush1.bf16.xpose.msra.mxu0 0
      %671 = vmatprep.subr.bf16.mxu0 0
      %672 = vmatpush1.bf16.xpose.msra.mxu0 0
      %673 = vmatprep.subr.bf16.mxu0 0
      %674 = vmatpush1.bf16.xpose.msra.mxu0 0
      %675 = vmatprep.subr.bf16.mxu0 0
      %676 = vmatpush1.bf16.xpose.msra.mxu0 0
      %677 = vmatprep.mubr.bf16.mxu0 0
      %678 = vmatmul.mubr.bf16.gmra.mrb[0].mxu0 %v631
      %v679 = vpop.f32.mrb[0].mxu0
      %v680 = vadd.f32 0.0, %v679
      %v681 = vpop.f32.mrb[0].mxu0
      %v682 = vpop.f32.mrb[0].mxu0
      %v683 = vadd.f32 0.0, %v682
      %v684 = vpop.f32.mrb[0].mxu0
      %685 = vmatprep.mubr.bf16.mxu0 0
      %686 = vmatmul.mubr.bf16.gmra.mrb[0].mxu0 %v634
      %v687 = vpop.f32.mrb[0].mxu0
      %v688 = vadd.f32 0.0, %v687
      %v689 = vpop.f32.mrb[0].mxu0
      %v690 = vpop.f32.mrb[0].mxu0
      %v691 = vadd.f32 0.0, %v690
      %v692 = vpop.f32.mrb[0].mxu0
      %693 = vmatprep.mubr.bf16.mxu0 0
      %694 = vmatmul.mubr.bf16.gmra.mrb[0].mxu0 %v637
      %v695 = vpop.f32.mrb[0].mxu0
      %v696 = vadd.f32 0.0, %v695
      %v697 = vpop.f32.mrb[0].mxu0
      %v698 = vpop.f32.mrb[0].mxu0
      %v699 = vadd.f32 0.0, %v698
      %v700 = vpop.f32.mrb[0].mxu0
      %701 = vmatprep.mubr.bf16.mxu0 0
      %702 = vmatmul.mubr.bf16.gmra.mrb[0].mxu0 %v640
      %v703 = vpop.f32.mrb[0].mxu0
      %v704 = vadd.f32 0.0, %v703
      %v705 = vpop.f32.mrb[0].mxu0
      %v706 = vpop.f32.mrb[0].mxu0
      %v707 = vadd.f32 0.0, %v706
      %v708 = vpop.f32.mrb[0].mxu0
      %709 = vdwg.mxu0
      %v710 = vmul.f32 %v680, 0.25
      %v711 = vmul.f32 %v683, 0.25
      %v712 = vmul.f32 %v688, 0.25
      %v713 = vmul.f32 %v691, 0.25
      %v714 = vmul.f32 %v696, 0.25
      %v715 = vmul.f32 %v699, 0.25
      %v716 = vmul.f32 %v704, 0.25
      %v717 = vmul.f32 %v707, 0.25
      %v718 = vsel %vm436, %v710, -inf
      %719 = vmax.xlane.f32.xlu0 %v718
      %v720 = vpop.xlane.xlu0 %719
      %v721 = vsel %vm436, %v711, -inf
      %722 = vmax.xlane.f32.xlu0 %v721
      %v723 = vpop.xlane.xlu0 %722
      %v724 = vsel %vm436, %v712, -inf
      %725 = vmax.xlane.f32.xlu0 %v724
      %v726 = vpop.xlane.xlu0 %725
      %v727 = vsel %vm436, %v713, -inf
      %728 = vmax.xlane.f32.xlu0 %v727
      %v729 = vpop.xlane.xlu0 %728
      %v730 = vsel %vm436, %v714, -inf
      %731 = vmax.xlane.f32.xlu0 %v730
      %v732 = vpop.xlane.xlu0 %731
      %v733 = vsel %vm436, %v715, -inf
      %734 = vmax.xlane.f32.xlu0 %v733
      %v735 = vpop.xlane.xlu0 %734
      %v736 = vsel %vm436, %v716, -inf
      %737 = vmax.xlane.f32.xlu0 %v736
      %v738 = vpop.xlane.xlu0 %737
      %v739 = vsel %vm436, %v717, -inf
      %740 = vmax.xlane.f32.xlu0 %v739
      %v741 = vpop.xlane.xlu0 %740
      %v742 = vsub.f32 %v710, %v720
      %v743 = vsub.f32 %v711, %v723
      %v744 = vsub.f32 %v712, %v726
      %v745 = vsub.f32 %v713, %v729
      %v746 = vsub.f32 %v714, %v732
      %v747 = vsub.f32 %v715, %v735
      %v748 = vsub.f32 %v716, %v738
      %v749 = vsub.f32 %v717, %v741
      %v750 = vmul.f32 %v742, 1.442695
      %v751 = vpow.pop %v750
      %v752 = vmul.f32 %v743, 1.442695
      %v753 = vpow.pop %v752
      %v754 = vmul.f32 %v744, 1.442695
      %v755 = vpow.pop %v754
      %v756 = vmul.f32 %v745, 1.442695
      %v757 = vpow.pop %v756
      %v758 = vmul.f32 %v746, 1.442695
      %v759 = vpow.pop %v758
      %v760 = vmul.f32 %v747, 1.442695
      %v761 = vpow.pop %v760
      %v762 = vmul.f32 %v748, 1.442695
      %v763 = vpow.pop %v762
      %v764 = vmul.f32 %v749, 1.442695
      %v765 = vpow.pop %v764
      %v766 = vsel %vm436, %v751, 0.0
      %767 = vadd.xlane.f32.xlu0 %v766
      %v768 = vpop.xlane.xlu0 %767
      %v769 = vsel %vm436, %v753, 0.0
      %770 = vadd.xlane.f32.xlu0 %v769
      %v771 = vpop.xlane.xlu0 %770
      %v772 = vsel %vm436, %v755, 0.0
      %773 = vadd.xlane.f32.xlu0 %v772
      %v774 = vpop.xlane.xlu0 %773
      %v775 = vsel %vm436, %v757, 0.0
      %776 = vadd.xlane.f32.xlu0 %v775
      %v777 = vpop.xlane.xlu0 %776
      %v778 = vsel %vm436, %v759, 0.0
      %779 = vadd.xlane.f32.xlu0 %v778
      %v780 = vpop.xlane.xlu0 %779
      %v781 = vsel %vm436, %v761, 0.0
      %782 = vadd.xlane.f32.xlu0 %v781
      %v783 = vpop.xlane.xlu0 %782
      %v784 = vsel %vm436, %v763, 0.0
      %785 = vadd.xlane.f32.xlu0 %v784
      %v786 = vpop.xlane.xlu0 %785
      %v787 = vsel %vm436, %v765, 0.0
      %788 = vadd.xlane.f32.xlu0 %v787
      %v789 = vpop.xlane.xlu0 %788
      %v790 = vpack.c.bf16 %v753, %v751
      %v791 = vpack.c.bf16 %v757, %v755
      %v792 = vpack.c.bf16 %v761, %v759
      %v793 = vpack.c.bf16 %v765, %v763
      %794 = vrot.lane.b32.xlu0 %v520, 48
      %v795 = vpop.permute.xlu0 %794
      %v797 = vsel %vm436, %v790, 0
      %v800 = vsel %vm436, %v791, 0
      %v803 = vsel %vm436, %v792, 0
      %v806 = vsel %vm436, %v793, 0
      %v809 = vsel %vm535, %v795, 0
      %811 = vmatprep.subr.bf16.mxu0 0
      %812 = vmatpush1.bf16.msra.mxu0 %v809
      %813 = vmatprep.subr.bf16.mxu0 0
      %814 = vmatpush1.bf16.msra.mxu0 0
      %815 = vmatprep.subr.bf16.mxu0 0
      %816 = vmatpush1.bf16.msra.mxu0 0
      %817 = vmatprep.subr.bf16.mxu0 0
      %818 = vmatpush1.bf16.msra.mxu0 0
      %819 = vmatprep.subr.bf16.mxu0 0
      %820 = vmatpush1.bf16.msra.mxu0 0
      %821 = vmatprep.subr.bf16.mxu0 0
      %822 = vmatpush1.bf16.msra.mxu0 0
      %823 = vmatprep.subr.bf16.mxu0 0
      %824 = vmatpush1.bf16.msra.mxu0 0
      %825 = vmatprep.subr.bf16.mxu0 0
      %826 = vmatpush1.bf16.msra.mxu0 0
      %827 = vmatprep.subr.bf16.mxu0 0
      %828 = vmatpush1.bf16.msra.mxu0 0
      %829 = vmatprep.subr.bf16.mxu0 0
      %830 = vmatpush1.bf16.msra.mxu0 0
      %831 = vmatprep.subr.bf16.mxu0 0
      %832 = vmatpush1.bf16.msra.mxu0 0
      %833 = vmatprep.subr.bf16.mxu0 0
      %834 = vmatpush1.bf16.msra.mxu0 0
      %835 = vmatprep.subr.bf16.mxu0 0
      %836 = vmatpush1.bf16.msra.mxu0 0
      %837 = vmatprep.subr.bf16.mxu0 0
      %838 = vmatpush1.bf16.msra.mxu0 0
      %839 = vmatprep.subr.bf16.mxu0 0
      %840 = vmatpush1.bf16.msra.mxu0 0
      %841 = vmatprep.subr.bf16.mxu0 0
      %842 = vmatpush1.bf16.msra.mxu0 0
      %843 = vmatprep.mubr.bf16.mxu0 0
      %844 = vmatmul.mubr.bf16.gmra.mrb[0].mxu0 %v797
      %v845 = vpop.f32.mrb[0].mxu0
      %v846 = vadd.f32 0.0, %v845
      %v847 = vpop.f32.mrb[0].mxu0
      %v848 = vpop.f32.mrb[0].mxu0
      %v849 = vadd.f32 0.0, %v848
      %v850 = vpop.f32.mrb[0].mxu0
      %851 = vmatprep.mubr.bf16.mxu0 0
      %852 = vmatmul.mubr.bf16.gmra.mrb[0].mxu0 %v800
      %v853 = vpop.f32.mrb[0].mxu0
      %v854 = vadd.f32 0.0, %v853
      %v855 = vpop.f32.mrb[0].mxu0
      %v856 = vpop.f32.mrb[0].mxu0
      %v857 = vadd.f32 0.0, %v856
      %v858 = vpop.f32.mrb[0].mxu0
      %859 = vmatprep.mubr.bf16.mxu0 0
      %860 = vmatmul.mubr.bf16.gmra.mrb[0].mxu0 %v803
      %v861 = vpop.f32.mrb[0].mxu0
      %v862 = vadd.f32 0.0, %v861
      %v863 = vpop.f32.mrb[0].mxu0
      %v864 = vpop.f32.mrb[0].mxu0
      %v865 = vadd.f32 0.0, %v864
      %v866 = vpop.f32.mrb[0].mxu0
      %867 = vmatprep.mubr.bf16.mxu0 0
      %868 = vmatmul.mubr.bf16.gmra.mrb[0].mxu0 %v806
      %v869 = vpop.f32.mrb[0].mxu0
      %v870 = vadd.f32 0.0, %v869
      %v871 = vpop.f32.mrb[0].mxu0
      %v872 = vpop.f32.mrb[0].mxu0
      %v873 = vadd.f32 0.0, %v872
      %v874 = vpop.f32.mrb[0].mxu0
      %875 = vdwg.mxu0
      %v876 = vrcp.pop %v768
      %v877 = vmul.f32 %v846, %v876
      %v878 = vrcp.pop %v771
      %v879 = vmul.f32 %v849, %v878
      %v880 = vrcp.pop %v774
      %v881 = vmul.f32 %v854, %v880
      %v882 = vrcp.pop %v777
      %v883 = vmul.f32 %v857, %v882
      %v884 = vrcp.pop %v780
      %v885 = vmul.f32 %v862, %v884
      %v886 = vrcp.pop %v783
      %v887 = vmul.f32 %v865, %v886
      %v888 = vrcp.pop %v786
      %v889 = vmul.f32 %v870, %v888
      %v890 = vrcp.pop %v789
      %v891 = vmul.f32 %v873, %v890
      %892 = vrot.lane.b32.xlu0 %v343, 96
      %v893 = vpop.permute.xlu0 %892
      %894 = vrot.lane.b32.xlu0 %v344, 96
      %v895 = vpop.permute.xlu0 %894
      %896 = vrot.lane.b32.xlu0 %v345, 96
      %v897 = vpop.permute.xlu0 %896
      %898 = vrot.lane.b32.xlu0 %v346, 96
      %v899 = vpop.permute.xlu0 %898
      %900 = vrot.lane.b32.xlu0 %v520, 96
      %v901 = vpop.permute.xlu0 %900
      %v903 = vsel %vm347, %v893, 0
      %v906 = vsel %vm347, %v895, 0
      %v909 = vsel %vm347, %v897, 0
      %v912 = vsel %vm347, %v899, 0
      %v915 = vsel %vm347, %v901, 0
      %917 = vmatprep.subr.bf16.mxu0 0
      %918 = vmatpush1.bf16.xpose.msra.mxu0 %v915
      %919 = vmatprep.subr.bf16.mxu0 0
      %920 = vmatpush1.bf16.xpose.msra.mxu0 0
      %921 = vmatprep.subr.bf16.mxu0 0
      %922 = vmatpush1.bf16.xpose.msra.mxu0 0
      %923 = vmatprep.subr.bf16.mxu0 0
      %924 = vmatpush1.bf16.xpose.msra.mxu0 0
      %925 = vmatprep.subr.bf16.mxu0 0
      %926 = vmatpush1.bf16.xpose.msra.mxu0 0
      %927 = vmatprep.subr.bf16.mxu0 0
      %928 = vmatpush1.bf16.xpose.msra.mxu0 0
      %929 = vmatprep.subr.bf16.mxu0 0
      %930 = vmatpush1.bf16.xpose.msra.mxu0 0
      %931 = vmatprep.subr.bf16.mxu0 0
      %932 = vmatpush1.bf16.xpose.msra.mxu0 0
      %933 = vmatprep.subr.bf16.mxu0 0
      %934 = vmatpush1.bf16.xpose.msra.mxu0 0
      %935 = vmatprep.subr.bf16.mxu0 0
      %936 = vmatpush1.bf16.xpose.msra.mxu0 0
      %937 = vmatprep.subr.bf16.mxu0 0
      %938 = vmatpush1.bf16.xpose.msra.mxu0 0
      %939 = vmatprep.subr.bf16.mxu0 0
      %940 = vmatpush1.bf16.xpose.msra.mxu0 0
      %941 = vmatprep.subr.bf16.mxu0 0
      %942 = vmatpush1.bf16.xpose.msra.mxu0 0
      %943 = vmatprep.subr.bf16.mxu0 0
      %944 = vmatpush1.bf16.xpose.msra.mxu0 0
      %945 = vmatprep.subr.bf16.mxu0 0
      %946 = vmatpush1.bf16.xpose.msra.mxu0 0
      %947 = vmatprep.subr.bf16.mxu0 0
      %948 = vmatpush1.bf16.xpose.msra.mxu0 0
      %949 = vmatprep.mubr.bf16.mxu0 0
      %950 = vmatmul.mubr.bf16.gmra.mrb[0].mxu0 %v903
      %v951 = vpop.f32.mrb[0].mxu0
      %v952 = vadd.f32 0.0, %v951
      %v953 = vpop.f32.mrb[0].mxu0
      %v954 = vpop.f32.mrb[0].mxu0
      %v955 = vadd.f32 0.0, %v954
      %v956 = vpop.f32.mrb[0].mxu0
      %957 = vmatprep.mubr.bf16.mxu0 0
      %958 = vmatmul.mubr.bf16.gmra.mrb[0].mxu0 %v906
      %v959 = vpop.f32.mrb[0].mxu0
      %v960 = vadd.f32 0.0, %v959
      %v961 = vpop.f32.mrb[0].mxu0
      %v962 = vpop.f32.mrb[0].mxu0
      %v963 = vadd.f32 0.0, %v962
      %v964 = vpop.f32.mrb[0].mxu0
      %965 = vmatprep.mubr.bf16.mxu0 0
      %966 = vmatmul.mubr.bf16.gmra.mrb[0].mxu0 %v909
      %v967 = vpop.f32.mrb[0].mxu0
      %v968 = vadd.f32 0.0, %v967
      %v969 = vpop.f32.mrb[0].mxu0
      %v970 = vpop.f32.mrb[0].mxu0
      %v971 = vadd.f32 0.0, %v970
      %v972 = vpop.f32.mrb[0].mxu0
      %973 = vmatprep.mubr.bf16.mxu0 0
      %974 = vmatmul.mubr.bf16.gmra.mrb[0].mxu0 %v912
      %v975 = vpop.f32.mrb[0].mxu0
      %v976 = vadd.f32 0.0, %v975
      %v977 = vpop.f32.mrb[0].mxu0
      %v978 = vpop.f32.mrb[0].mxu0
      %v979 = vadd.f32 0.0, %v978
      %v980 = vpop.f32.mrb[0].mxu0
      %981 = vdwg.mxu0
      %v982 = vmul.f32 %v952, 0.25
      %v983 = vmul.f32 %v955, 0.25
      %v984 = vmul.f32 %v960, 0.25
      %v985 = vmul.f32 %v963, 0.25
      %v986 = vmul.f32 %v968, 0.25
      %v987 = vmul.f32 %v971, 0.25
      %v988 = vmul.f32 %v976, 0.25
      %v989 = vmul.f32 %v979, 0.25
      %v990 = vsel %vm436, %v982, -inf
      %991 = vmax.xlane.f32.xlu0 %v990
      %v992 = vpop.xlane.xlu0 %991
      %v993 = vsel %vm436, %v983, -inf
      %994 = vmax.xlane.f32.xlu0 %v993
      %v995 = vpop.xlane.xlu0 %994
      %v996 = vsel %vm436, %v984, -inf
      %997 = vmax.xlane.f32.xlu0 %v996
      %v998 = vpop.xlane.xlu0 %997
      %v999 = vsel %vm436, %v985, -inf
      %1000 = vmax.xlane.f32.xlu0 %v999
      %v1001 = vpop.xlane.xlu0 %1000
      %v1002 = vsel %vm436, %v986, -inf
      %1003 = vmax.xlane.f32.xlu0 %v1002
      %v1004 = vpop.xlane.xlu0 %1003
      %v1005 = vsel %vm436, %v987, -inf
      %1006 = vmax.xlane.f32.xlu0 %v1005
      %v1007 = vpop.xlane.xlu0 %1006
      %v1008 = vsel %vm436, %v988, -inf
      %1009 = vmax.xlane.f32.xlu0 %v1008
      %v1010 = vpop.xlane.xlu0 %1009
      %v1011 = vsel %vm436, %v989, -inf
      %1012 = vmax.xlane.f32.xlu0 %v1011
      %v1013 = vpop.xlane.xlu0 %1012
      %v1014 = vsub.f32 %v982, %v992
      %v1015 = vsub.f32 %v983, %v995
      %v1016 = vsub.f32 %v984, %v998
      %v1017 = vsub.f32 %v985, %v1001
      %v1018 = vsub.f32 %v986, %v1004
      %v1019 = vsub.f32 %v987, %v1007
      %v1020 = vsub.f32 %v988, %v1010
      %v1021 = vsub.f32 %v989, %v1013
      %v1022 = vmul.f32 %v1014, 1.442695
      %v1023 = vpow.pop %v1022
      %v1024 = vmul.f32 %v1015, 1.442695
      %v1025 = vpow.pop %v1024
      %v1026 = vmul.f32 %v1016, 1.442695
      %v1027 = vpow.pop %v1026
      %v1028 = vmul.f32 %v1017, 1.442695
      %v1029 = vpow.pop %v1028
      %v1030 = vmul.f32 %v1018, 1.442695
      %v1031 = vpow.pop %v1030
      %v1032 = vmul.f32 %v1019, 1.442695
      %v1033 = vpow.pop %v1032
      %v1034 = vmul.f32 %v1020, 1.442695
      %v1035 = vpow.pop %v1034
      %v1036 = vmul.f32 %v1021, 1.442695
      %v1037 = vpow.pop %v1036
      %v1038 = vsel %vm436, %v1023, 0.0
      %1039 = vadd.xlane.f32.xlu0 %v1038
      %v1040 = vpop.xlane.xlu0 %1039
      %v1041 = vsel %vm436, %v1025, 0.0
      %1042 = vadd.xlane.f32.xlu0 %v1041
      %v1043 = vpop.xlane.xlu0 %1042
      %v1044 = vsel %vm436, %v1027, 0.0
      %1045 = vadd.xlane.f32.xlu0 %v1044
      %v1046 = vpop.xlane.xlu0 %1045
      %v1047 = vsel %vm436, %v1029, 0.0
      %1048 = vadd.xlane.f32.xlu0 %v1047
      %v1049 = vpop.xlane.xlu0 %1048
      %v1050 = vsel %vm436, %v1031, 0.0
      %1051 = vadd.xlane.f32.xlu0 %v1050
      %v1052 = vpop.xlane.xlu0 %1051
      %v1053 = vsel %vm436, %v1033, 0.0
      %1054 = vadd.xlane.f32.xlu0 %v1053
      %v1055 = vpop.xlane.xlu0 %1054
      %v1056 = vsel %vm436, %v1035, 0.0
      %1057 = vadd.xlane.f32.xlu0 %v1056
      %v1058 = vpop.xlane.xlu0 %1057
      %v1059 = vsel %vm436, %v1037, 0.0
      %1060 = vadd.xlane.f32.xlu0 %v1059
      %v1061 = vpop.xlane.xlu0 %1060
      %v1062 = vpack.c.bf16 %v1025, %v1023
      %v1063 = vpack.c.bf16 %v1029, %v1027
      %v1064 = vpack.c.bf16 %v1033, %v1031
      %v1065 = vpack.c.bf16 %v1037, %v1035
      %1066 = vrot.lane.b32.xlu0 %v520, 32
      %v1067 = vpop.permute.xlu0 %1066
      %v1069 = vsel %vm436, %v1062, 0
      %v1072 = vsel %vm436, %v1063, 0
      %v1075 = vsel %vm436, %v1064, 0
      %v1078 = vsel %vm436, %v1065, 0
      %v1081 = vsel %vm535, %v1067, 0
      %1083 = vmatprep.subr.bf16.mxu0 0
      %1084 = vmatpush1.bf16.msra.mxu0 %v1081
      %1085 = vmatprep.subr.bf16.mxu0 0
      %1086 = vmatpush1.bf16.msra.mxu0 0
      %1087 = vmatprep.subr.bf16.mxu0 0
      %1088 = vmatpush1.bf16.msra.mxu0 0
      %1089 = vmatprep.subr.bf16.mxu0 0
      %1090 = vmatpush1.bf16.msra.mxu0 0
      %1091 = vmatprep.subr.bf16.mxu0 0
      %1092 = vmatpush1.bf16.msra.mxu0 0
      %1093 = vmatprep.subr.bf16.mxu0 0
      %1094 = vmatpush1.bf16.msra.mxu0 0
      %1095 = vmatprep.subr.bf16.mxu0 0
      %1096 = vmatpush1.bf16.msra.mxu0 0
      %1097 = vmatprep.subr.bf16.mxu0 0
      %1098 = vmatpush1.bf16.msra.mxu0 0
      %1099 = vmatprep.subr.bf16.mxu0 0
      %1100 = vmatpush1.bf16.msra.mxu0 0
      %1101 = vmatprep.subr.bf16.mxu0 0
      %1102 = vmatpush1.bf16.msra.mxu0 0
      %1103 = vmatprep.subr.bf16.mxu0 0
      %1104 = vmatpush1.bf16.msra.mxu0 0
      %1105 = vmatprep.subr.bf16.mxu0 0
      %1106 = vmatpush1.bf16.msra.mxu0 0
      %1107 = vmatprep.subr.bf16.mxu0 0
      %1108 = vmatpush1.bf16.msra.mxu0 0
      %1109 = vmatprep.subr.bf16.mxu0 0
      %1110 = vmatpush1.bf16.msra.mxu0 0
      %1111 = vmatprep.subr.bf16.mxu0 0
      %1112 = vmatpush1.bf16.msra.mxu0 0
      %1113 = vmatprep.subr.bf16.mxu0 0
      %1114 = vmatpush1.bf16.msra.mxu0 0
      %1115 = vmatprep.mubr.bf16.mxu0 0
      %1116 = vmatmul.mubr.bf16.gmra.mrb[0].mxu0 %v1069
      %v1117 = vpop.f32.mrb[0].mxu0
      %v1118 = vadd.f32 0.0, %v1117
      %v1119 = vpop.f32.mrb[0].mxu0
      %v1120 = vpop.f32.mrb[0].mxu0
      %v1121 = vadd.f32 0.0, %v1120
      %v1122 = vpop.f32.mrb[0].mxu0
      %1123 = vmatprep.mubr.bf16.mxu0 0
      %1124 = vmatmul.mubr.bf16.gmra.mrb[0].mxu0 %v1072
      %v1125 = vpop.f32.mrb[0].mxu0
      %v1126 = vadd.f32 0.0, %v1125
      %v1127 = vpop.f32.mrb[0].mxu0
      %v1128 = vpop.f32.mrb[0].mxu0
      %v1129 = vadd.f32 0.0, %v1128
      %v1130 = vpop.f32.mrb[0].mxu0
      %1131 = vmatprep.mubr.bf16.mxu0 0
      %1132 = vmatmul.mubr.bf16.gmra.mrb[0].mxu0 %v1075
      %v1133 = vpop.f32.mrb[0].mxu0
      %v1134 = vadd.f32 0.0, %v1133
      %v1135 = vpop.f32.mrb[0].mxu0
      %v1136 = vpop.f32.mrb[0].mxu0
      %v1137 = vadd.f32 0.0, %v1136
      %v1138 = vpop.f32.mrb[0].mxu0
      %1139 = vmatprep.mubr.bf16.mxu0 0
      %1140 = vmatmul.mubr.bf16.gmra.mrb[0].mxu0 %v1078
      %v1141 = vpop.f32.mrb[0].mxu0
      %v1142 = vadd.f32 0.0, %v1141
      %v1143 = vpop.f32.mrb[0].mxu0
      %v1144 = vpop.f32.mrb[0].mxu0
      %v1145 = vadd.f32 0.0, %v1144
      %v1146 = vpop.f32.mrb[0].mxu0
      %1147 = vdwg.mxu0
      %v1148 = vrcp.pop %v1040
      %v1149 = vmul.f32 %v1118, %v1148
      %v1150 = vrcp.pop %v1043
      %v1151 = vmul.f32 %v1121, %v1150
      %v1152 = vrcp.pop %v1046
      %v1153 = vmul.f32 %v1126, %v1152
      %v1154 = vrcp.pop %v1049
      %v1155 = vmul.f32 %v1129, %v1154
      %v1156 = vrcp.pop %v1052
      %v1157 = vmul.f32 %v1134, %v1156
      %v1158 = vrcp.pop %v1055
      %v1159 = vmul.f32 %v1137, %v1158
      %v1160 = vrcp.pop %v1058
      %v1161 = vmul.f32 %v1142, %v1160
      %v1162 = vrcp.pop %v1061
      %v1163 = vmul.f32 %v1145, %v1162
      %1164 = vrot.lane.b32.xlu0 %v343, 80
      %v1165 = vpop.permute.xlu0 %1164
      %1166 = vrot.lane.b32.xlu0 %v344, 80
      %v1167 = vpop.permute.xlu0 %1166
      %1168 = vrot.lane.b32.xlu0 %v345, 80
      %v1169 = vpop.permute.xlu0 %1168
      %1170 = vrot.lane.b32.xlu0 %v346, 80
      %v1171 = vpop.permute.xlu0 %1170
      %1172 = vrot.lane.b32.xlu0 %v520, 80
      %v1173 = vpop.permute.xlu0 %1172
      %v1175 = vsel %vm347, %v1165, 0
      %v1178 = vsel %vm347, %v1167, 0
      %v1181 = vsel %vm347, %v1169, 0
      %v1184 = vsel %vm347, %v1171, 0
      %v1187 = vsel %vm347, %v1173, 0
      %1189 = vmatprep.subr.bf16.mxu0 0
      %1190 = vmatpush1.bf16.xpose.msra.mxu0 %v1187
      %1191 = vmatprep.subr.bf16.mxu0 0
      %1192 = vmatpush1.bf16.xpose.msra.mxu0 0
      %1193 = vmatprep.subr.bf16.mxu0 0
      %1194 = vmatpush1.bf16.xpose.msra.mxu0 0
      %1195 = vmatprep.subr.bf16.mxu0 0
      %1196 = vmatpush1.bf16.xpose.msra.mxu0 0
      %1197 = vmatprep.subr.bf16.mxu0 0
      %1198 = vmatpush1.bf16.xpose.msra.mxu0 0
      %1199 = vmatprep.subr.bf16.mxu0 0
      %1200 = vmatpush1.bf16.xpose.msra.mxu0 0
      %1201 = vmatprep.subr.bf16.mxu0 0
      %1202 = vmatpush1.bf16.xpose.msra.mxu0 0
      %1203 = vmatprep.subr.bf16.mxu0 0
      %1204 = vmatpush1.bf16.xpose.msra.mxu0 0
      %1205 = vmatprep.subr.bf16.mxu0 0
      %1206 = vmatpush1.bf16.xpose.msra.mxu0 0
      %1207 = vmatprep.subr.bf16.mxu0 0
      %1208 = vmatpush1.bf16.xpose.msra.mxu0 0
      %1209 = vmatprep.subr.bf16.mxu0 0
      %1210 = vmatpush1.bf16.xpose.msra.mxu0 0
      %1211 = vmatprep.subr.bf16.mxu0 0
      %1212 = vmatpush1.bf16.xpose.msra.mxu0 0
      %1213 = vmatprep.subr.bf16.mxu0 0
      %1214 = vmatpush1.bf16.xpose.msra.mxu0 0
      %1215 = vmatprep.subr.bf16.mxu0 0
      %1216 = vmatpush1.bf16.xpose.msra.mxu0 0
      %1217 = vmatprep.subr.bf16.mxu0 0
      %1218 = vmatpush1.bf16.xpose.msra.mxu0 0
      %1219 = vmatprep.subr.bf16.mxu0 0
      %1220 = vmatpush1.bf16.xpose.msra.mxu0 0
      %1221 = vmatprep.mubr.bf16.mxu0 0
      %1222 = vmatmul.mubr.bf16.gmra.mrb[0].mxu0 %v1175
      %v1223 = vpop.f32.mrb[0].mxu0
      %v1224 = vadd.f32 0.0, %v1223
      %v1225 = vpop.f32.mrb[0].mxu0
      %v1226 = vpop.f32.mrb[0].mxu0
      %v1227 = vadd.f32 0.0, %v1226
      %v1228 = vpop.f32.mrb[0].mxu0
      %1229 = vmatprep.mubr.bf16.mxu0 0
      %1230 = vmatmul.mubr.bf16.gmra.mrb[0].mxu0 %v1178
      %v1231 = vpop.f32.mrb[0].mxu0
      %v1232 = vadd.f32 0.0, %v1231
      %v1233 = vpop.f32.mrb[0].mxu0
      %v1234 = vpop.f32.mrb[0].mxu0
      %v1235 = vadd.f32 0.0, %v1234
      %v1236 = vpop.f32.mrb[0].mxu0
      %1237 = vmatprep.mubr.bf16.mxu0 0
      %1238 = vmatmul.mubr.bf16.gmra.mrb[0].mxu0 %v1181
      %v1239 = vpop.f32.mrb[0].mxu0
      %v1240 = vadd.f32 0.0, %v1239
      %v1241 = vpop.f32.mrb[0].mxu0
      %v1242 = vpop.f32.mrb[0].mxu0
      %v1243 = vadd.f32 0.0, %v1242
      %v1244 = vpop.f32.mrb[0].mxu0
      %1245 = vmatprep.mubr.bf16.mxu0 0
      %1246 = vmatmul.mubr.bf16.gmra.mrb[0].mxu0 %v1184
      %v1247 = vpop.f32.mrb[0].mxu0
      %v1248 = vadd.f32 0.0, %v1247
      %v1249 = vpop.f32.mrb[0].mxu0
      %v1250 = vpop.f32.mrb[0].mxu0
      %v1251 = vadd.f32 0.0, %v1250
      %v1252 = vpop.f32.mrb[0].mxu0
      %1253 = vdwg.mxu0
      %v1254 = vmul.f32 %v1224, 0.25
      %v1255 = vmul.f32 %v1227, 0.25
      %v1256 = vmul.f32 %v1232, 0.25
      %v1257 = vmul.f32 %v1235, 0.25
      %v1258 = vmul.f32 %v1240, 0.25
      %v1259 = vmul.f32 %v1243, 0.25
      %v1260 = vmul.f32 %v1248, 0.25
      %v1261 = vmul.f32 %v1251, 0.25
      %v1262 = vsel %vm436, %v1254, -inf
      %1263 = vmax.xlane.f32.xlu0 %v1262
      %v1264 = vpop.xlane.xlu0 %1263
      %v1265 = vsel %vm436, %v1255, -inf
      %1266 = vmax.xlane.f32.xlu0 %v1265
      %v1267 = vpop.xlane.xlu0 %1266
      %v1268 = vsel %vm436, %v1256, -inf
      %1269 = vmax.xlane.f32.xlu0 %v1268
      %v1270 = vpop.xlane.xlu0 %1269
      %v1271 = vsel %vm436, %v1257, -inf
      %1272 = vmax.xlane.f32.xlu0 %v1271
      %v1273 = vpop.xlane.xlu0 %1272
      %v1274 = vsel %vm436, %v1258, -inf
      %1275 = vmax.xlane.f32.xlu0 %v1274
      %v1276 = vpop.xlane.xlu0 %1275
      %v1277 = vsel %vm436, %v1259, -inf
      %1278 = vmax.xlane.f32.xlu0 %v1277
      %v1279 = vpop.xlane.xlu0 %1278
      %v1280 = vsel %vm436, %v1260, -inf
      %1281 = vmax.xlane.f32.xlu0 %v1280
      %v1282 = vpop.xlane.xlu0 %1281
      %v1283 = vsel %vm436, %v1261, -inf
      %1284 = vmax.xlane.f32.xlu0 %v1283
      %v1285 = vpop.xlane.xlu0 %1284
      %v1286 = vsub.f32 %v1254, %v1264
      %v1287 = vsub.f32 %v1255, %v1267
      %v1288 = vsub.f32 %v1256, %v1270
      %v1289 = vsub.f32 %v1257, %v1273
      %v1290 = vsub.f32 %v1258, %v1276
      %v1291 = vsub.f32 %v1259, %v1279
      %v1292 = vsub.f32 %v1260, %v1282
      %v1293 = vsub.f32 %v1261, %v1285
      %v1294 = vmul.f32 %v1286, 1.442695
      %v1295 = vpow.pop %v1294
      %v1296 = vmul.f32 %v1287, 1.442695
      %v1297 = vpow.pop %v1296
      %v1298 = vmul.f32 %v1288, 1.442695
      %v1299 = vpow.pop %v1298
      %v1300 = vmul.f32 %v1289, 1.442695
      %v1301 = vpow.pop %v1300
      %v1302 = vmul.f32 %v1290, 1.442695
      %v1303 = vpow.pop %v1302
      %v1304 = vmul.f32 %v1291, 1.442695
      %v1305 = vpow.pop %v1304
      %v1306 = vmul.f32 %v1292, 1.442695
      %v1307 = vpow.pop %v1306
      %v1308 = vmul.f32 %v1293, 1.442695
      %v1309 = vpow.pop %v1308
      %v1310 = vsel %vm436, %v1295, 0.0
      %1311 = vadd.xlane.f32.xlu0 %v1310
      %v1312 = vpop.xlane.xlu0 %1311
      %v1313 = vsel %vm436, %v1297, 0.0
      %1314 = vadd.xlane.f32.xlu0 %v1313
      %v1315 = vpop.xlane.xlu0 %1314
      %v1316 = vsel %vm436, %v1299, 0.0
      %1317 = vadd.xlane.f32.xlu0 %v1316
      %v1318 = vpop.xlane.xlu0 %1317
      %v1319 = vsel %vm436, %v1301, 0.0
      %1320 = vadd.xlane.f32.xlu0 %v1319
      %v1321 = vpop.xlane.xlu0 %1320
      %v1322 = vsel %vm436, %v1303, 0.0
      %1323 = vadd.xlane.f32.xlu0 %v1322
      %v1324 = vpop.xlane.xlu0 %1323
      %v1325 = vsel %vm436, %v1305, 0.0
      %1326 = vadd.xlane.f32.xlu0 %v1325
      %v1327 = vpop.xlane.xlu0 %1326
      %v1328 = vsel %vm436, %v1307, 0.0
      %1329 = vadd.xlane.f32.xlu0 %v1328
      %v1330 = vpop.xlane.xlu0 %1329
      %v1331 = vsel %vm436, %v1309, 0.0
      %1332 = vadd.xlane.f32.xlu0 %v1331
      %v1333 = vpop.xlane.xlu0 %1332
      %v1334 = vpack.c.bf16 %v1297, %v1295
      %v1335 = vpack.c.bf16 %v1301, %v1299
      %v1336 = vpack.c.bf16 %v1305, %v1303
      %v1337 = vpack.c.bf16 %v1309, %v1307
      %1338 = vrot.lane.b32.xlu0 %v520, 16
      %v1339 = vpop.permute.xlu0 %1338
      %v1341 = vsel %vm436, %v1334, 0
      %v1344 = vsel %vm436, %v1335, 0
      %v1347 = vsel %vm436, %v1336, 0
      %v1350 = vsel %vm436, %v1337, 0
      %v1353 = vsel %vm535, %v1339, 0
      %1355 = vmatprep.subr.bf16.mxu0 0
      %1356 = vmatpush1.bf16.msra.mxu0 %v1353
      %1357 = vmatprep.subr.bf16.mxu0 0
      %1358 = vmatpush1.bf16.msra.mxu0 0
      %1359 = vmatprep.subr.bf16.mxu0 0
      %1360 = vmatpush1.bf16.msra.mxu0 0
      %1361 = vmatprep.subr.bf16.mxu0 0
      %1362 = vmatpush1.bf16.msra.mxu0 0
      %1363 = vmatprep.subr.bf16.mxu0 0
      %1364 = vmatpush1.bf16.msra.mxu0 0
      %1365 = vmatprep.subr.bf16.mxu0 0
      %1366 = vmatpush1.bf16.msra.mxu0 0
      %1367 = vmatprep.subr.bf16.mxu0 0
      %1368 = vmatpush1.bf16.msra.mxu0 0
      %1369 = vmatprep.subr.bf16.mxu0 0
      %1370 = vmatpush1.bf16.msra.mxu0 0
      %1371 = vmatprep.subr.bf16.mxu0 0
      %1372 = vmatpush1.bf16.msra.mxu0 0
      %1373 = vmatprep.subr.bf16.mxu0 0
      %1374 = vmatpush1.bf16.msra.mxu0 0
      %1375 = vmatprep.subr.bf16.mxu0 0
      %1376 = vmatpush1.bf16.msra.mxu0 0
      %1377 = vmatprep.subr.bf16.mxu0 0
      %1378 = vmatpush1.bf16.msra.mxu0 0
      %1379 = vmatprep.subr.bf16.mxu0 0
      %1380 = vmatpush1.bf16.msra.mxu0 0
      %1381 = vmatprep.subr.bf16.mxu0 0
      %1382 = vmatpush1.bf16.msra.mxu0 0
      %1383 = vmatprep.subr.bf16.mxu0 0
      %1384 = vmatpush1.bf16.msra.mxu0 0
      %1385 = vmatprep.subr.bf16.mxu0 0
      %1386 = vmatpush1.bf16.msra.mxu0 0
      %1387 = vmatprep.mubr.bf16.mxu0 0
      %1388 = vmatmul.mubr.bf16.gmra.mrb[0].mxu0 %v1341
      %v1389 = vpop.f32.mrb[0].mxu0
      %v1390 = vadd.f32 0.0, %v1389
      %v1391 = vpop.f32.mrb[0].mxu0
      %v1392 = vpop.f32.mrb[0].mxu0
      %v1393 = vadd.f32 0.0, %v1392
      %v1394 = vpop.f32.mrb[0].mxu0
      %1395 = vmatprep.mubr.bf16.mxu0 0
      %1396 = vmatmul.mubr.bf16.gmra.mrb[0].mxu0 %v1344
      %v1397 = vpop.f32.mrb[0].mxu0
      %v1398 = vadd.f32 0.0, %v1397
      %v1399 = vpop.f32.mrb[0].mxu0
      %v1400 = vpop.f32.mrb[0].mxu0
      %v1401 = vadd.f32 0.0, %v1400
      %v1402 = vpop.f32.mrb[0].mxu0
      %1403 = vmatprep.mubr.bf16.mxu0 0
      %1404 = vmatmul.mubr.bf16.gmra.mrb[0].mxu0 %v1347
      %v1405 = vpop.f32.mrb[0].mxu0
      %v1406 = vadd.f32 0.0, %v1405
      %v1407 = vpop.f32.mrb[0].mxu0
      %v1408 = vpop.f32.mrb[0].mxu0
      %v1409 = vadd.f32 0.0, %v1408
      %v1410 = vpop.f32.mrb[0].mxu0
      %1411 = vmatprep.mubr.bf16.mxu0 0
      %1412 = vmatmul.mubr.bf16.gmra.mrb[0].mxu0 %v1350
      %v1413 = vpop.f32.mrb[0].mxu0
      %v1414 = vadd.f32 0.0, %v1413
      %v1415 = vpop.f32.mrb[0].mxu0
      %v1416 = vpop.f32.mrb[0].mxu0
      %v1417 = vadd.f32 0.0, %v1416
      %v1418 = vpop.f32.mrb[0].mxu0
      %1419 = vdwg.mxu0
      %v1420 = vrcp.pop %v1312
      %v1421 = vmul.f32 %v1390, %v1420
      %v1422 = vrcp.pop %v1315
      %v1423 = vmul.f32 %v1393, %v1422
      %v1424 = vrcp.pop %v1318
      %v1425 = vmul.f32 %v1398, %v1424
      %v1426 = vrcp.pop %v1321
      %v1427 = vmul.f32 %v1401, %v1426
      %v1428 = vrcp.pop %v1324
      %v1429 = vmul.f32 %v1406, %v1428
      %v1430 = vrcp.pop %v1327
      %v1431 = vmul.f32 %v1409, %v1430
      %v1432 = vrcp.pop %v1330
      %v1433 = vmul.f32 %v1414, %v1432
      %v1434 = vrcp.pop %v1333
      %v1435 = vmul.f32 %v1417, %v1434
      %1444 = vrot.lane.b32.xlu0 %v877, 16
      %v1445 = vpop.permute.xlu0 %1444
      %1446 = vrot.lane.b32.xlu0 %v879, 16
      %v1447 = vpop.permute.xlu0 %1446
      %1448 = vrot.lane.b32.xlu0 %v881, 16
      %v1449 = vpop.permute.xlu0 %1448
      %1450 = vrot.lane.b32.xlu0 %v883, 16
      %v1451 = vpop.permute.xlu0 %1450
      %1452 = vrot.lane.b32.xlu0 %v885, 16
      %v1453 = vpop.permute.xlu0 %1452
      %1454 = vrot.lane.b32.xlu0 %v887, 16
      %v1455 = vpop.permute.xlu0 %1454
      %1456 = vrot.lane.b32.xlu0 %v889, 16
      %v1457 = vpop.permute.xlu0 %1456
      %1458 = vrot.lane.b32.xlu0 %v891, 16
      %v1459 = vpop.permute.xlu0 %1458
      %1476 = vrot.lane.b32.xlu0 %v1149, 32
      %v1477 = vpop.permute.xlu0 %1476
      %1478 = vrot.lane.b32.xlu0 %v1151, 32
      %v1479 = vpop.permute.xlu0 %1478
      %1480 = vrot.lane.b32.xlu0 %v1153, 32
      %v1481 = vpop.permute.xlu0 %1480
      %1482 = vrot.lane.b32.xlu0 %v1155, 32
      %v1483 = vpop.permute.xlu0 %1482
      %1484 = vrot.lane.b32.xlu0 %v1157, 32
      %v1485 = vpop.permute.xlu0 %1484
      %1486 = vrot.lane.b32.xlu0 %v1159, 32
      %v1487 = vpop.permute.xlu0 %1486
      %1488 = vrot.lane.b32.xlu0 %v1161, 32
      %v1489 = vpop.permute.xlu0 %1488
      %1490 = vrot.lane.b32.xlu0 %v1163, 32
      %v1491 = vpop.permute.xlu0 %1490
      %1508 = vrot.lane.b32.xlu0 %v1421, 48
      %v1509 = vpop.permute.xlu0 %1508
      %1510 = vrot.lane.b32.xlu0 %v1423, 48
      %v1511 = vpop.permute.xlu0 %1510
      %1512 = vrot.lane.b32.xlu0 %v1425, 48
      %v1513 = vpop.permute.xlu0 %1512
      %1514 = vrot.lane.b32.xlu0 %v1427, 48
      %v1515 = vpop.permute.xlu0 %1514
      %1516 = vrot.lane.b32.xlu0 %v1429, 48
      %v1517 = vpop.permute.xlu0 %1516
      %1518 = vrot.lane.b32.xlu0 %v1431, 48
      %v1519 = vpop.permute.xlu0 %1518
      %1520 = vrot.lane.b32.xlu0 %v1433, 48
      %v1521 = vpop.permute.xlu0 %1520
      %1522 = vrot.lane.b32.xlu0 %v1435, 48
      %v1523 = vpop.permute.xlu0 %1522
      %v1532 = vsel %vm347, %v605, %v1445
      %v1533 = vsel %vm347, %v607, %v1447
      %v1534 = vsel %vm347, %v609, %v1449
      %v1535 = vsel %vm347, %v611, %v1451
      %v1536 = vsel %vm347, %v613, %v1453
      %v1537 = vsel %vm347, %v615, %v1455
      %v1538 = vsel %vm347, %v617, %v1457
      %v1539 = vsel %vm347, %v619, %v1459
      %vm1540 = vcmask 261120
      %v1541 = vsel %vm1540, %v1532, %v1477
      %v1542 = vsel %vm1540, %v1533, %v1479
      %v1543 = vsel %vm1540, %v1534, %v1481
      %v1544 = vsel %vm1540, %v1535, %v1483
      %v1545 = vsel %vm1540, %v1536, %v1485
      %v1546 = vsel %vm1540, %v1537, %v1487
      %v1547 = vsel %vm1540, %v1538, %v1489
      %v1548 = vsel %vm1540, %v1539, %v1491
      %vm1549 = vcmask 392192
      %v1550 = vsel %vm1549, %v1541, %v1509
      %v1551 = vsel %vm1549, %v1542, %v1511
      %v1552 = vsel %vm1549, %v1543, %v1513
      %v1553 = vsel %vm1549, %v1544, %v1515
      %v1554 = vsel %vm1549, %v1545, %v1517
      %v1555 = vsel %vm1549, %v1546, %v1519
      %v1556 = vsel %vm1549, %v1547, %v1521
      %v1557 = vsel %vm1549, %v1548, %v1523
      %v1558 = vpack.c.bf16 %v1551, %v1550
      %v1559 = vpack.c.bf16 %v1553, %v1552
      %v1560 = vpack.c.bf16 %v1555, %v1554
      %v1561 = vpack.c.bf16 %v1557, %v1556
      %v1562 = vld [vmem:[%s3] sm:$0xf]
      %v1563 = vld [vmem:[%s3 + $0x4] sm:$0xf]
      %v1564 = vld [vmem:[%s3 + $0x8] sm:$0xf]
      %v1565 = vld [vmem:[%s3 + $0xc] sm:$0xf]
      %v1566 = vld [vmem:[%s3 + $0x10] sm:$0xf]
      %v1567 = vld [vmem:[%s3 + $0x14] sm:$0xf]
      %v1568 = vld [vmem:[%s3 + $0x18] sm:$0xf]
      %v1569 = vld [vmem:[%s3 + $0x1c] sm:$0xf]
      %v1570 = vld [vmem:[%s4] sm:$0x1]
      %v1572 = vlaneseq
      %v1573 = vshrl.u32 %v1572, 7
      %v1574 = vsub.s32 0, %v1573
      %v1575 = vrot.slane %v1570, %v1574
      %v1585 = vunpack.c.l.b16 %v1562
      %v1586 = vunpack.c.l.b16 %v1563
      %v1587 = vunpack.c.l.b16 %v1564
      %v1588 = vunpack.c.l.b16 %v1565
      %v1589 = vunpack.c.l.b16 %v1566
      %v1590 = vunpack.c.l.b16 %v1567
      %v1591 = vunpack.c.l.b16 %v1568
      %v1592 = vunpack.c.l.b16 %v1569
      %v1593 = vpack.c.b16 %v1586, %v1585
      %v1594 = vpack.c.b16 %v1588, %v1587
      %v1595 = vpack.c.b16 %v1590, %v1589
      %v1596 = vpack.c.b16 %v1592, %v1591
      %vm1601 = vcmask 523264
      %v1603 = vsel %vm1601, %v1558, 0
      %v1606 = vsel %vm1601, %v1559, 0
      %v1609 = vsel %vm1601, %v1560, 0
      %v1612 = vsel %vm1601, %v1561, 0
      %1614 = vmatprep.subr.bf16.mxu0 0
      %1615 = vmatpush1.bf16.msra.mxu0 %v1593
      %1616 = vmatprep.subr.bf16.mxu0 0
      %1617 = vmatpush1.bf16.msra.mxu0 %v1594
      %1618 = vmatprep.subr.bf16.mxu0 0
      %1619 = vmatpush1.bf16.msra.mxu0 %v1595
      %1620 = vmatprep.subr.bf16.mxu0 0
      %1621 = vmatpush1.bf16.msra.mxu0 %v1596
      %1622 = vmatprep.subr.bf16.mxu0 0
      %1623 = vmatpush1.bf16.msra.mxu0 0
      %1624 = vmatprep.subr.bf16.mxu0 0
      %1625 = vmatpush1.bf16.msra.mxu0 0
      %1626 = vmatprep.subr.bf16.mxu0 0
      %1627 = vmatpush1.bf16.msra.mxu0 0
      %1628 = vmatprep.subr.bf16.mxu0 0
      %1629 = vmatpush1.bf16.msra.mxu0 0
      %1630 = vmatprep.subr.bf16.mxu0 0
      %1631 = vmatpush1.bf16.msra.mxu0 0
      %1632 = vmatprep.subr.bf16.mxu0 0
      %1633 = vmatpush1.bf16.msra.mxu0 0
      %1634 = vmatprep.subr.bf16.mxu0 0
      %1635 = vmatpush1.bf16.msra.mxu0 0
      %1636 = vmatprep.subr.bf16.mxu0 0
      %1637 = vmatpush1.bf16.msra.mxu0 0
      %1638 = vmatprep.subr.bf16.mxu0 0
      %1639 = vmatpush1.bf16.msra.mxu0 0
      %1640 = vmatprep.subr.bf16.mxu0 0
      %1641 = vmatpush1.bf16.msra.mxu0 0
      %1642 = vmatprep.subr.bf16.mxu0 0
      %1643 = vmatpush1.bf16.msra.mxu0 0
      %1644 = vmatprep.subr.bf16.mxu0 0
      %1645 = vmatpush1.bf16.msra.mxu0 0
      %1646 = vmatprep.mubr.bf16.mxu0 0
      %1647 = vmatmul.mubr.bf16.gmra.mrb[0].mxu0 %v1603
      %v1648 = vpop.f32.mrb[0].mxu0
      %v1649 = vadd.f32 %v1575, %v1648
      %v1650 = vpop.f32.mrb[0].mxu0
      %v1651 = vpop.f32.mrb[0].mxu0
      %v1652 = vadd.f32 %v1575, %v1651
      %v1653 = vpop.f32.mrb[0].mxu0
      %1654 = vmatprep.mubr.bf16.mxu0 0
      %1655 = vmatmul.mubr.bf16.gmra.mrb[0].mxu0 %v1606
      %v1656 = vpop.f32.mrb[0].mxu0
      %v1657 = vadd.f32 %v1575, %v1656
      %v1658 = vpop.f32.mrb[0].mxu0
      %v1659 = vpop.f32.mrb[0].mxu0
      %v1660 = vadd.f32 %v1575, %v1659
      %v1661 = vpop.f32.mrb[0].mxu0
      %1662 = vmatprep.mubr.bf16.mxu0 0
      %1663 = vmatmul.mubr.bf16.gmra.mrb[0].mxu0 %v1609
      %v1664 = vpop.f32.mrb[0].mxu0
      %v1665 = vadd.f32 %v1575, %v1664
      %v1666 = vpop.f32.mrb[0].mxu0
      %v1667 = vpop.f32.mrb[0].mxu0
      %v1668 = vadd.f32 %v1575, %v1667
      %v1669 = vpop.f32.mrb[0].mxu0
      %1670 = vmatprep.mubr.bf16.mxu0 0
      %1671 = vmatmul.mubr.bf16.gmra.mrb[0].mxu0 %v1612
      %v1672 = vpop.f32.mrb[0].mxu0
      %v1673 = vadd.f32 %v1575, %v1672
      %v1674 = vpop.f32.mrb[0].mxu0
      %v1675 = vpop.f32.mrb[0].mxu0
      %v1676 = vadd.f32 %v1575, %v1675
      %v1677 = vpop.f32.mrb[0].mxu0
      %1678 = vdwg.mxu0
      %v1679 = vld [vmem:[%s305] sm:$0xff]
      %v1680 = vld [vmem:[%s305 + $0x8] sm:$0xff]
      %v1681 = vld [vmem:[%s305 + $0x10] sm:$0xff]
      %v1682 = vld [vmem:[%s305 + $0x18] sm:$0xff]
      %v1683 = vld [vmem:[%s305 + $0x20] sm:$0xff]
      %v1684 = vld [vmem:[%s305 + $0x28] sm:$0xff]
      %v1685 = vld [vmem:[%s305 + $0x30] sm:$0xff]
      %v1686 = vld [vmem:[%s305 + $0x38] sm:$0xff]
      %v1687 = vadd.f32 %v1649, %v1679
      %v1688 = vadd.f32 %v1652, %v1680
      %v1689 = vadd.f32 %v1657, %v1681
      %v1690 = vadd.f32 %v1660, %v1682
      %v1691 = vadd.f32 %v1665, %v1683
      %v1692 = vadd.f32 %v1668, %v1684
      %v1693 = vadd.f32 %v1673, %v1685
      %v1694 = vadd.f32 %v1676, %v1686
      %1695 = vst.msk [vmem:[%s315] sm:$0xff] %vm1601, %v1687
      %1696 = vst.msk [vmem:[%s315 + $0x8] sm:$0xff] %vm1601, %v1688
      %1697 = vst.msk [vmem:[%s315 + $0x10] sm:$0xff] %vm1601, %v1689
      %1698 = vst.msk [vmem:[%s315 + $0x18] sm:$0xff] %vm1601, %v1690
      %1699 = vst.msk [vmem:[%s315 + $0x20] sm:$0xff] %vm1601, %v1691
      %1700 = vst.msk [vmem:[%s315 + $0x28] sm:$0xff] %vm1601, %v1692
      %1701 = vst.msk [vmem:[%s315 + $0x30] sm:$0xff] %vm1601, %v1693
      %1702 = vst.msk [vmem:[%s315 + $0x38] sm:$0xff] %vm1601, %v1694
      %s1703 = smul.u32 8, %s21
      %p1704 = scmp.lt.s32.totalorder %s20, 1
      %s1705 = scalar_select %p1704, %s20, 1
      %p1706 = scmp.lt.s32.totalorder %s1703, 7
      %s1707 = scalar_select %p1706, %s1703, 7
      %s1708 = smul.addr %s1705, 8
      %s1709 = sadd.s32 %s1707, %s1708
      %s1710 = smul.addr %s1709, 8
      %s1711 = scalar_lea.vmem %s5, %s1710
      // Predicated region
      $region41: #{modulated_multiview_cond.23} parent=39 // pred_check
        %p1712 = pneg %p172
      $region42: #{modulated_multiview_cond.23} parent=39 // pred_check_branch
        %1714 = sbr.rel (%p1712) target = $region44
      $region43: #{modulated_multiview_cond.23} parent=39 // pred_region
        %s1715 = smul.u32 8, %s21
      $region44: #{modulated_multiview_cond.23} parent=39 // pred_fallthru
        _
    $region40: #{modulated_multiview_cond.23} parent=5 // pred_fallthru
      _
    %p1716 = scmp.le.s32.totalorder 2, %s11
    // Predicated region
    $region45: #{modulated_multiview_cond.23} parent=5 // pred_check
      %p1717 = pneg %p1716
    $region46: #{modulated_multiview_cond.23} parent=5 // pred_check_branch
      %1719 = sbr.rel (%p1717) target = $region48
    $region47: #{modulated_multiview_cond.23} parent=5 // pred_region
      %s1720 = ssub.s32 %s11, 2
      // Predicated region
      $region49: #{modulated_multiview_cond.23} parent=47 // pred_check
        %p1721 = pneg %p178
      $region50: #{modulated_multiview_cond.23} parent=47 // pred_check_branch
        %1723 = sbr.rel (%p1721) target = $region52
      $region51: #{modulated_multiview_cond.23} parent=47 // pred_region
        %s1724 = smul.u32 8, %s23
        %p1725 = scmp.lt.s32.totalorder %s22, 1
        %s1726 = scalar_select %p1725, %s22, 1
        %p1727 = scmp.lt.s32.totalorder %s1724, 7
        %s1728 = scalar_select %p1727, %s1724, 7
        %s1729 = smul.addr %s1726, 8
        %s1730 = sadd.s32 %s1728, %s1729
        %s1731 = smul.addr %s1730, 8
        %s1732 = scalar_lea.vmem %s5, %s1731
      $region52: #{modulated_multiview_cond.23} parent=47 // pred_fallthru
        _
    $region48: #{modulated_multiview_cond.23} parent=5 // pred_fallthru
      _
  $region6: #{modulated_multiview_cond.23} parent=0 // loop_footer
    %s15 = sadd.s32 1, %s11
  $region7: #{modulated_multiview_cond.23} parent=0 // loop_footer_branch
    %10 = sbr.rel target = $region3
  $region8: #{modulated_multiview_cond.23} parent=0 // loop_exit
    _

// kernel: modulated_multiview_cond.22
$region0: #{modulated_multiview_cond.22}
  #allocation0 [shape = 'u32[]', space=smem, size = 0x4, offset = 0x4, fixed_abs, tag = 'smem constant byte address 0x4 - core index']
  #allocation1 [shape = 'u32[144,128]{1,0:T(1,128)}', space=vmem, size = 0x12000, scoped, tag = 'internal scratch']
  %s0 = inlined_call_operand.vmem [shape: f32[8,2048], index: 0, kind: input, shape index: {}]
  %s1 = inlined_call_operand.vmem [shape: f32[8,1024], index: 1, kind: input, shape index: {}]
  %s2 = inlined_call_operand.vmem [shape: bf16[2048,128], index: 2, kind: input, shape index: {}]
  %s3 = inlined_call_operand.vmem [shape: bf16[1024,128], index: 3, kind: input, shape index: {}]
  %s4 = inlined_call_operand.vmem [shape: f32[1,128], index: 4, kind: input, shape index: {}]
  %s5 = inlined_call_operand.vmem [shape: bf16[8,128], index: 5, kind: output, shape index: {}]
  %s6 = sld [smem:[#allocation0]]
  $region30: #{modulated_multiview_cond.22} parent=0
    _
  %s8 = ssub.s32 1, %s6
  %s9 = scalar_select 0, %s8, %s6
  // Predicated region
  $region2: #{modulated_multiview_cond.22} parent=0 // pred_check
    _
  $region3: #{modulated_multiview_cond.22} parent=0 // pred_check_branch
    %11 = sbr.rel (0) target = $region5
  $region4: #{modulated_multiview_cond.22} parent=0 // pred_region
    _
  $region5: #{modulated_multiview_cond.22} parent=0 // pred_fallthru
    _
  // Predicated region
  $region6: #{modulated_multiview_cond.22} parent=0 // pred_check
    _
  $region7: #{modulated_multiview_cond.22} parent=0 // pred_check_branch
    %13 = sbr.rel (0) target = $region9
  $region8: #{modulated_multiview_cond.22} parent=0 // pred_region
    _
  $region9: #{modulated_multiview_cond.22} parent=0 // pred_fallthru
    _
  // Predicated region
  $region10: #{modulated_multiview_cond.22} parent=0 // pred_check
    _
  $region11: #{modulated_multiview_cond.22} parent=0 // pred_check_branch
    %15 = sbr.rel (0) target = $region13
  $region12: #{modulated_multiview_cond.22} parent=0 // pred_region
    _
  $region13: #{modulated_multiview_cond.22} parent=0 // pred_fallthru
    _
  // Predicated region
  $region14: #{modulated_multiview_cond.22} parent=0 // pred_check
    _
  $region15: #{modulated_multiview_cond.22} parent=0 // pred_check_branch
    %17 = sbr.rel (0) target = $region17
  $region16: #{modulated_multiview_cond.22} parent=0 // pred_region
    _
  $region17: #{modulated_multiview_cond.22} parent=0 // pred_fallthru
    _
  // Predicated region
  $region18: #{modulated_multiview_cond.22} parent=0 // pred_check
    _
  $region19: #{modulated_multiview_cond.22} parent=0 // pred_check_branch
    %19 = sbr.rel (0) target = $region21
  $region20: #{modulated_multiview_cond.22} parent=0 // pred_region
    _
  $region21: #{modulated_multiview_cond.22} parent=0 // pred_fallthru
    _
  %v21 = vld [vmem:[%s0] sm:$0xff]
  %v22 = vld [vmem:[%s0 + $0x8] sm:$0xff]
  %v23 = vld [vmem:[%s0 + $0x10] sm:$0xff]
  %v24 = vld [vmem:[%s0 + $0x18] sm:$0xff]
  %v25 = vld [vmem:[%s0 + $0x20] sm:$0xff]
  %v26 = vld [vmem:[%s0 + $0x28] sm:$0xff]
  %v27 = vld [vmem:[%s0 + $0x30] sm:$0xff]
  %v28 = vld [vmem:[%s0 + $0x38] sm:$0xff]
  %v29 = vld [vmem:[%s0 + $0x40] sm:$0xff]
  %v30 = vld [vmem:[%s0 + $0x48] sm:$0xff]
  %v31 = vld [vmem:[%s0 + $0x50] sm:$0xff]
  %v32 = vld [vmem:[%s0 + $0x58] sm:$0xff]
  %v33 = vld [vmem:[%s0 + $0x60] sm:$0xff]
  %v34 = vld [vmem:[%s0 + $0x68] sm:$0xff]
  %v35 = vld [vmem:[%s0 + $0x70] sm:$0xff]
  %v36 = vld [vmem:[%s0 + $0x78] sm:$0xff]
  %v37 = vpack.c.bf16 %v21, %v21
  %v38 = vpack.c.bf16 %v22, %v22
  %v39 = vpack.c.bf16 %v23, %v23
  %v40 = vpack.c.bf16 %v24, %v24
  %v41 = vpack.c.bf16 %v25, %v25
  %v42 = vpack.c.bf16 %v26, %v26
  %v43 = vpack.c.bf16 %v27, %v27
  %v44 = vpack.c.bf16 %v28, %v28
  %v45 = vpack.c.bf16 %v29, %v29
  %v46 = vpack.c.bf16 %v30, %v30
  %v47 = vpack.c.bf16 %v31, %v31
  %v48 = vpack.c.bf16 %v32, %v32
  %v49 = vpack.c.bf16 %v33, %v33
  %v50 = vpack.c.bf16 %v34, %v34
  %v51 = vpack.c.bf16 %v35, %v35
  %v52 = vpack.c.bf16 %v36, %v36
  %v53 = vld [vmem:[%s2] sm:$0xf]
  %v54 = vld [vmem:[%s2 + $0x4] sm:$0xf]
  %v55 = vld [vmem:[%s2 + $0x8] sm:$0xf]
  %v56 = vld [vmem:[%s2 + $0xc] sm:$0xf]
  %v57 = vld [vmem:[%s2 + $0x10] sm:$0xf]
  %v58 = vld [vmem:[%s2 + $0x14] sm:$0xf]
  %v59 = vld [vmem:[%s2 + $0x18] sm:$0xf]
  %v60 = vld [vmem:[%s2 + $0x1c] sm:$0xf]
  %v61 = vld [vmem:[%s2 + $0x20] sm:$0xf]
  %v62 = vld [vmem:[%s2 + $0x24] sm:$0xf]
  %v63 = vld [vmem:[%s2 + $0x28] sm:$0xf]
  %v64 = vld [vmem:[%s2 + $0x2c] sm:$0xf]
  %v65 = vld [vmem:[%s2 + $0x30] sm:$0xf]
  %v66 = vld [vmem:[%s2 + $0x34] sm:$0xf]
  %v67 = vld [vmem:[%s2 + $0x38] sm:$0xf]
  %v68 = vld [vmem:[%s2 + $0x3c] sm:$0xf]
  %v69 = vld [vmem:[%s2 + $0x40] sm:$0xf]
  %v70 = vld [vmem:[%s2 + $0x44] sm:$0xf]
  %v71 = vld [vmem:[%s2 + $0x48] sm:$0xf]
  %v72 = vld [vmem:[%s2 + $0x4c] sm:$0xf]
  %v73 = vld [vmem:[%s2 + $0x50] sm:$0xf]
  %v74 = vld [vmem:[%s2 + $0x54] sm:$0xf]
  %v75 = vld [vmem:[%s2 + $0x58] sm:$0xf]
  %v76 = vld [vmem:[%s2 + $0x5c] sm:$0xf]
  %v77 = vld [vmem:[%s2 + $0x60] sm:$0xf]
  %v78 = vld [vmem:[%s2 + $0x64] sm:$0xf]
  %v79 = vld [vmem:[%s2 + $0x68] sm:$0xf]
  %v80 = vld [vmem:[%s2 + $0x6c] sm:$0xf]
  %v81 = vld [vmem:[%s2 + $0x70] sm:$0xf]
  %v82 = vld [vmem:[%s2 + $0x74] sm:$0xf]
  %v83 = vld [vmem:[%s2 + $0x78] sm:$0xf]
  %v84 = vld [vmem:[%s2 + $0x7c] sm:$0xf]
  %v85 = vld [vmem:[%s2 + $0x80] sm:$0xf]
  %v86 = vld [vmem:[%s2 + $0x84] sm:$0xf]
  %v87 = vld [vmem:[%s2 + $0x88] sm:$0xf]
  %v88 = vld [vmem:[%s2 + $0x8c] sm:$0xf]
  %v89 = vld [vmem:[%s2 + $0x90] sm:$0xf]
  %v90 = vld [vmem:[%s2 + $0x94] sm:$0xf]
  %v91 = vld [vmem:[%s2 + $0x98] sm:$0xf]
  %v92 = vld [vmem:[%s2 + $0x9c] sm:$0xf]
  %v93 = vld [vmem:[%s2 + $0xa0] sm:$0xf]
  %v94 = vld [vmem:[%s2 + $0xa4] sm:$0xf]
  %v95 = vld [vmem:[%s2 + $0xa8] sm:$0xf]
  %v96 = vld [vmem:[%s2 + $0xac] sm:$0xf]
  %v97 = vld [vmem:[%s2 + $0xb0] sm:$0xf]
  %v98 = vld [vmem:[%s2 + $0xb4] sm:$0xf]
  %v99 = vld [vmem:[%s2 + $0xb8] sm:$0xf]
  %v100 = vld [vmem:[%s2 + $0xbc] sm:$0xf]
  %v101 = vld [vmem:[%s2 + $0xc0] sm:$0xf]
  %v102 = vld [vmem:[%s2 + $0xc4] sm:$0xf]
  %v103 = vld [vmem:[%s2 + $0xc8] sm:$0xf]
  %v104 = vld [vmem:[%s2 + $0xcc] sm:$0xf]
  %v105 = vld [vmem:[%s2 + $0xd0] sm:$0xf]
  %v106 = vld [vmem:[%s2 + $0xd4] sm:$0xf]
  %v107 = vld [vmem:[%s2 + $0xd8] sm:$0xf]
  %v108 = vld [vmem:[%s2 + $0xdc] sm:$0xf]
  %v109 = vld [vmem:[%s2 + $0xe0] sm:$0xf]
  %v110 = vld [vmem:[%s2 + $0xe4] sm:$0xf]
  %v111 = vld [vmem:[%s2 + $0xe8] sm:$0xf]
  %v112 = vld [vmem:[%s2 + $0xec] sm:$0xf]
  %v113 = vld [vmem:[%s2 + $0xf0] sm:$0xf]
  %v114 = vld [vmem:[%s2 + $0xf4] sm:$0xf]
  %v115 = vld [vmem:[%s2 + $0xf8] sm:$0xf]
  %v116 = vld [vmem:[%s2 + $0xfc] sm:$0xf]
  %v117 = vld [vmem:[%s2 + $0x100] sm:$0xf]
  %v118 = vld [vmem:[%s2 + $0x104] sm:$0xf]
  %v119 = vld [vmem:[%s2 + $0x108] sm:$0xf]
  %v120 = vld [vmem:[%s2 + $0x10c] sm:$0xf]
  %v121 = vld [vmem:[%s2 + $0x110] sm:$0xf]
  %v122 = vld [vmem:[%s2 + $0x114] sm:$0xf]
  %v123 = vld [vmem:[%s2 + $0x118] sm:$0xf]
  %v124 = vld [vmem:[%s2 + $0x11c] sm:$0xf]
  %v125 = vld [vmem:[%s2 + $0x120] sm:$0xf]
  %v126 = vld [vmem:[%s2 + $0x124] sm:$0xf]
  %v127 = vld [vmem:[%s2 + $0x128] sm:$0xf]
  %v128 = vld [vmem:[%s2 + $0x12c] sm:$0xf]
  %v129 = vld [vmem:[%s2 + $0x130] sm:$0xf]
  %v130 = vld [vmem:[%s2 + $0x134] sm:$0xf]
  %v131 = vld [vmem:[%s2 + $0x138] sm:$0xf]
  %v132 = vld [vmem:[%s2 + $0x13c] sm:$0xf]
  %v133 = vld [vmem:[%s2 + $0x140] sm:$0xf]
  %v134 = vld [vmem:[%s2 + $0x144] sm:$0xf]
  %v135 = vld [vmem:[%s2 + $0x148] sm:$0xf]
  %v136 = vld [vmem:[%s2 + $0x14c] sm:$0xf]
  %v137 = vld [vmem:[%s2 + $0x150] sm:$0xf]
  %v138 = vld [vmem:[%s2 + $0x154] sm:$0xf]
  %v139 = vld [vmem:[%s2 + $0x158] sm:$0xf]
  %v140 = vld [vmem:[%s2 + $0x15c] sm:$0xf]
  %v141 = vld [vmem:[%s2 + $0x160] sm:$0xf]
  %v142 = vld [vmem:[%s2 + $0x164] sm:$0xf]
  %v143 = vld [vmem:[%s2 + $0x168] sm:$0xf]
  %v144 = vld [vmem:[%s2 + $0x16c] sm:$0xf]
  %v145 = vld [vmem:[%s2 + $0x170] sm:$0xf]
  %v146 = vld [vmem:[%s2 + $0x174] sm:$0xf]
  %v147 = vld [vmem:[%s2 + $0x178] sm:$0xf]
  %v148 = vld [vmem:[%s2 + $0x17c] sm:$0xf]
  %v149 = vld [vmem:[%s2 + $0x180] sm:$0xf]
  %v150 = vld [vmem:[%s2 + $0x184] sm:$0xf]
  %v151 = vld [vmem:[%s2 + $0x188] sm:$0xf]
  %v152 = vld [vmem:[%s2 + $0x18c] sm:$0xf]
  %v153 = vld [vmem:[%s2 + $0x190] sm:$0xf]
  %v154 = vld [vmem:[%s2 + $0x194] sm:$0xf]
  %v155 = vld [vmem:[%s2 + $0x198] sm:$0xf]
  %v156 = vld [vmem:[%s2 + $0x19c] sm:$0xf]
  %v157 = vld [vmem:[%s2 + $0x1a0] sm:$0xf]
  %v158 = vld [vmem:[%s2 + $0x1a4] sm:$0xf]
  %v159 = vld [vmem:[%s2 + $0x1a8] sm:$0xf]
  %v160 = vld [vmem:[%s2 + $0x1ac] sm:$0xf]
  %v161 = vld [vmem:[%s2 + $0x1b0] sm:$0xf]
  %v162 = vld [vmem:[%s2 + $0x1b4] sm:$0xf]
  %v163 = vld [vmem:[%s2 + $0x1b8] sm:$0xf]
  %v164 = vld [vmem:[%s2 + $0x1bc] sm:$0xf]
  %v165 = vld [vmem:[%s2 + $0x1c0] sm:$0xf]
  %v166 = vld [vmem:[%s2 + $0x1c4] sm:$0xf]
  %v167 = vld [vmem:[%s2 + $0x1c8] sm:$0xf]
  %v168 = vld [vmem:[%s2 + $0x1cc] sm:$0xf]
  %v169 = vld [vmem:[%s2 + $0x1d0] sm:$0xf]
  %v170 = vld [vmem:[%s2 + $0x1d4] sm:$0xf]
  %v171 = vld [vmem:[%s2 + $0x1d8] sm:$0xf]
  %v172 = vld [vmem:[%s2 + $0x1dc] sm:$0xf]
  %v173 = vld [vmem:[%s2 + $0x1e0] sm:$0xf]
  %v174 = vld [vmem:[%s2 + $0x1e4] sm:$0xf]
  %v175 = vld [vmem:[%s2 + $0x1e8] sm:$0xf]
  %v176 = vld [vmem:[%s2 + $0x1ec] sm:$0xf]
  %v177 = vld [vmem:[%s2 + $0x1f0] sm:$0xf]
  %v178 = vld [vmem:[%s2 + $0x1f4] sm:$0xf]
  %v179 = vld [vmem:[%s2 + $0x1f8] sm:$0xf]
  %v180 = vld [vmem:[%s2 + $0x1fc] sm:$0xf]
  %v181 = vld [vmem:[%s2 + $0x200] sm:$0xf]
  %v182 = vld [vmem:[%s2 + $0x204] sm:$0xf]
  %v183 = vld [vmem:[%s2 + $0x208] sm:$0xf]
  %v184 = vld [vmem:[%s2 + $0x20c] sm:$0xf]
  %v185 = vld [vmem:[%s2 + $0x210] sm:$0xf]
  %v186 = vld [vmem:[%s2 + $0x214] sm:$0xf]
  %v187 = vld [vmem:[%s2 + $0x218] sm:$0xf]
  %v188 = vld [vmem:[%s2 + $0x21c] sm:$0xf]
  %v189 = vld [vmem:[%s2 + $0x220] sm:$0xf]
  %v190 = vld [vmem:[%s2 + $0x224] sm:$0xf]
  %v191 = vld [vmem:[%s2 + $0x228] sm:$0xf]
  %v192 = vld [vmem:[%s2 + $0x22c] sm:$0xf]
  %v193 = vld [vmem:[%s2 + $0x230] sm:$0xf]
  %v194 = vld [vmem:[%s2 + $0x234] sm:$0xf]
  %v195 = vld [vmem:[%s2 + $0x238] sm:$0xf]
  %v196 = vld [vmem:[%s2 + $0x23c] sm:$0xf]
  %v197 = vld [vmem:[%s2 + $0x240] sm:$0xf]
  %v198 = vld [vmem:[%s2 + $0x244] sm:$0xf]
  %v199 = vld [vmem:[%s2 + $0x248] sm:$0xf]
  %v200 = vld [vmem:[%s2 + $0x24c] sm:$0xf]
  %v201 = vld [vmem:[%s2 + $0x250] sm:$0xf]
  %v202 = vld [vmem:[%s2 + $0x254] sm:$0xf]
  %v203 = vld [vmem:[%s2 + $0x258] sm:$0xf]
  %v204 = vld [vmem:[%s2 + $0x25c] sm:$0xf]
  %v205 = vld [vmem:[%s2 + $0x260] sm:$0xf]
  %v206 = vld [vmem:[%s2 + $0x264] sm:$0xf]
  %v207 = vld [vmem:[%s2 + $0x268] sm:$0xf]
  %v208 = vld [vmem:[%s2 + $0x26c] sm:$0xf]
  %v209 = vld [vmem:[%s2 + $0x270] sm:$0xf]
  %v210 = vld [vmem:[%s2 + $0x274] sm:$0xf]
  %v211 = vld [vmem:[%s2 + $0x278] sm:$0xf]
  %v212 = vld [vmem:[%s2 + $0x27c] sm:$0xf]
  %v213 = vld [vmem:[%s2 + $0x280] sm:$0xf]
  %v214 = vld [vmem:[%s2 + $0x284] sm:$0xf]
  %v215 = vld [vmem:[%s2 + $0x288] sm:$0xf]
  %v216 = vld [vmem:[%s2 + $0x28c] sm:$0xf]
  %v217 = vld [vmem:[%s2 + $0x290] sm:$0xf]
  %v218 = vld [vmem:[%s2 + $0x294] sm:$0xf]
  %v219 = vld [vmem:[%s2 + $0x298] sm:$0xf]
  %v220 = vld [vmem:[%s2 + $0x29c] sm:$0xf]
  %v221 = vld [vmem:[%s2 + $0x2a0] sm:$0xf]
  %v222 = vld [vmem:[%s2 + $0x2a4] sm:$0xf]
  %v223 = vld [vmem:[%s2 + $0x2a8] sm:$0xf]
  %v224 = vld [vmem:[%s2 + $0x2ac] sm:$0xf]
  %v225 = vld [vmem:[%s2 + $0x2b0] sm:$0xf]
  %v226 = vld [vmem:[%s2 + $0x2b4] sm:$0xf]
  %v227 = vld [vmem:[%s2 + $0x2b8] sm:$0xf]
  %v228 = vld [vmem:[%s2 + $0x2bc] sm:$0xf]
  %v229 = vld [vmem:[%s2 + $0x2c0] sm:$0xf]
  %v230 = vld [vmem:[%s2 + $0x2c4] sm:$0xf]
  %v231 = vld [vmem:[%s2 + $0x2c8] sm:$0xf]
  %v232 = vld [vmem:[%s2 + $0x2cc] sm:$0xf]
  %v233 = vld [vmem:[%s2 + $0x2d0] sm:$0xf]
  %v234 = vld [vmem:[%s2 + $0x2d4] sm:$0xf]
  %v235 = vld [vmem:[%s2 + $0x2d8] sm:$0xf]
  %v236 = vld [vmem:[%s2 + $0x2dc] sm:$0xf]
  %v237 = vld [vmem:[%s2 + $0x2e0] sm:$0xf]
  %v238 = vld [vmem:[%s2 + $0x2e4] sm:$0xf]
  %v239 = vld [vmem:[%s2 + $0x2e8] sm:$0xf]
  %v240 = vld [vmem:[%s2 + $0x2ec] sm:$0xf]
  %v241 = vld [vmem:[%s2 + $0x2f0] sm:$0xf]
  %v242 = vld [vmem:[%s2 + $0x2f4] sm:$0xf]
  %v243 = vld [vmem:[%s2 + $0x2f8] sm:$0xf]
  %v244 = vld [vmem:[%s2 + $0x2fc] sm:$0xf]
  %v245 = vld [vmem:[%s2 + $0x300] sm:$0xf]
  %v246 = vld [vmem:[%s2 + $0x304] sm:$0xf]
  %v247 = vld [vmem:[%s2 + $0x308] sm:$0xf]
  %v248 = vld [vmem:[%s2 + $0x30c] sm:$0xf]
  %v249 = vld [vmem:[%s2 + $0x310] sm:$0xf]
  %v250 = vld [vmem:[%s2 + $0x314] sm:$0xf]
  %v251 = vld [vmem:[%s2 + $0x318] sm:$0xf]
  %v252 = vld [vmem:[%s2 + $0x31c] sm:$0xf]
  %v253 = vld [vmem:[%s2 + $0x320] sm:$0xf]
  %v254 = vld [vmem:[%s2 + $0x324] sm:$0xf]
  %v255 = vld [vmem:[%s2 + $0x328] sm:$0xf]
  %v256 = vld [vmem:[%s2 + $0x32c] sm:$0xf]
  %v257 = vld [vmem:[%s2 + $0x330] sm:$0xf]
  %v258 = vld [vmem:[%s2 + $0x334] sm:$0xf]
  %v259 = vld [vmem:[%s2 + $0x338] sm:$0xf]
  %v260 = vld [vmem:[%s2 + $0x33c] sm:$0xf]
  %v261 = vld [vmem:[%s2 + $0x340] sm:$0xf]
  %v262 = vld [vmem:[%s2 + $0x344] sm:$0xf]
  %v263 = vld [vmem:[%s2 + $0x348] sm:$0xf]
  %v264 = vld [vmem:[%s2 + $0x34c] sm:$0xf]
  %v265 = vld [vmem:[%s2 + $0x350] sm:$0xf]
  %v266 = vld [vmem:[%s2 + $0x354] sm:$0xf]
  %v267 = vld [vmem:[%s2 + $0x358] sm:$0xf]
  %v268 = vld [vmem:[%s2 + $0x35c] sm:$0xf]
  %v269 = vld [vmem:[%s2 + $0x360] sm:$0xf]
  %v270 = vld [vmem:[%s2 + $0x364] sm:$0xf]
  %v271 = vld [vmem:[%s2 + $0x368] sm:$0xf]
  %v272 = vld [vmem:[%s2 + $0x36c] sm:$0xf]
  %v273 = vld [vmem:[%s2 + $0x370] sm:$0xf]
  %v274 = vld [vmem:[%s2 + $0x374] sm:$0xf]
  %v275 = vld [vmem:[%s2 + $0x378] sm:$0xf]
  %v276 = vld [vmem:[%s2 + $0x37c] sm:$0xf]
  %v277 = vld [vmem:[%s2 + $0x380] sm:$0xf]
  %v278 = vld [vmem:[%s2 + $0x384] sm:$0xf]
  %v279 = vld [vmem:[%s2 + $0x388] sm:$0xf]
  %v280 = vld [vmem:[%s2 + $0x38c] sm:$0xf]
  %v281 = vld [vmem:[%s2 + $0x390] sm:$0xf]
  %v282 = vld [vmem:[%s2 + $0x394] sm:$0xf]
  %v283 = vld [vmem:[%s2 + $0x398] sm:$0xf]
  %v284 = vld [vmem:[%s2 + $0x39c] sm:$0xf]
  %v285 = vld [vmem:[%s2 + $0x3a0] sm:$0xf]
  %v286 = vld [vmem:[%s2 + $0x3a4] sm:$0xf]
  %v287 = vld [vmem:[%s2 + $0x3a8] sm:$0xf]
  %v288 = vld [vmem:[%s2 + $0x3ac] sm:$0xf]
  %v289 = vld [vmem:[%s2 + $0x3b0] sm:$0xf]
  %v290 = vld [vmem:[%s2 + $0x3b4] sm:$0xf]
  %v291 = vld [vmem:[%s2 + $0x3b8] sm:$0xf]
  %v292 = vld [vmem:[%s2 + $0x3bc] sm:$0xf]
  %v293 = vld [vmem:[%s2 + $0x3c0] sm:$0xf]
  %v294 = vld [vmem:[%s2 + $0x3c4] sm:$0xf]
  %v295 = vld [vmem:[%s2 + $0x3c8] sm:$0xf]
  %v296 = vld [vmem:[%s2 + $0x3cc] sm:$0xf]
  %v297 = vld [vmem:[%s2 + $0x3d0] sm:$0xf]
  %v298 = vld [vmem:[%s2 + $0x3d4] sm:$0xf]
  %v299 = vld [vmem:[%s2 + $0x3d8] sm:$0xf]
  %v300 = vld [vmem:[%s2 + $0x3dc] sm:$0xf]
  %v301 = vld [vmem:[%s2 + $0x3e0] sm:$0xf]
  %v302 = vld [vmem:[%s2 + $0x3e4] sm:$0xf]
  %v303 = vld [vmem:[%s2 + $0x3e8] sm:$0xf]
  %v304 = vld [vmem:[%s2 + $0x3ec] sm:$0xf]
  %v305 = vld [vmem:[%s2 + $0x3f0] sm:$0xf]
  %v306 = vld [vmem:[%s2 + $0x3f4] sm:$0xf]
  %v307 = vld [vmem:[%s2 + $0x3f8] sm:$0xf]
  %v308 = vld [vmem:[%s2 + $0x3fc] sm:$0xf]
  %v309 = vld [vmem:[%s1] sm:$0xff]
  %v310 = vld [vmem:[%s1 + $0x8] sm:$0xff]
  %v311 = vld [vmem:[%s1 + $0x10] sm:$0xff]
  %v312 = vld [vmem:[%s1 + $0x18] sm:$0xff]
  %v313 = vld [vmem:[%s1 + $0x20] sm:$0xff]
  %v314 = vld [vmem:[%s1 + $0x28] sm:$0xff]
  %v315 = vld [vmem:[%s1 + $0x30] sm:$0xff]
  %v316 = vld [vmem:[%s1 + $0x38] sm:$0xff]
  %v317 = vpack.c.bf16 %v309, %v309
  %v318 = vpack.c.bf16 %v310, %v310
  %v319 = vpack.c.bf16 %v311, %v311
  %v320 = vpack.c.bf16 %v312, %v312
  %v321 = vpack.c.bf16 %v313, %v313
  %v322 = vpack.c.bf16 %v314, %v314
  %v323 = vpack.c.bf16 %v315, %v315
  %v324 = vpack.c.bf16 %v316, %v316
  %v325 = vld [vmem:[%s3] sm:$0xf]
  %v326 = vld [vmem:[%s3 + $0x4] sm:$0xf]
  %v327 = vld [vmem:[%s3 + $0x8] sm:$0xf]
  %v328 = vld [vmem:[%s3 + $0xc] sm:$0xf]
  %v329 = vld [vmem:[%s3 + $0x10] sm:$0xf]
  %v330 = vld [vmem:[%s3 + $0x14] sm:$0xf]
  %v331 = vld [vmem:[%s3 + $0x18] sm:$0xf]
  %v332 = vld [vmem:[%s3 + $0x1c] sm:$0xf]
  %v333 = vld [vmem:[%s3 + $0x20] sm:$0xf]
  %v334 = vld [vmem:[%s3 + $0x24] sm:$0xf]
  %v335 = vld [vmem:[%s3 + $0x28] sm:$0xf]
  %v336 = vld [vmem:[%s3 + $0x2c] sm:$0xf]
  %v337 = vld [vmem:[%s3 + $0x30] sm:$0xf]
  %v338 = vld [vmem:[%s3 + $0x34] sm:$0xf]
  %v339 = vld [vmem:[%s3 + $0x38] sm:$0xf]
  %v340 = vld [vmem:[%s3 + $0x3c] sm:$0xf]
  %v341 = vld [vmem:[%s3 + $0x40] sm:$0xf]
  %v342 = vld [vmem:[%s3 + $0x44] sm:$0xf]
  %v343 = vld [vmem:[%s3 + $0x48] sm:$0xf]
  %v344 = vld [vmem:[%s3 + $0x4c] sm:$0xf]
  %v345 = vld [vmem:[%s3 + $0x50] sm:$0xf]
  %v346 = vld [vmem:[%s3 + $0x54] sm:$0xf]
  %v347 = vld [vmem:[%s3 + $0x58] sm:$0xf]
  %v348 = vld [vmem:[%s3 + $0x5c] sm:$0xf]
  %v349 = vld [vmem:[%s3 + $0x60] sm:$0xf]
  %v350 = vld [vmem:[%s3 + $0x64] sm:$0xf]
  %v351 = vld [vmem:[%s3 + $0x68] sm:$0xf]
  %v352 = vld [vmem:[%s3 + $0x6c] sm:$0xf]
  %v353 = vld [vmem:[%s3 + $0x70] sm:$0xf]
  %v354 = vld [vmem:[%s3 + $0x74] sm:$0xf]
  %v355 = vld [vmem:[%s3 + $0x78] sm:$0xf]
  %v356 = vld [vmem:[%s3 + $0x7c] sm:$0xf]
  %v357 = vld [vmem:[%s3 + $0x80] sm:$0xf]
  %v358 = vld [vmem:[%s3 + $0x84] sm:$0xf]
  %v359 = vld [vmem:[%s3 + $0x88] sm:$0xf]
  %v360 = vld [vmem:[%s3 + $0x8c] sm:$0xf]
  %v361 = vld [vmem:[%s3 + $0x90] sm:$0xf]
  %v362 = vld [vmem:[%s3 + $0x94] sm:$0xf]
  %v363 = vld [vmem:[%s3 + $0x98] sm:$0xf]
  %v364 = vld [vmem:[%s3 + $0x9c] sm:$0xf]
  %v365 = vld [vmem:[%s3 + $0xa0] sm:$0xf]
  %v366 = vld [vmem:[%s3 + $0xa4] sm:$0xf]
  %v367 = vld [vmem:[%s3 + $0xa8] sm:$0xf]
  %v368 = vld [vmem:[%s3 + $0xac] sm:$0xf]
  %v369 = vld [vmem:[%s3 + $0xb0] sm:$0xf]
  %v370 = vld [vmem:[%s3 + $0xb4] sm:$0xf]
  %v371 = vld [vmem:[%s3 + $0xb8] sm:$0xf]
  %v372 = vld [vmem:[%s3 + $0xbc] sm:$0xf]
  %v373 = vld [vmem:[%s3 + $0xc0] sm:$0xf]
  %v374 = vld [vmem:[%s3 + $0xc4] sm:$0xf]
  %v375 = vld [vmem:[%s3 + $0xc8] sm:$0xf]
  %v376 = vld [vmem:[%s3 + $0xcc] sm:$0xf]
  %v377 = vld [vmem:[%s3 + $0xd0] sm:$0xf]
  %v378 = vld [vmem:[%s3 + $0xd4] sm:$0xf]
  %v379 = vld [vmem:[%s3 + $0xd8] sm:$0xf]
  %v380 = vld [vmem:[%s3 + $0xdc] sm:$0xf]
  %v381 = vld [vmem:[%s3 + $0xe0] sm:$0xf]
  %v382 = vld [vmem:[%s3 + $0xe4] sm:$0xf]
  %v383 = vld [vmem:[%s3 + $0xe8] sm:$0xf]
  %v384 = vld [vmem:[%s3 + $0xec] sm:$0xf]
  %v385 = vld [vmem:[%s3 + $0xf0] sm:$0xf]
  %v386 = vld [vmem:[%s3 + $0xf4] sm:$0xf]
  %v387 = vld [vmem:[%s3 + $0xf8] sm:$0xf]
  %v388 = vld [vmem:[%s3 + $0xfc] sm:$0xf]
  %v389 = vld [vmem:[%s3 + $0x100] sm:$0xf]
  %v390 = vld [vmem:[%s3 + $0x104] sm:$0xf]
  %v391 = vld [vmem:[%s3 + $0x108] sm:$0xf]
  %v392 = vld [vmem:[%s3 + $0x10c] sm:$0xf]
  %v393 = vld [vmem:[%s3 + $0x110] sm:$0xf]
  %v394 = vld [vmem:[%s3 + $0x114] sm:$0xf]
  %v395 = vld [vmem:[%s3 + $0x118] sm:$0xf]
  %v396 = vld [vmem:[%s3 + $0x11c] sm:$0xf]
  %v397 = vld [vmem:[%s3 + $0x120] sm:$0xf]
  %v398 = vld [vmem:[%s3 + $0x124] sm:$0xf]
  %v399 = vld [vmem:[%s3 + $0x128] sm:$0xf]
  %v400 = vld [vmem:[%s3 + $0x12c] sm:$0xf]
  %v401 = vld [vmem:[%s3 + $0x130] sm:$0xf]
  %v402 = vld [vmem:[%s3 + $0x134] sm:$0xf]
  %v403 = vld [vmem:[%s3 + $0x138] sm:$0xf]
  %v404 = vld [vmem:[%s3 + $0x13c] sm:$0xf]
  %v405 = vld [vmem:[%s3 + $0x140] sm:$0xf]
  %v406 = vld [vmem:[%s3 + $0x144] sm:$0xf]
  %v407 = vld [vmem:[%s3 + $0x148] sm:$0xf]
  %v408 = vld [vmem:[%s3 + $0x14c] sm:$0xf]
  %v409 = vld [vmem:[%s3 + $0x150] sm:$0xf]
  %v410 = vld [vmem:[%s3 + $0x154] sm:$0xf]
  %v411 = vld [vmem:[%s3 + $0x158] sm:$0xf]
  %v412 = vld [vmem:[%s3 + $0x15c] sm:$0xf]
  %v413 = vld [vmem:[%s3 + $0x160] sm:$0xf]
  %v414 = vld [vmem:[%s3 + $0x164] sm:$0xf]
  %v415 = vld [vmem:[%s3 + $0x168] sm:$0xf]
  %v416 = vld [vmem:[%s3 + $0x16c] sm:$0xf]
  %v417 = vld [vmem:[%s3 + $0x170] sm:$0xf]
  %v418 = vld [vmem:[%s3 + $0x174] sm:$0xf]
  %v419 = vld [vmem:[%s3 + $0x178] sm:$0xf]
  %v420 = vld [vmem:[%s3 + $0x17c] sm:$0xf]
  %v421 = vld [vmem:[%s3 + $0x180] sm:$0xf]
  %v422 = vld [vmem:[%s3 + $0x184] sm:$0xf]
  %v423 = vld [vmem:[%s3 + $0x188] sm:$0xf]
  %v424 = vld [vmem:[%s3 + $0x18c] sm:$0xf]
  %v425 = vld [vmem:[%s3 + $0x190] sm:$0xf]
  %v426 = vld [vmem:[%s3 + $0x194] sm:$0xf]
  %v427 = vld [vmem:[%s3 + $0x198] sm:$0xf]
  %v428 = vld [vmem:[%s3 + $0x19c] sm:$0xf]
  %v429 = vld [vmem:[%s3 + $0x1a0] sm:$0xf]
  %v430 = vld [vmem:[%s3 + $0x1a4] sm:$0xf]
  %v431 = vld [vmem:[%s3 + $0x1a8] sm:$0xf]
  %v432 = vld [vmem:[%s3 + $0x1ac] sm:$0xf]
  %v433 = vld [vmem:[%s3 + $0x1b0] sm:$0xf]
  %v434 = vld [vmem:[%s3 + $0x1b4] sm:$0xf]
  %v435 = vld [vmem:[%s3 + $0x1b8] sm:$0xf]
  %v436 = vld [vmem:[%s3 + $0x1bc] sm:$0xf]
  %v437 = vld [vmem:[%s3 + $0x1c0] sm:$0xf]
  %v438 = vld [vmem:[%s3 + $0x1c4] sm:$0xf]
  %v439 = vld [vmem:[%s3 + $0x1c8] sm:$0xf]
  %v440 = vld [vmem:[%s3 + $0x1cc] sm:$0xf]
  %v441 = vld [vmem:[%s3 + $0x1d0] sm:$0xf]
  %v442 = vld [vmem:[%s3 + $0x1d4] sm:$0xf]
  %v443 = vld [vmem:[%s3 + $0x1d8] sm:$0xf]
  %v444 = vld [vmem:[%s3 + $0x1dc] sm:$0xf]
  %v445 = vld [vmem:[%s3 + $0x1e0] sm:$0xf]
  %v446 = vld [vmem:[%s3 + $0x1e4] sm:$0xf]
  %v447 = vld [vmem:[%s3 + $0x1e8] sm:$0xf]
  %v448 = vld [vmem:[%s3 + $0x1ec] sm:$0xf]
  %v449 = vld [vmem:[%s3 + $0x1f0] sm:$0xf]
  %v450 = vld [vmem:[%s3 + $0x1f4] sm:$0xf]
  %v451 = vld [vmem:[%s3 + $0x1f8] sm:$0xf]
  %v452 = vld [vmem:[%s3 + $0x1fc] sm:$0xf]
  %v581 = vunpack.c.l.b16 %v325
  %v582 = vunpack.c.l.b16 %v326
  %v583 = vunpack.c.l.b16 %v327
  %v584 = vunpack.c.l.b16 %v328
  %v585 = vunpack.c.l.b16 %v329
  %v586 = vunpack.c.l.b16 %v330
  %v587 = vunpack.c.l.b16 %v331
  %v588 = vunpack.c.l.b16 %v332
  %v589 = vunpack.c.l.b16 %v333
  %v590 = vunpack.c.l.b16 %v334
  %v591 = vunpack.c.l.b16 %v335
  %v592 = vunpack.c.l.b16 %v336
  %v593 = vunpack.c.l.b16 %v337
  %v594 = vunpack.c.l.b16 %v338
  %v595 = vunpack.c.l.b16 %v339
  %v596 = vunpack.c.l.b16 %v340
  %v597 = vunpack.c.l.b16 %v341
  %v598 = vunpack.c.l.b16 %v342
  %v599 = vunpack.c.l.b16 %v343
  %v600 = vunpack.c.l.b16 %v344
  %v601 = vunpack.c.l.b16 %v345
  %v602 = vunpack.c.l.b16 %v346
  %v603 = vunpack.c.l.b16 %v347
  %v604 = vunpack.c.l.b16 %v348
  %v605 = vunpack.c.l.b16 %v349
  %v606 = vunpack.c.l.b16 %v350
  %v607 = vunpack.c.l.b16 %v351
  %v608 = vunpack.c.l.b16 %v352
  %v609 = vunpack.c.l.b16 %v353
  %v610 = vunpack.c.l.b16 %v354
  %v611 = vunpack.c.l.b16 %v355
  %v612 = vunpack.c.l.b16 %v356
  %v613 = vunpack.c.l.b16 %v357
  %v614 = vunpack.c.l.b16 %v358
  %v615 = vunpack.c.l.b16 %v359
  %v616 = vunpack.c.l.b16 %v360
  %v617 = vunpack.c.l.b16 %v361
  %v618 = vunpack.c.l.b16 %v362
  %v619 = vunpack.c.l.b16 %v363
  %v620 = vunpack.c.l.b16 %v364
  %v621 = vunpack.c.l.b16 %v365
  %v622 = vunpack.c.l.b16 %v366
  %v623 = vunpack.c.l.b16 %v367
  %v624 = vunpack.c.l.b16 %v368
  %v625 = vunpack.c.l.b16 %v369
  %v626 = vunpack.c.l.b16 %v370
  %v627 = vunpack.c.l.b16 %v371
  %v628 = vunpack.c.l.b16 %v372
  %v629 = vunpack.c.l.b16 %v373
  %v630 = vunpack.c.l.b16 %v374
  %v631 = vunpack.c.l.b16 %v375
  %v632 = vunpack.c.l.b16 %v376
  %v633 = vunpack.c.l.b16 %v377
  %v634 = vunpack.c.l.b16 %v378
  %v635 = vunpack.c.l.b16 %v379
  %v636 = vunpack.c.l.b16 %v380
  %v637 = vunpack.c.l.b16 %v381
  %v638 = vunpack.c.l.b16 %v382
  %v639 = vunpack.c.l.b16 %v383
  %v640 = vunpack.c.l.b16 %v384
  %v641 = vunpack.c.l.b16 %v385
  %v642 = vunpack.c.l.b16 %v386
  %v643 = vunpack.c.l.b16 %v387
  %v644 = vunpack.c.l.b16 %v388
  %v645 = vunpack.c.l.b16 %v389
  %v646 = vunpack.c.l.b16 %v390
  %v647 = vunpack.c.l.b16 %v391
  %v648 = vunpack.c.l.b16 %v392
  %v649 = vunpack.c.l.b16 %v393
  %v650 = vunpack.c.l.b16 %v394
  %v651 = vunpack.c.l.b16 %v395
  %v652 = vunpack.c.l.b16 %v396
  %v653 = vunpack.c.l.b16 %v397
  %v654 = vunpack.c.l.b16 %v398
  %v655 = vunpack.c.l.b16 %v399
  %v656 = vunpack.c.l.b16 %v400
  %v657 = vunpack.c.l.b16 %v401
  %v658 = vunpack.c.l.b16 %v402
  %v659 = vunpack.c.l.b16 %v403
  %v660 = vunpack.c.l.b16 %v404
  %v661 = vunpack.c.l.b16 %v405
  %v662 = vunpack.c.l.b16 %v406
  %v663 = vunpack.c.l.b16 %v407
  %v664 = vunpack.c.l.b16 %v408
  %v665 = vunpack.c.l.b16 %v409
  %v666 = vunpack.c.l.b16 %v410
  %v667 = vunpack.c.l.b16 %v411
  %v668 = vunpack.c.l.b16 %v412
  %v669 = vunpack.c.l.b16 %v413
  %v670 = vunpack.c.l.b16 %v414
  %v671 = vunpack.c.l.b16 %v415
  %v672 = vunpack.c.l.b16 %v416
  %v673 = vunpack.c.l.b16 %v417
  %v674 = vunpack.c.l.b16 %v418
  %v675 = vunpack.c.l.b16 %v419
  %v676 = vunpack.c.l.b16 %v420
  %v677 = vunpack.c.l.b16 %v421
  %v678 = vunpack.c.l.b16 %v422
  %v679 = vunpack.c.l.b16 %v423
  %v680 = vunpack.c.l.b16 %v424
  %v681 = vunpack.c.l.b16 %v425
  %v682 = vunpack.c.l.b16 %v426
  %v683 = vunpack.c.l.b16 %v427
  %v684 = vunpack.c.l.b16 %v428
  %v685 = vunpack.c.l.b16 %v429
  %v686 = vunpack.c.l.b16 %v430
  %v687 = vunpack.c.l.b16 %v431
  %v688 = vunpack.c.l.b16 %v432
  %v689 = vunpack.c.l.b16 %v433
  %v690 = vunpack.c.l.b16 %v434
  %v691 = vunpack.c.l.b16 %v435
  %v692 = vunpack.c.l.b16 %v436
  %v693 = vunpack.c.l.b16 %v437
  %v694 = vunpack.c.l.b16 %v438
  %v695 = vunpack.c.l.b16 %v439
  %v696 = vunpack.c.l.b16 %v440
  %v697 = vunpack.c.l.b16 %v441
  %v698 = vunpack.c.l.b16 %v442
  %v699 = vunpack.c.l.b16 %v443
  %v700 = vunpack.c.l.b16 %v444
  %v701 = vunpack.c.l.b16 %v445
  %v702 = vunpack.c.l.b16 %v446
  %v703 = vunpack.c.l.b16 %v447
  %v704 = vunpack.c.l.b16 %v448
  %v705 = vunpack.c.l.b16 %v449
  %v706 = vunpack.c.l.b16 %v450
  %v707 = vunpack.c.l.b16 %v451
  %v708 = vunpack.c.l.b16 %v452
  %v709 = vpack.c.b16 %v582, %v581
  %v710 = vpack.c.b16 %v584, %v583
  %v711 = vpack.c.b16 %v586, %v585
  %v712 = vpack.c.b16 %v588, %v587
  %v713 = vpack.c.b16 %v590, %v589
  %v714 = vpack.c.b16 %v592, %v591
  %v715 = vpack.c.b16 %v594, %v593
  %v716 = vpack.c.b16 %v596, %v595
  %v717 = vpack.c.b16 %v598, %v597
  %v718 = vpack.c.b16 %v600, %v599
  %v719 = vpack.c.b16 %v602, %v601
  %v720 = vpack.c.b16 %v604, %v603
  %v721 = vpack.c.b16 %v606, %v605
  %v722 = vpack.c.b16 %v608, %v607
  %v723 = vpack.c.b16 %v610, %v609
  %v724 = vpack.c.b16 %v612, %v611
  %v725 = vpack.c.b16 %v614, %v613
  %v726 = vpack.c.b16 %v616, %v615
  %v727 = vpack.c.b16 %v618, %v617
  %v728 = vpack.c.b16 %v620, %v619
  %v729 = vpack.c.b16 %v622, %v621
  %v730 = vpack.c.b16 %v624, %v623
  %v731 = vpack.c.b16 %v626, %v625
  %v732 = vpack.c.b16 %v628, %v627
  %v733 = vpack.c.b16 %v630, %v629
  %v734 = vpack.c.b16 %v632, %v631
  %v735 = vpack.c.b16 %v634, %v633
  %v736 = vpack.c.b16 %v636, %v635
  %v737 = vpack.c.b16 %v638, %v637
  %v738 = vpack.c.b16 %v640, %v639
  %v739 = vpack.c.b16 %v642, %v641
  %v740 = vpack.c.b16 %v644, %v643
  %v741 = vpack.c.b16 %v646, %v645
  %v742 = vpack.c.b16 %v648, %v647
  %v743 = vpack.c.b16 %v650, %v649
  %v744 = vpack.c.b16 %v652, %v651
  %v745 = vpack.c.b16 %v654, %v653
  %v746 = vpack.c.b16 %v656, %v655
  %v747 = vpack.c.b16 %v658, %v657
  %v748 = vpack.c.b16 %v660, %v659
  %v749 = vpack.c.b16 %v662, %v661
  %v750 = vpack.c.b16 %v664, %v663
  %v751 = vpack.c.b16 %v666, %v665
  %v752 = vpack.c.b16 %v668, %v667
  %v753 = vpack.c.b16 %v670, %v669
  %v754 = vpack.c.b16 %v672, %v671
  %v755 = vpack.c.b16 %v674, %v673
  %v756 = vpack.c.b16 %v676, %v675
  %v757 = vpack.c.b16 %v678, %v677
  %v758 = vpack.c.b16 %v680, %v679
  %v759 = vpack.c.b16 %v682, %v681
  %v760 = vpack.c.b16 %v684, %v683
  %v761 = vpack.c.b16 %v686, %v685
  %v762 = vpack.c.b16 %v688, %v687
  %v763 = vpack.c.b16 %v690, %v689
  %v764 = vpack.c.b16 %v692, %v691
  %v765 = vpack.c.b16 %v694, %v693
  %v766 = vpack.c.b16 %v696, %v695
  %v767 = vpack.c.b16 %v698, %v697
  %v768 = vpack.c.b16 %v700, %v699
  %v769 = vpack.c.b16 %v702, %v701
  %v770 = vpack.c.b16 %v704, %v703
  %v771 = vpack.c.b16 %v706, %v705
  %v772 = vpack.c.b16 %v708, %v707
  %837 = vmatprep.subr.bf16.mxu0 0
  %838 = vmatpush1.bf16.msra.mxu0 %v709
  %839 = vmatprep.subr.bf16.mxu0 0
  %840 = vmatpush1.bf16.msra.mxu0 %v710
  %841 = vmatprep.subr.bf16.mxu0 0
  %842 = vmatpush1.bf16.msra.mxu0 %v711
  %843 = vmatprep.subr.bf16.mxu0 0
  %844 = vmatpush1.bf16.msra.mxu0 %v712
  %845 = vmatprep.subr.bf16.mxu0 0
  %846 = vmatpush1.bf16.msra.mxu0 %v713
  %847 = vmatprep.subr.bf16.mxu0 0
  %848 = vmatpush1.bf16.msra.mxu0 %v714
  %849 = vmatprep.subr.bf16.mxu0 0
  %850 = vmatpush1.bf16.msra.mxu0 %v715
  %851 = vmatprep.subr.bf16.mxu0 0
  %852 = vmatpush1.bf16.msra.mxu0 %v716
  %853 = vmatprep.subr.bf16.mxu0 0
  %854 = vmatpush1.bf16.msra.mxu0 %v717
  %855 = vmatprep.subr.bf16.mxu0 0
  %856 = vmatpush1.bf16.msra.mxu0 %v718
  %857 = vmatprep.subr.bf16.mxu0 0
  %858 = vmatpush1.bf16.msra.mxu0 %v719
  %859 = vmatprep.subr.bf16.mxu0 0
  %860 = vmatpush1.bf16.msra.mxu0 %v720
  %861 = vmatprep.subr.bf16.mxu0 0
  %862 = vmatpush1.bf16.msra.mxu0 %v721
  %863 = vmatprep.subr.bf16.mxu0 0
  %864 = vmatpush1.bf16.msra.mxu0 %v722
  %865 = vmatprep.subr.bf16.mxu0 0
  %866 = vmatpush1.bf16.msra.mxu0 %v723
  %867 = vmatprep.subr.bf16.mxu0 0
  %868 = vmatpush1.bf16.msra.mxu0 %v724
  %869 = vmatprep.mubr.bf16.mxu0 %v318
  %870 = vmatmul.mubr.bf16.gmra.mrb[0].mxu0 %v317
  %v871 = vpop.f32.mrb[0].mxu0
  %v872 = vadd.f32 0.0, %v871
  %v873 = vpop.f32.mrb[0].mxu0
  %v874 = vpop.f32.mrb[0].mxu0
  %v875 = vpop.f32.mrb[0].mxu0
  %876 = vdwg.mxu0
  %877 = vmatprep.subr.bf16.mxu0 0
  %878 = vmatpush1.bf16.msra.mxu0 %v725
  %879 = vmatprep.subr.bf16.mxu0 0
  %880 = vmatpush1.bf16.msra.mxu0 %v726
  %881 = vmatprep.subr.bf16.mxu0 0
  %882 = vmatpush1.bf16.msra.mxu0 %v727
  %883 = vmatprep.subr.bf16.mxu0 0
  %884 = vmatpush1.bf16.msra.mxu0 %v728
  %885 = vmatprep.subr.bf16.mxu0 0
  %886 = vmatpush1.bf16.msra.mxu0 %v729
  %887 = vmatprep.subr.bf16.mxu0 0
  %888 = vmatpush1.bf16.msra.mxu0 %v730
  %889 = vmatprep.subr.bf16.mxu0 0
  %890 = vmatpush1.bf16.msra.mxu0 %v731
  %891 = vmatprep.subr.bf16.mxu0 0
  %892 = vmatpush1.bf16.msra.mxu0 %v732
  %893 = vmatprep.subr.bf16.mxu0 0
  %894 = vmatpush1.bf16.msra.mxu0 %v733
  %895 = vmatprep.subr.bf16.mxu0 0
  %896 = vmatpush1.bf16.msra.mxu0 %v734
  %897 = vmatprep.subr.bf16.mxu0 0
  %898 = vmatpush1.bf16.msra.mxu0 %v735
  %899 = vmatprep.subr.bf16.mxu0 0
  %900 = vmatpush1.bf16.msra.mxu0 %v736
  %901 = vmatprep.subr.bf16.mxu0 0
  %902 = vmatpush1.bf16.msra.mxu0 %v737
  %903 = vmatprep.subr.bf16.mxu0 0
  %904 = vmatpush1.bf16.msra.mxu0 %v738
  %905 = vmatprep.subr.bf16.mxu0 0
  %906 = vmatpush1.bf16.msra.mxu0 %v739
  %907 = vmatprep.subr.bf16.mxu0 0
  %908 = vmatpush1.bf16.msra.mxu0 %v740
  %909 = vmatprep.mubr.bf16.mxu0 %v320
  %910 = vmatmul.mubr.bf16.gmra.mrb[0].mxu0 %v319
  %v911 = vpop.f32.mrb[0].mxu0
  %v912 = vadd.f32 %v872, %v911
  %v913 = vpop.f32.mrb[0].mxu0
  %v914 = vpop.f32.mrb[0].mxu0
  %v915 = vpop.f32.mrb[0].mxu0
  %916 = vdwg.mxu0
  %917 = vmatprep.subr.bf16.mxu0 0
  %918 = vmatpush1.bf16.msra.mxu0 %v741
  %919 = vmatprep.subr.bf16.mxu0 0
  %920 = vmatpush1.bf16.msra.mxu0 %v742
  %921 = vmatprep.subr.bf16.mxu0 0
  %922 = vmatpush1.bf16.msra.mxu0 %v743
  %923 = vmatprep.subr.bf16.mxu0 0
  %924 = vmatpush1.bf16.msra.mxu0 %v744
  %925 = vmatprep.subr.bf16.mxu0 0
  %926 = vmatpush1.bf16.msra.mxu0 %v745
  %927 = vmatprep.subr.bf16.mxu0 0
  %928 = vmatpush1.bf16.msra.mxu0 %v746
  %929 = vmatprep.subr.bf16.mxu0 0
  %930 = vmatpush1.bf16.msra.mxu0 %v747
  %931 = vmatprep.subr.bf16.mxu0 0
  %932 = vmatpush1.bf16.msra.mxu0 %v748
  %933 = vmatprep.subr.bf16.mxu0 0
  %934 = vmatpush1.bf16.msra.mxu0 %v749
  %935 = vmatprep.subr.bf16.mxu0 0
  %936 = vmatpush1.bf16.msra.mxu0 %v750
  %937 = vmatprep.subr.bf16.mxu0 0
  %938 = vmatpush1.bf16.msra.mxu0 %v751
  %939 = vmatprep.subr.bf16.mxu0 0
  %940 = vmatpush1.bf16.msra.mxu0 %v752
  %941 = vmatprep.subr.bf16.mxu0 0
  %942 = vmatpush1.bf16.msra.mxu0 %v753
  %943 = vmatprep.subr.bf16.mxu0 0
  %944 = vmatpush1.bf16.msra.mxu0 %v754
  %945 = vmatprep.subr.bf16.mxu0 0
  %946 = vmatpush1.bf16.msra.mxu0 %v755
  %947 = vmatprep.subr.bf16.mxu0 0
  %948 = vmatpush1.bf16.msra.mxu0 %v756
  %949 = vmatprep.mubr.bf16.mxu0 %v322
  %950 = vmatmul.mubr.bf16.gmra.mrb[0].mxu0 %v321
  %v951 = vpop.f32.mrb[0].mxu0
  %v952 = vadd.f32 %v912, %v951
  %v953 = vpop.f32.mrb[0].mxu0
  %v954 = vpop.f32.mrb[0].mxu0
  %v955 = vpop.f32.mrb[0].mxu0
  %956 = vdwg.mxu0
  %957 = vmatprep.subr.bf16.mxu0 0
  %958 = vmatpush1.bf16.msra.mxu0 %v757
  %959 = vmatprep.subr.bf16.mxu0 0
  %960 = vmatpush1.bf16.msra.mxu0 %v758
  %961 = vmatprep.subr.bf16.mxu0 0
  %962 = vmatpush1.bf16.msra.mxu0 %v759
  %963 = vmatprep.subr.bf16.mxu0 0
  %964 = vmatpush1.bf16.msra.mxu0 %v760
  %965 = vmatprep.subr.bf16.mxu0 0
  %966 = vmatpush1.bf16.msra.mxu0 %v761
  %967 = vmatprep.subr.bf16.mxu0 0
  %968 = vmatpush1.bf16.msra.mxu0 %v762
  %969 = vmatprep.subr.bf16.mxu0 0
  %970 = vmatpush1.bf16.msra.mxu0 %v763
  %971 = vmatprep.subr.bf16.mxu0 0
  %972 = vmatpush1.bf16.msra.mxu0 %v764
  %973 = vmatprep.subr.bf16.mxu0 0
  %974 = vmatpush1.bf16.msra.mxu0 %v765
  %975 = vmatprep.subr.bf16.mxu0 0
  %976 = vmatpush1.bf16.msra.mxu0 %v766
  %977 = vmatprep.subr.bf16.mxu0 0
  %978 = vmatpush1.bf16.msra.mxu0 %v767
  %979 = vmatprep.subr.bf16.mxu0 0
  %980 = vmatpush1.bf16.msra.mxu0 %v768
  %981 = vmatprep.subr.bf16.mxu0 0
  %982 = vmatpush1.bf16.msra.mxu0 %v769
  %983 = vmatprep.subr.bf16.mxu0 0
  %984 = vmatpush1.bf16.msra.mxu0 %v770
  %985 = vmatprep.subr.bf16.mxu0 0
  %986 = vmatpush1.bf16.msra.mxu0 %v771
  %987 = vmatprep.subr.bf16.mxu0 0
  %988 = vmatpush1.bf16.msra.mxu0 %v772
  %989 = vmatprep.mubr.bf16.mxu0 %v324
  %990 = vmatmul.mubr.bf16.gmra.mrb[0].mxu0 %v323
  %v991 = vpop.f32.mrb[0].mxu0
  %v992 = vadd.f32 %v952, %v991
  %v993 = vpop.f32.mrb[0].mxu0
  %v994 = vpop.f32.mrb[0].mxu0
  %v995 = vpop.f32.mrb[0].mxu0
  %996 = vdwg.mxu0
  %v1253 = vunpack.c.l.b16 %v53
  %v1254 = vunpack.c.l.b16 %v54
  %v1255 = vunpack.c.l.b16 %v55
  %v1256 = vunpack.c.l.b16 %v56
  %v1257 = vunpack.c.l.b16 %v57
  %v1258 = vunpack.c.l.b16 %v58
  %v1259 = vunpack.c.l.b16 %v59
  %v1260 = vunpack.c.l.b16 %v60
  %v1261 = vunpack.c.l.b16 %v61
  %v1262 = vunpack.c.l.b16 %v62
  %v1263 = vunpack.c.l.b16 %v63
  %v1264 = vunpack.c.l.b16 %v64
  %v1265 = vunpack.c.l.b16 %v65
  %v1266 = vunpack.c.l.b16 %v66
  %v1267 = vunpack.c.l.b16 %v67
  %v1268 = vunpack.c.l.b16 %v68
  %v1269 = vunpack.c.l.b16 %v69
  %v1270 = vunpack.c.l.b16 %v70
  %v1271 = vunpack.c.l.b16 %v71
  %v1272 = vunpack.c.l.b16 %v72
  %v1273 = vunpack.c.l.b16 %v73
  %v1274 = vunpack.c.l.b16 %v74
  %v1275 = vunpack.c.l.b16 %v75
  %v1276 = vunpack.c.l.b16 %v76
  %v1277 = vunpack.c.l.b16 %v77
  %v1278 = vunpack.c.l.b16 %v78
  %v1279 = vunpack.c.l.b16 %v79
  %v1280 = vunpack.c.l.b16 %v80
  %v1281 = vunpack.c.l.b16 %v81
  %v1282 = vunpack.c.l.b16 %v82
  %v1283 = vunpack.c.l.b16 %v83
  %v1284 = vunpack.c.l.b16 %v84
  %v1285 = vunpack.c.l.b16 %v85
  %v1286 = vunpack.c.l.b16 %v86
  %v1287 = vunpack.c.l.b16 %v87
  %v1288 = vunpack.c.l.b16 %v88
  %v1289 = vunpack.c.l.b16 %v89
  %v1290 = vunpack.c.l.b16 %v90
  %v1291 = vunpack.c.l.b16 %v91
  %v1292 = vunpack.c.l.b16 %v92
  %v1293 = vunpack.c.l.b16 %v93
  %v1294 = vunpack.c.l.b16 %v94
  %v1295 = vunpack.c.l.b16 %v95
  %v1296 = vunpack.c.l.b16 %v96
  %v1297 = vunpack.c.l.b16 %v97
  %v1298 = vunpack.c.l.b16 %v98
  %v1299 = vunpack.c.l.b16 %v99
  %v1300 = vunpack.c.l.b16 %v100
  %v1301 = vunpack.c.l.b16 %v101
  %v1302 = vunpack.c.l.b16 %v102
  %v1303 = vunpack.c.l.b16 %v103
  %v1304 = vunpack.c.l.b16 %v104
  %v1305 = vunpack.c.l.b16 %v105
  %v1306 = vunpack.c.l.b16 %v106
  %v1307 = vunpack.c.l.b16 %v107
  %v1308 = vunpack.c.l.b16 %v108
  %v1309 = vunpack.c.l.b16 %v109
  %v1310 = vunpack.c.l.b16 %v110
  %v1311 = vunpack.c.l.b16 %v111
  %v1312 = vunpack.c.l.b16 %v112
  %v1313 = vunpack.c.l.b16 %v113
  %v1314 = vunpack.c.l.b16 %v114
  %v1315 = vunpack.c.l.b16 %v115
  %v1316 = vunpack.c.l.b16 %v116
  %v1317 = vunpack.c.l.b16 %v117
  %v1318 = vunpack.c.l.b16 %v118
  %v1319 = vunpack.c.l.b16 %v119
  %v1320 = vunpack.c.l.b16 %v120
  %v1321 = vunpack.c.l.b16 %v121
  %v1322 = vunpack.c.l.b16 %v122
  %v1323 = vunpack.c.l.b16 %v123
  %v1324 = vunpack.c.l.b16 %v124
  %v1325 = vunpack.c.l.b16 %v125
  %v1326 = vunpack.c.l.b16 %v126
  %v1327 = vunpack.c.l.b16 %v127
  %v1328 = vunpack.c.l.b16 %v128
  %v1329 = vunpack.c.l.b16 %v129
  %v1330 = vunpack.c.l.b16 %v130
  %v1331 = vunpack.c.l.b16 %v131
  %v1332 = vunpack.c.l.b16 %v132
  %v1333 = vunpack.c.l.b16 %v133
  %v1334 = vunpack.c.l.b16 %v134
  %v1335 = vunpack.c.l.b16 %v135
  %v1336 = vunpack.c.l.b16 %v136
  %v1337 = vunpack.c.l.b16 %v137
  %v1338 = vunpack.c.l.b16 %v138
  %v1339 = vunpack.c.l.b16 %v139
  %v1340 = vunpack.c.l.b16 %v140
  %v1341 = vunpack.c.l.b16 %v141
  %v1342 = vunpack.c.l.b16 %v142
  %v1343 = vunpack.c.l.b16 %v143
  %v1344 = vunpack.c.l.b16 %v144
  %v1345 = vunpack.c.l.b16 %v145
  %v1346 = vunpack.c.l.b16 %v146
  %v1347 = vunpack.c.l.b16 %v147
  %v1348 = vunpack.c.l.b16 %v148
  %v1349 = vunpack.c.l.b16 %v149
  %v1350 = vunpack.c.l.b16 %v150
  %v1351 = vunpack.c.l.b16 %v151
  %v1352 = vunpack.c.l.b16 %v152
  %v1353 = vunpack.c.l.b16 %v153
  %v1354 = vunpack.c.l.b16 %v154
  %v1355 = vunpack.c.l.b16 %v155
  %v1356 = vunpack.c.l.b16 %v156
  %v1357 = vunpack.c.l.b16 %v157
  %v1358 = vunpack.c.l.b16 %v158
  %v1359 = vunpack.c.l.b16 %v159
  %v1360 = vunpack.c.l.b16 %v160
  %v1361 = vunpack.c.l.b16 %v161
  %v1362 = vunpack.c.l.b16 %v162
  %v1363 = vunpack.c.l.b16 %v163
  %v1364 = vunpack.c.l.b16 %v164
  %v1365 = vunpack.c.l.b16 %v165
  %v1366 = vunpack.c.l.b16 %v166
  %v1367 = vunpack.c.l.b16 %v167
  %v1368 = vunpack.c.l.b16 %v168
  %v1369 = vunpack.c.l.b16 %v169
  %v1370 = vunpack.c.l.b16 %v170
  %v1371 = vunpack.c.l.b16 %v171
  %v1372 = vunpack.c.l.b16 %v172
  %v1373 = vunpack.c.l.b16 %v173
  %v1374 = vunpack.c.l.b16 %v174
  %v1375 = vunpack.c.l.b16 %v175
  %v1376 = vunpack.c.l.b16 %v176
  %v1377 = vunpack.c.l.b16 %v177
  %v1378 = vunpack.c.l.b16 %v178
  %v1379 = vunpack.c.l.b16 %v179
  %v1380 = vunpack.c.l.b16 %v180
  %v1381 = vunpack.c.l.b16 %v181
  %v1382 = vunpack.c.l.b16 %v182
  %v1383 = vunpack.c.l.b16 %v183
  %v1384 = vunpack.c.l.b16 %v184
  %v1385 = vunpack.c.l.b16 %v185
  %v1386 = vunpack.c.l.b16 %v186
  %v1387 = vunpack.c.l.b16 %v187
  %v1388 = vunpack.c.l.b16 %v188
  %v1389 = vunpack.c.l.b16 %v189
  %v1390 = vunpack.c.l.b16 %v190
  %v1391 = vunpack.c.l.b16 %v191
  %v1392 = vunpack.c.l.b16 %v192
  %v1393 = vunpack.c.l.b16 %v193
  %v1394 = vunpack.c.l.b16 %v194
  %v1395 = vunpack.c.l.b16 %v195
  %v1396 = vunpack.c.l.b16 %v196
  %v1397 = vunpack.c.l.b16 %v197
  %v1398 = vunpack.c.l.b16 %v198
  %v1399 = vunpack.c.l.b16 %v199
  %v1400 = vunpack.c.l.b16 %v200
  %v1401 = vunpack.c.l.b16 %v201
  %v1402 = vunpack.c.l.b16 %v202
  %v1403 = vunpack.c.l.b16 %v203
  %v1404 = vunpack.c.l.b16 %v204
  %v1405 = vunpack.c.l.b16 %v205
  %v1406 = vunpack.c.l.b16 %v206
  %v1407 = vunpack.c.l.b16 %v207
  %v1408 = vunpack.c.l.b16 %v208
  %v1409 = vunpack.c.l.b16 %v209
  %v1410 = vunpack.c.l.b16 %v210
  %v1411 = vunpack.c.l.b16 %v211
  %v1412 = vunpack.c.l.b16 %v212
  %v1413 = vunpack.c.l.b16 %v213
  %v1414 = vunpack.c.l.b16 %v214
  %v1415 = vunpack.c.l.b16 %v215
  %v1416 = vunpack.c.l.b16 %v216
  %v1417 = vunpack.c.l.b16 %v217
  %v1418 = vunpack.c.l.b16 %v218
  %v1419 = vunpack.c.l.b16 %v219
  %v1420 = vunpack.c.l.b16 %v220
  %v1421 = vunpack.c.l.b16 %v221
  %v1422 = vunpack.c.l.b16 %v222
  %v1423 = vunpack.c.l.b16 %v223
  %v1424 = vunpack.c.l.b16 %v224
  %v1425 = vunpack.c.l.b16 %v225
  %v1426 = vunpack.c.l.b16 %v226
  %v1427 = vunpack.c.l.b16 %v227
  %v1428 = vunpack.c.l.b16 %v228
  %v1429 = vunpack.c.l.b16 %v229
  %v1430 = vunpack.c.l.b16 %v230
  %v1431 = vunpack.c.l.b16 %v231
  %v1432 = vunpack.c.l.b16 %v232
  %v1433 = vunpack.c.l.b16 %v233
  %v1434 = vunpack.c.l.b16 %v234
  %v1435 = vunpack.c.l.b16 %v235
  %v1436 = vunpack.c.l.b16 %v236
  %v1437 = vunpack.c.l.b16 %v237
  %v1438 = vunpack.c.l.b16 %v238
  %v1439 = vunpack.c.l.b16 %v239
  %v1440 = vunpack.c.l.b16 %v240
  %v1441 = vunpack.c.l.b16 %v241
  %v1442 = vunpack.c.l.b16 %v242
  %v1443 = vunpack.c.l.b16 %v243
  %v1444 = vunpack.c.l.b16 %v244
  %v1445 = vunpack.c.l.b16 %v245
  %v1446 = vunpack.c.l.b16 %v246
  %v1447 = vunpack.c.l.b16 %v247
  %v1448 = vunpack.c.l.b16 %v248
  %v1449 = vunpack.c.l.b16 %v249
  %v1450 = vunpack.c.l.b16 %v250
  %v1451 = vunpack.c.l.b16 %v251
  %v1452 = vunpack.c.l.b16 %v252
  %v1453 = vunpack.c.l.b16 %v253
  %v1454 = vunpack.c.l.b16 %v254
  %v1455 = vunpack.c.l.b16 %v255
  %v1456 = vunpack.c.l.b16 %v256
  %v1457 = vunpack.c.l.b16 %v257
  %v1458 = vunpack.c.l.b16 %v258
  %v1459 = vunpack.c.l.b16 %v259
  %v1460 = vunpack.c.l.b16 %v260
  %v1461 = vunpack.c.l.b16 %v261
  %v1462 = vunpack.c.l.b16 %v262
  %v1463 = vunpack.c.l.b16 %v263
  %v1464 = vunpack.c.l.b16 %v264
  %v1465 = vunpack.c.l.b16 %v265
  %v1466 = vunpack.c.l.b16 %v266
  %v1467 = vunpack.c.l.b16 %v267
  %v1468 = vunpack.c.l.b16 %v268
  %v1469 = vunpack.c.l.b16 %v269
  %v1470 = vunpack.c.l.b16 %v270
  %v1471 = vunpack.c.l.b16 %v271
  %v1472 = vunpack.c.l.b16 %v272
  %v1473 = vunpack.c.l.b16 %v273
  %v1474 = vunpack.c.l.b16 %v274
  %v1475 = vunpack.c.l.b16 %v275
  %v1476 = vunpack.c.l.b16 %v276
  %v1477 = vunpack.c.l.b16 %v277
  %v1478 = vunpack.c.l.b16 %v278
  %v1479 = vunpack.c.l.b16 %v279
  %v1480 = vunpack.c.l.b16 %v280
  %v1481 = vunpack.c.l.b16 %v281
  %v1482 = vunpack.c.l.b16 %v282
  %v1483 = vunpack.c.l.b16 %v283
  %v1484 = vunpack.c.l.b16 %v284
  %v1485 = vunpack.c.l.b16 %v285
  %v1486 = vunpack.c.l.b16 %v286
  %v1487 = vunpack.c.l.b16 %v287
  %v1488 = vunpack.c.l.b16 %v288
  %v1489 = vunpack.c.l.b16 %v289
  %v1490 = vunpack.c.l.b16 %v290
  %v1491 = vunpack.c.l.b16 %v291
  %v1492 = vunpack.c.l.b16 %v292
  %v1493 = vunpack.c.l.b16 %v293
  %v1494 = vunpack.c.l.b16 %v294
  %v1495 = vunpack.c.l.b16 %v295
  %v1496 = vunpack.c.l.b16 %v296
  %v1497 = vunpack.c.l.b16 %v297
  %v1498 = vunpack.c.l.b16 %v298
  %v1499 = vunpack.c.l.b16 %v299
  %v1500 = vunpack.c.l.b16 %v300
  %v1501 = vunpack.c.l.b16 %v301
  %v1502 = vunpack.c.l.b16 %v302
  %v1503 = vunpack.c.l.b16 %v303
  %v1504 = vunpack.c.l.b16 %v304
  %v1505 = vunpack.c.l.b16 %v305
  %v1506 = vunpack.c.l.b16 %v306
  %v1507 = vunpack.c.l.b16 %v307
  %v1508 = vunpack.c.l.b16 %v308
  %v1509 = vpack.c.b16 %v1254, %v1253
  %v1510 = vpack.c.b16 %v1256, %v1255
  %v1511 = vpack.c.b16 %v1258, %v1257
  %v1512 = vpack.c.b16 %v1260, %v1259
  %v1513 = vpack.c.b16 %v1262, %v1261
  %v1514 = vpack.c.b16 %v1264, %v1263
  %v1515 = vpack.c.b16 %v1266, %v1265
  %v1516 = vpack.c.b16 %v1268, %v1267
  %v1517 = vpack.c.b16 %v1270, %v1269
  %v1518 = vpack.c.b16 %v1272, %v1271
  %v1519 = vpack.c.b16 %v1274, %v1273
  %v1520 = vpack.c.b16 %v1276, %v1275
  %v1521 = vpack.c.b16 %v1278, %v1277
  %v1522 = vpack.c.b16 %v1280, %v1279
  %v1523 = vpack.c.b16 %v1282, %v1281
  %v1524 = vpack.c.b16 %v1284, %v1283
  %v1525 = vpack.c.b16 %v1286, %v1285
  %v1526 = vpack.c.b16 %v1288, %v1287
  %v1527 = vpack.c.b16 %v1290, %v1289
  %v1528 = vpack.c.b16 %v1292, %v1291
  %v1529 = vpack.c.b16 %v1294, %v1293
  %v1530 = vpack.c.b16 %v1296, %v1295
  %v1531 = vpack.c.b16 %v1298, %v1297
  %v1532 = vpack.c.b16 %v1300, %v1299
  %v1533 = vpack.c.b16 %v1302, %v1301
  %v1534 = vpack.c.b16 %v1304, %v1303
  %v1535 = vpack.c.b16 %v1306, %v1305
  %v1536 = vpack.c.b16 %v1308, %v1307
  %v1537 = vpack.c.b16 %v1310, %v1309
  %v1538 = vpack.c.b16 %v1312, %v1311
  %v1539 = vpack.c.b16 %v1314, %v1313
  %v1540 = vpack.c.b16 %v1316, %v1315
  %v1541 = vpack.c.b16 %v1318, %v1317
  %v1542 = vpack.c.b16 %v1320, %v1319
  %v1543 = vpack.c.b16 %v1322, %v1321
  %v1544 = vpack.c.b16 %v1324, %v1323
  %v1545 = vpack.c.b16 %v1326, %v1325
  %v1546 = vpack.c.b16 %v1328, %v1327
  %v1547 = vpack.c.b16 %v1330, %v1329
  %v1548 = vpack.c.b16 %v1332, %v1331
  %v1549 = vpack.c.b16 %v1334, %v1333
  %v1550 = vpack.c.b16 %v1336, %v1335
  %v1551 = vpack.c.b16 %v1338, %v1337
  %v1552 = vpack.c.b16 %v1340, %v1339
  %v1553 = vpack.c.b16 %v1342, %v1341
  %v1554 = vpack.c.b16 %v1344, %v1343
  %v1555 = vpack.c.b16 %v1346, %v1345
  %v1556 = vpack.c.b16 %v1348, %v1347
  %v1557 = vpack.c.b16 %v1350, %v1349
  %v1558 = vpack.c.b16 %v1352, %v1351
  %v1559 = vpack.c.b16 %v1354, %v1353
  %v1560 = vpack.c.b16 %v1356, %v1355
  %v1561 = vpack.c.b16 %v1358, %v1357
  %v1562 = vpack.c.b16 %v1360, %v1359
  %v1563 = vpack.c.b16 %v1362, %v1361
  %v1564 = vpack.c.b16 %v1364, %v1363
  %v1565 = vpack.c.b16 %v1366, %v1365
  %v1566 = vpack.c.b16 %v1368, %v1367
  %v1567 = vpack.c.b16 %v1370, %v1369
  %v1568 = vpack.c.b16 %v1372, %v1371
  %v1569 = vpack.c.b16 %v1374, %v1373
  %v1570 = vpack.c.b16 %v1376, %v1375
  %v1571 = vpack.c.b16 %v1378, %v1377
  %v1572 = vpack.c.b16 %v1380, %v1379
  %v1573 = vpack.c.b16 %v1382, %v1381
  %v1574 = vpack.c.b16 %v1384, %v1383
  %v1575 = vpack.c.b16 %v1386, %v1385
  %v1576 = vpack.c.b16 %v1388, %v1387
  %v1577 = vpack.c.b16 %v1390, %v1389
  %v1578 = vpack.c.b16 %v1392, %v1391
  %v1579 = vpack.c.b16 %v1394, %v1393
  %v1580 = vpack.c.b16 %v1396, %v1395
  %v1581 = vpack.c.b16 %v1398, %v1397
  %v1582 = vpack.c.b16 %v1400, %v1399
  %v1583 = vpack.c.b16 %v1402, %v1401
  %v1584 = vpack.c.b16 %v1404, %v1403
  %v1585 = vpack.c.b16 %v1406, %v1405
  %v1586 = vpack.c.b16 %v1408, %v1407
  %v1587 = vpack.c.b16 %v1410, %v1409
  %v1588 = vpack.c.b16 %v1412, %v1411
  %v1589 = vpack.c.b16 %v1414, %v1413
  %v1590 = vpack.c.b16 %v1416, %v1415
  %v1591 = vpack.c.b16 %v1418, %v1417
  %v1592 = vpack.c.b16 %v1420, %v1419
  %v1593 = vpack.c.b16 %v1422, %v1421
  %v1594 = vpack.c.b16 %v1424, %v1423
  %v1595 = vpack.c.b16 %v1426, %v1425
  %v1596 = vpack.c.b16 %v1428, %v1427
  %v1597 = vpack.c.b16 %v1430, %v1429
  %v1598 = vpack.c.b16 %v1432, %v1431
  %v1599 = vpack.c.b16 %v1434, %v1433
  %v1600 = vpack.c.b16 %v1436, %v1435
  %v1601 = vpack.c.b16 %v1438, %v1437
  %v1602 = vpack.c.b16 %v1440, %v1439
  %v1603 = vpack.c.b16 %v1442, %v1441
  %v1604 = vpack.c.b16 %v1444, %v1443
  %v1605 = vpack.c.b16 %v1446, %v1445
  %v1606 = vpack.c.b16 %v1448, %v1447
  %v1607 = vpack.c.b16 %v1450, %v1449
  %v1608 = vpack.c.b16 %v1452, %v1451
  %v1609 = vpack.c.b16 %v1454, %v1453
  %v1610 = vpack.c.b16 %v1456, %v1455
  %v1611 = vpack.c.b16 %v1458, %v1457
  %v1612 = vpack.c.b16 %v1460, %v1459
  %v1613 = vpack.c.b16 %v1462, %v1461
  %v1614 = vpack.c.b16 %v1464, %v1463
  %v1615 = vpack.c.b16 %v1466, %v1465
  %v1616 = vpack.c.b16 %v1468, %v1467
  %v1617 = vpack.c.b16 %v1470, %v1469
  %v1618 = vpack.c.b16 %v1472, %v1471
  %v1619 = vpack.c.b16 %v1474, %v1473
  %v1620 = vpack.c.b16 %v1476, %v1475
  %v1621 = vpack.c.b16 %v1478, %v1477
  %v1622 = vpack.c.b16 %v1480, %v1479
  %v1623 = vpack.c.b16 %v1482, %v1481
  %v1624 = vpack.c.b16 %v1484, %v1483
  %v1625 = vpack.c.b16 %v1486, %v1485
  %v1626 = vpack.c.b16 %v1488, %v1487
  %v1627 = vpack.c.b16 %v1490, %v1489
  %v1628 = vpack.c.b16 %v1492, %v1491
  %v1629 = vpack.c.b16 %v1494, %v1493
  %v1630 = vpack.c.b16 %v1496, %v1495
  %v1631 = vpack.c.b16 %v1498, %v1497
  %v1632 = vpack.c.b16 %v1500, %v1499
  %v1633 = vpack.c.b16 %v1502, %v1501
  %v1634 = vpack.c.b16 %v1504, %v1503
  %v1635 = vpack.c.b16 %v1506, %v1505
  %v1636 = vpack.c.b16 %v1508, %v1507
  %1765 = vmatprep.subr.bf16.mxu0 0
  %1766 = vmatpush1.bf16.msra.mxu0 %v1509
  %1767 = vmatprep.subr.bf16.mxu0 0
  %1768 = vmatpush1.bf16.msra.mxu0 %v1510
  %1769 = vmatprep.subr.bf16.mxu0 0
  %1770 = vmatpush1.bf16.msra.mxu0 %v1511
  %1771 = vmatprep.subr.bf16.mxu0 0
  %1772 = vmatpush1.bf16.msra.mxu0 %v1512
  %1773 = vmatprep.subr.bf16.mxu0 0
  %1774 = vmatpush1.bf16.msra.mxu0 %v1513
  %1775 = vmatprep.subr.bf16.mxu0 0
  %1776 = vmatpush1.bf16.msra.mxu0 %v1514
  %1777 = vmatprep.subr.bf16.mxu0 0
  %1778 = vmatpush1.bf16.msra.mxu0 %v1515
  %1779 = vmatprep.subr.bf16.mxu0 0
  %1780 = vmatpush1.bf16.msra.mxu0 %v1516
  %1781 = vmatprep.subr.bf16.mxu0 0
  %1782 = vmatpush1.bf16.msra.mxu0 %v1517
  %1783 = vmatprep.subr.bf16.mxu0 0
  %1784 = vmatpush1.bf16.msra.mxu0 %v1518
  %1785 = vmatprep.subr.bf16.mxu0 0
  %1786 = vmatpush1.bf16.msra.mxu0 %v1519
  %1787 = vmatprep.subr.bf16.mxu0 0
  %1788 = vmatpush1.bf16.msra.mxu0 %v1520
  %1789 = vmatprep.subr.bf16.mxu0 0
  %1790 = vmatpush1.bf16.msra.mxu0 %v1521
  %1791 = vmatprep.subr.bf16.mxu0 0
  %1792 = vmatpush1.bf16.msra.mxu0 %v1522
  %1793 = vmatprep.subr.bf16.mxu0 0
  %1794 = vmatpush1.bf16.msra.mxu0 %v1523
  %1795 = vmatprep.subr.bf16.mxu0 0
  %1796 = vmatpush1.bf16.msra.mxu0 %v1524
  %1797 = vmatprep.mubr.bf16.mxu0 %v38
  %1798 = vmatmul.mubr.bf16.gmra.mrb[0].mxu0 %v37
  %v1799 = vpop.f32.mrb[0].mxu0
  %v1800 = vadd.f32 %v992, %v1799
  %v1801 = vpop.f32.mrb[0].mxu0
  %v1802 = vpop.f32.mrb[0].mxu0
  %v1803 = vpop.f32.mrb[0].mxu0
  %1804 = vdwg.mxu0
  %1805 = vmatprep.subr.bf16.mxu0 0
  %1806 = vmatpush1.bf16.msra.mxu0 %v1525
  %1807 = vmatprep.subr.bf16.mxu0 0
  %1808 = vmatpush1.bf16.msra.mxu0 %v1526
  %1809 = vmatprep.subr.bf16.mxu0 0
  %1810 = vmatpush1.bf16.msra.mxu0 %v1527
  %1811 = vmatprep.subr.bf16.mxu0 0
  %1812 = vmatpush1.bf16.msra.mxu0 %v1528
  %1813 = vmatprep.subr.bf16.mxu0 0
  %1814 = vmatpush1.bf16.msra.mxu0 %v1529
  %1815 = vmatprep.subr.bf16.mxu0 0
  %1816 = vmatpush1.bf16.msra.mxu0 %v1530
  %1817 = vmatprep.subr.bf16.mxu0 0
  %1818 = vmatpush1.bf16.msra.mxu0 %v1531
  %1819 = vmatprep.subr.bf16.mxu0 0
  %1820 = vmatpush1.bf16.msra.mxu0 %v1532
  %1821 = vmatprep.subr.bf16.mxu0 0
  %1822 = vmatpush1.bf16.msra.mxu0 %v1533
  %1823 = vmatprep.subr.bf16.mxu0 0
  %1824 = vmatpush1.bf16.msra.mxu0 %v1534
  %1825 = vmatprep.subr.bf16.mxu0 0
  %1826 = vmatpush1.bf16.msra.mxu0 %v1535
  %1827 = vmatprep.subr.bf16.mxu0 0
  %1828 = vmatpush1.bf16.msra.mxu0 %v1536
  %1829 = vmatprep.subr.bf16.mxu0 0
  %1830 = vmatpush1.bf16.msra.mxu0 %v1537
  %1831 = vmatprep.subr.bf16.mxu0 0
  %1832 = vmatpush1.bf16.msra.mxu0 %v1538
  %1833 = vmatprep.subr.bf16.mxu0 0
  %1834 = vmatpush1.bf16.msra.mxu0 %v1539
  %1835 = vmatprep.subr.bf16.mxu0 0
  %1836 = vmatpush1.bf16.msra.mxu0 %v1540
  %1837 = vmatprep.mubr.bf16.mxu0 %v40
  %1838 = vmatmul.mubr.bf16.gmra.mrb[0].mxu0 %v39
  %v1839 = vpop.f32.mrb[0].mxu0
  %v1840 = vadd.f32 %v1800, %v1839
  %v1841 = vpop.f32.mrb[0].mxu0
  %v1842 = vpop.f32.mrb[0].mxu0
  %v1843 = vpop.f32.mrb[0].mxu0
  %1844 = vdwg.mxu0
  %1845 = vmatprep.subr.bf16.mxu0 0
  %1846 = vmatpush1.bf16.msra.mxu0 %v1541
  %1847 = vmatprep.subr.bf16.mxu0 0
  %1848 = vmatpush1.bf16.msra.mxu0 %v1542
  %1849 = vmatprep.subr.bf16.mxu0 0
  %1850 = vmatpush1.bf16.msra.mxu0 %v1543
  %1851 = vmatprep.subr.bf16.mxu0 0
  %1852 = vmatpush1.bf16.msra.mxu0 %v1544
  %1853 = vmatprep.subr.bf16.mxu0 0
  %1854 = vmatpush1.bf16.msra.mxu0 %v1545
  %1855 = vmatprep.subr.bf16.mxu0 0
  %1856 = vmatpush1.bf16.msra.mxu0 %v1546
  %1857 = vmatprep.subr.bf16.mxu0 0
  %1858 = vmatpush1.bf16.msra.mxu0 %v1547
  %1859 = vmatprep.subr.bf16.mxu0 0
  %1860 = vmatpush1.bf16.msra.mxu0 %v1548
  %1861 = vmatprep.subr.bf16.mxu0 0
  %1862 = vmatpush1.bf16.msra.mxu0 %v1549
  %1863 = vmatprep.subr.bf16.mxu0 0
  %1864 = vmatpush1.bf16.msra.mxu0 %v1550
  %1865 = vmatprep.subr.bf16.mxu0 0
  %1866 = vmatpush1.bf16.msra.mxu0 %v1551
  %1867 = vmatprep.subr.bf16.mxu0 0
  %1868 = vmatpush1.bf16.msra.mxu0 %v1552
  %1869 = vmatprep.subr.bf16.mxu0 0
  %1870 = vmatpush1.bf16.msra.mxu0 %v1553
  %1871 = vmatprep.subr.bf16.mxu0 0
  %1872 = vmatpush1.bf16.msra.mxu0 %v1554
  %1873 = vmatprep.subr.bf16.mxu0 0
  %1874 = vmatpush1.bf16.msra.mxu0 %v1555
  %1875 = vmatprep.subr.bf16.mxu0 0
  %1876 = vmatpush1.bf16.msra.mxu0 %v1556
  %1877 = vmatprep.mubr.bf16.mxu0 %v42
  %1878 = vmatmul.mubr.bf16.gmra.mrb[0].mxu0 %v41
  %v1879 = vpop.f32.mrb[0].mxu0
  %v1880 = vadd.f32 %v1840, %v1879
  %v1881 = vpop.f32.mrb[0].mxu0
  %v1882 = vpop.f32.mrb[0].mxu0
  %v1883 = vpop.f32.mrb[0].mxu0
  %1884 = vdwg.mxu0
  %1885 = vmatprep.subr.bf16.mxu0 0
  %1886 = vmatpush1.bf16.msra.mxu0 %v1557
  %1887 = vmatprep.subr.bf16.mxu0 0
  %1888 = vmatpush1.bf16.msra.mxu0 %v1558
  %1889 = vmatprep.subr.bf16.mxu0 0
  %1890 = vmatpush1.bf16.msra.mxu0 %v1559
  %1891 = vmatprep.subr.bf16.mxu0 0
  %1892 = vmatpush1.bf16.msra.mxu0 %v1560
  %1893 = vmatprep.subr.bf16.mxu0 0
  %1894 = vmatpush1.bf16.msra.mxu0 %v1561
  %1895 = vmatprep.subr.bf16.mxu0 0
  %1896 = vmatpush1.bf16.msra.mxu0 %v1562
  %1897 = vmatprep.subr.bf16.mxu0 0
  %1898 = vmatpush1.bf16.msra.mxu0 %v1563
  %1899 = vmatprep.subr.bf16.mxu0 0
  %1900 = vmatpush1.bf16.msra.mxu0 %v1564
  %1901 = vmatprep.subr.bf16.mxu0 0
  %1902 = vmatpush1.bf16.msra.mxu0 %v1565
  %1903 = vmatprep.subr.bf16.mxu0 0
  %1904 = vmatpush1.bf16.msra.mxu0 %v1566
  %1905 = vmatprep.subr.bf16.mxu0 0
  %1906 = vmatpush1.bf16.msra.mxu0 %v1567
  %1907 = vmatprep.subr.bf16.mxu0 0
  %1908 = vmatpush1.bf16.msra.mxu0 %v1568
  %1909 = vmatprep.subr.bf16.mxu0 0
  %1910 = vmatpush1.bf16.msra.mxu0 %v1569
  %1911 = vmatprep.subr.bf16.mxu0 0
  %1912 = vmatpush1.bf16.msra.mxu0 %v1570
  %1913 = vmatprep.subr.bf16.mxu0 0
  %1914 = vmatpush1.bf16.msra.mxu0 %v1571
  %1915 = vmatprep.subr.bf16.mxu0 0
  %1916 = vmatpush1.bf16.msra.mxu0 %v1572
  %1917 = vmatprep.mubr.bf16.mxu0 %v44
  %1918 = vmatmul.mubr.bf16.gmra.mrb[0].mxu0 %v43
  %v1919 = vpop.f32.mrb[0].mxu0
  %v1920 = vadd.f32 %v1880, %v1919
  %v1921 = vpop.f32.mrb[0].mxu0
  %v1922 = vpop.f32.mrb[0].mxu0
  %v1923 = vpop.f32.mrb[0].mxu0
  %1924 = vdwg.mxu0
  %1925 = vmatprep.subr.bf16.mxu0 0
  %1926 = vmatpush1.bf16.msra.mxu0 %v1573
  %1927 = vmatprep.subr.bf16.mxu0 0
  %1928 = vmatpush1.bf16.msra.mxu0 %v1574
  %1929 = vmatprep.subr.bf16.mxu0 0
  %1930 = vmatpush1.bf16.msra.mxu0 %v1575
  %1931 = vmatprep.subr.bf16.mxu0 0
  %1932 = vmatpush1.bf16.msra.mxu0 %v1576
  %1933 = vmatprep.subr.bf16.mxu0 0
  %1934 = vmatpush1.bf16.msra.mxu0 %v1577
  %1935 = vmatprep.subr.bf16.mxu0 0
  %1936 = vmatpush1.bf16.msra.mxu0 %v1578
  %1937 = vmatprep.subr.bf16.mxu0 0
  %1938 = vmatpush1.bf16.msra.mxu0 %v1579
  %1939 = vmatprep.subr.bf16.mxu0 0
  %1940 = vmatpush1.bf16.msra.mxu0 %v1580
  %1941 = vmatprep.subr.bf16.mxu0 0
  %1942 = vmatpush1.bf16.msra.mxu0 %v1581
  %1943 = vmatprep.subr.bf16.mxu0 0
  %1944 = vmatpush1.bf16.msra.mxu0 %v1582
  %1945 = vmatprep.subr.bf16.mxu0 0
  %1946 = vmatpush1.bf16.msra.mxu0 %v1583
  %1947 = vmatprep.subr.bf16.mxu0 0
  %1948 = vmatpush1.bf16.msra.mxu0 %v1584
  %1949 = vmatprep.subr.bf16.mxu0 0
  %1950 = vmatpush1.bf16.msra.mxu0 %v1585
  %1951 = vmatprep.subr.bf16.mxu0 0
  %1952 = vmatpush1.bf16.msra.mxu0 %v1586
  %1953 = vmatprep.subr.bf16.mxu0 0
  %1954 = vmatpush1.bf16.msra.mxu0 %v1587
  %1955 = vmatprep.subr.bf16.mxu0 0
  %1956 = vmatpush1.bf16.msra.mxu0 %v1588
  %1957 = vmatprep.mubr.bf16.mxu0 %v46
  %1958 = vmatmul.mubr.bf16.gmra.mrb[0].mxu0 %v45
  %v1959 = vpop.f32.mrb[0].mxu0
  %v1960 = vadd.f32 %v1920, %v1959
  %v1961 = vpop.f32.mrb[0].mxu0
  %v1962 = vpop.f32.mrb[0].mxu0
  %v1963 = vpop.f32.mrb[0].mxu0
  %1964 = vdwg.mxu0
  %1965 = vmatprep.subr.bf16.mxu0 0
  %1966 = vmatpush1.bf16.msra.mxu0 %v1589
  %1967 = vmatprep.subr.bf16.mxu0 0
  %1968 = vmatpush1.bf16.msra.mxu0 %v1590
  %1969 = vmatprep.subr.bf16.mxu0 0
  %1970 = vmatpush1.bf16.msra.mxu0 %v1591
  %1971 = vmatprep.subr.bf16.mxu0 0
  %1972 = vmatpush1.bf16.msra.mxu0 %v1592
  %1973 = vmatprep.subr.bf16.mxu0 0
  %1974 = vmatpush1.bf16.msra.mxu0 %v1593
  %1975 = vmatprep.subr.bf16.mxu0 0
  %1976 = vmatpush1.bf16.msra.mxu0 %v1594
  %1977 = vmatprep.subr.bf16.mxu0 0
  %1978 = vmatpush1.bf16.msra.mxu0 %v1595
  %1979 = vmatprep.subr.bf16.mxu0 0
  %1980 = vmatpush1.bf16.msra.mxu0 %v1596
  %1981 = vmatprep.subr.bf16.mxu0 0
  %1982 = vmatpush1.bf16.msra.mxu0 %v1597
  %1983 = vmatprep.subr.bf16.mxu0 0
  %1984 = vmatpush1.bf16.msra.mxu0 %v1598
  %1985 = vmatprep.subr.bf16.mxu0 0
  %1986 = vmatpush1.bf16.msra.mxu0 %v1599
  %1987 = vmatprep.subr.bf16.mxu0 0
  %1988 = vmatpush1.bf16.msra.mxu0 %v1600
  %1989 = vmatprep.subr.bf16.mxu0 0
  %1990 = vmatpush1.bf16.msra.mxu0 %v1601
  %1991 = vmatprep.subr.bf16.mxu0 0
  %1992 = vmatpush1.bf16.msra.mxu0 %v1602
  %1993 = vmatprep.subr.bf16.mxu0 0
  %1994 = vmatpush1.bf16.msra.mxu0 %v1603
  %1995 = vmatprep.subr.bf16.mxu0 0
  %1996 = vmatpush1.bf16.msra.mxu0 %v1604
  %1997 = vmatprep.mubr.bf16.mxu0 %v48
  %1998 = vmatmul.mubr.bf16.gmra.mrb[0].mxu0 %v47
  %v1999 = vpop.f32.mrb[0].mxu0
  %v2000 = vadd.f32 %v1960, %v1999
  %v2001 = vpop.f32.mrb[0].mxu0
  %v2002 = vpop.f32.mrb[0].mxu0
  %v2003 = vpop.f32.mrb[0].mxu0
  %2004 = vdwg.mxu0
  %2005 = vmatprep.subr.bf16.mxu0 0
  %2006 = vmatpush1.bf16.msra.mxu0 %v1605
  %2007 = vmatprep.subr.bf16.mxu0 0
  %2008 = vmatpush1.bf16.msra.mxu0 %v1606
  %2009 = vmatprep.subr.bf16.mxu0 0
  %2010 = vmatpush1.bf16.msra.mxu0 %v1607
  %2011 = vmatprep.subr.bf16.mxu0 0
  %2012 = vmatpush1.bf16.msra.mxu0 %v1608
  %2013 = vmatprep.subr.bf16.mxu0 0
  %2014 = vmatpush1.bf16.msra.mxu0 %v1609
  %2015 = vmatprep.subr.bf16.mxu0 0
  %2016 = vmatpush1.bf16.msra.mxu0 %v1610
  %2017 = vmatprep.subr.bf16.mxu0 0
  %2018 = vmatpush1.bf16.msra.mxu0 %v1611
  %2019 = vmatprep.subr.bf16.mxu0 0
  %2020 = vmatpush1.bf16.msra.mxu0 %v1612
  %2021 = vmatprep.subr.bf16.mxu0 0
  %2022 = vmatpush1.bf16.msra.mxu0 %v1613
  %2023 = vmatprep.subr.bf16.mxu0 0
  %2024 = vmatpush1.bf16.msra.mxu0 %v1614
  %2025 = vmatprep.subr.bf16.mxu0 0
  %2026 = vmatpush1.bf16.msra.mxu0 %v1615
  %2027 = vmatprep.subr.bf16.mxu0 0
  %2028 = vmatpush1.bf16.msra.mxu0 %v1616
  %2029 = vmatprep.subr.bf16.mxu0 0
  %2030 = vmatpush1.bf16.msra.mxu0 %v1617
  %2031 = vmatprep.subr.bf16.mxu0 0
  %2032 = vmatpush1.bf16.msra.mxu0 %v1618
  %2033 = vmatprep.subr.bf16.mxu0 0
  %2034 = vmatpush1.bf16.msra.mxu0 %v1619
  %2035 = vmatprep.subr.bf16.mxu0 0
  %2036 = vmatpush1.bf16.msra.mxu0 %v1620
  %2037 = vmatprep.mubr.bf16.mxu0 %v50
  %2038 = vmatmul.mubr.bf16.gmra.mrb[0].mxu0 %v49
  %v2039 = vpop.f32.mrb[0].mxu0
  %v2040 = vadd.f32 %v2000, %v2039
  %v2041 = vpop.f32.mrb[0].mxu0
  %v2042 = vpop.f32.mrb[0].mxu0
  %v2043 = vpop.f32.mrb[0].mxu0
  %2044 = vdwg.mxu0
  %2045 = vmatprep.subr.bf16.mxu0 0
  %2046 = vmatpush1.bf16.msra.mxu0 %v1621
  %2047 = vmatprep.subr.bf16.mxu0 0
  %2048 = vmatpush1.bf16.msra.mxu0 %v1622
  %2049 = vmatprep.subr.bf16.mxu0 0
  %2050 = vmatpush1.bf16.msra.mxu0 %v1623
  %2051 = vmatprep.subr.bf16.mxu0 0
  %2052 = vmatpush1.bf16.msra.mxu0 %v1624
  %2053 = vmatprep.subr.bf16.mxu0 0
  %2054 = vmatpush1.bf16.msra.mxu0 %v1625
  %2055 = vmatprep.subr.bf16.mxu0 0
  %2056 = vmatpush1.bf16.msra.mxu0 %v1626
  %2057 = vmatprep.subr.bf16.mxu0 0
  %2058 = vmatpush1.bf16.msra.mxu0 %v1627
  %2059 = vmatprep.subr.bf16.mxu0 0
  %2060 = vmatpush1.bf16.msra.mxu0 %v1628
  %2061 = vmatprep.subr.bf16.mxu0 0
  %2062 = vmatpush1.bf16.msra.mxu0 %v1629
  %2063 = vmatprep.subr.bf16.mxu0 0
  %2064 = vmatpush1.bf16.msra.mxu0 %v1630
  %2065 = vmatprep.subr.bf16.mxu0 0
  %2066 = vmatpush1.bf16.msra.mxu0 %v1631
  %2067 = vmatprep.subr.bf16.mxu0 0
  %2068 = vmatpush1.bf16.msra.mxu0 %v1632
  %2069 = vmatprep.subr.bf16.mxu0 0
  %2070 = vmatpush1.bf16.msra.mxu0 %v1633
  %2071 = vmatprep.subr.bf16.mxu0 0
  %2072 = vmatpush1.bf16.msra.mxu0 %v1634
  %2073 = vmatprep.subr.bf16.mxu0 0
  %2074 = vmatpush1.bf16.msra.mxu0 %v1635
  %2075 = vmatprep.subr.bf16.mxu0 0
  %2076 = vmatpush1.bf16.msra.mxu0 %v1636
  %2077 = vmatprep.mubr.bf16.mxu0 %v52
  %2078 = vmatmul.mubr.bf16.gmra.mrb[0].mxu0 %v51
  %v2079 = vpop.f32.mrb[0].mxu0
  %v2080 = vadd.f32 %v2040, %v2079
  %v2081 = vpop.f32.mrb[0].mxu0
  %v2082 = vpop.f32.mrb[0].mxu0
  %v2083 = vpop.f32.mrb[0].mxu0
  %2084 = vdwg.mxu0
  %v2085 = vld [vmem:[%s4] sm:$0x1]
  %v2087 = vlaneseq
  %v2088 = vshrl.u32 %v2087, 7
  %v2089 = vsub.s32 0, %v2088
  %v2090 = vrot.slane %v2085, %v2089
  %v2092 = vadd.f32 %v2080, %v2090
  %v2093 = vpack.c.bf16 %v2092, %v2092
  %2094 = vst [vmem:[%s5] sm:$0xf] %v2093
  // Predicated region
  $region22: #{modulated_multiview_cond.22} parent=0 // pred_check
    _
  $region23: #{modulated_multiview_cond.22} parent=0 // pred_check_branch
    %2096 = sbr.rel (0) target = $region25
  $region24: #{modulated_multiview_cond.22} parent=0 // pred_region
    _
  $region25: #{modulated_multiview_cond.22} parent=0 // pred_fallthru
    _
  // Predicated region
  $region26: #{modulated_multiview_cond.22} parent=0 // pred_check
    _
  $region27: #{modulated_multiview_cond.22} parent=0 // pred_check_branch
    %2098 = sbr.rel (0) target = $region29
  $region28: #{modulated_multiview_cond.22} parent=0 // pred_region
    _
  $region29: #{modulated_multiview_cond.22} parent=0 // pred_fallthru
    _

// kernel: modulated_multiview_cond.24
$region0: #{modulated_multiview_cond.24}
  #allocation0 [shape = 'u32[]', space=smem, size = 0x4, offset = 0x4, fixed_abs, tag = 'smem constant byte address 0x4 - core index']
  #allocation1 [shape = 'u32[144,128]{1,0:T(1,128)}', space=vmem, size = 0x12000, scoped, tag = 'internal scratch']
  %s0 = inlined_call_operand.vmem [shape: f32[128,64], index: 0, kind: input, shape index: {}]
  %s1 = inlined_call_operand.vmem [shape: bf16[64,256], index: 1, kind: input, shape index: {}]
  %s2 = inlined_call_operand.vmem [shape: f32[1,256], index: 2, kind: input, shape index: {}]
  %s3 = inlined_call_operand.vmem [shape: bf16[256,64], index: 3, kind: input, shape index: {}]
  %s4 = inlined_call_operand.vmem [shape: f32[1,64], index: 4, kind: input, shape index: {}]
  %s5 = inlined_call_operand.vmem [shape: f32[128,64], index: 5, kind: output, shape index: {}]
  %s6 = sld [smem:[#allocation0]]
  $region53: #{modulated_multiview_cond.24} parent=0
    _
  %s8 = ssub.s32 1, %s6
  %s9 = scalar_select 0, %s8, %s6
  loop: start=0, step=1, limit=4
  $region2: #{modulated_multiview_cond.24} parent=0 // loop_pre_header
    _
  $region3: #{modulated_multiview_cond.24} parent=0 // loop_header
    %s11 = sphi 0, %s15
    %p12 = scmp.ge.s32.totalorder %s11, 4
    %s21 = sphi 0, %s23
    %s24 = sphi 0, %s21
    %s25 = sphi 0, %s24
    %s41 = sphi 0, %s25
    %s45 = sphi 0, %s45
    %s47 = sphi 0, %s45
    %s48 = sphi 0, %s47
    %s62 = sphi 0, %s48
    %s66 = sphi 0, %s66
    %s68 = sphi 0, %s66
    %s69 = sphi 0, %s68
    %s83 = sphi 0, %s69
    %s87 = sphi 0, %s87
    %s89 = sphi 0, %s87
    %s90 = sphi 0, %s89
    %s104 = sphi 0, %s90
    %s108 = sphi 0, %s108
    %s110 = sphi 0, %s108
    %s111 = sphi 0, %s110
    %s125 = sphi 0, %s111
    %s131 = sphi 0, %s133
    %s134 = sphi 0, %s131
    %s135 = sphi 0, %s134
    %s151 = sphi 0, %s135
  $region4: #{modulated_multiview_cond.24} parent=0 // loop_header_branch
    %14 = sbr.rel (%p12) target = $region8
  $region5: #{modulated_multiview_cond.24} parent=0 // loop_body
    %s16 = ssub.s32 %s11, 1
    %s17 = ssub.s32 %s11, 2
    %s18 = sadd.s32 %s11, 1
    %s19 = ssub.s32 %s11, %s18
    %p20 = scmp.eq.s32.totalorder %s19, 0
    %s22 = sadd.s32 %s21, 1
    %s23 = scalar_select %p20, %s21, %s22
    %p26 = pneg %p20
    %p27 = scmp.eq.s32.totalorder %s11, 1
    %p28 = por %p26, %p27
    %p29 = scmp.ne.s32.totalorder %s21, %s24
    %p30 = scmp.eq.s32.totalorder %s11, 0
    %p31 = por %p29, %p30
    %p32 = scmp.ne.s32.totalorder %s21, %s24
    %p33 = scmp.eq.s32.totalorder %s16, 1
    %p34 = por %p32, %p33
    %p35 = scmp.ne.s32.totalorder %s24, %s25
    %p36 = scmp.eq.s32.totalorder %s16, 0
    %p37 = por %p35, %p36
    %p38 = scmp.ne.s32.totalorder %s24, %s25
    %p39 = scmp.eq.s32.totalorder %s17, 1
    %p40 = por %p38, %p39
    %p42 = scmp.ne.s32.totalorder %s25, %s41
    %p43 = scmp.eq.s32.totalorder %s17, 0
    %p44 = por %p42, %p43
    %s46 = sadd.s32 %s45, 1
    %p49 = scmp.eq.s32.totalorder %s11, 1
    %p50 = scmp.ne.s32.totalorder %s45, %s47
    %p51 = scmp.eq.s32.totalorder %s11, 0
    %p52 = por %p50, %p51
    %p53 = scmp.ne.s32.totalorder %s45, %s47
    %p54 = scmp.eq.s32.totalorder %s16, 1
    %p55 = por %p53, %p54
    %p56 = scmp.ne.s32.totalorder %s47, %s48
    %p57 = scmp.eq.s32.totalorder %s16, 0
    %p58 = por %p56, %p57
    %p59 = scmp.ne.s32.totalorder %s47, %s48
    %p60 = scmp.eq.s32.totalorder %s17, 1
    %p61 = por %p59, %p60
    %p63 = scmp.ne.s32.totalorder %s48, %s62
    %p64 = scmp.eq.s32.totalorder %s17, 0
    %p65 = por %p63, %p64
    %s67 = sadd.s32 %s66, 1
    %p70 = scmp.eq.s32.totalorder %s11, 1
    %p71 = scmp.ne.s32.totalorder %s66, %s68
    %p72 = scmp.eq.s32.totalorder %s11, 0
    %p73 = por %p71, %p72
    %p74 = scmp.ne.s32.totalorder %s66, %s68
    %p75 = scmp.eq.s32.totalorder %s16, 1
    %p76 = por %p74, %p75
    %p77 = scmp.ne.s32.totalorder %s68, %s69
    %p78 = scmp.eq.s32.totalorder %s16, 0
    %p79 = por %p77, %p78
    %p80 = scmp.ne.s32.totalorder %s68, %s69
    %p81 = scmp.eq.s32.totalorder %s17, 1
    %p82 = por %p80, %p81
    %p84 = scmp.ne.s32.totalorder %s69, %s83
    %p85 = scmp.eq.s32.totalorder %s17, 0
    %p86 = por %p84, %p85
    %s88 = sadd.s32 %s87, 1
    %p91 = scmp.eq.s32.totalorder %s11, 1
    %p92 = scmp.ne.s32.totalorder %s87, %s89
    %p93 = scmp.eq.s32.totalorder %s11, 0
    %p94 = por %p92, %p93
    %p95 = scmp.ne.s32.totalorder %s87, %s89
    %p96 = scmp.eq.s32.totalorder %s16, 1
    %p97 = por %p95, %p96
    %p98 = scmp.ne.s32.totalorder %s89, %s90
    %p99 = scmp.eq.s32.totalorder %s16, 0
    %p100 = por %p98, %p99
    %p101 = scmp.ne.s32.totalorder %s89, %s90
    %p102 = scmp.eq.s32.totalorder %s17, 1
    %p103 = por %p101, %p102
    %p105 = scmp.ne.s32.totalorder %s90, %s104
    %p106 = scmp.eq.s32.totalorder %s17, 0
    %p107 = por %p105, %p106
    %s109 = sadd.s32 %s108, 1
    %p112 = scmp.eq.s32.totalorder %s11, 1
    %p113 = scmp.ne.s32.totalorder %s108, %s110
    %p114 = scmp.eq.s32.totalorder %s11, 0
    %p115 = por %p113, %p114
    %p116 = scmp.ne.s32.totalorder %s108, %s110
    %p117 = scmp.eq.s32.totalorder %s16, 1
    %p118 = por %p116, %p117
    %p119 = scmp.ne.s32.totalorder %s110, %s111
    %p120 = scmp.eq.s32.totalorder %s16, 0
    %p121 = por %p119, %p120
    %p122 = scmp.ne.s32.totalorder %s110, %s111
    %p123 = scmp.eq.s32.totalorder %s17, 1
    %p124 = por %p122, %p123
    %p126 = scmp.ne.s32.totalorder %s111, %s125
    %p127 = scmp.eq.s32.totalorder %s17, 0
    %p128 = por %p126, %p127
    %s129 = ssub.s32 %s11, %s18
    %p130 = scmp.eq.s32.totalorder %s129, 0
    %s132 = sadd.s32 %s131, 1
    %s133 = scalar_select %p130, %s131, %s132
    %p136 = pneg %p130
    %p137 = scmp.eq.s32.totalorder %s11, 1
    %p138 = por %p136, %p137
    %p139 = scmp.ne.s32.totalorder %s131, %s134
    %p140 = scmp.eq.s32.totalorder %s11, 0
    %p141 = por %p139, %p140
    %p142 = scmp.ne.s32.totalorder %s131, %s134
    %p143 = scmp.eq.s32.totalorder %s16, 1
    %p144 = por %p142, %p143
    %p145 = scmp.ne.s32.totalorder %s134, %s135
    %p146 = scmp.eq.s32.totalorder %s16, 0
    %p147 = por %p145, %p146
    %p148 = scmp.ne.s32.totalorder %s134, %s135
    %p149 = scmp.eq.s32.totalorder %s17, 1
    %p150 = por %p148, %p149
    %p152 = scmp.ne.s32.totalorder %s135, %s151
    %p153 = scmp.eq.s32.totalorder %s17, 0
    %p154 = por %p152, %p153
    %p155 = scmp.le.s32.totalorder 1, %s11
    %p156 = scmp.lt.s32.totalorder %s11, 3
    %p157 = pnand %p155, %p156
    %p158 = pneg %p157
    // Predicated region
    $region9: #{modulated_multiview_cond.24} parent=5 // pred_check
      _
    $region10: #{modulated_multiview_cond.24} parent=5 // pred_check_branch
      %160 = sbr.rel (%p157) target = $region12
    $region11: #{modulated_multiview_cond.24} parent=5 // pred_region
      %s161 = ssub.s32 %s11, 1
      // Predicated region
      $region13: #{modulated_multiview_cond.24} parent=11 // pred_check
        %p162 = pneg %p58
      $region14: #{modulated_multiview_cond.24} parent=11 // pred_check_branch
        %164 = sbr.rel (%p162) target = $region16
      $region15: #{modulated_multiview_cond.24} parent=11 // pred_region
        _
      $region16: #{modulated_multiview_cond.24} parent=11 // pred_fallthru
        _
      // Predicated region
      $region17: #{modulated_multiview_cond.24} parent=11 // pred_check
        %p165 = pneg %p79
      $region18: #{modulated_multiview_cond.24} parent=11 // pred_check_branch
        %167 = sbr.rel (%p165) target = $region20
      $region19: #{modulated_multiview_cond.24} parent=11 // pred_region
        _
      $region20: #{modulated_multiview_cond.24} parent=11 // pred_fallthru
        _
      // Predicated region
      $region21: #{modulated_multiview_cond.24} parent=11 // pred_check
        %p168 = pneg %p100
      $region22: #{modulated_multiview_cond.24} parent=11 // pred_check_branch
        %170 = sbr.rel (%p168) target = $region24
      $region23: #{modulated_multiview_cond.24} parent=11 // pred_region
        _
      $region24: #{modulated_multiview_cond.24} parent=11 // pred_fallthru
        _
      // Predicated region
      $region25: #{modulated_multiview_cond.24} parent=11 // pred_check
        %p171 = pneg %p121
      $region26: #{modulated_multiview_cond.24} parent=11 // pred_check_branch
        %173 = sbr.rel (%p171) target = $region28
      $region27: #{modulated_multiview_cond.24} parent=11 // pred_region
        _
      $region28: #{modulated_multiview_cond.24} parent=11 // pred_fallthru
        _
    $region12: #{modulated_multiview_cond.24} parent=5 // pred_fallthru
      _
    %p174 = scmp.lt.s32.totalorder %s11, 2
    // Predicated region
    $region29: #{modulated_multiview_cond.24} parent=5 // pred_check
      %p175 = pneg %p174
    $region30: #{modulated_multiview_cond.24} parent=5 // pred_check_branch
      %177 = sbr.rel (%p175) target = $region32
    $region31: #{modulated_multiview_cond.24} parent=5 // pred_region
      // Predicated region
      $region33: #{modulated_multiview_cond.24} parent=31 // pred_check
        %p178 = pneg %p31
      $region34: #{modulated_multiview_cond.24} parent=31 // pred_check_branch
        %180 = sbr.rel (%p178) target = $region36
      $region35: #{modulated_multiview_cond.24} parent=31 // pred_region
        %s181 = smul.u32 8, %s11
        %p182 = scmp.lt.s32.totalorder %s181, 15
        %s183 = scalar_select %p182, %s181, 15
        %s184 = smul.addr %s183, 8
        %s185 = scalar_lea.vmem %s0, %s184
        %s186 = smul.u32 8, %s11
      $region36: #{modulated_multiview_cond.24} parent=31 // pred_fallthru
        _
    $region32: #{modulated_multiview_cond.24} parent=5 // pred_fallthru
      _
    %p187 = scmp.le.s32.totalorder 1, %s11
    %p188 = scmp.lt.s32.totalorder %s11, 3
    %p189 = pnand %p187, %p188
    %p190 = pneg %p189
    // Predicated region
    $region37: #{modulated_multiview_cond.24} parent=5 // pred_check
      _
    $region38: #{modulated_multiview_cond.24} parent=5 // pred_check_branch
      %192 = sbr.rel (%p189) target = $region40
    $region39: #{modulated_multiview_cond.24} parent=5 // pred_region
      %s193 = ssub.s32 %s11, 1
      %s194 = smul.u32 8, %s16
      %p195 = scmp.lt.s32.totalorder %s194, 15
      %s196 = scalar_select %p195, %s194, 15
      %s197 = smul.addr %s196, 8
      %s198 = scalar_lea.vmem %s0, %s197
      %p199 = pneg %p37
      %p200 = pneg %p34
      %p201 = pneg %p58
      %p202 = pneg %p55
      %p203 = pneg %p79
      %p204 = pneg %p76
      %p205 = pneg %p100
      %p206 = pneg %p97
      %p207 = pneg %p121
      %p208 = pneg %p118
      %p209 = pneg %p147
      %p210 = pneg %p144
      %s211 = smul.u32 8, %s16
      %p212 = scmp.lt.s32.totalorder %s211, 15
      %s213 = scalar_select %p212, %s211, 15
      %s214 = smul.addr %s213, 8
      %s215 = scalar_lea.vmem %s5, %s214
      %s216 = smul.u32 8, %s16
      %p217 = scmp.lt.s32.totalorder %s216, 15
      %s218 = scalar_select %p217, %s216, 15
      %s219 = smul.addr %s218, 8
      %s220 = scalar_lea.vmem %s0, %s219
      %s221 = smul.u32 8, %s16
      %s222 = smul.u32 8, %s16
      %p223 = scmp.lt.s32.totalorder %s222, 15
      %s224 = scalar_select %p223, %s222, 15
      %s225 = smul.addr %s224, 8
      %s226 = scalar_lea.vmem %s5, %s225
      %s227 = smul.u32 8, %s16
      %v229 = vld [vmem:[%s220] sm:$0xff]
      %v230 = vld [vmem:[%s220 + $0x8] sm:$0xff]
      %v231 = vld [vmem:[%s220 + $0x10] sm:$0xff]
      %v232 = vld [vmem:[%s220 + $0x18] sm:$0xff]
      %v233 = vld [vmem:[%s220 + $0x20] sm:$0xff]
      %v234 = vld [vmem:[%s220 + $0x28] sm:$0xff]
      %v235 = vld [vmem:[%s220 + $0x30] sm:$0xff]
      %v236 = vld [vmem:[%s220 + $0x38] sm:$0xff]
      %vm237 = vcmask 523264
      %v238 = vsel %vm237, %v229, 0.0
      %239 = vadd.xlane.f32.xlu0 %v238
      %v240 = vpop.xlane.xlu0 %239
      %v241 = vsel %vm237, %v230, 0.0
      %242 = vadd.xlane.f32.xlu0 %v241
      %v243 = vpop.xlane.xlu0 %242
      %v244 = vsel %vm237, %v231, 0.0
      %245 = vadd.xlane.f32.xlu0 %v244
      %v246 = vpop.xlane.xlu0 %245
      %v247 = vsel %vm237, %v232, 0.0
      %248 = vadd.xlane.f32.xlu0 %v247
      %v249 = vpop.xlane.xlu0 %248
      %v250 = vsel %vm237, %v233, 0.0
      %251 = vadd.xlane.f32.xlu0 %v250
      %v252 = vpop.xlane.xlu0 %251
      %v253 = vsel %vm237, %v234, 0.0
      %254 = vadd.xlane.f32.xlu0 %v253
      %v255 = vpop.xlane.xlu0 %254
      %v256 = vsel %vm237, %v235, 0.0
      %257 = vadd.xlane.f32.xlu0 %v256
      %v258 = vpop.xlane.xlu0 %257
      %v259 = vsel %vm237, %v236, 0.0
      %260 = vadd.xlane.f32.xlu0 %v259
      %v261 = vpop.xlane.xlu0 %260
      %v262 = vrcp.pop 64.0
      %v263 = vmul.f32 %v240, %v262
      %v264 = vmul.f32 %v243, %v262
      %v265 = vmul.f32 %v246, %v262
      %v266 = vmul.f32 %v249, %v262
      %v267 = vmul.f32 %v252, %v262
      %v268 = vmul.f32 %v255, %v262
      %v269 = vmul.f32 %v258, %v262
      %v270 = vmul.f32 %v261, %v262
      %v271 = vsub.f32 %v229, %v263
      %v272 = vsub.f32 %v230, %v264
      %v273 = vsub.f32 %v231, %v265
      %v274 = vsub.f32 %v232, %v266
      %v275 = vsub.f32 %v233, %v267
      %v276 = vsub.f32 %v234, %v268
      %v277 = vsub.f32 %v235, %v269
      %v278 = vsub.f32 %v236, %v270
      %v279 = vmul.f32 %v271, %v271
      %v280 = vmul.f32 %v272, %v272
      %v281 = vmul.f32 %v273, %v273
      %v282 = vmul.f32 %v274, %v274
      %v283 = vmul.f32 %v275, %v275
      %v284 = vmul.f32 %v276, %v276
      %v285 = vmul.f32 %v277, %v277
      %v286 = vmul.f32 %v278, %v278
      %v287 = vsel %vm237, %v279, 0.0
      %288 = vadd.xlane.f32.xlu0 %v287
      %v289 = vpop.xlane.xlu0 %288
      %v290 = vsel %vm237, %v280, 0.0
      %291 = vadd.xlane.f32.xlu0 %v290
      %v292 = vpop.xlane.xlu0 %291
      %v293 = vsel %vm237, %v281, 0.0
      %294 = vadd.xlane.f32.xlu0 %v293
      %v295 = vpop.xlane.xlu0 %294
      %v296 = vsel %vm237, %v282, 0.0
      %297 = vadd.xlane.f32.xlu0 %v296
      %v298 = vpop.xlane.xlu0 %297
      %v299 = vsel %vm237, %v283, 0.0
      %300 = vadd.xlane.f32.xlu0 %v299
      %v301 = vpop.xlane.xlu0 %300
      %v302 = vsel %vm237, %v284, 0.0
      %303 = vadd.xlane.f32.xlu0 %v302
      %v304 = vpop.xlane.xlu0 %303
      %v305 = vsel %vm237, %v285, 0.0
      %306 = vadd.xlane.f32.xlu0 %v305
      %v307 = vpop.xlane.xlu0 %306
      %v308 = vsel %vm237, %v286, 0.0
      %309 = vadd.xlane.f32.xlu0 %v308
      %v310 = vpop.xlane.xlu0 %309
      %v311 = vmul.f32 %v289, %v262
      %v312 = vmul.f32 %v292, %v262
      %v313 = vmul.f32 %v295, %v262
      %v314 = vmul.f32 %v298, %v262
      %v315 = vmul.f32 %v301, %v262
      %v316 = vmul.f32 %v304, %v262
      %v317 = vmul.f32 %v307, %v262
      %v318 = vmul.f32 %v310, %v262
      %v319 = vadd.f32 %v311, 1e-06
      %v320 = vadd.f32 %v312, 1e-06
      %v321 = vadd.f32 %v313, 1e-06
      %v322 = vadd.f32 %v314, 1e-06
      %v323 = vadd.f32 %v315, 1e-06
      %v324 = vadd.f32 %v316, 1e-06
      %v325 = vadd.f32 %v317, 1e-06
      %v326 = vadd.f32 %v318, 1e-06
      %v327 = vrsqrt.pop %v319
      %v328 = vrsqrt.pop %v320
      %v329 = vrsqrt.pop %v321
      %v330 = vrsqrt.pop %v322
      %v331 = vrsqrt.pop %v323
      %v332 = vrsqrt.pop %v324
      %v333 = vrsqrt.pop %v325
      %v334 = vrsqrt.pop %v326
      %v335 = vmul.f32 %v271, %v327
      %v336 = vmul.f32 %v272, %v328
      %v337 = vmul.f32 %v273, %v329
      %v338 = vmul.f32 %v274, %v330
      %v339 = vmul.f32 %v275, %v331
      %v340 = vmul.f32 %v276, %v332
      %v341 = vmul.f32 %v277, %v333
      %v342 = vmul.f32 %v278, %v334
      %v343 = vpack.c.bf16 %v336, %v335
      %v344 = vpack.c.bf16 %v338, %v337
      %v345 = vpack.c.bf16 %v340, %v339
      %v346 = vpack.c.bf16 %v342, %v341
      %v347 = vld [vmem:[%s1] sm:$0xff]
      %v348 = vld [vmem:[%s1 + $0x8] sm:$0xff]
      %v349 = vld [vmem:[%s1 + $0x10] sm:$0xff]
      %v350 = vld [vmem:[%s1 + $0x18] sm:$0xff]
      %v351 = vld [vmem:[%s1 + $0x20] sm:$0xff]
      %v352 = vld [vmem:[%s1 + $0x28] sm:$0xff]
      %v353 = vld [vmem:[%s1 + $0x30] sm:$0xff]
      %v354 = vld [vmem:[%s1 + $0x38] sm:$0xff]
      %v355 = vld [vmem:[%s2] sm:$0x3]
      %v357 = vlaneseq
      %v358 = vshrl.u32 %v357, 7
      %v359 = vsub.s32 0, %v358
      %v360 = vrot.slane %v355, %v359
      %v361 = vlaneseq
      %v362 = vshrl.u32 %v361, 7
      %v363 = vsub.s32 1, %v362
      %v364 = vrot.slane %v355, %v363
      %v375 = vunpack.c.l.b16 %v347
      %v376 = vunpack.c.h.b16 %v347
      %v377 = vunpack.c.l.b16 %v348
      %v378 = vunpack.c.h.b16 %v348
      %v379 = vunpack.c.l.b16 %v349
      %v380 = vunpack.c.h.b16 %v349
      %v381 = vunpack.c.l.b16 %v350
      %v382 = vunpack.c.h.b16 %v350
      %v383 = vunpack.c.l.b16 %v351
      %v384 = vunpack.c.h.b16 %v351
      %v385 = vunpack.c.l.b16 %v352
      %v386 = vunpack.c.h.b16 %v352
      %v387 = vunpack.c.l.b16 %v353
      %v388 = vunpack.c.h.b16 %v353
      %v389 = vunpack.c.l.b16 %v354
      %v390 = vunpack.c.h.b16 %v354
      %v391 = vpack.c.b16 %v377, %v375
      %v392 = vpack.c.b16 %v378, %v376
      %v393 = vpack.c.b16 %v381, %v379
      %v394 = vpack.c.b16 %v382, %v380
      %v395 = vpack.c.b16 %v385, %v383
      %v396 = vpack.c.b16 %v386, %v384
      %v397 = vpack.c.b16 %v389, %v387
      %v398 = vpack.c.b16 %v390, %v388
      %v408 = vsel %vm237, %v343, 0
      %v411 = vsel %vm237, %v344, 0
      %v414 = vsel %vm237, %v345, 0
      %v417 = vsel %vm237, %v346, 0
      %419 = vmatprep.subr.bf16.mxu0 %v392
      %420 = vmatpush1.bf16.msra.mxu0 %v391
      %421 = vmatprep.subr.bf16.mxu0 %v394
      %422 = vmatpush1.bf16.msra.mxu0 %v393
      %423 = vmatprep.subr.bf16.mxu0 %v396
      %424 = vmatpush1.bf16.msra.mxu0 %v395
      %425 = vmatprep.subr.bf16.mxu0 %v398
      %426 = vmatpush1.bf16.msra.mxu0 %v397
      %427 = vmatprep.subr.bf16.mxu0 0
      %428 = vmatpush1.bf16.msra.mxu0 0
      %429 = vmatprep.subr.bf16.mxu0 0
      %430 = vmatpush1.bf16.msra.mxu0 0
      %431 = vmatprep.subr.bf16.mxu0 0
      %432 = vmatpush1.bf16.msra.mxu0 0
      %433 = vmatprep.subr.bf16.mxu0 0
      %434 = vmatpush1.bf16.msra.mxu0 0
      %435 = vmatprep.subr.bf16.mxu0 0
      %436 = vmatpush1.bf16.msra.mxu0 0
      %437 = vmatprep.subr.bf16.mxu0 0
      %438 = vmatpush1.bf16.msra.mxu0 0
      %439 = vmatprep.subr.bf16.mxu0 0
      %440 = vmatpush1.bf16.msra.mxu0 0
      %441 = vmatprep.subr.bf16.mxu0 0
      %442 = vmatpush1.bf16.msra.mxu0 0
      %443 = vmatprep.subr.bf16.mxu0 0
      %444 = vmatpush1.bf16.msra.mxu0 0
      %445 = vmatprep.subr.bf16.mxu0 0
      %446 = vmatpush1.bf16.msra.mxu0 0
      %447 = vmatprep.subr.bf16.mxu0 0
      %448 = vmatpush1.bf16.msra.mxu0 0
      %449 = vmatprep.subr.bf16.mxu0 0
      %450 = vmatpush1.bf16.msra.mxu0 0
      %451 = vmatprep.mubr.bf16.mxu0 0
      %452 = vmatmul.mubr.bf16.gmra.mrb[0].mxu0 %v408
      %v453 = vpop.f32.mrb[0].mxu0
      %v454 = vadd.f32 %v360, %v453
      %v455 = vpop.f32.mrb[0].mxu0
      %v456 = vadd.f32 %v364, %v455
      %v457 = vpop.f32.mrb[0].mxu0
      %v458 = vadd.f32 %v360, %v457
      %v459 = vpop.f32.mrb[0].mxu0
      %v460 = vadd.f32 %v364, %v459
      %461 = vmatprep.mubr.bf16.mxu0 0
      %462 = vmatmul.mubr.bf16.gmra.mrb[0].mxu0 %v411
      %v463 = vpop.f32.mrb[0].mxu0
      %v464 = vadd.f32 %v360, %v463
      %v465 = vpop.f32.mrb[0].mxu0
      %v466 = vadd.f32 %v364, %v465
      %v467 = vpop.f32.mrb[0].mxu0
      %v468 = vadd.f32 %v360, %v467
      %v469 = vpop.f32.mrb[0].mxu0
      %v470 = vadd.f32 %v364, %v469
      %471 = vmatprep.mubr.bf16.mxu0 0
      %472 = vmatmul.mubr.bf16.gmra.mrb[0].mxu0 %v414
      %v473 = vpop.f32.mrb[0].mxu0
      %v474 = vadd.f32 %v360, %v473
      %v475 = vpop.f32.mrb[0].mxu0
      %v476 = vadd.f32 %v364, %v475
      %v477 = vpop.f32.mrb[0].mxu0
      %v478 = vadd.f32 %v360, %v477
      %v479 = vpop.f32.mrb[0].mxu0
      %v480 = vadd.f32 %v364, %v479
      %481 = vmatprep.mubr.bf16.mxu0 0
      %482 = vmatmul.mubr.bf16.gmra.mrb[0].mxu0 %v417
      %v483 = vpop.f32.mrb[0].mxu0
      %v484 = vadd.f32 %v360, %v483
      %v485 = vpop.f32.mrb[0].mxu0
      %v486 = vadd.f32 %v364, %v485
      %v487 = vpop.f32.mrb[0].mxu0
      %v488 = vadd.f32 %v360, %v487
      %v489 = vpop.f32.mrb[0].mxu0
      %v490 = vadd.f32 %v364, %v489
      %491 = vdwg.mxu0
      %v492 = vmul.f32 %v454, %v454
      %v493 = vmul.f32 %v456, %v456
      %v494 = vmul.f32 %v458, %v458
      %v495 = vmul.f32 %v460, %v460
      %v496 = vmul.f32 %v464, %v464
      %v497 = vmul.f32 %v466, %v466
      %v498 = vmul.f32 %v468, %v468
      %v499 = vmul.f32 %v470, %v470
      %v500 = vmul.f32 %v474, %v474
      %v501 = vmul.f32 %v476, %v476
      %v502 = vmul.f32 %v478, %v478
      %v503 = vmul.f32 %v480, %v480
      %v504 = vmul.f32 %v484, %v484
      %v505 = vmul.f32 %v486, %v486
      %v506 = vmul.f32 %v488, %v488
      %v507 = vmul.f32 %v490, %v490
      %v508 = vmul.f32 %v454, %v492
      %v509 = vmul.f32 %v456, %v493
      %v510 = vmul.f32 %v458, %v494
      %v511 = vmul.f32 %v460, %v495
      %v512 = vmul.f32 %v464, %v496
      %v513 = vmul.f32 %v466, %v497
      %v514 = vmul.f32 %v468, %v498
      %v515 = vmul.f32 %v470, %v499
      %v516 = vmul.f32 %v474, %v500
      %v517 = vmul.f32 %v476, %v501
      %v518 = vmul.f32 %v478, %v502
      %v519 = vmul.f32 %v480, %v503
      %v520 = vmul.f32 %v484, %v504
      %v521 = vmul.f32 %v486, %v505
      %v522 = vmul.f32 %v488, %v506
      %v523 = vmul.f32 %v490, %v507
      %v524 = vmul.f32 %v508, 0.044715
      %v525 = vmul.f32 %v509, 0.044715
      %v526 = vmul.f32 %v510, 0.044715
      %v527 = vmul.f32 %v511, 0.044715
      %v528 = vmul.f32 %v512, 0.044715
      %v529 = vmul.f32 %v513, 0.044715
      %v530 = vmul.f32 %v514, 0.044715
      %v531 = vmul.f32 %v515, 0.044715
      %v532 = vmul.f32 %v516, 0.044715
      %v533 = vmul.f32 %v517, 0.044715
      %v534 = vmul.f32 %v518, 0.044715
      %v535 = vmul.f32 %v519, 0.044715
      %v536 = vmul.f32 %v520, 0.044715
      %v537 = vmul.f32 %v521, 0.044715
      %v538 = vmul.f32 %v522, 0.044715
      %v539 = vmul.f32 %v523, 0.044715
      %v540 = vadd.f32 %v454, %v524
      %v541 = vadd.f32 %v456, %v525
      %v542 = vadd.f32 %v458, %v526
      %v543 = vadd.f32 %v460, %v527
      %v544 = vadd.f32 %v464, %v528
      %v545 = vadd.f32 %v466, %v529
      %v546 = vadd.f32 %v468, %v530
      %v547 = vadd.f32 %v470, %v531
      %v548 = vadd.f32 %v474, %v532
      %v549 = vadd.f32 %v476, %v533
      %v550 = vadd.f32 %v478, %v534
      %v551 = vadd.f32 %v480, %v535
      %v552 = vadd.f32 %v484, %v536
      %v553 = vadd.f32 %v486, %v537
      %v554 = vadd.f32 %v488, %v538
      %v555 = vadd.f32 %v490, %v539
      %v556 = vmul.f32 %v540, 0.7978846
      %v557 = vmul.f32 %v541, 0.7978846
      %v558 = vmul.f32 %v542, 0.7978846
      %v559 = vmul.f32 %v543, 0.7978846
      %v560 = vmul.f32 %v544, 0.7978846
      %v561 = vmul.f32 %v545, 0.7978846
      %v562 = vmul.f32 %v546, 0.7978846
      %v563 = vmul.f32 %v547, 0.7978846
      %v564 = vmul.f32 %v548, 0.7978846
      %v565 = vmul.f32 %v549, 0.7978846
      %v566 = vmul.f32 %v550, 0.7978846
      %v567 = vmul.f32 %v551, 0.7978846
      %v568 = vmul.f32 %v552, 0.7978846
      %v569 = vmul.f32 %v553, 0.7978846
      %v570 = vmul.f32 %v554, 0.7978846
      %v571 = vmul.f32 %v555, 0.7978846
      %v572 = vtanh.pop %v556
      %v573 = vtanh.pop %v557
      %v574 = vtanh.pop %v558
      %v575 = vtanh.pop %v559
      %v576 = vtanh.pop %v560
      %v577 = vtanh.pop %v561
      %v578 = vtanh.pop %v562
      %v579 = vtanh.pop %v563
      %v580 = vtanh.pop %v564
      %v581 = vtanh.pop %v565
      %v582 = vtanh.pop %v566
      %v583 = vtanh.pop %v567
      %v584 = vtanh.pop %v568
      %v585 = vtanh.pop %v569
      %v586 = vtanh.pop %v570
      %v587 = vtanh.pop %v571
      %v588 = vadd.f32 %v572, 1.0
      %v589 = vadd.f32 %v573, 1.0
      %v590 = vadd.f32 %v574, 1.0
      %v591 = vadd.f32 %v575, 1.0
      %v592 = vadd.f32 %v576, 1.0
      %v593 = vadd.f32 %v577, 1.0
      %v594 = vadd.f32 %v578, 1.0
      %v595 = vadd.f32 %v579, 1.0
      %v596 = vadd.f32 %v580, 1.0
      %v597 = vadd.f32 %v581, 1.0
      %v598 = vadd.f32 %v582, 1.0
      %v599 = vadd.f32 %v583, 1.0
      %v600 = vadd.f32 %v584, 1.0
      %v601 = vadd.f32 %v585, 1.0
      %v602 = vadd.f32 %v586, 1.0
      %v603 = vadd.f32 %v587, 1.0
      %v604 = vmul.f32 %v588, 0.5
      %v605 = vmul.f32 %v589, 0.5
      %v606 = vmul.f32 %v590, 0.5
      %v607 = vmul.f32 %v591, 0.5
      %v608 = vmul.f32 %v592, 0.5
      %v609 = vmul.f32 %v593, 0.5
      %v610 = vmul.f32 %v594, 0.5
      %v611 = vmul.f32 %v595, 0.5
      %v612 = vmul.f32 %v596, 0.5
      %v613 = vmul.f32 %v597, 0.5
      %v614 = vmul.f32 %v598, 0.5
      %v615 = vmul.f32 %v599, 0.5
      %v616 = vmul.f32 %v600, 0.5
      %v617 = vmul.f32 %v601, 0.5
      %v618 = vmul.f32 %v602, 0.5
      %v619 = vmul.f32 %v603, 0.5
      %v620 = vmul.f32 %v454, %v604
      %v621 = vmul.f32 %v456, %v605
      %v622 = vmul.f32 %v458, %v606
      %v623 = vmul.f32 %v460, %v607
      %v624 = vmul.f32 %v464, %v608
      %v625 = vmul.f32 %v466, %v609
      %v626 = vmul.f32 %v468, %v610
      %v627 = vmul.f32 %v470, %v611
      %v628 = vmul.f32 %v474, %v612
      %v629 = vmul.f32 %v476, %v613
      %v630 = vmul.f32 %v478, %v614
      %v631 = vmul.f32 %v480, %v615
      %v632 = vmul.f32 %v484, %v616
      %v633 = vmul.f32 %v486, %v617
      %v634 = vmul.f32 %v488, %v618
      %v635 = vmul.f32 %v490, %v619
      %v636 = vpack.c.bf16 %v622, %v620
      %v637 = vpack.c.bf16 %v623, %v621
      %v638 = vpack.c.bf16 %v626, %v624
      %v639 = vpack.c.bf16 %v627, %v625
      %v640 = vpack.c.bf16 %v630, %v628
      %v641 = vpack.c.bf16 %v631, %v629
      %v642 = vpack.c.bf16 %v634, %v632
      %v643 = vpack.c.bf16 %v635, %v633
      %v644 = vld [vmem:[%s3] sm:$0xf]
      %v645 = vld [vmem:[%s3 + $0x4] sm:$0xf]
      %v646 = vld [vmem:[%s3 + $0x8] sm:$0xf]
      %v647 = vld [vmem:[%s3 + $0xc] sm:$0xf]
      %v648 = vld [vmem:[%s3 + $0x10] sm:$0xf]
      %v649 = vld [vmem:[%s3 + $0x14] sm:$0xf]
      %v650 = vld [vmem:[%s3 + $0x18] sm:$0xf]
      %v651 = vld [vmem:[%s3 + $0x1c] sm:$0xf]
      %v652 = vld [vmem:[%s3 + $0x20] sm:$0xf]
      %v653 = vld [vmem:[%s3 + $0x24] sm:$0xf]
      %v654 = vld [vmem:[%s3 + $0x28] sm:$0xf]
      %v655 = vld [vmem:[%s3 + $0x2c] sm:$0xf]
      %v656 = vld [vmem:[%s3 + $0x30] sm:$0xf]
      %v657 = vld [vmem:[%s3 + $0x34] sm:$0xf]
      %v658 = vld [vmem:[%s3 + $0x38] sm:$0xf]
      %v659 = vld [vmem:[%s3 + $0x3c] sm:$0xf]
      %v660 = vld [vmem:[%s3 + $0x40] sm:$0xf]
      %v661 = vld [vmem:[%s3 + $0x44] sm:$0xf]
      %v662 = vld [vmem:[%s3 + $0x48] sm:$0xf]
      %v663 = vld [vmem:[%s3 + $0x4c] sm:$0xf]
      %v664 = vld [vmem:[%s3 + $0x50] sm:$0xf]
      %v665 = vld [vmem:[%s3 + $0x54] sm:$0xf]
      %v666 = vld [vmem:[%s3 + $0x58] sm:$0xf]
      %v667 = vld [vmem:[%s3 + $0x5c] sm:$0xf]
      %v668 = vld [vmem:[%s3 + $0x60] sm:$0xf]
      %v669 = vld [vmem:[%s3 + $0x64] sm:$0xf]
      %v670 = vld [vmem:[%s3 + $0x68] sm:$0xf]
      %v671 = vld [vmem:[%s3 + $0x6c] sm:$0xf]
      %v672 = vld [vmem:[%s3 + $0x70] sm:$0xf]
      %v673 = vld [vmem:[%s3 + $0x74] sm:$0xf]
      %v674 = vld [vmem:[%s3 + $0x78] sm:$0xf]
      %v675 = vld [vmem:[%s3 + $0x7c] sm:$0xf]
      %v676 = vld [vmem:[%s4] sm:$0x1]
      %v678 = vlaneseq
      %v679 = vshrl.u32 %v678, 7
      %v680 = vsub.s32 0, %v679
      %v681 = vrot.slane %v676, %v680
      %v715 = vunpack.c.l.b16 %v644
      %v716 = vunpack.c.l.b16 %v645
      %v717 = vunpack.c.l.b16 %v646
      %v718 = vunpack.c.l.b16 %v647
      %v719 = vunpack.c.l.b16 %v648
      %v720 = vunpack.c.l.b16 %v649
      %v721 = vunpack.c.l.b16 %v650
      %v722 = vunpack.c.l.b16 %v651
      %v723 = vunpack.c.l.b16 %v652
      %v724 = vunpack.c.l.b16 %v653
      %v725 = vunpack.c.l.b16 %v654
      %v726 = vunpack.c.l.b16 %v655
      %v727 = vunpack.c.l.b16 %v656
      %v728 = vunpack.c.l.b16 %v657
      %v729 = vunpack.c.l.b16 %v658
      %v730 = vunpack.c.l.b16 %v659
      %v731 = vunpack.c.l.b16 %v660
      %v732 = vunpack.c.l.b16 %v661
      %v733 = vunpack.c.l.b16 %v662
      %v734 = vunpack.c.l.b16 %v663
      %v735 = vunpack.c.l.b16 %v664
      %v736 = vunpack.c.l.b16 %v665
      %v737 = vunpack.c.l.b16 %v666
      %v738 = vunpack.c.l.b16 %v667
      %v739 = vunpack.c.l.b16 %v668
      %v740 = vunpack.c.l.b16 %v669
      %v741 = vunpack.c.l.b16 %v670
      %v742 = vunpack.c.l.b16 %v671
      %v743 = vunpack.c.l.b16 %v672
      %v744 = vunpack.c.l.b16 %v673
      %v745 = vunpack.c.l.b16 %v674
      %v746 = vunpack.c.l.b16 %v675
      %v747 = vpack.c.b16 %v716, %v715
      %v748 = vpack.c.b16 %v718, %v717
      %v749 = vpack.c.b16 %v720, %v719
      %v750 = vpack.c.b16 %v722, %v721
      %v751 = vpack.c.b16 %v724, %v723
      %v752 = vpack.c.b16 %v726, %v725
      %v753 = vpack.c.b16 %v728, %v727
      %v754 = vpack.c.b16 %v730, %v729
      %v755 = vpack.c.b16 %v732, %v731
      %v756 = vpack.c.b16 %v734, %v733
      %v757 = vpack.c.b16 %v736, %v735
      %v758 = vpack.c.b16 %v738, %v737
      %v759 = vpack.c.b16 %v740, %v739
      %v760 = vpack.c.b16 %v742, %v741
      %v761 = vpack.c.b16 %v744, %v743
      %v762 = vpack.c.b16 %v746, %v745
      %779 = vmatprep.subr.bf16.mxu0 0
      %780 = vmatpush1.bf16.msra.mxu0 %v747
      %781 = vmatprep.subr.bf16.mxu0 0
      %782 = vmatpush1.bf16.msra.mxu0 %v748
      %783 = vmatprep.subr.bf16.mxu0 0
      %784 = vmatpush1.bf16.msra.mxu0 %v749
      %785 = vmatprep.subr.bf16.mxu0 0
      %786 = vmatpush1.bf16.msra.mxu0 %v750
      %787 = vmatprep.subr.bf16.mxu0 0
      %788 = vmatpush1.bf16.msra.mxu0 %v751
      %789 = vmatprep.subr.bf16.mxu0 0
      %790 = vmatpush1.bf16.msra.mxu0 %v752
      %791 = vmatprep.subr.bf16.mxu0 0
      %792 = vmatpush1.bf16.msra.mxu0 %v753
      %793 = vmatprep.subr.bf16.mxu0 0
      %794 = vmatpush1.bf16.msra.mxu0 %v754
      %795 = vmatprep.subr.bf16.mxu0 0
      %796 = vmatpush1.bf16.msra.mxu0 %v755
      %797 = vmatprep.subr.bf16.mxu0 0
      %798 = vmatpush1.bf16.msra.mxu0 %v756
      %799 = vmatprep.subr.bf16.mxu0 0
      %800 = vmatpush1.bf16.msra.mxu0 %v757
      %801 = vmatprep.subr.bf16.mxu0 0
      %802 = vmatpush1.bf16.msra.mxu0 %v758
      %803 = vmatprep.subr.bf16.mxu0 0
      %804 = vmatpush1.bf16.msra.mxu0 %v759
      %805 = vmatprep.subr.bf16.mxu0 0
      %806 = vmatpush1.bf16.msra.mxu0 %v760
      %807 = vmatprep.subr.bf16.mxu0 0
      %808 = vmatpush1.bf16.msra.mxu0 %v761
      %809 = vmatprep.subr.bf16.mxu0 0
      %810 = vmatpush1.bf16.msra.mxu0 %v762
      %811 = vmatprep.mubr.bf16.mxu0 %v637
      %812 = vmatmul.mubr.bf16.gmra.mrb[0].mxu0 %v636
      %v813 = vpop.f32.mrb[0].mxu0
      %v814 = vadd.f32 %v681, %v813
      %v815 = vpop.f32.mrb[0].mxu0
      %v816 = vpop.f32.mrb[0].mxu0
      %v817 = vadd.f32 %v681, %v816
      %v818 = vpop.f32.mrb[0].mxu0
      %819 = vmatprep.mubr.bf16.mxu0 %v639
      %820 = vmatmul.mubr.bf16.gmra.mrb[0].mxu0 %v638
      %v821 = vpop.f32.mrb[0].mxu0
      %v822 = vadd.f32 %v681, %v821
      %v823 = vpop.f32.mrb[0].mxu0
      %v824 = vpop.f32.mrb[0].mxu0
      %v825 = vadd.f32 %v681, %v824
      %v826 = vpop.f32.mrb[0].mxu0
      %827 = vmatprep.mubr.bf16.mxu0 %v641
      %828 = vmatmul.mubr.bf16.gmra.mrb[0].mxu0 %v640
      %v829 = vpop.f32.mrb[0].mxu0
      %v830 = vadd.f32 %v681, %v829
      %v831 = vpop.f32.mrb[0].mxu0
      %v832 = vpop.f32.mrb[0].mxu0
      %v833 = vadd.f32 %v681, %v832
      %v834 = vpop.f32.mrb[0].mxu0
      %835 = vmatprep.mubr.bf16.mxu0 %v643
      %836 = vmatmul.mubr.bf16.gmra.mrb[0].mxu0 %v642
      %v837 = vpop.f32.mrb[0].mxu0
      %v838 = vadd.f32 %v681, %v837
      %v839 = vpop.f32.mrb[0].mxu0
      %v840 = vpop.f32.mrb[0].mxu0
      %v841 = vadd.f32 %v681, %v840
      %v842 = vpop.f32.mrb[0].mxu0
      %843 = vdwg.mxu0
      %v844 = vadd.f32 %v229, %v814
      %v845 = vadd.f32 %v230, %v817
      %v846 = vadd.f32 %v231, %v822
      %v847 = vadd.f32 %v232, %v825
      %v848 = vadd.f32 %v233, %v830
      %v849 = vadd.f32 %v234, %v833
      %v850 = vadd.f32 %v235, %v838
      %v851 = vadd.f32 %v236, %v841
      %852 = vst.msk [vmem:[%s226] sm:$0xff] %vm237, %v844
      %853 = vst.msk [vmem:[%s226 + $0x8] sm:$0xff] %vm237, %v845
      %854 = vst.msk [vmem:[%s226 + $0x10] sm:$0xff] %vm237, %v846
      %855 = vst.msk [vmem:[%s226 + $0x18] sm:$0xff] %vm237, %v847
      %856 = vst.msk [vmem:[%s226 + $0x20] sm:$0xff] %vm237, %v848
      %857 = vst.msk [vmem:[%s226 + $0x28] sm:$0xff] %vm237, %v849
      %858 = vst.msk [vmem:[%s226 + $0x30] sm:$0xff] %vm237, %v850
      %859 = vst.msk [vmem:[%s226 + $0x38] sm:$0xff] %vm237, %v851
      %s860 = smul.u32 8, %s16
      %p861 = scmp.lt.s32.totalorder %s860, 15
      %s862 = scalar_select %p861, %s860, 15
      %s863 = smul.addr %s862, 8
      %s864 = scalar_lea.vmem %s5, %s863
      // Predicated region
      $region41: #{modulated_multiview_cond.24} parent=39 // pred_check
        %p865 = pneg %p144
      $region42: #{modulated_multiview_cond.24} parent=39 // pred_check_branch
        %867 = sbr.rel (%p865) target = $region44
      $region43: #{modulated_multiview_cond.24} parent=39 // pred_region
        %s868 = smul.u32 8, %s16
      $region44: #{modulated_multiview_cond.24} parent=39 // pred_fallthru
        _
    $region40: #{modulated_multiview_cond.24} parent=5 // pred_fallthru
      _
    %p869 = scmp.le.s32.totalorder 2, %s11
    // Predicated region
    $region45: #{modulated_multiview_cond.24} parent=5 // pred_check
      %p870 = pneg %p869
    $region46: #{modulated_multiview_cond.24} parent=5 // pred_check_branch
      %872 = sbr.rel (%p870) target = $region48
    $region47: #{modulated_multiview_cond.24} parent=5 // pred_region
      %s873 = ssub.s32 %s11, 2
      // Predicated region
      $region49: #{modulated_multiview_cond.24} parent=47 // pred_check
        %p874 = pneg %p150
      $region50: #{modulated_multiview_cond.24} parent=47 // pred_check_branch
        %876 = sbr.rel (%p874) target = $region52
      $region51: #{modulated_multiview_cond.24} parent=47 // pred_region
        %s877 = smul.u32 8, %s17
        %p878 = scmp.lt.s32.totalorder %s877, 15
        %s879 = scalar_select %p878, %s877, 15
        %s880 = smul.addr %s879, 8
        %s881 = scalar_lea.vmem %s5, %s880
      $region52: #{modulated_multiview_cond.24} parent=47 // pred_fallthru
        _
    $region48: #{modulated_multiview_cond.24} parent=5 // pred_fallthru
      _
  $region6: #{modulated_multiview_cond.24} parent=0 // loop_footer
    %s15 = sadd.s32 1, %s11
  $region7: #{modulated_multiview_cond.24} parent=0 // loop_footer_branch
    %10 = sbr.rel target = $region3
  $region8: #{modulated_multiview_cond.24} parent=0 // loop_exit
    _

// kernel: modulated_multiview_cond.39
$region0: #{modulated_multiview_cond.39}
  #allocation0 [shape = 'u32[]', space=smem, size = 0x4, offset = 0x4, fixed_abs, tag = 'smem constant byte address 0x4 - core index']
  #allocation1 [shape = 'u32[144,128]{1,0:T(1,128)}', space=vmem, size = 0x12000, scoped, tag = 'internal scratch']
  %s0 = inlined_call_operand.vmem [shape: f32[128,64], index: 0, kind: input, shape index: {}]
  %s1 = inlined_call_operand.vmem [shape: bf16[64,256], index: 1, kind: input, shape index: {}]
  %s2 = inlined_call_operand.vmem [shape: f32[1,256], index: 2, kind: input, shape index: {}]
  %s3 = inlined_call_operand.vmem [shape: bf16[256,64], index: 3, kind: input, shape index: {}]
  %s4 = inlined_call_operand.vmem [shape: f32[1,64], index: 4, kind: input, shape index: {}]
  %s5 = inlined_call_operand.hbm [shape: f32[128,64], index: 5, kind: output, shape index: {}]
  %s6 = sld [smem:[#allocation0]]
  $region53: #{modulated_multiview_cond.39} parent=0
    _
  %s8 = ssub.s32 1, %s6
  %s9 = scalar_select 0, %s8, %s6
  $region1: #{modulated_multiview_cond.39} parent=0
    #allocation2 [shape = 'u8[65536]{0}', space=vmem, size = 0x10000, scoped, tag = 'output window, operand 0']
    #allocation3 [shape = 's32[2]{0}', space=sflag, size = 0x8, scoped, tag = 'scoped memory for modulated_multiview_cond.39']
    %10 = vsyncpa [#allocation3], 0
    %s11 = scalar_lea.sflag [#allocation3], 1
    %12 = vsyncpa %s11, 0
    loop: start=0, step=1, limit=4
    $region2: #{modulated_multiview_cond.39} parent=1 // loop_pre_header
      _
    $region3: #{modulated_multiview_cond.39} parent=1 // loop_header
      %s14 = sphi 0, %s18
      %p15 = scmp.ge.s32.totalorder %s14, 4
      %s24 = sphi 0, %s26
      %s27 = sphi 0, %s24
      %s28 = sphi 0, %s27
      %s44 = sphi 0, %s28
      %s48 = sphi 0, %s48
      %s50 = sphi 0, %s48
      %s51 = sphi 0, %s50
      %s65 = sphi 0, %s51
      %s69 = sphi 0, %s69
      %s71 = sphi 0, %s69
      %s72 = sphi 0, %s71
      %s86 = sphi 0, %s72
      %s90 = sphi 0, %s90
      %s92 = sphi 0, %s90
      %s93 = sphi 0, %s92
      %s107 = sphi 0, %s93
      %s111 = sphi 0, %s111
      %s113 = sphi 0, %s111
      %s114 = sphi 0, %s113
      %s128 = sphi 0, %s114
      %s134 = sphi 0, %s136
      %s137 = sphi 0, %s134
      %s138 = sphi 0, %s137
      %s154 = sphi 0, %s138
    $region4: #{modulated_multiview_cond.39} parent=1 // loop_header_branch
      %17 = sbr.rel (%p15) target = $region8
    $region5: #{modulated_multiview_cond.39} parent=1 // loop_body
      %s19 = ssub.s32 %s14, 1
      %s20 = ssub.s32 %s14, 2
      %s21 = sadd.s32 %s14, 1
      %s22 = ssub.s32 %s14, %s21
      %p23 = scmp.eq.s32.totalorder %s22, 0
      %s25 = sadd.s32 %s24, 1
      %s26 = scalar_select %p23, %s24, %s25
      %p29 = pneg %p23
      %p30 = scmp.eq.s32.totalorder %s14, 1
      %p31 = por %p29, %p30
      %p32 = scmp.ne.s32.totalorder %s24, %s27
      %p33 = scmp.eq.s32.totalorder %s14, 0
      %p34 = por %p32, %p33
      %p35 = scmp.ne.s32.totalorder %s24, %s27
      %p36 = scmp.eq.s32.totalorder %s19, 1
      %p37 = por %p35, %p36
      %p38 = scmp.ne.s32.totalorder %s27, %s28
      %p39 = scmp.eq.s32.totalorder %s19, 0
      %p40 = por %p38, %p39
      %p41 = scmp.ne.s32.totalorder %s27, %s28
      %p42 = scmp.eq.s32.totalorder %s20, 1
      %p43 = por %p41, %p42
      %p45 = scmp.ne.s32.totalorder %s28, %s44
      %p46 = scmp.eq.s32.totalorder %s20, 0
      %p47 = por %p45, %p46
      %s49 = sadd.s32 %s48, 1
      %p52 = scmp.eq.s32.totalorder %s14, 1
      %p53 = scmp.ne.s32.totalorder %s48, %s50
      %p54 = scmp.eq.s32.totalorder %s14, 0
      %p55 = por %p53, %p54
      %p56 = scmp.ne.s32.totalorder %s48, %s50
      %p57 = scmp.eq.s32.totalorder %s19, 1
      %p58 = por %p56, %p57
      %p59 = scmp.ne.s32.totalorder %s50, %s51
      %p60 = scmp.eq.s32.totalorder %s19, 0
      %p61 = por %p59, %p60
      %p62 = scmp.ne.s32.totalorder %s50, %s51
      %p63 = scmp.eq.s32.totalorder %s20, 1
      %p64 = por %p62, %p63
      %p66 = scmp.ne.s32.totalorder %s51, %s65
      %p67 = scmp.eq.s32.totalorder %s20, 0
      %p68 = por %p66, %p67
      %s70 = sadd.s32 %s69, 1
      %p73 = scmp.eq.s32.totalorder %s14, 1
      %p74 = scmp.ne.s32.totalorder %s69, %s71
      %p75 = scmp.eq.s32.totalorder %s14, 0
      %p76 = por %p74, %p75
      %p77 = scmp.ne.s32.totalorder %s69, %s71
      %p78 = scmp.eq.s32.totalorder %s19, 1
      %p79 = por %p77, %p78
      %p80 = scmp.ne.s32.totalorder %s71, %s72
      %p81 = scmp.eq.s32.totalorder %s19, 0
      %p82 = por %p80, %p81
      %p83 = scmp.ne.s32.totalorder %s71, %s72
      %p84 = scmp.eq.s32.totalorder %s20, 1
      %p85 = por %p83, %p84
      %p87 = scmp.ne.s32.totalorder %s72, %s86
      %p88 = scmp.eq.s32.totalorder %s20, 0
      %p89 = por %p87, %p88
      %s91 = sadd.s32 %s90, 1
      %p94 = scmp.eq.s32.totalorder %s14, 1
      %p95 = scmp.ne.s32.totalorder %s90, %s92
      %p96 = scmp.eq.s32.totalorder %s14, 0
      %p97 = por %p95, %p96
      %p98 = scmp.ne.s32.totalorder %s90, %s92
      %p99 = scmp.eq.s32.totalorder %s19, 1
      %p100 = por %p98, %p99
      %p101 = scmp.ne.s32.totalorder %s92, %s93
      %p102 = scmp.eq.s32.totalorder %s19, 0
      %p103 = por %p101, %p102
      %p104 = scmp.ne.s32.totalorder %s92, %s93
      %p105 = scmp.eq.s32.totalorder %s20, 1
      %p106 = por %p104, %p105
      %p108 = scmp.ne.s32.totalorder %s93, %s107
      %p109 = scmp.eq.s32.totalorder %s20, 0
      %p110 = por %p108, %p109
      %s112 = sadd.s32 %s111, 1
      %p115 = scmp.eq.s32.totalorder %s14, 1
      %p116 = scmp.ne.s32.totalorder %s111, %s113
      %p117 = scmp.eq.s32.totalorder %s14, 0
      %p118 = por %p116, %p117
      %p119 = scmp.ne.s32.totalorder %s111, %s113
      %p120 = scmp.eq.s32.totalorder %s19, 1
      %p121 = por %p119, %p120
      %p122 = scmp.ne.s32.totalorder %s113, %s114
      %p123 = scmp.eq.s32.totalorder %s19, 0
      %p124 = por %p122, %p123
      %p125 = scmp.ne.s32.totalorder %s113, %s114
      %p126 = scmp.eq.s32.totalorder %s20, 1
      %p127 = por %p125, %p126
      %p129 = scmp.ne.s32.totalorder %s114, %s128
      %p130 = scmp.eq.s32.totalorder %s20, 0
      %p131 = por %p129, %p130
      %s132 = ssub.s32 %s14, %s21
      %p133 = scmp.eq.s32.totalorder %s132, 0
      %s135 = sadd.s32 %s134, 1
      %s136 = scalar_select %p133, %s134, %s135
      %p139 = pneg %p133
      %p140 = scmp.eq.s32.totalorder %s14, 1
      %p141 = por %p139, %p140
      %p142 = scmp.ne.s32.totalorder %s134, %s137
      %p143 = scmp.eq.s32.totalorder %s14, 0
      %p144 = por %p142, %p143
      %p145 = scmp.ne.s32.totalorder %s134, %s137
      %p146 = scmp.eq.s32.totalorder %s19, 1
      %p147 = por %p145, %p146
      %p148 = scmp.ne.s32.totalorder %s137, %s138
      %p149 = scmp.eq.s32.totalorder %s19, 0
      %p150 = por %p148, %p149
      %p151 = scmp.ne.s32.totalorder %s137, %s138
      %p152 = scmp.eq.s32.totalorder %s20, 1
      %p153 = por %p151, %p152
      %p155 = scmp.ne.s32.totalorder %s138, %s154
      %p156 = scmp.eq.s32.totalorder %s20, 0
      %p157 = por %p155, %p156
      %p158 = scmp.le.s32.totalorder 1, %s14
      %p159 = scmp.lt.s32.totalorder %s14, 3
      %p160 = pnand %p158, %p159
      %p161 = pneg %p160
      // Predicated region
      $region9: #{modulated_multiview_cond.39} parent=5 // pred_check
        _
      $region10: #{modulated_multiview_cond.39} parent=5 // pred_check_branch
        %163 = sbr.rel (%p160) target = $region12
      $region11: #{modulated_multiview_cond.39} parent=5 // pred_region
        %s164 = ssub.s32 %s14, 1
        // Predicated region
        $region13: #{modulated_multiview_cond.39} parent=11 // pred_check
          %p165 = pneg %p61
        $region14: #{modulated_multiview_cond.39} parent=11 // pred_check_branch
          %167 = sbr.rel (%p165) target = $region16
        $region15: #{modulated_multiview_cond.39} parent=11 // pred_region
          _
        $region16: #{modulated_multiview_cond.39} parent=11 // pred_fallthru
          _
        // Predicated region
        $region17: #{modulated_multiview_cond.39} parent=11 // pred_check
          %p168 = pneg %p82
        $region18: #{modulated_multiview_cond.39} parent=11 // pred_check_branch
          %170 = sbr.rel (%p168) target = $region20
        $region19: #{modulated_multiview_cond.39} parent=11 // pred_region
          _
        $region20: #{modulated_multiview_cond.39} parent=11 // pred_fallthru
          _
        // Predicated region
        $region21: #{modulated_multiview_cond.39} parent=11 // pred_check
          %p171 = pneg %p103
        $region22: #{modulated_multiview_cond.39} parent=11 // pred_check_branch
          %173 = sbr.rel (%p171) target = $region24
        $region23: #{modulated_multiview_cond.39} parent=11 // pred_region
          _
        $region24: #{modulated_multiview_cond.39} parent=11 // pred_fallthru
          _
        // Predicated region
        $region25: #{modulated_multiview_cond.39} parent=11 // pred_check
          %p174 = pneg %p124
        $region26: #{modulated_multiview_cond.39} parent=11 // pred_check_branch
          %176 = sbr.rel (%p174) target = $region28
        $region27: #{modulated_multiview_cond.39} parent=11 // pred_region
          _
        $region28: #{modulated_multiview_cond.39} parent=11 // pred_fallthru
          _
      $region12: #{modulated_multiview_cond.39} parent=5 // pred_fallthru
        _
      %p177 = scmp.lt.s32.totalorder %s14, 2
      // Predicated region
      $region29: #{modulated_multiview_cond.39} parent=5 // pred_check
        %p178 = pneg %p177
      $region30: #{modulated_multiview_cond.39} parent=5 // pred_check_branch
        %180 = sbr.rel (%p178) target = $region32
      $region31: #{modulated_multiview_cond.39} parent=5 // pred_region
        // Predicated region
        $region33: #{modulated_multiview_cond.39} parent=31 // pred_check
          %p181 = pneg %p34
        $region34: #{modulated_multiview_cond.39} parent=31 // pred_check_branch
          %183 = sbr.rel (%p181) target = $region36
        $region35: #{modulated_multiview_cond.39} parent=31 // pred_region
          %s184 = smul.u32 8, %s14
          %p185 = scmp.lt.s32.totalorder %s184, 15
          %s186 = scalar_select %p185, %s184, 15
          %s187 = smul.addr %s186, 8
          %s188 = scalar_lea.vmem %s0, %s187
          %s189 = smul.u32 8, %s14
        $region36: #{modulated_multiview_cond.39} parent=31 // pred_fallthru
          _
      $region32: #{modulated_multiview_cond.39} parent=5 // pred_fallthru
        _
      %p190 = scmp.le.s32.totalorder 1, %s14
      %p191 = scmp.lt.s32.totalorder %s14, 3
      %p192 = pnand %p190, %p191
      %p193 = pneg %p192
      // Predicated region
      $region37: #{modulated_multiview_cond.39} parent=5 // pred_check
        _
      $region38: #{modulated_multiview_cond.39} parent=5 // pred_check_branch
        %195 = sbr.rel (%p192) target = $region40
      $region39: #{modulated_multiview_cond.39} parent=5 // pred_region
        %s196 = ssub.s32 %s14, 1
        %s197 = smul.u32 8, %s19
        %p198 = scmp.lt.s32.totalorder %s197, 15
        %s199 = scalar_select %p198, %s197, 15
        %s200 = smul.addr %s199, 8
        %s201 = scalar_lea.vmem %s0, %s200
        %p202 = pneg %p40
        %p203 = pneg %p37
        %p204 = pneg %p61
        %p205 = pneg %p58
        %p206 = pneg %p82
        %p207 = pneg %p79
        %p208 = pneg %p103
        %p209 = pneg %p100
        %p210 = pneg %p124
        %p211 = pneg %p121
        %p212 = pneg %p150
        %p213 = pneg %p147
        %s214 = sand.u32 %s137, 1
        %s215 = scalar_lea.sflag [#allocation3], %s214
        %s216 = sand.u32 %s137, 1
        %s217 = smul.addr %s216, 64
        %s218 = scalar_lea.vmem [#allocation2], %s217
        %s219 = smul.u32 8, %s19
        %p220 = scmp.lt.s32.totalorder %s219, 15
        %s221 = scalar_select %p220, %s219, 15
        %s222 = smul.addr %s221, 8
        %s223 = scalar_lea.vmem %s0, %s222
        %s224 = smul.u32 8, %s19
        %s225 = smul.u32 8, %s19
        %v227 = vld [vmem:[%s223] sm:$0xff]
        %v228 = vld [vmem:[%s223 + $0x8] sm:$0xff]
        %v229 = vld [vmem:[%s223 + $0x10] sm:$0xff]
        %v230 = vld [vmem:[%s223 + $0x18] sm:$0xff]
        %v231 = vld [vmem:[%s223 + $0x20] sm:$0xff]
        %v232 = vld [vmem:[%s223 + $0x28] sm:$0xff]
        %v233 = vld [vmem:[%s223 + $0x30] sm:$0xff]
        %v234 = vld [vmem:[%s223 + $0x38] sm:$0xff]
        %vm235 = vcmask 523264
        %v236 = vsel %vm235, %v227, 0.0
        %237 = vadd.xlane.f32.xlu0 %v236
        %v238 = vpop.xlane.xlu0 %237
        %v239 = vsel %vm235, %v228, 0.0
        %240 = vadd.xlane.f32.xlu0 %v239
        %v241 = vpop.xlane.xlu0 %240
        %v242 = vsel %vm235, %v229, 0.0
        %243 = vadd.xlane.f32.xlu0 %v242
        %v244 = vpop.xlane.xlu0 %243
        %v245 = vsel %vm235, %v230, 0.0
        %246 = vadd.xlane.f32.xlu0 %v245
        %v247 = vpop.xlane.xlu0 %246
        %v248 = vsel %vm235, %v231, 0.0
        %249 = vadd.xlane.f32.xlu0 %v248
        %v250 = vpop.xlane.xlu0 %249
        %v251 = vsel %vm235, %v232, 0.0
        %252 = vadd.xlane.f32.xlu0 %v251
        %v253 = vpop.xlane.xlu0 %252
        %v254 = vsel %vm235, %v233, 0.0
        %255 = vadd.xlane.f32.xlu0 %v254
        %v256 = vpop.xlane.xlu0 %255
        %v257 = vsel %vm235, %v234, 0.0
        %258 = vadd.xlane.f32.xlu0 %v257
        %v259 = vpop.xlane.xlu0 %258
        %v260 = vrcp.pop 64.0
        %v261 = vmul.f32 %v238, %v260
        %v262 = vmul.f32 %v241, %v260
        %v263 = vmul.f32 %v244, %v260
        %v264 = vmul.f32 %v247, %v260
        %v265 = vmul.f32 %v250, %v260
        %v266 = vmul.f32 %v253, %v260
        %v267 = vmul.f32 %v256, %v260
        %v268 = vmul.f32 %v259, %v260
        %v269 = vsub.f32 %v227, %v261
        %v270 = vsub.f32 %v228, %v262
        %v271 = vsub.f32 %v229, %v263
        %v272 = vsub.f32 %v230, %v264
        %v273 = vsub.f32 %v231, %v265
        %v274 = vsub.f32 %v232, %v266
        %v275 = vsub.f32 %v233, %v267
        %v276 = vsub.f32 %v234, %v268
        %v277 = vmul.f32 %v269, %v269
        %v278 = vmul.f32 %v270, %v270
        %v279 = vmul.f32 %v271, %v271
        %v280 = vmul.f32 %v272, %v272
        %v281 = vmul.f32 %v273, %v273
        %v282 = vmul.f32 %v274, %v274
        %v283 = vmul.f32 %v275, %v275
        %v284 = vmul.f32 %v276, %v276
        %v285 = vsel %vm235, %v277, 0.0
        %286 = vadd.xlane.f32.xlu0 %v285
        %v287 = vpop.xlane.xlu0 %286
        %v288 = vsel %vm235, %v278, 0.0
        %289 = vadd.xlane.f32.xlu0 %v288
        %v290 = vpop.xlane.xlu0 %289
        %v291 = vsel %vm235, %v279, 0.0
        %292 = vadd.xlane.f32.xlu0 %v291
        %v293 = vpop.xlane.xlu0 %292
        %v294 = vsel %vm235, %v280, 0.0
        %295 = vadd.xlane.f32.xlu0 %v294
        %v296 = vpop.xlane.xlu0 %295
        %v297 = vsel %vm235, %v281, 0.0
        %298 = vadd.xlane.f32.xlu0 %v297
        %v299 = vpop.xlane.xlu0 %298
        %v300 = vsel %vm235, %v282, 0.0
        %301 = vadd.xlane.f32.xlu0 %v300
        %v302 = vpop.xlane.xlu0 %301
        %v303 = vsel %vm235, %v283, 0.0
        %304 = vadd.xlane.f32.xlu0 %v303
        %v305 = vpop.xlane.xlu0 %304
        %v306 = vsel %vm235, %v284, 0.0
        %307 = vadd.xlane.f32.xlu0 %v306
        %v308 = vpop.xlane.xlu0 %307
        %v309 = vmul.f32 %v287, %v260
        %v310 = vmul.f32 %v290, %v260
        %v311 = vmul.f32 %v293, %v260
        %v312 = vmul.f32 %v296, %v260
        %v313 = vmul.f32 %v299, %v260
        %v314 = vmul.f32 %v302, %v260
        %v315 = vmul.f32 %v305, %v260
        %v316 = vmul.f32 %v308, %v260
        %v317 = vadd.f32 %v309, 1e-06
        %v318 = vadd.f32 %v310, 1e-06
        %v319 = vadd.f32 %v311, 1e-06
        %v320 = vadd.f32 %v312, 1e-06
        %v321 = vadd.f32 %v313, 1e-06
        %v322 = vadd.f32 %v314, 1e-06
        %v323 = vadd.f32 %v315, 1e-06
        %v324 = vadd.f32 %v316, 1e-06
        %v325 = vrsqrt.pop %v317
        %v326 = vrsqrt.pop %v318
        %v327 = vrsqrt.pop %v319
        %v328 = vrsqrt.pop %v320
        %v329 = vrsqrt.pop %v321
        %v330 = vrsqrt.pop %v322
        %v331 = vrsqrt.pop %v323
        %v332 = vrsqrt.pop %v324
        %v333 = vmul.f32 %v269, %v325
        %v334 = vmul.f32 %v270, %v326
        %v335 = vmul.f32 %v271, %v327
        %v336 = vmul.f32 %v272, %v328
        %v337 = vmul.f32 %v273, %v329
        %v338 = vmul.f32 %v274, %v330
        %v339 = vmul.f32 %v275, %v331
        %v340 = vmul.f32 %v276, %v332
        %v341 = vpack.c.bf16 %v334, %v333
        %v342 = vpack.c.bf16 %v336, %v335
        %v343 = vpack.c.bf16 %v338, %v337
        %v344 = vpack.c.bf16 %v340, %v339
        %v345 = vld [vmem:[%s1] sm:$0xff]
        %v346 = vld [vmem:[%s1 + $0x8] sm:$0xff]
        %v347 = vld [vmem:[%s1 + $0x10] sm:$0xff]
        %v348 = vld [vmem:[%s1 + $0x18] sm:$0xff]
        %v349 = vld [vmem:[%s1 + $0x20] sm:$0xff]
        %v350 = vld [vmem:[%s1 + $0x28] sm:$0xff]
        %v351 = vld [vmem:[%s1 + $0x30] sm:$0xff]
        %v352 = vld [vmem:[%s1 + $0x38] sm:$0xff]
        %v353 = vld [vmem:[%s2] sm:$0x3]
        %v355 = vlaneseq
        %v356 = vshrl.u32 %v355, 7
        %v357 = vsub.s32 0, %v356
        %v358 = vrot.slane %v353, %v357
        %v359 = vlaneseq
        %v360 = vshrl.u32 %v359, 7
        %v361 = vsub.s32 1, %v360
        %v362 = vrot.slane %v353, %v361
        %v373 = vunpack.c.l.b16 %v345
        %v374 = vunpack.c.h.b16 %v345
        %v375 = vunpack.c.l.b16 %v346
        %v376 = vunpack.c.h.b16 %v346
        %v377 = vunpack.c.l.b16 %v347
        %v378 = vunpack.c.h.b16 %v347
        %v379 = vunpack.c.l.b16 %v348
        %v380 = vunpack.c.h.b16 %v348
        %v381 = vunpack.c.l.b16 %v349
        %v382 = vunpack.c.h.b16 %v349
        %v383 = vunpack.c.l.b16 %v350
        %v384 = vunpack.c.h.b16 %v350
        %v385 = vunpack.c.l.b16 %v351
        %v386 = vunpack.c.h.b16 %v351
        %v387 = vunpack.c.l.b16 %v352
        %v388 = vunpack.c.h.b16 %v352
        %v389 = vpack.c.b16 %v375, %v373
        %v390 = vpack.c.b16 %v376, %v374
        %v391 = vpack.c.b16 %v379, %v377
        %v392 = vpack.c.b16 %v380, %v378
        %v393 = vpack.c.b16 %v383, %v381
        %v394 = vpack.c.b16 %v384, %v382
        %v395 = vpack.c.b16 %v387, %v385
        %v396 = vpack.c.b16 %v388, %v386
        %v406 = vsel %vm235, %v341, 0
        %v409 = vsel %vm235, %v342, 0
        %v412 = vsel %vm235, %v343, 0
        %v415 = vsel %vm235, %v344, 0
        %417 = vmatprep.subr.bf16.mxu0 %v390
        %418 = vmatpush1.bf16.msra.mxu0 %v389
        %419 = vmatprep.subr.bf16.mxu0 %v392
        %420 = vmatpush1.bf16.msra.mxu0 %v391
        %421 = vmatprep.subr.bf16.mxu0 %v394
        %422 = vmatpush1.bf16.msra.mxu0 %v393
        %423 = vmatprep.subr.bf16.mxu0 %v396
        %424 = vmatpush1.bf16.msra.mxu0 %v395
        %425 = vmatprep.subr.bf16.mxu0 0
        %426 = vmatpush1.bf16.msra.mxu0 0
        %427 = vmatprep.subr.bf16.mxu0 0
        %428 = vmatpush1.bf16.msra.mxu0 0
        %429 = vmatprep.subr.bf16.mxu0 0
        %430 = vmatpush1.bf16.msra.mxu0 0
        %431 = vmatprep.subr.bf16.mxu0 0
        %432 = vmatpush1.bf16.msra.mxu0 0
        %433 = vmatprep.subr.bf16.mxu0 0
        %434 = vmatpush1.bf16.msra.mxu0 0
        %435 = vmatprep.subr.bf16.mxu0 0
        %436 = vmatpush1.bf16.msra.mxu0 0
        %437 = vmatprep.subr.bf16.mxu0 0
        %438 = vmatpush1.bf16.msra.mxu0 0
        %439 = vmatprep.subr.bf16.mxu0 0
        %440 = vmatpush1.bf16.msra.mxu0 0
        %441 = vmatprep.subr.bf16.mxu0 0
        %442 = vmatpush1.bf16.msra.mxu0 0
        %443 = vmatprep.subr.bf16.mxu0 0
        %444 = vmatpush1.bf16.msra.mxu0 0
        %445 = vmatprep.subr.bf16.mxu0 0
        %446 = vmatpush1.bf16.msra.mxu0 0
        %447 = vmatprep.subr.bf16.mxu0 0
        %448 = vmatpush1.bf16.msra.mxu0 0
        %449 = vmatprep.mubr.bf16.mxu0 0
        %450 = vmatmul.mubr.bf16.gmra.mrb[0].mxu0 %v406
        %v451 = vpop.f32.mrb[0].mxu0
        %v452 = vadd.f32 %v358, %v451
        %v453 = vpop.f32.mrb[0].mxu0
        %v454 = vadd.f32 %v362, %v453
        %v455 = vpop.f32.mrb[0].mxu0
        %v456 = vadd.f32 %v358, %v455
        %v457 = vpop.f32.mrb[0].mxu0
        %v458 = vadd.f32 %v362, %v457
        %459 = vmatprep.mubr.bf16.mxu0 0
        %460 = vmatmul.mubr.bf16.gmra.mrb[0].mxu0 %v409
        %v461 = vpop.f32.mrb[0].mxu0
        %v462 = vadd.f32 %v358, %v461
        %v463 = vpop.f32.mrb[0].mxu0
        %v464 = vadd.f32 %v362, %v463
        %v465 = vpop.f32.mrb[0].mxu0
        %v466 = vadd.f32 %v358, %v465
        %v467 = vpop.f32.mrb[0].mxu0
        %v468 = vadd.f32 %v362, %v467
        %469 = vmatprep.mubr.bf16.mxu0 0
        %470 = vmatmul.mubr.bf16.gmra.mrb[0].mxu0 %v412
        %v471 = vpop.f32.mrb[0].mxu0
        %v472 = vadd.f32 %v358, %v471
        %v473 = vpop.f32.mrb[0].mxu0
        %v474 = vadd.f32 %v362, %v473
        %v475 = vpop.f32.mrb[0].mxu0
        %v476 = vadd.f32 %v358, %v475
        %v477 = vpop.f32.mrb[0].mxu0
        %v478 = vadd.f32 %v362, %v477
        %479 = vmatprep.mubr.bf16.mxu0 0
        %480 = vmatmul.mubr.bf16.gmra.mrb[0].mxu0 %v415
        %v481 = vpop.f32.mrb[0].mxu0
        %v482 = vadd.f32 %v358, %v481
        %v483 = vpop.f32.mrb[0].mxu0
        %v484 = vadd.f32 %v362, %v483
        %v485 = vpop.f32.mrb[0].mxu0
        %v486 = vadd.f32 %v358, %v485
        %v487 = vpop.f32.mrb[0].mxu0
        %v488 = vadd.f32 %v362, %v487
        %489 = vdwg.mxu0
        %v490 = vmul.f32 %v452, %v452
        %v491 = vmul.f32 %v454, %v454
        %v492 = vmul.f32 %v456, %v456
        %v493 = vmul.f32 %v458, %v458
        %v494 = vmul.f32 %v462, %v462
        %v495 = vmul.f32 %v464, %v464
        %v496 = vmul.f32 %v466, %v466
        %v497 = vmul.f32 %v468, %v468
        %v498 = vmul.f32 %v472, %v472
        %v499 = vmul.f32 %v474, %v474
        %v500 = vmul.f32 %v476, %v476
        %v501 = vmul.f32 %v478, %v478
        %v502 = vmul.f32 %v482, %v482
        %v503 = vmul.f32 %v484, %v484
        %v504 = vmul.f32 %v486, %v486
        %v505 = vmul.f32 %v488, %v488
        %v506 = vmul.f32 %v452, %v490
        %v507 = vmul.f32 %v454, %v491
        %v508 = vmul.f32 %v456, %v492
        %v509 = vmul.f32 %v458, %v493
        %v510 = vmul.f32 %v462, %v494
        %v511 = vmul.f32 %v464, %v495
        %v512 = vmul.f32 %v466, %v496
        %v513 = vmul.f32 %v468, %v497
        %v514 = vmul.f32 %v472, %v498
        %v515 = vmul.f32 %v474, %v499
        %v516 = vmul.f32 %v476, %v500
        %v517 = vmul.f32 %v478, %v501
        %v518 = vmul.f32 %v482, %v502
        %v519 = vmul.f32 %v484, %v503
        %v520 = vmul.f32 %v486, %v504
        %v521 = vmul.f32 %v488, %v505
        %v522 = vmul.f32 %v506, 0.044715
        %v523 = vmul.f32 %v507, 0.044715
        %v524 = vmul.f32 %v508, 0.044715
        %v525 = vmul.f32 %v509, 0.044715
        %v526 = vmul.f32 %v510, 0.044715
        %v527 = vmul.f32 %v511, 0.044715
        %v528 = vmul.f32 %v512, 0.044715
        %v529 = vmul.f32 %v513, 0.044715
        %v530 = vmul.f32 %v514, 0.044715
        %v531 = vmul.f32 %v515, 0.044715
        %v532 = vmul.f32 %v516, 0.044715
        %v533 = vmul.f32 %v517, 0.044715
        %v534 = vmul.f32 %v518, 0.044715
        %v535 = vmul.f32 %v519, 0.044715
        %v536 = vmul.f32 %v520, 0.044715
        %v537 = vmul.f32 %v521, 0.044715
        %v538 = vadd.f32 %v452, %v522
        %v539 = vadd.f32 %v454, %v523
        %v540 = vadd.f32 %v456, %v524
        %v541 = vadd.f32 %v458, %v525
        %v542 = vadd.f32 %v462, %v526
        %v543 = vadd.f32 %v464, %v527
        %v544 = vadd.f32 %v466, %v528
        %v545 = vadd.f32 %v468, %v529
        %v546 = vadd.f32 %v472, %v530
        %v547 = vadd.f32 %v474, %v531
        %v548 = vadd.f32 %v476, %v532
        %v549 = vadd.f32 %v478, %v533
        %v550 = vadd.f32 %v482, %v534
        %v551 = vadd.f32 %v484, %v535
        %v552 = vadd.f32 %v486, %v536
        %v553 = vadd.f32 %v488, %v537
        %v554 = vmul.f32 %v538, 0.7978846
        %v555 = vmul.f32 %v539, 0.7978846
        %v556 = vmul.f32 %v540, 0.7978846
        %v557 = vmul.f32 %v541, 0.7978846
        %v558 = vmul.f32 %v542, 0.7978846
        %v559 = vmul.f32 %v543, 0.7978846
        %v560 = vmul.f32 %v544, 0.7978846
        %v561 = vmul.f32 %v545, 0.7978846
        %v562 = vmul.f32 %v546, 0.7978846
        %v563 = vmul.f32 %v547, 0.7978846
        %v564 = vmul.f32 %v548, 0.7978846
        %v565 = vmul.f32 %v549, 0.7978846
        %v566 = vmul.f32 %v550, 0.7978846
        %v567 = vmul.f32 %v551, 0.7978846
        %v568 = vmul.f32 %v552, 0.7978846
        %v569 = vmul.f32 %v553, 0.7978846
        %v570 = vtanh.pop %v554
        %v571 = vtanh.pop %v555
        %v572 = vtanh.pop %v556
        %v573 = vtanh.pop %v557
        %v574 = vtanh.pop %v558
        %v575 = vtanh.pop %v559
        %v576 = vtanh.pop %v560
        %v577 = vtanh.pop %v561
        %v578 = vtanh.pop %v562
        %v579 = vtanh.pop %v563
        %v580 = vtanh.pop %v564
        %v581 = vtanh.pop %v565
        %v582 = vtanh.pop %v566
        %v583 = vtanh.pop %v567
        %v584 = vtanh.pop %v568
        %v585 = vtanh.pop %v569
        %v586 = vadd.f32 %v570, 1.0
        %v587 = vadd.f32 %v571, 1.0
        %v588 = vadd.f32 %v572, 1.0
        %v589 = vadd.f32 %v573, 1.0
        %v590 = vadd.f32 %v574, 1.0
        %v591 = vadd.f32 %v575, 1.0
        %v592 = vadd.f32 %v576, 1.0
        %v593 = vadd.f32 %v577, 1.0
        %v594 = vadd.f32 %v578, 1.0
        %v595 = vadd.f32 %v579, 1.0
        %v596 = vadd.f32 %v580, 1.0
        %v597 = vadd.f32 %v581, 1.0
        %v598 = vadd.f32 %v582, 1.0
        %v599 = vadd.f32 %v583, 1.0
        %v600 = vadd.f32 %v584, 1.0
        %v601 = vadd.f32 %v585, 1.0
        %v602 = vmul.f32 %v586, 0.5
        %v603 = vmul.f32 %v587, 0.5
        %v604 = vmul.f32 %v588, 0.5
        %v605 = vmul.f32 %v589, 0.5
        %v606 = vmul.f32 %v590, 0.5
        %v607 = vmul.f32 %v591, 0.5
        %v608 = vmul.f32 %v592, 0.5
        %v609 = vmul.f32 %v593, 0.5
        %v610 = vmul.f32 %v594, 0.5
        %v611 = vmul.f32 %v595, 0.5
        %v612 = vmul.f32 %v596, 0.5
        %v613 = vmul.f32 %v597, 0.5
        %v614 = vmul.f32 %v598, 0.5
        %v615 = vmul.f32 %v599, 0.5
        %v616 = vmul.f32 %v600, 0.5
        %v617 = vmul.f32 %v601, 0.5
        %v618 = vmul.f32 %v452, %v602
        %v619 = vmul.f32 %v454, %v603
        %v620 = vmul.f32 %v456, %v604
        %v621 = vmul.f32 %v458, %v605
        %v622 = vmul.f32 %v462, %v606
        %v623 = vmul.f32 %v464, %v607
        %v624 = vmul.f32 %v466, %v608
        %v625 = vmul.f32 %v468, %v609
        %v626 = vmul.f32 %v472, %v610
        %v627 = vmul.f32 %v474, %v611
        %v628 = vmul.f32 %v476, %v612
        %v629 = vmul.f32 %v478, %v613
        %v630 = vmul.f32 %v482, %v614
        %v631 = vmul.f32 %v484, %v615
        %v632 = vmul.f32 %v486, %v616
        %v633 = vmul.f32 %v488, %v617
        %v634 = vpack.c.bf16 %v620, %v618
        %v635 = vpack.c.bf16 %v621, %v619
        %v636 = vpack.c.bf16 %v624, %v622
        %v637 = vpack.c.bf16 %v625, %v623
        %v638 = vpack.c.bf16 %v628, %v626
        %v639 = vpack.c.bf16 %v629, %v627
        %v640 = vpack.c.bf16 %v632, %v630
        %v641 = vpack.c.bf16 %v633, %v631
        %v642 = vld [vmem:[%s3] sm:$0xf]
        %v643 = vld [vmem:[%s3 + $0x4] sm:$0xf]
        %v644 = vld [vmem:[%s3 + $0x8] sm:$0xf]
        %v645 = vld [vmem:[%s3 + $0xc] sm:$0xf]
        %v646 = vld [vmem:[%s3 + $0x10] sm:$0xf]
        %v647 = vld [vmem:[%s3 + $0x14] sm:$0xf]
        %v648 = vld [vmem:[%s3 + $0x18] sm:$0xf]
        %v649 = vld [vmem:[%s3 + $0x1c] sm:$0xf]
        %v650 = vld [vmem:[%s3 + $0x20] sm:$0xf]
        %v651 = vld [vmem:[%s3 + $0x24] sm:$0xf]
        %v652 = vld [vmem:[%s3 + $0x28] sm:$0xf]
        %v653 = vld [vmem:[%s3 + $0x2c] sm:$0xf]
        %v654 = vld [vmem:[%s3 + $0x30] sm:$0xf]
        %v655 = vld [vmem:[%s3 + $0x34] sm:$0xf]
        %v656 = vld [vmem:[%s3 + $0x38] sm:$0xf]
        %v657 = vld [vmem:[%s3 + $0x3c] sm:$0xf]
        %v658 = vld [vmem:[%s3 + $0x40] sm:$0xf]
        %v659 = vld [vmem:[%s3 + $0x44] sm:$0xf]
        %v660 = vld [vmem:[%s3 + $0x48] sm:$0xf]
        %v661 = vld [vmem:[%s3 + $0x4c] sm:$0xf]
        %v662 = vld [vmem:[%s3 + $0x50] sm:$0xf]
        %v663 = vld [vmem:[%s3 + $0x54] sm:$0xf]
        %v664 = vld [vmem:[%s3 + $0x58] sm:$0xf]
        %v665 = vld [vmem:[%s3 + $0x5c] sm:$0xf]
        %v666 = vld [vmem:[%s3 + $0x60] sm:$0xf]
        %v667 = vld [vmem:[%s3 + $0x64] sm:$0xf]
        %v668 = vld [vmem:[%s3 + $0x68] sm:$0xf]
        %v669 = vld [vmem:[%s3 + $0x6c] sm:$0xf]
        %v670 = vld [vmem:[%s3 + $0x70] sm:$0xf]
        %v671 = vld [vmem:[%s3 + $0x74] sm:$0xf]
        %v672 = vld [vmem:[%s3 + $0x78] sm:$0xf]
        %v673 = vld [vmem:[%s3 + $0x7c] sm:$0xf]
        %v674 = vld [vmem:[%s4] sm:$0x1]
        %v676 = vlaneseq
        %v677 = vshrl.u32 %v676, 7
        %v678 = vsub.s32 0, %v677
        %v679 = vrot.slane %v674, %v678
        %v713 = vunpack.c.l.b16 %v642
        %v714 = vunpack.c.l.b16 %v643
        %v715 = vunpack.c.l.b16 %v644
        %v716 = vunpack.c.l.b16 %v645
        %v717 = vunpack.c.l.b16 %v646
        %v718 = vunpack.c.l.b16 %v647
        %v719 = vunpack.c.l.b16 %v648
        %v720 = vunpack.c.l.b16 %v649
        %v721 = vunpack.c.l.b16 %v650
        %v722 = vunpack.c.l.b16 %v651
        %v723 = vunpack.c.l.b16 %v652
        %v724 = vunpack.c.l.b16 %v653
        %v725 = vunpack.c.l.b16 %v654
        %v726 = vunpack.c.l.b16 %v655
        %v727 = vunpack.c.l.b16 %v656
        %v728 = vunpack.c.l.b16 %v657
        %v729 = vunpack.c.l.b16 %v658
        %v730 = vunpack.c.l.b16 %v659
        %v731 = vunpack.c.l.b16 %v660
        %v732 = vunpack.c.l.b16 %v661
        %v733 = vunpack.c.l.b16 %v662
        %v734 = vunpack.c.l.b16 %v663
        %v735 = vunpack.c.l.b16 %v664
        %v736 = vunpack.c.l.b16 %v665
        %v737 = vunpack.c.l.b16 %v666
        %v738 = vunpack.c.l.b16 %v667
        %v739 = vunpack.c.l.b16 %v668
        %v740 = vunpack.c.l.b16 %v669
        %v741 = vunpack.c.l.b16 %v670
        %v742 = vunpack.c.l.b16 %v671
        %v743 = vunpack.c.l.b16 %v672
        %v744 = vunpack.c.l.b16 %v673
        %v745 = vpack.c.b16 %v714, %v713
        %v746 = vpack.c.b16 %v716, %v715
        %v747 = vpack.c.b16 %v718, %v717
        %v748 = vpack.c.b16 %v720, %v719
        %v749 = vpack.c.b16 %v722, %v721
        %v750 = vpack.c.b16 %v724, %v723
        %v751 = vpack.c.b16 %v726, %v725
        %v752 = vpack.c.b16 %v728, %v727
        %v753 = vpack.c.b16 %v730, %v729
        %v754 = vpack.c.b16 %v732, %v731
        %v755 = vpack.c.b16 %v734, %v733
        %v756 = vpack.c.b16 %v736, %v735
        %v757 = vpack.c.b16 %v738, %v737
        %v758 = vpack.c.b16 %v740, %v739
        %v759 = vpack.c.b16 %v742, %v741
        %v760 = vpack.c.b16 %v744, %v743
        %777 = vmatprep.subr.bf16.mxu0 0
        %778 = vmatpush1.bf16.msra.mxu0 %v745
        %779 = vmatprep.subr.bf16.mxu0 0
        %780 = vmatpush1.bf16.msra.mxu0 %v746
        %781 = vmatprep.subr.bf16.mxu0 0
        %782 = vmatpush1.bf16.msra.mxu0 %v747
        %783 = vmatprep.subr.bf16.mxu0 0
        %784 = vmatpush1.bf16.msra.mxu0 %v748
        %785 = vmatprep.subr.bf16.mxu0 0
        %786 = vmatpush1.bf16.msra.mxu0 %v749
        %787 = vmatprep.subr.bf16.mxu0 0
        %788 = vmatpush1.bf16.msra.mxu0 %v750
        %789 = vmatprep.subr.bf16.mxu0 0
        %790 = vmatpush1.bf16.msra.mxu0 %v751
        %791 = vmatprep.subr.bf16.mxu0 0
        %792 = vmatpush1.bf16.msra.mxu0 %v752
        %793 = vmatprep.subr.bf16.mxu0 0
        %794 = vmatpush1.bf16.msra.mxu0 %v753
        %795 = vmatprep.subr.bf16.mxu0 0
        %796 = vmatpush1.bf16.msra.mxu0 %v754
        %797 = vmatprep.subr.bf16.mxu0 0
        %798 = vmatpush1.bf16.msra.mxu0 %v755
        %799 = vmatprep.subr.bf16.mxu0 0
        %800 = vmatpush1.bf16.msra.mxu0 %v756
        %801 = vmatprep.subr.bf16.mxu0 0
        %802 = vmatpush1.bf16.msra.mxu0 %v757
        %803 = vmatprep.subr.bf16.mxu0 0
        %804 = vmatpush1.bf16.msra.mxu0 %v758
        %805 = vmatprep.subr.bf16.mxu0 0
        %806 = vmatpush1.bf16.msra.mxu0 %v759
        %807 = vmatprep.subr.bf16.mxu0 0
        %808 = vmatpush1.bf16.msra.mxu0 %v760
        %809 = vmatprep.mubr.bf16.mxu0 %v635
        %810 = vmatmul.mubr.bf16.gmra.mrb[0].mxu0 %v634
        %v811 = vpop.f32.mrb[0].mxu0
        %v812 = vadd.f32 %v679, %v811
        %v813 = vpop.f32.mrb[0].mxu0
        %v814 = vpop.f32.mrb[0].mxu0
        %v815 = vadd.f32 %v679, %v814
        %v816 = vpop.f32.mrb[0].mxu0
        %817 = vmatprep.mubr.bf16.mxu0 %v637
        %818 = vmatmul.mubr.bf16.gmra.mrb[0].mxu0 %v636
        %v819 = vpop.f32.mrb[0].mxu0
        %v820 = vadd.f32 %v679, %v819
        %v821 = vpop.f32.mrb[0].mxu0
        %v822 = vpop.f32.mrb[0].mxu0
        %v823 = vadd.f32 %v679, %v822
        %v824 = vpop.f32.mrb[0].mxu0
        %825 = vmatprep.mubr.bf16.mxu0 %v639
        %826 = vmatmul.mubr.bf16.gmra.mrb[0].mxu0 %v638
        %v827 = vpop.f32.mrb[0].mxu0
        %v828 = vadd.f32 %v679, %v827
        %v829 = vpop.f32.mrb[0].mxu0
        %v830 = vpop.f32.mrb[0].mxu0
        %v831 = vadd.f32 %v679, %v830
        %v832 = vpop.f32.mrb[0].mxu0
        %833 = vmatprep.mubr.bf16.mxu0 %v641
        %834 = vmatmul.mubr.bf16.gmra.mrb[0].mxu0 %v640
        %v835 = vpop.f32.mrb[0].mxu0
        %v836 = vadd.f32 %v679, %v835
        %v837 = vpop.f32.mrb[0].mxu0
        %v838 = vpop.f32.mrb[0].mxu0
        %v839 = vadd.f32 %v679, %v838
        %v840 = vpop.f32.mrb[0].mxu0
        %841 = vdwg.mxu0
        %v842 = vadd.f32 %v227, %v812
        %v843 = vadd.f32 %v228, %v815
        %v844 = vadd.f32 %v229, %v820
        %v845 = vadd.f32 %v230, %v823
        %v846 = vadd.f32 %v231, %v828
        %v847 = vadd.f32 %v232, %v831
        %v848 = vadd.f32 %v233, %v836
        %v849 = vadd.f32 %v234, %v839
        %850 = vst.msk [vmem:[%s218] sm:$0xff] %vm235, %v842
        %851 = vst.msk [vmem:[%s218 + $0x8] sm:$0xff] %vm235, %v843
        %852 = vst.msk [vmem:[%s218 + $0x10] sm:$0xff] %vm235, %v844
        %853 = vst.msk [vmem:[%s218 + $0x18] sm:$0xff] %vm235, %v845
        %854 = vst.msk [vmem:[%s218 + $0x20] sm:$0xff] %vm235, %v846
        %855 = vst.msk [vmem:[%s218 + $0x28] sm:$0xff] %vm235, %v847
        %856 = vst.msk [vmem:[%s218 + $0x30] sm:$0xff] %vm235, %v848
        %857 = vst.msk [vmem:[%s218 + $0x38] sm:$0xff] %vm235, %v849
        %s858 = sand.u32 %s137, 1
        %s859 = scalar_lea.sflag [#allocation3], %s858
        %s860 = sand.u32 %s137, 1
        %s861 = smul.addr %s860, 64
        %s862 = scalar_lea.vmem [#allocation2], %s861
        // Predicated region
        $region41: #{modulated_multiview_cond.39} parent=39 // pred_check
          %p863 = pneg %p147
        $region42: #{modulated_multiview_cond.39} parent=39 // pred_check_branch
          %865 = sbr.rel (%p863) target = $region44
        $region43: #{modulated_multiview_cond.39} parent=39 // pred_region
          %s866 = smul.u32 8, %s19
          %s868 = ssub.s32 1024, 1024
          %869 = vsyncadd %s859, %s868
          %s870 = smul.addr %s866, 128
          %s871 = scalar_lea.hbm %s5, %s870
          %s872 = sshll.u32 %s862, 4
          %s873 = int_to_ptr.vmem [resolvable:$true] %s872
          %878 = dma.vmem_to_hbm [thread:$0]  %s873, 1024, %s871, %s859, 128, 128, 8
        $region44: #{modulated_multiview_cond.39} parent=39 // pred_fallthru
          _
      $region40: #{modulated_multiview_cond.39} parent=5 // pred_fallthru
        _
      %p879 = scmp.le.s32.totalorder 2, %s14
      // Predicated region
      $region45: #{modulated_multiview_cond.39} parent=5 // pred_check
        %p880 = pneg %p879
      $region46: #{modulated_multiview_cond.39} parent=5 // pred_check_branch
        %882 = sbr.rel (%p880) target = $region48
      $region47: #{modulated_multiview_cond.39} parent=5 // pred_region
        %s883 = ssub.s32 %s14, 2
        // Predicated region
        $region49: #{modulated_multiview_cond.39} parent=47 // pred_check
          %p884 = pneg %p153
        $region50: #{modulated_multiview_cond.39} parent=47 // pred_check_branch
          %886 = sbr.rel (%p884) target = $region52
        $region51: #{modulated_multiview_cond.39} parent=47 // pred_region
          %s887 = sand.u32 %s138, 1
          %s888 = scalar_lea.sflag [#allocation3], %s887
          %s889 = sand.u32 %s138, 1
          %s890 = smul.addr %s889, 64
          %s891 = scalar_lea.vmem [#allocation2], %s890
          %892 = dma.done %s888, 1024
        $region52: #{modulated_multiview_cond.39} parent=47 // pred_fallthru
          _
      $region48: #{modulated_multiview_cond.39} parent=5 // pred_fallthru
        _
    $region6: #{modulated_multiview_cond.39} parent=1 // loop_footer
      %s18 = sadd.s32 1, %s14
    $region7: #{modulated_multiview_cond.39} parent=1 // loop_footer_branch
      %13 = sbr.rel target = $region3
    $region8: #{modulated_multiview_cond.39} parent=1 // loop_exit
      _
    %893 = vsyncpa [#allocation3], 1
    %s894 = scalar_lea.sflag [#allocation3], 1
    %895 = vsyncpa %s894, 1

</llo_original>
